<compile_context>
chip_gen: v5e
topology: v5e:2x2
jax: 0.10.0
libtpu: 0.0.40
codegen_flags: <defaults>
</compile_context>

<pallas_src>
import functools

import jax
import jax.numpy as jnp
from jax.experimental import pallas as pl
from jax.experimental.pallas import tpu as pltpu

LANE = 128


# ----------------------------- in-kernel helpers ---------------------------

def _conv3x3_taps(load_rows, w_ref, *, stride, ho, wo):
    """3x3 conv as 9 tap matmuls with row-only (major-axis) operand slicing.

    load_rows(ph, dh) -> (ho, wpp, cin) slab of the phase-decomposed padded
    plane, sliced only along rows, so the MXU operand needs no relayout.
    The matmul runs at the full padded width wpp; the kw shift is applied to
    the f32 result (~(wpp/wo - 1) extra MXU work instead of a per-tap copy).
    Returns the (ho, wo, cout) f32 accumulator.
    """
    cout = w_ref.shape[-1]
    acc = None
    row_blocks = {}
    for kh in range(3):
        for kw in range(3):
            ph = (kh % stride) * stride + (kw % stride)
            dh, dw = kh // stride, kw // stride
            key = (ph, dh)
            if key not in row_blocks:
                rows = load_rows(ph, dh)                       # (ho, wpp, cin)
                row_blocks[key] = rows.reshape(ho * rows.shape[1], rows.shape[2])
            rows2d = row_blocks[key]
            wpp = rows2d.shape[0] // ho
            prod = jnp.dot(rows2d, w_ref[kh, kw],
                           preferred_element_type=jnp.float32)
            tap = prod.reshape(ho, wpp, cout)[:, dw:dw + wo, :]
            acc = tap if acc is None else acc + tap
    return acc


def _bb_core(xph_ref, w1_ref, b1_ref, w2_ref, b2_ref, wd_ref, bd_ref,
             o_ref, y1_ref, *, stride, ho, wo, tn):
    """Fused BasicBlock body for one (image, cout-tile) grid step."""
    downsample = wd_ref is not None
    j = pl.program_id(1)
    cin_pad = xph_ref.shape[-1]

    # ---- conv1 + folded BN + ReLU -> padded y1 plane, VMEM-resident across j
    @pl.when(j == 0)
    def _():
        y1_ref[...] = jnp.zeros_like(y1_ref)            # zero the +1 halo
        acc1 = _conv3x3_taps(lambda ph, dh: xph_ref[0, ph, dh:dh + ho, :, :],
                             w1_ref, stride=stride, ho=ho, wo=wo)
        y1 = jnp.maximum(acc1 + b1_ref[...], 0.0)
        y1_ref[1:1 + ho, 1:1 + wo, :] = y1.astype(y1_ref.dtype)

    # ---- conv2 + folded BN for this cout tile, reading y1 straight from VMEM
    acc2 = _conv3x3_taps(lambda ph, dh: y1_ref[dh:dh + ho, :, :],
                         w2_ref, stride=1, ho=ho, wo=wo)
    y2 = acc2 + b2_ref[...]

    # ---- residual branch, taken from the phase planes already in VMEM ------
    # x[s*y, s*x] == tap (1,1) of the padded input plane.
    ph_r = (1 % stride) * stride + (1 % stride)
    dr = 1 // stride
    if downsample:
        xres = xph_ref[0, ph_r, dr:dr + ho, dr:dr + wo, :]
        res = jnp.dot(xres.reshape(ho * wo, cin_pad), wd_ref[...],
                      preferred_element_type=jnp.float32).reshape(ho, wo, tn)
        res = res + bd_ref[...]
    else:
        if tn == cin_pad:
            xres = xph_ref[0, ph_r, dr:dr + ho, dr:dr + wo, :]
        else:
            c0 = pl.multiple_of(j * tn, LANE)
            xres = xph_ref[0, ph_r, dr:dr + ho, dr:dr + wo, pl.ds(c0, tn)]
        res = xres.astype(jnp.float32)

    out = jnp.maximum(y2 + res, 0.0)
    o_ref[...] = out.reshape(1, ho, wo, tn).astype(o_ref.dtype)


def _bb_kernel_identity(xph_ref, w1_ref, b1_ref, w2_ref, b2_ref,
                        o_ref, y1_ref, *, stride, ho, wo, tn):
    _bb_core(xph_ref, w1_ref, b1_ref, w2_ref, b2_ref, None, None,
             o_ref, y1_ref, stride=stride, ho=ho, wo=wo, tn=tn)


def _bb_kernel_downsample(xph_ref, w1_ref, b1_ref, w2_ref, b2_ref,
                          wd_ref, bd_ref, o_ref, y1_ref,
                          *, stride, ho, wo, tn):
    _bb_core(xph_ref, w1_ref, b1_ref, w2_ref, b2_ref, wd_ref, bd_ref,
             o_ref, y1_ref, stride=stride, ho=ho, wo=wo, tn=tn)


# ----------------------------- pallas_call wrapper -------------------------

def _vmem_limit_bytes():
    cap = 64 * 1024 * 1024                      # conservative fallback (v7x)
    try:
        info = pltpu.get_tpu_info()
        cap = int(getattr(info, "vmem_capacity_bytes", cap))
    except Exception:
        pass
    return min(int(cap * 3 // 4), 96 * 1024 * 1024)


def _pick_tn(cout_pad):
    # 256-wide output tiles fill the 2x256^2 MXU on v6e/v7x; 128 otherwise.
    # TODO(synk): keep 128 on v5e (4x128^2 MXU) via a generation query.
    if cout_pad % 256 == 0:
        return 256
    return min(cout_pad, LANE)


def fused_basic_block(xph, w1, b1, w2, b2, wd=None, bd=None, *,
                      stride, out_hw, tn):
    n, ss, hpp, wpp, cin_pad = xph.shape
    cmid_pad = w1.shape[-1]
    cout_pad = w2.shape[-1]
    ho, wo = out_hw
    downsample = wd is not None

    in_specs = [
        pl.BlockSpec((1, ss, hpp, wpp, cin_pad), lambda i, j: (i, 0, 0, 0, 0)),
        pl.BlockSpec((3, 3, cin_pad, cmid_pad), lambda i, j: (0, 0, 0, 0)),
        pl.BlockSpec((1, cmid_pad), lambda i, j: (0, 0)),
        pl.BlockSpec((3, 3, cmid_pad, tn), lambda i, j: (0, 0, 0, j)),
        pl.BlockSpec((1, tn), lambda i, j: (0, j)),
    ]
    args = [xph, w1, b1, w2, b2]
    if downsample:
        kernel = functools.partial(_bb_kernel_downsample, stride=stride,
                                   ho=ho, wo=wo, tn=tn)
        in_specs += [pl.BlockSpec((cin_pad, tn), lambda i, j: (0, j)),
                     pl.BlockSpec((1, tn), lambda i, j: (0, j))]
        args += [wd, bd]
    else:
        kernel = functools.partial(_bb_kernel_identity, stride=stride,
                                   ho=ho, wo=wo, tn=tn)

    return pl.pallas_call(
        kernel,
        out_shape=jax.ShapeDtypeStruct((n, ho, wo, cout_pad), jnp.bfloat16),
        grid_spec=pltpu.PrefetchScalarGridSpec(
            num_scalar_prefetch=0,
            grid=(n, cout_pad // tn),
            in_specs=in_specs,
            out_specs=pl.BlockSpec((1, ho, wo, tn), lambda i, j: (i, 0, 0, j)),
            scratch_shapes=[
                pltpu.VMEM((ho + 2, wo + 2, cmid_pad), jnp.bfloat16)],
        ),
        compiler_params=pltpu.CompilerParams(
            dimension_semantics=("parallel", "arbitrary"),
            vmem_limit_bytes=_vmem_limit_bytes()),
    )(*args)


# ------------------------------ JAX glue -----------------------------------

def _round_up(x, m):
    return (x + m - 1) // m * m


def _pad_last(a, target):
    pad = target - a.shape[-1]
    if pad:
        a = jnp.pad(a, [(0, 0)] * (a.ndim - 1) + [(0, pad)])
    return a


def fold_conv_bn(w_oihw, bn, cin_pad, cout_pad, eps=1e-5):
    """Fold BN (eval mode) into conv weights; pad channels to lane multiples."""
    gamma, beta, mean, var = bn
    scale = gamma / jnp.sqrt(var + eps)
    shift = beta - mean * scale
    w = jnp.transpose(w_oihw, (2, 3, 1, 0)) * scale            # (KH,KW,Cin,Cout)
    kh, kw, cin, cout = w.shape
    w = jnp.pad(w, ((0, 0), (0, 0), (0, cin_pad - cin), (0, cout_pad - cout)))
    b = jnp.pad(shift, (0, cout_pad - cout)).reshape(1, cout_pad)
    return w.astype(jnp.bfloat16), b.astype(jnp.float32)


def build_tap_planes(x, ksize, stride, padding):
    """Phase-decompose a padded NHWC activation (no 9x im2col blowup).

    For stride==1 this is just the +1 halo pad.  For tap (kh, kw) the value
    at output (ho, wo) is xph[n, (kh%s)*s + (kw%s), ho + kh//s, wo + kw//s, c].
    """
    n, h, w, c = x.shape
    ho = (h + 2 * padding - ksize) // stride + 1
    wo = (w + 2 * padding - ksize) // stride + 1
    hpp = ho + (ksize - 1) // stride
    wpp = wo + (ksize - 1) // stride
    xp = jnp.pad(x, ((0, 0), (padding, padding), (padding, padding), (0, 0)))
    phases = []
    for p in range(stride):
        for q in range(stride):
            ph = xp[:, p::stride, q::stride, :][:, :hpp, :wpp, :]
            pad_h = hpp - ph.shape[1]
            pad_w = wpp - ph.shape[2]
            if pad_h or pad_w:
                ph = jnp.pad(ph, ((0, 0), (0, pad_h), (0, pad_w), (0, 0)))
            phases.append(ph)
    return jnp.stack(phases, axis=1), (ho, wo)


@functools.partial(jax.jit, static_argnums=(2,))
def basic_block_forward(x_nchw, params, stride):
    x = jnp.transpose(x_nchw, (0, 2, 3, 1))                     # NHWC
    n, h, w, cin = x.shape
    planes = params["w1"].shape[0]
    downsample = (stride != 1) or (cin != planes)

    # TODO(synk): for ResNet layer1 (cin=64) the 128-lane pad doubles input
    # traffic; tap-folding K=2*cin contractions would avoid it.
    cin_pad = _round_up(cin, LANE)
    cmid_pad = _round_up(planes, LANE)
    cout_pad = cmid_pad
    tn = _pick_tn(cout_pad)

    xb = _pad_last(x, cin_pad).astype(jnp.bfloat16)

    w1, b1 = fold_conv_bn(params["w1"], params["bn1"], cin_pad, cmid_pad)
    w2, b2 = fold_conv_bn(params["w2"], params["bn2"], cmid_pad, cout_pad)
    xph, (ho, wo) = build_tap_planes(xb, 3, stride, 1)

    if downsample:
        wd, bd = fold_conv_bn(params["wd"], params["bnd"], cin_pad, cout_pad)
        wd2d = wd.reshape(cin_pad, cout_pad)                    # 1x1 kernel
        out = fused_basic_block(xph, w1, b1, w2, b2, wd2d, bd,
                                stride=stride, out_hw=(ho, wo), tn=tn)
    else:
        out = fused_basic_block(xph, w1, b1, w2, b2,
                                stride=stride, out_hw=(ho, wo), tn=tn)

    out = out[..., :planes].astype(jnp.float32)
    return jnp.transpose(out, (0, 3, 1, 2))                     # NCHW


# ------------------------- pure-JAX reference -------------------------------

def _ref_conv(x, w_hwio, stride, pad):
    return jax.lax.conv_general_dilated(
        x, w_hwio, (stride, stride), ((pad, pad), (pad, pad)),
        dimension_numbers=("NHWC", "HWIO", "NHWC"),
        preferred_element_type=jnp.float32)


def ref_basic_block(x_nchw, params, stride, eps=1e-5):
    x = jnp.transpose(x_nchw, (0, 2, 3, 1))
    xb = x.astype(jnp.bfloat16)
    cin = x.shape[-1]
    planes = params["w1"].shape[0]
    downsample = (stride != 1) or (cin != planes)

    def fold(w, bn):
        gamma, beta, mean, var = bn
        scale = gamma / jnp.sqrt(var + eps)
        shift = beta - mean * scale
        return (jnp.transpose(w, (2, 3, 1, 0)) * scale).astype(jnp.bfloat16), \
               shift.astype(jnp.float32)

    w1, b1 = fold(params["w1"], params["bn1"])
    w2, b2 = fold(params["w2"], params["bn2"])
    y1 = jnp.maximum(_ref_conv(xb, w1, stride, 1) + b1, 0.0).astype(jnp.bfloat16)
    y2 = _ref_conv(y1, w2, 1, 1) + b2
    if downsample:
        wd, bd = fold(params["wd"], params["bnd"])
        res = _ref_conv(xb, wd, stride, 0) + bd
    else:
        res = xb.astype(jnp.float32)
    out = jnp.maximum(y2 + res, 0.0)
    return jnp.transpose(out, (0, 3, 1, 2))


# --------------------------------- main --------------------------------------

def make_params(key, inplanes, planes):
    ks = jax.random.split(key, 6)

    def bn(k, c):
        kg, kb, km, kv = jax.random.split(k, 4)
        gamma = 1.0 + 0.1 * jax.random.normal(kg, (c,), jnp.float32)
        beta = 0.1 * jax.random.normal(kb, (c,), jnp.float32)
        mean = 0.1 * jax.random.normal(km, (c,), jnp.float32)
        var = 1.0 + 0.1 * jnp.abs(jax.random.normal(kv, (c,), jnp.float32))
        return (gamma, beta, mean, var)

    return {
        "w1": 0.1 * jax.random.normal(ks[0], (planes, inplanes, 3, 3), jnp.float32),
        "bn1": bn(ks[1], planes),
        "w2": 0.1 * jax.random.normal(ks[2], (planes, planes, 3, 3), jnp.float32),
        "bn2": bn(ks[3], planes),
        "wd": 0.1 * jax.random.normal(ks[4], (planes, inplanes, 1, 1), jnp.float32),
        "bnd": bn(ks[5], planes),
    }


if __name__ == "__main__":
    key = jax.random.PRNGKey(0)
    k_x1, k_p1, k_x2, k_p2 = jax.random.split(key, 4)

    # Case 1: downsample path (stride=2, channel change)
    inplanes, planes, stride = 4, 8, 2
    x1 = jax.random.normal(k_x1, (2, inplanes, 16, 16), jnp.float32)
    p1 = make_params(k_p1, inplanes, planes)
    out1 = jax.block_until_ready(basic_block_forward(x1, p1, stride))
    ref1 = jax.block_until_ready(ref_basic_block(x1, p1, stride))
    assert out1.shape == (2, planes, 8, 8), out1.shape
    assert jnp.allclose(out1, ref1, atol=2e-2, rtol=2e-2), float(
        jnp.max(jnp.abs(out1 - ref1)))

    # Case 2: identity-residual path (stride=1, same channels)
    inplanes2 = planes2 = 8
    x2 = jax.random.normal(k_x2, (2, inplanes2, 16, 16), jnp.float32)
    p2 = make_params(k_p2, inplanes2, planes2)
    out2 = jax.block_until_ready(basic_block_forward(x2, p2, 1))
    ref2 = jax.block_until_ready(ref_basic_block(x2, p2, 1))
    assert out2.shape == (2, planes2, 16, 16), out2.shape
    assert jnp.allclose(out2, ref2, atol=2e-2, rtol=2e-2), float(
        jnp.max(jnp.abs(out2 - ref2)))

    print("KERNEL_OK")
</pallas_src>

<mosaic_0001>
module attributes {stable_mosaic.version = 11 : i64} {
  func.func @_bb_kernel_downsample(%arg0: i32, %arg1: i32, %arg2: memref<1x4x9x9x128xbf16, #tpu.memory_space<vmem>>, %arg3: memref<3x3x128x128xbf16, #tpu.memory_space<vmem>>, %arg4: memref<1x128xf32, #tpu.memory_space<vmem>>, %arg5: memref<3x3x128x128xbf16, #tpu.memory_space<vmem>>, %arg6: memref<1x128xf32, #tpu.memory_space<vmem>>, %arg7: memref<128x128xbf16, #tpu.memory_space<vmem>>, %arg8: memref<1x128xf32, #tpu.memory_space<vmem>>, %arg9: memref<1x8x8x128xbf16, #tpu.memory_space<vmem>>, %arg10: memref<10x10x128xbf16, #tpu.memory_space<vmem>>) attributes {dimension_semantics = [#tpu.dimension_semantics<parallel>, #tpu.dimension_semantics<arbitrary>], iteration_bounds = array<i64: 2, 1>, scalar_prefetch = 0 : i64, scratch_operands = 1 : i64, tpu.core_type = #tpu.core_type<tc>, window_params = [{transform_indices = @transform_0, window_bounds = array<i64: 1, 4, 9, 9, 128>}, {pipeline_mode = #tpu.pipeline_mode<synchronous>, transform_indices = @transform_1, window_bounds = array<i64: 3, 3, 128, 128>}, {pipeline_mode = #tpu.pipeline_mode<synchronous>, transform_indices = @transform_2, window_bounds = array<i64: 1, 128>}, {transform_indices = @transform_3, window_bounds = array<i64: 3, 3, 128, 128>}, {transform_indices = @transform_4, window_bounds = array<i64: 1, 128>}, {transform_indices = @transform_5, window_bounds = array<i64: 128, 128>}, {transform_indices = @transform_6, window_bounds = array<i64: 1, 128>}, {transform_indices = @transform_7, window_bounds = array<i64: 1, 8, 8, 128>}]} {
    %c0_i32 = arith.constant 0 : i32
    %0 = arith.cmpi eq, %arg1, %c0_i32 : i32
    %1 = arith.extui %0 : i1 to i32
    %c0_i32_0 = arith.constant 0 : i32
    %2 = arith.cmpi ne, %1, %c0_i32_0 : i32
    scf.if %2 {
      %cst_67 = arith.constant 0.000000e+00 : bf16
      %82 = vector.broadcast %cst_67 : bf16 to vector<10x10x128xbf16>
      %c0_68 = arith.constant 0 : index
      %c0_69 = arith.constant 0 : index
      %c0_70 = arith.constant 0 : index
      %83 = vector.load %arg10[%c0_68, %c0_69, %c0_70] : memref<10x10x128xbf16, #tpu.memory_space<vmem>>, vector<10x10x128xbf16>
      tpu.vector_store %arg10[%c0_68, %c0_69, %c0_70], %82 {strides = array<i32>} : memref<10x10x128xbf16, #tpu.memory_space<vmem>>, vector<10x10x128xbf16>,
      %c0_71 = arith.constant 0 : index
      %c0_72 = arith.constant 0 : index
      %c0_73 = arith.constant 0 : index
      %c0_74 = arith.constant 0 : index
      %c0_75 = arith.constant 0 : index
      %84 = vector.load %arg2[%c0_71, %c0_72, %c0_73, %c0_74, %c0_75] : memref<1x4x9x9x128xbf16, #tpu.memory_space<vmem>>, vector<1x1x8x9x128xbf16>
      %85 = vector.shape_cast %84 : vector<1x1x8x9x128xbf16> to vector<8x9x128xbf16>
      %86 = vector.shape_cast %85 : vector<8x9x128xbf16> to vector<72x128xbf16>
      %c0_76 = arith.constant 0 : index
      %c0_77 = arith.constant 0 : index
      %c0_78 = arith.constant 0 : index
      %c0_79 = arith.constant 0 : index
      %87 = vector.load %arg3[%c0_76, %c0_77, %c0_78, %c0_79] : memref<3x3x128x128xbf16, #tpu.memory_space<vmem>>, vector<1x1x128x128xbf16>
      %88 = vector.shape_cast %87 : vector<1x1x128x128xbf16> to vector<128x128xbf16>
      %cst_80 = arith.constant dense<0.000000e+00> : vector<72x128xf32>
      %89 = tpu.matmul %86, %88, %cst_80 {dimension_numbers = #tpu.dot_dimension_numbers<[1], [0], [0], [1], [0, 0, 1, 1], [], []>} : vector<72x128xbf16>, vector<128x128xbf16>, vector<72x128xf32> -> vector<72x128xf32>
      %90 = vector.shape_cast %89 : vector<72x128xf32> to vector<8x9x128xf32>
      %91 = vector.extract_strided_slice %90 {offsets = [0, 0, 0], sizes = [8, 8, 128], strides = [1, 1, 1]} : vector<8x9x128xf32> to vector<8x8x128xf32>
      %c0_81 = arith.constant 0 : index
      %c1_82 = arith.constant 1 : index
      %c0_83 = arith.constant 0 : index
      %c0_84 = arith.constant 0 : index
      %c0_85 = arith.constant 0 : index
      %92 = vector.load %arg2[%c0_81, %c1_82, %c0_83, %c0_84, %c0_85] : memref<1x4x9x9x128xbf16, #tpu.memory_space<vmem>>, vector<1x1x8x9x128xbf16>
      %93 = vector.shape_cast %92 : vector<1x1x8x9x128xbf16> to vector<8x9x128xbf16>
      %94 = vector.shape_cast %93 : vector<8x9x128xbf16> to vector<72x128xbf16>
      %c0_86 = arith.constant 0 : index
      %c1_87 = arith.constant 1 : index
      %c0_88 = arith.constant 0 : index
      %c0_89 = arith.constant 0 : index
      %95 = vector.load %arg3[%c0_86, %c1_87, %c0_88, %c0_89] : memref<3x3x128x128xbf16, #tpu.memory_space<vmem>>, vector<1x1x128x128xbf16>
      %96 = vector.shape_cast %95 : vector<1x1x128x128xbf16> to vector<128x128xbf16>
      %cst_90 = arith.constant dense<0.000000e+00> : vector<72x128xf32>
      %97 = tpu.matmul %94, %96, %cst_90 {dimension_numbers = #tpu.dot_dimension_numbers<[1], [0], [0], [1], [0, 0, 1, 1], [], []>} : vector<72x128xbf16>, vector<128x128xbf16>, vector<72x128xf32> -> vector<72x128xf32>
      %98 = vector.shape_cast %97 : vector<72x128xf32> to vector<8x9x128xf32>
      %99 = vector.extract_strided_slice %98 {offsets = [0, 0, 0], sizes = [8, 8, 128], strides = [1, 1, 1]} : vector<8x9x128xf32> to vector<8x8x128xf32>
      %100 = arith.addf %91, %99 : vector<8x8x128xf32>
      %c0_91 = arith.constant 0 : index
      %c2_92 = arith.constant 2 : index
      %c0_93 = arith.constant 0 : index
      %c0_94 = arith.constant 0 : index
      %101 = vector.load %arg3[%c0_91, %c2_92, %c0_93, %c0_94] : memref<3x3x128x128xbf16, #tpu.memory_space<vmem>>, vector<1x1x128x128xbf16>
      %102 = vector.shape_cast %101 : vector<1x1x128x128xbf16> to vector<128x128xbf16>
      %cst_95 = arith.constant dense<0.000000e+00> : vector<72x128xf32>
      %103 = tpu.matmul %86, %102, %cst_95 {dimension_numbers = #tpu.dot_dimension_numbers<[1], [0], [0], [1], [0, 0, 1, 1], [], []>} : vector<72x128xbf16>, vector<128x128xbf16>, vector<72x128xf32> -> vector<72x128xf32>
      %104 = vector.shape_cast %103 : vector<72x128xf32> to vector<8x9x128xf32>
      %105 = vector.extract_strided_slice %104 {offsets = [0, 1, 0], sizes = [8, 8, 128], strides = [1, 1, 1]} : vector<8x9x128xf32> to vector<8x8x128xf32>
      %106 = arith.addf %100, %105 : vector<8x8x128xf32>
      %c0_96 = arith.constant 0 : index
      %c2_97 = arith.constant 2 : index
      %c0_98 = arith.constant 0 : index
      %c0_99 = arith.constant 0 : index
      %c0_100 = arith.constant 0 : index
      %107 = vector.load %arg2[%c0_96, %c2_97, %c0_98, %c0_99, %c0_100] : memref<1x4x9x9x128xbf16, #tpu.memory_space<vmem>>, vector<1x1x8x9x128xbf16>
      %108 = vector.shape_cast %107 : vector<1x1x8x9x128xbf16> to vector<8x9x128xbf16>
      %109 = vector.shape_cast %108 : vector<8x9x128xbf16> to vector<72x128xbf16>
      %c1_101 = arith.constant 1 : index
      %c0_102 = arith.constant 0 : index
      %c0_103 = arith.constant 0 : index
      %c0_104 = arith.constant 0 : index
      %110 = vector.load %arg3[%c1_101, %c0_102, %c0_103, %c0_104] : memref<3x3x128x128xbf16, #tpu.memory_space<vmem>>, vector<1x1x128x128xbf16>
      %111 = vector.shape_cast %110 : vector<1x1x128x128xbf16> to vector<128x128xbf16>
      %cst_105 = arith.constant dense<0.000000e+00> : vector<72x128xf32>
      %112 = tpu.matmul %109, %111, %cst_105 {dimension_numbers = #tpu.dot_dimension_numbers<[1], [0], [0], [1], [0, 0, 1, 1], [], []>} : vector<72x128xbf16>, vector<128x128xbf16>, vector<72x128xf32> -> vector<72x128xf32>
      %113 = vector.shape_cast %112 : vector<72x128xf32> to vector<8x9x128xf32>
      %114 = vector.extract_strided_slice %113 {offsets = [0, 0, 0], sizes = [8, 8, 128], strides = [1, 1, 1]} : vector<8x9x128xf32> to vector<8x8x128xf32>
      %115 = arith.addf %106, %114 : vector<8x8x128xf32>
      %c0_106 = arith.constant 0 : index
      %c3_107 = arith.constant 3 : index
      %c0_108 = arith.constant 0 : index
      %c0_109 = arith.constant 0 : index
      %c0_110 = arith.constant 0 : index
      %116 = vector.load %arg2[%c0_106, %c3_107, %c0_108, %c0_109, %c0_110] : memref<1x4x9x9x128xbf16, #tpu.memory_space<vmem>>, vector<1x1x8x9x128xbf16>
      %117 = vector.shape_cast %116 : vector<1x1x8x9x128xbf16> to vector<8x9x128xbf16>
      %118 = vector.shape_cast %117 : vector<8x9x128xbf16> to vector<72x128xbf16>
      %c1_111 = arith.constant 1 : index
      %c1_112 = arith.constant 1 : index
      %c0_113 = arith.constant 0 : index
      %c0_114 = arith.constant 0 : index
      %119 = vector.load %arg3[%c1_111, %c1_112, %c0_113, %c0_114] : memref<3x3x128x128xbf16, #tpu.memory_space<vmem>>, vector<1x1x128x128xbf16>
      %120 = vector.shape_cast %119 : vector<1x1x128x128xbf16> to vector<128x128xbf16>
      %cst_115 = arith.constant dense<0.000000e+00> : vector<72x128xf32>
      %121 = tpu.matmul %118, %120, %cst_115 {dimension_numbers = #tpu.dot_dimension_numbers<[1], [0], [0], [1], [0, 0, 1, 1], [], []>} : vector<72x128xbf16>, vector<128x128xbf16>, vector<72x128xf32> -> vector<72x128xf32>
      %122 = vector.shape_cast %121 : vector<72x128xf32> to vector<8x9x128xf32>
      %123 = vector.extract_strided_slice %122 {offsets = [0, 0, 0], sizes = [8, 8, 128], strides = [1, 1, 1]} : vector<8x9x128xf32> to vector<8x8x128xf32>
      %124 = arith.addf %115, %123 : vector<8x8x128xf32>
      %c1_116 = arith.constant 1 : index
      %c2_117 = arith.constant 2 : index
      %c0_118 = arith.constant 0 : index
      %c0_119 = arith.constant 0 : index
      %125 = vector.load %arg3[%c1_116, %c2_117, %c0_118, %c0_119] : memref<3x3x128x128xbf16, #tpu.memory_space<vmem>>, vector<1x1x128x128xbf16>
      %126 = vector.shape_cast %125 : vector<1x1x128x128xbf16> to vector<128x128xbf16>
      %cst_120 = arith.constant dense<0.000000e+00> : vector<72x128xf32>
      %127 = tpu.matmul %109, %126, %cst_120 {dimension_numbers = #tpu.dot_dimension_numbers<[1], [0], [0], [1], [0, 0, 1, 1], [], []>} : vector<72x128xbf16>, vector<128x128xbf16>, vector<72x128xf32> -> vector<72x128xf32>
      %128 = vector.shape_cast %127 : vector<72x128xf32> to vector<8x9x128xf32>
      %129 = vector.extract_strided_slice %128 {offsets = [0, 1, 0], sizes = [8, 8, 128], strides = [1, 1, 1]} : vector<8x9x128xf32> to vector<8x8x128xf32>
      %130 = arith.addf %124, %129 : vector<8x8x128xf32>
      %c0_121 = arith.constant 0 : index
      %c0_122 = arith.constant 0 : index
      %c1_123 = arith.constant 1 : index
      %c0_124 = arith.constant 0 : index
      %c0_125 = arith.constant 0 : index
      %131 = vector.load %arg2[%c0_121, %c0_122, %c1_123, %c0_124, %c0_125] : memref<1x4x9x9x128xbf16, #tpu.memory_space<vmem>>, vector<1x1x8x9x128xbf16>
      %132 = vector.shape_cast %131 : vector<1x1x8x9x128xbf16> to vector<8x9x128xbf16>
      %133 = vector.shape_cast %132 : vector<8x9x128xbf16> to vector<72x128xbf16>
      %c2_126 = arith.constant 2 : index
      %c0_127 = arith.constant 0 : index
      %c0_128 = arith.constant 0 : index
      %c0_129 = arith.constant 0 : index
      %134 = vector.load %arg3[%c2_126, %c0_127, %c0_128, %c0_129] : memref<3x3x128x128xbf16, #tpu.memory_space<vmem>>, vector<1x1x128x128xbf16>
      %135 = vector.shape_cast %134 : vector<1x1x128x128xbf16> to vector<128x128xbf16>
      %cst_130 = arith.constant dense<0.000000e+00> : vector<72x128xf32>
      %136 = tpu.matmul %133, %135, %cst_130 {dimension_numbers = #tpu.dot_dimension_numbers<[1], [0], [0], [1], [0, 0, 1, 1], [], []>} : vector<72x128xbf16>, vector<128x128xbf16>, vector<72x128xf32> -> vector<72x128xf32>
      %137 = vector.shape_cast %136 : vector<72x128xf32> to vector<8x9x128xf32>
      %138 = vector.extract_strided_slice %137 {offsets = [0, 0, 0], sizes = [8, 8, 128], strides = [1, 1, 1]} : vector<8x9x128xf32> to vector<8x8x128xf32>
      %139 = arith.addf %130, %138 : vector<8x8x128xf32>
      %c0_131 = arith.constant 0 : index
      %c1_132 = arith.constant 1 : index
      %c1_133 = arith.constant 1 : index
      %c0_134 = arith.constant 0 : index
      %c0_135 = arith.constant 0 : index
      %140 = vector.load %arg2[%c0_131, %c1_132, %c1_133, %c0_134, %c0_135] : memref<1x4x9x9x128xbf16, #tpu.memory_space<vmem>>, vector<1x1x8x9x128xbf16>
      %141 = vector.shape_cast %140 : vector<1x1x8x9x128xbf16> to vector<8x9x128xbf16>
      %142 = vector.shape_cast %141 : vector<8x9x128xbf16> to vector<72x128xbf16>
      %c2_136 = arith.constant 2 : index
      %c1_137 = arith.constant 1 : index
      %c0_138 = arith.constant 0 : index
      %c0_139 = arith.constant 0 : index
      %143 = vector.load %arg3[%c2_136, %c1_137, %c0_138, %c0_139] : memref<3x3x128x128xbf16, #tpu.memory_space<vmem>>, vector<1x1x128x128xbf16>
      %144 = vector.shape_cast %143 : vector<1x1x128x128xbf16> to vector<128x128xbf16>
      %cst_140 = arith.constant dense<0.000000e+00> : vector<72x128xf32>
      %145 = tpu.matmul %142, %144, %cst_140 {dimension_numbers = #tpu.dot_dimension_numbers<[1], [0], [0], [1], [0, 0, 1, 1], [], []>} : vector<72x128xbf16>, vector<128x128xbf16>, vector<72x128xf32> -> vector<72x128xf32>
      %146 = vector.shape_cast %145 : vector<72x128xf32> to vector<8x9x128xf32>
      %147 = vector.extract_strided_slice %146 {offsets = [0, 0, 0], sizes = [8, 8, 128], strides = [1, 1, 1]} : vector<8x9x128xf32> to vector<8x8x128xf32>
      %148 = arith.addf %139, %147 : vector<8x8x128xf32>
      %c2_141 = arith.constant 2 : index
      %c2_142 = arith.constant 2 : index
      %c0_143 = arith.constant 0 : index
      %c0_144 = arith.constant 0 : index
      %149 = vector.load %arg3[%c2_141, %c2_142, %c0_143, %c0_144] : memref<3x3x128x128xbf16, #tpu.memory_space<vmem>>, vector<1x1x128x128xbf16>
      %150 = vector.shape_cast %149 : vector<1x1x128x128xbf16> to vector<128x128xbf16>
      %cst_145 = arith.constant dense<0.000000e+00> : vector<72x128xf32>
      %151 = tpu.matmul %133, %150, %cst_145 {dimension_numbers = #tpu.dot_dimension_numbers<[1], [0], [0], [1], [0, 0, 1, 1], [], []>} : vector<72x128xbf16>, vector<128x128xbf16>, vector<72x128xf32> -> vector<72x128xf32>
      %152 = vector.shape_cast %151 : vector<72x128xf32> to vector<8x9x128xf32>
      %153 = vector.extract_strided_slice %152 {offsets = [0, 1, 0], sizes = [8, 8, 128], strides = [1, 1, 1]} : vector<8x9x128xf32> to vector<8x8x128xf32>
      %154 = arith.addf %148, %153 : vector<8x8x128xf32>
      %c0_146 = arith.constant 0 : index
      %c0_147 = arith.constant 0 : index
      %155 = vector.load %arg4[%c0_146, %c0_147] : memref<1x128xf32, #tpu.memory_space<vmem>>, vector<1x128xf32>
      %156 = vector.shape_cast %155 : vector<1x128xf32> to vector<1x1x128xf32>
      %157 = vector.broadcast %156 : vector<1x1x128xf32> to vector<8x8x128xf32>
      %158 = arith.addf %154, %157 : vector<8x8x128xf32>
      %cst_148 = arith.constant 0.000000e+00 : f32
      %159 = vector.broadcast %cst_148 : f32 to vector<8x8x128xf32>
      %160 = arith.maximumf %158, %159 : vector<8x8x128xf32>
      %161 = arith.truncf %160 : vector<8x8x128xf32> to vector<8x8x128xbf16>
      %c1_149 = arith.constant 1 : index
      %c1_150 = arith.constant 1 : index
      %c0_151 = arith.constant 0 : index
      %162 = vector.load %arg10[%c1_149, %c1_150, %c0_151] : memref<10x10x128xbf16, #tpu.memory_space<vmem>>, vector<8x8x128xbf16>
      tpu.vector_store %arg10[%c1_149, %c1_150, %c0_151], %161 {strides = array<i32>} : memref<10x10x128xbf16, #tpu.memory_space<vmem>>, vector<8x8x128xbf16>,
    } else {
    }
    %c0 = arith.constant 0 : index
    %c0_1 = arith.constant 0 : index
    %c0_2 = arith.constant 0 : index
    %3 = vector.load %arg10[%c0, %c0_1, %c0_2] : memref<10x10x128xbf16, #tpu.memory_space<vmem>>, vector<8x10x128xbf16>
    %4 = vector.shape_cast %3 : vector<8x10x128xbf16> to vector<80x128xbf16>
    %c0_3 = arith.constant 0 : index
    %c0_4 = arith.constant 0 : index
    %c0_5 = arith.constant 0 : index
    %c0_6 = arith.constant 0 : index
    %5 = vector.load %arg5[%c0_3, %c0_4, %c0_5, %c0_6] : memref<3x3x128x128xbf16, #tpu.memory_space<vmem>>, vector<1x1x128x128xbf16>
    %6 = vector.shape_cast %5 : vector<1x1x128x128xbf16> to vector<128x128xbf16>
    %cst = arith.constant dense<0.000000e+00> : vector<80x128xf32>
    %7 = tpu.matmul %4, %6, %cst {dimension_numbers = #tpu.dot_dimension_numbers<[1], [0], [0], [1], [0, 0, 1, 1], [], []>} : vector<80x128xbf16>, vector<128x128xbf16>, vector<80x128xf32> -> vector<80x128xf32>
    %8 = vector.shape_cast %7 : vector<80x128xf32> to vector<8x10x128xf32>
    %9 = vector.extract_strided_slice %8 {offsets = [0, 0, 0], sizes = [8, 8, 128], strides = [1, 1, 1]} : vector<8x10x128xf32> to vector<8x8x128xf32>
    %c0_7 = arith.constant 0 : index
    %c1 = arith.constant 1 : index
    %c0_8 = arith.constant 0 : index
    %c0_9 = arith.constant 0 : index
    %10 = vector.load %arg5[%c0_7, %c1, %c0_8, %c0_9] : memref<3x3x128x128xbf16, #tpu.memory_space<vmem>>, vector<1x1x128x128xbf16>
    %11 = vector.shape_cast %10 : vector<1x1x128x128xbf16> to vector<128x128xbf16>
    %cst_10 = arith.constant dense<0.000000e+00> : vector<80x128xf32>
    %12 = tpu.matmul %4, %11, %cst_10 {dimension_numbers = #tpu.dot_dimension_numbers<[1], [0], [0], [1], [0, 0, 1, 1], [], []>} : vector<80x128xbf16>, vector<128x128xbf16>, vector<80x128xf32> -> vector<80x128xf32>
    %13 = vector.shape_cast %12 : vector<80x128xf32> to vector<8x10x128xf32>
    %14 = vector.extract_strided_slice %13 {offsets = [0, 1, 0], sizes = [8, 8, 128], strides = [1, 1, 1]} : vector<8x10x128xf32> to vector<8x8x128xf32>
    %15 = arith.addf %9, %14 : vector<8x8x128xf32>
    %c0_11 = arith.constant 0 : index
    %c2 = arith.constant 2 : index
    %c0_12 = arith.constant 0 : index
    %c0_13 = arith.constant 0 : index
    %16 = vector.load %arg5[%c0_11, %c2, %c0_12, %c0_13] : memref<3x3x128x128xbf16, #tpu.memory_space<vmem>>, vector<1x1x128x128xbf16>
    %17 = vector.shape_cast %16 : vector<1x1x128x128xbf16> to vector<128x128xbf16>
    %cst_14 = arith.constant dense<0.000000e+00> : vector<80x128xf32>
    %18 = tpu.matmul %4, %17, %cst_14 {dimension_numbers = #tpu.dot_dimension_numbers<[1], [0], [0], [1], [0, 0, 1, 1], [], []>} : vector<80x128xbf16>, vector<128x128xbf16>, vector<80x128xf32> -> vector<80x128xf32>
    %19 = vector.shape_cast %18 : vector<80x128xf32> to vector<8x10x128xf32>
    %20 = vector.extract_strided_slice %19 {offsets = [0, 2, 0], sizes = [8, 8, 128], strides = [1, 1, 1]} : vector<8x10x128xf32> to vector<8x8x128xf32>
    %21 = arith.addf %15, %20 : vector<8x8x128xf32>
    %c1_15 = arith.constant 1 : index
    %c0_16 = arith.constant 0 : index
    %c0_17 = arith.constant 0 : index
    %22 = vector.load %arg10[%c1_15, %c0_16, %c0_17] : memref<10x10x128xbf16, #tpu.memory_space<vmem>>, vector<8x10x128xbf16>
    %23 = vector.shape_cast %22 : vector<8x10x128xbf16> to vector<80x128xbf16>
    %c1_18 = arith.constant 1 : index
    %c0_19 = arith.constant 0 : index
    %c0_20 = arith.constant 0 : index
    %c0_21 = arith.constant 0 : index
    %24 = vector.load %arg5[%c1_18, %c0_19, %c0_20, %c0_21] : memref<3x3x128x128xbf16, #tpu.memory_space<vmem>>, vector<1x1x128x128xbf16>
    %25 = vector.shape_cast %24 : vector<1x1x128x128xbf16> to vector<128x128xbf16>
    %cst_22 = arith.constant dense<0.000000e+00> : vector<80x128xf32>
    %26 = tpu.matmul %23, %25, %cst_22 {dimension_numbers = #tpu.dot_dimension_numbers<[1], [0], [0], [1], [0, 0, 1, 1], [], []>} : vector<80x128xbf16>, vector<128x128xbf16>, vector<80x128xf32> -> vector<80x128xf32>
    %27 = vector.shape_cast %26 : vector<80x128xf32> to vector<8x10x128xf32>
    %28 = vector.extract_strided_slice %27 {offsets = [0, 0, 0], sizes = [8, 8, 128], strides = [1, 1, 1]} : vector<8x10x128xf32> to vector<8x8x128xf32>
    %29 = arith.addf %21, %28 : vector<8x8x128xf32>
    %c1_23 = arith.constant 1 : index
    %c1_24 = arith.constant 1 : index
    %c0_25 = arith.constant 0 : index
    %c0_26 = arith.constant 0 : index
    %30 = vector.load %arg5[%c1_23, %c1_24, %c0_25, %c0_26] : memref<3x3x128x128xbf16, #tpu.memory_space<vmem>>, vector<1x1x128x128xbf16>
    %31 = vector.shape_cast %30 : vector<1x1x128x128xbf16> to vector<128x128xbf16>
    %cst_27 = arith.constant dense<0.000000e+00> : vector<80x128xf32>
    %32 = tpu.matmul %23, %31, %cst_27 {dimension_numbers = #tpu.dot_dimension_numbers<[1], [0], [0], [1], [0, 0, 1, 1], [], []>} : vector<80x128xbf16>, vector<128x128xbf16>, vector<80x128xf32> -> vector<80x128xf32>
    %33 = vector.shape_cast %32 : vector<80x128xf32> to vector<8x10x128xf32>
    %34 = vector.extract_strided_slice %33 {offsets = [0, 1, 0], sizes = [8, 8, 128], strides = [1, 1, 1]} : vector<8x10x128xf32> to vector<8x8x128xf32>
    %35 = arith.addf %29, %34 : vector<8x8x128xf32>
    %c1_28 = arith.constant 1 : index
    %c2_29 = arith.constant 2 : index
    %c0_30 = arith.constant 0 : index
    %c0_31 = arith.constant 0 : index
    %36 = vector.load %arg5[%c1_28, %c2_29, %c0_30, %c0_31] : memref<3x3x128x128xbf16, #tpu.memory_space<vmem>>, vector<1x1x128x128xbf16>
    %37 = vector.shape_cast %36 : vector<1x1x128x128xbf16> to vector<128x128xbf16>
    %cst_32 = arith.constant dense<0.000000e+00> : vector<80x128xf32>
    %38 = tpu.matmul %23, %37, %cst_32 {dimension_numbers = #tpu.dot_dimension_numbers<[1], [0], [0], [1], [0, 0, 1, 1], [], []>} : vector<80x128xbf16>, vector<128x128xbf16>, vector<80x128xf32> -> vector<80x128xf32>
    %39 = vector.shape_cast %38 : vector<80x128xf32> to vector<8x10x128xf32>
    %40 = vector.extract_strided_slice %39 {offsets = [0, 2, 0], sizes = [8, 8, 128], strides = [1, 1, 1]} : vector<8x10x128xf32> to vector<8x8x128xf32>
    %41 = arith.addf %35, %40 : vector<8x8x128xf32>
    %c2_33 = arith.constant 2 : index
    %c0_34 = arith.constant 0 : index
    %c0_35 = arith.constant 0 : index
    %42 = vector.load %arg10[%c2_33, %c0_34, %c0_35] : memref<10x10x128xbf16, #tpu.memory_space<vmem>>, vector<8x10x128xbf16>
    %43 = vector.shape_cast %42 : vector<8x10x128xbf16> to vector<80x128xbf16>
    %c2_36 = arith.constant 2 : index
    %c0_37 = arith.constant 0 : index
    %c0_38 = arith.constant 0 : index
    %c0_39 = arith.constant 0 : index
    %44 = vector.load %arg5[%c2_36, %c0_37, %c0_38, %c0_39] : memref<3x3x128x128xbf16, #tpu.memory_space<vmem>>, vector<1x1x128x128xbf16>
    %45 = vector.shape_cast %44 : vector<1x1x128x128xbf16> to vector<128x128xbf16>
    %cst_40 = arith.constant dense<0.000000e+00> : vector<80x128xf32>
    %46 = tpu.matmul %43, %45, %cst_40 {dimension_numbers = #tpu.dot_dimension_numbers<[1], [0], [0], [1], [0, 0, 1, 1], [], []>} : vector<80x128xbf16>, vector<128x128xbf16>, vector<80x128xf32> -> vector<80x128xf32>
    %47 = vector.shape_cast %46 : vector<80x128xf32> to vector<8x10x128xf32>
    %48 = vector.extract_strided_slice %47 {offsets = [0, 0, 0], sizes = [8, 8, 128], strides = [1, 1, 1]} : vector<8x10x128xf32> to vector<8x8x128xf32>
    %49 = arith.addf %41, %48 : vector<8x8x128xf32>
    %c2_41 = arith.constant 2 : index
    %c1_42 = arith.constant 1 : index
    %c0_43 = arith.constant 0 : index
    %c0_44 = arith.constant 0 : index
    %50 = vector.load %arg5[%c2_41, %c1_42, %c0_43, %c0_44] : memref<3x3x128x128xbf16, #tpu.memory_space<vmem>>, vector<1x1x128x128xbf16>
    %51 = vector.shape_cast %50 : vector<1x1x128x128xbf16> to vector<128x128xbf16>
    %cst_45 = arith.constant dense<0.000000e+00> : vector<80x128xf32>
    %52 = tpu.matmul %43, %51, %cst_45 {dimension_numbers = #tpu.dot_dimension_numbers<[1], [0], [0], [1], [0, 0, 1, 1], [], []>} : vector<80x128xbf16>, vector<128x128xbf16>, vector<80x128xf32> -> vector<80x128xf32>
    %53 = vector.shape_cast %52 : vector<80x128xf32> to vector<8x10x128xf32>
    %54 = vector.extract_strided_slice %53 {offsets = [0, 1, 0], sizes = [8, 8, 128], strides = [1, 1, 1]} : vector<8x10x128xf32> to vector<8x8x128xf32>
    %55 = arith.addf %49, %54 : vector<8x8x128xf32>
    %c2_46 = arith.constant 2 : index
    %c2_47 = arith.constant 2 : index
    %c0_48 = arith.constant 0 : index
    %c0_49 = arith.constant 0 : index
    %56 = vector.load %arg5[%c2_46, %c2_47, %c0_48, %c0_49] : memref<3x3x128x128xbf16, #tpu.memory_space<vmem>>, vector<1x1x128x128xbf16>
    %57 = vector.shape_cast %56 : vector<1x1x128x128xbf16> to vector<128x128xbf16>
    %cst_50 = arith.constant dense<0.000000e+00> : vector<80x128xf32>
    %58 = tpu.matmul %43, %57, %cst_50 {dimension_numbers = #tpu.dot_dimension_numbers<[1], [0], [0], [1], [0, 0, 1, 1], [], []>} : vector<80x128xbf16>, vector<128x128xbf16>, vector<80x128xf32> -> vector<80x128xf32>
    %59 = vector.shape_cast %58 : vector<80x128xf32> to vector<8x10x128xf32>
    %60 = vector.extract_strided_slice %59 {offsets = [0, 2, 0], sizes = [8, 8, 128], strides = [1, 1, 1]} : vector<8x10x128xf32> to vector<8x8x128xf32>
    %61 = arith.addf %55, %60 : vector<8x8x128xf32>
    %c0_51 = arith.constant 0 : index
    %c0_52 = arith.constant 0 : index
    %62 = vector.load %arg6[%c0_51, %c0_52] : memref<1x128xf32, #tpu.memory_space<vmem>>, vector<1x128xf32>
    %63 = vector.shape_cast %62 : vector<1x128xf32> to vector<1x1x128xf32>
    %64 = vector.broadcast %63 : vector<1x1x128xf32> to vector<8x8x128xf32>
    %65 = arith.addf %61, %64 : vector<8x8x128xf32>
    %c0_53 = arith.constant 0 : index
    %c3 = arith.constant 3 : index
    %c0_54 = arith.constant 0 : index
    %c0_55 = arith.constant 0 : index
    %c0_56 = arith.constant 0 : index
    %66 = vector.load %arg2[%c0_53, %c3, %c0_54, %c0_55, %c0_56] : memref<1x4x9x9x128xbf16, #tpu.memory_space<vmem>>, vector<1x1x8x8x128xbf16>
    %67 = vector.shape_cast %66 : vector<1x1x8x8x128xbf16> to vector<8x8x128xbf16>
    %68 = vector.shape_cast %67 : vector<8x8x128xbf16> to vector<64x128xbf16>
    %c0_57 = arith.constant 0 : index
    %c0_58 = arith.constant 0 : index
    %69 = vector.load %arg7[%c0_57, %c0_58] : memref<128x128xbf16, #tpu.memory_space<vmem>>, vector<128x128xbf16>
    %cst_59 = arith.constant dense<0.000000e+00> : vector<64x128xf32>
    %70 = tpu.matmul %68, %69, %cst_59 {dimension_numbers = #tpu.dot_dimension_numbers<[1], [0], [0], [1], [0, 0, 1, 1], [], []>} : vector<64x128xbf16>, vector<128x128xbf16>, vector<64x128xf32> -> vector<64x128xf32>
    %71 = vector.shape_cast %70 : vector<64x128xf32> to vector<8x8x128xf32>
    %c0_60 = arith.constant 0 : index
    %c0_61 = arith.constant 0 : index
    %72 = vector.load %arg8[%c0_60, %c0_61] : memref<1x128xf32, #tpu.memory_space<vmem>>, vector<1x128xf32>
    %73 = vector.shape_cast %72 : vector<1x128xf32> to vector<1x1x128xf32>
    %74 = vector.broadcast %73 : vector<1x1x128xf32> to vector<8x8x128xf32>
    %75 = arith.addf %71, %74 : vector<8x8x128xf32>
    %76 = arith.addf %65, %75 : vector<8x8x128xf32>
    %cst_62 = arith.constant 0.000000e+00 : f32
    %77 = vector.broadcast %cst_62 : f32 to vector<8x8x128xf32>
    %78 = arith.maximumf %76, %77 : vector<8x8x128xf32>
    %79 = vector.shape_cast %78 : vector<8x8x128xf32> to vector<1x8x8x128xf32>
    %80 = arith.truncf %79 : vector<1x8x8x128xf32> to vector<1x8x8x128xbf16>
    %c0_63 = arith.constant 0 : index
    %c0_64 = arith.constant 0 : index
    %c0_65 = arith.constant 0 : index
    %c0_66 = arith.constant 0 : index
    %81 = vector.load %arg9[%c0_63, %c0_64, %c0_65, %c0_66] : memref<1x8x8x128xbf16, #tpu.memory_space<vmem>>, vector<1x8x8x128xbf16>
    tpu.vector_store %arg9[%c0_63, %c0_64, %c0_65, %c0_66], %80 {strides = array<i32>} : memref<1x8x8x128xbf16, #tpu.memory_space<vmem>>, vector<1x8x8x128xbf16>,
    return
  }
  func.func @transform_0(%arg0: i32, %arg1: i32) -> (i32, i32, i32, i32, i32) {
    %c0_i32 = arith.constant 0 : i32
    %c0_i32_0 = arith.constant 0 : i32
    %c0_i32_1 = arith.constant 0 : i32
    %c0_i32_2 = arith.constant 0 : i32
    %c0_i32_3 = arith.constant 0 : i32
    return %arg0, %c0_i32, %c0_i32_0, %c0_i32_1, %c0_i32_2 : i32, i32, i32, i32, i32
  }
  func.func @transform_1(%arg0: i32, %arg1: i32) -> (i32, i32, i32, i32) {
    %c0_i32 = arith.constant 0 : i32
    %c0_i32_0 = arith.constant 0 : i32
    %c0_i32_1 = arith.constant 0 : i32
    %c0_i32_2 = arith.constant 0 : i32
    %c0_i32_3 = arith.constant 0 : i32
    return %c0_i32, %c0_i32_0, %c0_i32_1, %c0_i32_2 : i32, i32, i32, i32
  }
  func.func @transform_2(%arg0: i32, %arg1: i32) -> (i32, i32) {
    %c0_i32 = arith.constant 0 : i32
    %c0_i32_0 = arith.constant 0 : i32
    %c0_i32_1 = arith.constant 0 : i32
    return %c0_i32, %c0_i32_0 : i32, i32
  }
  func.func @transform_3(%arg0: i32, %arg1: i32) -> (i32, i32, i32, i32) {
    %c0_i32 = arith.constant 0 : i32
    %c0_i32_0 = arith.constant 0 : i32
    %c0_i32_1 = arith.constant 0 : i32
    %c0_i32_2 = arith.constant 0 : i32
    return %c0_i32, %c0_i32_0, %c0_i32_1, %arg1 : i32, i32, i32, i32
  }
  func.func @transform_4(%arg0: i32, %arg1: i32) -> (i32, i32) {
    %c0_i32 = arith.constant 0 : i32
    %c0_i32_0 = arith.constant 0 : i32
    return %c0_i32, %arg1 : i32, i32
  }
  func.func @transform_5(%arg0: i32, %arg1: i32) -> (i32, i32) {
    %c0_i32 = arith.constant 0 : i32
    %c0_i32_0 = arith.constant 0 : i32
    return %c0_i32, %arg1 : i32, i32
  }
  func.func @transform_6(%arg0: i32, %arg1: i32) -> (i32, i32) {
    %c0_i32 = arith.constant 0 : i32
    %c0_i32_0 = arith.constant 0 : i32
    return %c0_i32, %arg1 : i32, i32
  }
  func.func @transform_7(%arg0: i32, %arg1: i32) -> (i32, i32, i32, i32) {
    %c0_i32 = arith.constant 0 : i32
    %c0_i32_0 = arith.constant 0 : i32
    %c0_i32_1 = arith.constant 0 : i32
    return %arg0, %c0_i32, %c0_i32_0, %arg1 : i32, i32, i32, i32
  }
}

</mosaic_0001>

<llo_original>
// kernel: basic_block_forward.1
$region0: #{basic_block_forward.1}
  #allocation0 [shape = 'u32[]', space=smem, size = 0x4, offset = 0x4, fixed_abs, tag = 'smem constant byte address 0x4 - core index']
  #allocation1 [shape = 'u32[72,128]{1,0:T(1,128)}', space=vmem, size = 0x9000, scoped, tag = 'internal scratch']
  #allocation2 [shape = 'bf16[10,10,128]{2,1,0:T(8,128)(2,1)}', space=vmem, size = 0xa000, scoped, tag = 'scratch operand']
  %s0 = inlined_call_operand.vmem [shape: bf16[2,4,9,9,128], index: 0, kind: input, shape index: {}]
  %s1 = inlined_call_operand.vmem [shape: bf16[3,3,128,128], index: 1, kind: input, shape index: {}]
  %s2 = inlined_call_operand.vmem [shape: f32[1,128], index: 2, kind: input, shape index: {}]
  %s3 = inlined_call_operand.vmem [shape: bf16[3,3,128,128], index: 3, kind: input, shape index: {}]
  %s4 = inlined_call_operand.vmem [shape: f32[1,128], index: 4, kind: input, shape index: {}]
  %s5 = inlined_call_operand.vmem [shape: bf16[128,128], index: 5, kind: input, shape index: {}]
  %s6 = inlined_call_operand.vmem [shape: f32[1,128], index: 6, kind: input, shape index: {}]
  %s7 = inlined_call_operand.vmem [shape: bf16[2,8,8,128], index: 7, kind: output, shape index: {}]
  %s8 = sld [smem:[#allocation0]]
  $region65: #{basic_block_forward.1} parent=0
    _
  %s10 = ssub.s32 1, %s8
  %s11 = scalar_select 0, %s10, %s8
  loop: start=0, step=1, limit=4
  $region2: #{basic_block_forward.1} parent=0 // loop_pre_header
    _
  $region3: #{basic_block_forward.1} parent=0 // loop_header
    %s13 = sphi 0, %s17
    %p14 = scmp.ge.s32.totalorder %s13, 4
    %s20 = sphi 0, %s32
    %s21 = sphi 0, %s28
    %s22 = sphi 0, %s20
    %s23 = sphi 0, %s21
    %s24 = sphi 0, %s22
    %s25 = sphi 0, %s23
    %s35 = sphi 0, %s37
    %s38 = sphi 0, %s35
    %s39 = sphi 0, %s38
    %s55 = sphi 0, %s39
    %s59 = sphi 0, %s59
    %s61 = sphi 0, %s59
    %s62 = sphi 0, %s61
    %s76 = sphi 0, %s62
    %s80 = sphi 0, %s80
    %s82 = sphi 0, %s80
    %s83 = sphi 0, %s82
    %s97 = sphi 0, %s83
    %s103 = sphi 0, %s105
    %s106 = sphi 0, %s103
    %s107 = sphi 0, %s106
    %s123 = sphi 0, %s107
    %s129 = sphi 0, %s131
    %s132 = sphi 0, %s129
    %s133 = sphi 0, %s132
    %s149 = sphi 0, %s133
    %s155 = sphi 0, %s157
    %s158 = sphi 0, %s155
    %s159 = sphi 0, %s158
    %s175 = sphi 0, %s159
    %s181 = sphi 0, %s183
    %s184 = sphi 0, %s181
    %s185 = sphi 0, %s184
    %s201 = sphi 0, %s185
    %s209 = sphi 0, %s211
    %s212 = sphi 0, %s209
    %s213 = sphi 0, %s212
    %s229 = sphi 0, %s213
  $region4: #{basic_block_forward.1} parent=0 // loop_header_branch
    %16 = sbr.rel (%p14) target = $region8
  $region5: #{basic_block_forward.1} parent=0 // loop_body
    %s18 = ssub.s32 %s13, 1
    %s19 = ssub.s32 %s13, 2
    %s26 = sadd.s32 1, %s21
    %p27 = scmp.ge.s32.totalorder %s26, 1
    %s28 = scalar_select %p27, 0, %s26
    %s29 = sadd.s32 1, %s20
    %s30 = scalar_select %p27, %s29, %s20
    %p31 = scmp.ge.s32.totalorder %s30, 2
    %s32 = scalar_select %p31, 0, %s30
    %s33 = ssub.s32 %s20, %s32
    %p34 = scmp.eq.s32.totalorder %s33, 0
    %s36 = sadd.s32 %s35, 1
    %s37 = scalar_select %p34, %s35, %s36
    %p40 = pneg %p34
    %p41 = scmp.eq.s32.totalorder %s13, 1
    %p42 = por %p40, %p41
    %p43 = scmp.ne.s32.totalorder %s35, %s38
    %p44 = scmp.eq.s32.totalorder %s13, 0
    %p45 = por %p43, %p44
    %p46 = scmp.ne.s32.totalorder %s35, %s38
    %p47 = scmp.eq.s32.totalorder %s18, 1
    %p48 = por %p46, %p47
    %p49 = scmp.ne.s32.totalorder %s38, %s39
    %p50 = scmp.eq.s32.totalorder %s18, 0
    %p51 = por %p49, %p50
    %p52 = scmp.ne.s32.totalorder %s38, %s39
    %p53 = scmp.eq.s32.totalorder %s19, 1
    %p54 = por %p52, %p53
    %p56 = scmp.ne.s32.totalorder %s39, %s55
    %p57 = scmp.eq.s32.totalorder %s19, 0
    %p58 = por %p56, %p57
    %s60 = sadd.s32 %s59, 1
    %p63 = scmp.eq.s32.totalorder %s13, 1
    %p64 = scmp.ne.s32.totalorder %s59, %s61
    %p65 = scmp.eq.s32.totalorder %s13, 0
    %p66 = por %p64, %p65
    %p67 = scmp.ne.s32.totalorder %s59, %s61
    %p68 = scmp.eq.s32.totalorder %s18, 1
    %p69 = por %p67, %p68
    %p70 = scmp.ne.s32.totalorder %s61, %s62
    %p71 = scmp.eq.s32.totalorder %s18, 0
    %p72 = por %p70, %p71
    %p73 = scmp.ne.s32.totalorder %s61, %s62
    %p74 = scmp.eq.s32.totalorder %s19, 1
    %p75 = por %p73, %p74
    %p77 = scmp.ne.s32.totalorder %s62, %s76
    %p78 = scmp.eq.s32.totalorder %s19, 0
    %p79 = por %p77, %p78
    %s81 = sadd.s32 %s80, 1
    %p84 = scmp.eq.s32.totalorder %s13, 1
    %p85 = scmp.ne.s32.totalorder %s80, %s82
    %p86 = scmp.eq.s32.totalorder %s13, 0
    %p87 = por %p85, %p86
    %p88 = scmp.ne.s32.totalorder %s80, %s82
    %p89 = scmp.eq.s32.totalorder %s18, 1
    %p90 = por %p88, %p89
    %p91 = scmp.ne.s32.totalorder %s82, %s83
    %p92 = scmp.eq.s32.totalorder %s18, 0
    %p93 = por %p91, %p92
    %p94 = scmp.ne.s32.totalorder %s82, %s83
    %p95 = scmp.eq.s32.totalorder %s19, 1
    %p96 = por %p94, %p95
    %p98 = scmp.ne.s32.totalorder %s83, %s97
    %p99 = scmp.eq.s32.totalorder %s19, 0
    %p100 = por %p98, %p99
    %s101 = ssub.s32 %s21, %s28
    %p102 = scmp.eq.s32.totalorder %s101, 0
    %s104 = sadd.s32 %s103, 1
    %s105 = scalar_select %p102, %s103, %s104
    %p108 = pneg %p102
    %p109 = scmp.eq.s32.totalorder %s13, 1
    %p110 = por %p108, %p109
    %p111 = scmp.ne.s32.totalorder %s103, %s106
    %p112 = scmp.eq.s32.totalorder %s13, 0
    %p113 = por %p111, %p112
    %p114 = scmp.ne.s32.totalorder %s103, %s106
    %p115 = scmp.eq.s32.totalorder %s18, 1
    %p116 = por %p114, %p115
    %p117 = scmp.ne.s32.totalorder %s106, %s107
    %p118 = scmp.eq.s32.totalorder %s18, 0
    %p119 = por %p117, %p118
    %p120 = scmp.ne.s32.totalorder %s106, %s107
    %p121 = scmp.eq.s32.totalorder %s19, 1
    %p122 = por %p120, %p121
    %p124 = scmp.ne.s32.totalorder %s107, %s123
    %p125 = scmp.eq.s32.totalorder %s19, 0
    %p126 = por %p124, %p125
    %s127 = ssub.s32 %s21, %s28
    %p128 = scmp.eq.s32.totalorder %s127, 0
    %s130 = sadd.s32 %s129, 1
    %s131 = scalar_select %p128, %s129, %s130
    %p134 = pneg %p128
    %p135 = scmp.eq.s32.totalorder %s13, 1
    %p136 = por %p134, %p135
    %p137 = scmp.ne.s32.totalorder %s129, %s132
    %p138 = scmp.eq.s32.totalorder %s13, 0
    %p139 = por %p137, %p138
    %p140 = scmp.ne.s32.totalorder %s129, %s132
    %p141 = scmp.eq.s32.totalorder %s18, 1
    %p142 = por %p140, %p141
    %p143 = scmp.ne.s32.totalorder %s132, %s133
    %p144 = scmp.eq.s32.totalorder %s18, 0
    %p145 = por %p143, %p144
    %p146 = scmp.ne.s32.totalorder %s132, %s133
    %p147 = scmp.eq.s32.totalorder %s19, 1
    %p148 = por %p146, %p147
    %p150 = scmp.ne.s32.totalorder %s133, %s149
    %p151 = scmp.eq.s32.totalorder %s19, 0
    %p152 = por %p150, %p151
    %s153 = ssub.s32 %s21, %s28
    %p154 = scmp.eq.s32.totalorder %s153, 0
    %s156 = sadd.s32 %s155, 1
    %s157 = scalar_select %p154, %s155, %s156
    %p160 = pneg %p154
    %p161 = scmp.eq.s32.totalorder %s13, 1
    %p162 = por %p160, %p161
    %p163 = scmp.ne.s32.totalorder %s155, %s158
    %p164 = scmp.eq.s32.totalorder %s13, 0
    %p165 = por %p163, %p164
    %p166 = scmp.ne.s32.totalorder %s155, %s158
    %p167 = scmp.eq.s32.totalorder %s18, 1
    %p168 = por %p166, %p167
    %p169 = scmp.ne.s32.totalorder %s158, %s159
    %p170 = scmp.eq.s32.totalorder %s18, 0
    %p171 = por %p169, %p170
    %p172 = scmp.ne.s32.totalorder %s158, %s159
    %p173 = scmp.eq.s32.totalorder %s19, 1
    %p174 = por %p172, %p173
    %p176 = scmp.ne.s32.totalorder %s159, %s175
    %p177 = scmp.eq.s32.totalorder %s19, 0
    %p178 = por %p176, %p177
    %s179 = ssub.s32 %s21, %s28
    %p180 = scmp.eq.s32.totalorder %s179, 0
    %s182 = sadd.s32 %s181, 1
    %s183 = scalar_select %p180, %s181, %s182
    %p186 = pneg %p180
    %p187 = scmp.eq.s32.totalorder %s13, 1
    %p188 = por %p186, %p187
    %p189 = scmp.ne.s32.totalorder %s181, %s184
    %p190 = scmp.eq.s32.totalorder %s13, 0
    %p191 = por %p189, %p190
    %p192 = scmp.ne.s32.totalorder %s181, %s184
    %p193 = scmp.eq.s32.totalorder %s18, 1
    %p194 = por %p192, %p193
    %p195 = scmp.ne.s32.totalorder %s184, %s185
    %p196 = scmp.eq.s32.totalorder %s18, 0
    %p197 = por %p195, %p196
    %p198 = scmp.ne.s32.totalorder %s184, %s185
    %p199 = scmp.eq.s32.totalorder %s19, 1
    %p200 = por %p198, %p199
    %p202 = scmp.ne.s32.totalorder %s185, %s201
    %p203 = scmp.eq.s32.totalorder %s19, 0
    %p204 = por %p202, %p203
    %s205 = ssub.s32 %s20, %s32
    %s206 = ssub.s32 %s21, %s28
    %s207 = sor.u32 %s205, %s206
    %p208 = scmp.eq.s32.totalorder %s207, 0
    %s210 = sadd.s32 %s209, 1
    %s211 = scalar_select %p208, %s209, %s210
    %p214 = pneg %p208
    %p215 = scmp.eq.s32.totalorder %s13, 1
    %p216 = por %p214, %p215
    %p217 = scmp.ne.s32.totalorder %s209, %s212
    %p218 = scmp.eq.s32.totalorder %s13, 0
    %p219 = por %p217, %p218
    %p220 = scmp.ne.s32.totalorder %s209, %s212
    %p221 = scmp.eq.s32.totalorder %s18, 1
    %p222 = por %p220, %p221
    %p223 = scmp.ne.s32.totalorder %s212, %s213
    %p224 = scmp.eq.s32.totalorder %s18, 0
    %p225 = por %p223, %p224
    %p226 = scmp.ne.s32.totalorder %s212, %s213
    %p227 = scmp.eq.s32.totalorder %s19, 1
    %p228 = por %p226, %p227
    %p230 = scmp.ne.s32.totalorder %s213, %s229
    %p231 = scmp.eq.s32.totalorder %s19, 0
    %p232 = por %p230, %p231
    %p233 = scmp.le.s32.totalorder 1, %s13
    %p234 = scmp.lt.s32.totalorder %s13, 3
    %p235 = pnand %p233, %p234
    %p236 = pneg %p235
    // Predicated region
    $region9: #{basic_block_forward.1} parent=5 // pred_check
      _
    $region10: #{basic_block_forward.1} parent=5 // pred_check_branch
      %238 = sbr.rel (%p235) target = $region12
    $region11: #{basic_block_forward.1} parent=5 // pred_region
      %s239 = ssub.s32 %s13, 1
      // Predicated region
      $region13: #{basic_block_forward.1} parent=11 // pred_check
        %p240 = pneg %p72
      $region14: #{basic_block_forward.1} parent=11 // pred_check_branch
        %242 = sbr.rel (%p240) target = $region16
      $region15: #{basic_block_forward.1} parent=11 // pred_region
        _
      $region16: #{basic_block_forward.1} parent=11 // pred_fallthru
        _
      // Predicated region
      $region17: #{basic_block_forward.1} parent=11 // pred_check
        %p243 = pneg %p93
      $region18: #{basic_block_forward.1} parent=11 // pred_check_branch
        %245 = sbr.rel (%p243) target = $region20
      $region19: #{basic_block_forward.1} parent=11 // pred_region
        _
      $region20: #{basic_block_forward.1} parent=11 // pred_fallthru
        _
      // Predicated region
      $region21: #{basic_block_forward.1} parent=11 // pred_check
        %p246 = pneg %p119
      $region22: #{basic_block_forward.1} parent=11 // pred_check_branch
        %248 = sbr.rel (%p246) target = $region24
      $region23: #{basic_block_forward.1} parent=11 // pred_region
        %p249 = scmp.lt.s32.totalorder %s23, 0
        %s250 = scalar_select %p249, %s23, 0
        %s251 = smul.addr %s250, 4
        %s252 = scalar_lea.vmem %s3, %s251
      $region24: #{basic_block_forward.1} parent=11 // pred_fallthru
        _
      // Predicated region
      $region25: #{basic_block_forward.1} parent=11 // pred_check
        %p253 = pneg %p145
      $region26: #{basic_block_forward.1} parent=11 // pred_check_branch
        %255 = sbr.rel (%p253) target = $region28
      $region27: #{basic_block_forward.1} parent=11 // pred_region
        %p256 = scmp.lt.s32.totalorder %s23, 0
        %s257 = scalar_select %p256, %s23, 0
        %s258 = scalar_lea.vmem %s4, %s257
      $region28: #{basic_block_forward.1} parent=11 // pred_fallthru
        _
      // Predicated region
      $region29: #{basic_block_forward.1} parent=11 // pred_check
        %p259 = pneg %p171
      $region30: #{basic_block_forward.1} parent=11 // pred_check_branch
        %261 = sbr.rel (%p259) target = $region32
      $region31: #{basic_block_forward.1} parent=11 // pred_region
        %p262 = scmp.lt.s32.totalorder %s23, 0
        %s263 = scalar_select %p262, %s23, 0
        %s264 = smul.addr %s263, 4
        %s265 = scalar_lea.vmem %s5, %s264
      $region32: #{basic_block_forward.1} parent=11 // pred_fallthru
        _
      // Predicated region
      $region33: #{basic_block_forward.1} parent=11 // pred_check
        %p266 = pneg %p197
      $region34: #{basic_block_forward.1} parent=11 // pred_check_branch
        %268 = sbr.rel (%p266) target = $region36
      $region35: #{basic_block_forward.1} parent=11 // pred_region
        %p269 = scmp.lt.s32.totalorder %s23, 0
        %s270 = scalar_select %p269, %s23, 0
        %s271 = scalar_lea.vmem %s6, %s270
      $region36: #{basic_block_forward.1} parent=11 // pred_fallthru
        _
    $region12: #{basic_block_forward.1} parent=5 // pred_fallthru
      _
    %p272 = scmp.lt.s32.totalorder %s13, 2
    // Predicated region
    $region37: #{basic_block_forward.1} parent=5 // pred_check
      %p273 = pneg %p272
    $region38: #{basic_block_forward.1} parent=5 // pred_check_branch
      %275 = sbr.rel (%p273) target = $region40
    $region39: #{basic_block_forward.1} parent=5 // pred_region
      // Predicated region
      $region41: #{basic_block_forward.1} parent=39 // pred_check
        %p276 = pneg %p45
      $region42: #{basic_block_forward.1} parent=39 // pred_check_branch
        %278 = sbr.rel (%p276) target = $region44
      $region43: #{basic_block_forward.1} parent=39 // pred_region
        %p279 = scmp.lt.s32.totalorder %s20, 1
        %s280 = scalar_select %p279, %s20, 1
        %s281 = smul.addr %s280, 72
        %s282 = smul.addr %s281, 4
        %s283 = scalar_lea.vmem %s0, %s282
      $region44: #{basic_block_forward.1} parent=39 // pred_fallthru
        _
    $region40: #{basic_block_forward.1} parent=5 // pred_fallthru
      _
    %p284 = scmp.le.s32.totalorder 1, %s13
    %p285 = scmp.lt.s32.totalorder %s13, 3
    %p286 = pnand %p284, %p285
    %p287 = pneg %p286
    // Predicated region
    $region45: #{basic_block_forward.1} parent=5 // pred_check
      _
    $region46: #{basic_block_forward.1} parent=5 // pred_check_branch
      %289 = sbr.rel (%p286) target = $region48
    $region47: #{basic_block_forward.1} parent=5 // pred_region
      %s290 = ssub.s32 %s13, 1
      %p291 = scmp.lt.s32.totalorder %s22, 1
      %s292 = scalar_select %p291, %s22, 1
      %s293 = smul.addr %s292, 72
      %s294 = smul.addr %s293, 4
      %s295 = scalar_lea.vmem %s0, %s294
      %p296 = pneg %p51
      %p297 = pneg %p48
      %p298 = pneg %p72
      %p299 = pneg %p69
      %p300 = pneg %p93
      %p301 = pneg %p90
      %p302 = scmp.lt.s32.totalorder %s23, 0
      %s303 = scalar_select %p302, %s23, 0
      %s304 = smul.addr %s303, 4
      %s305 = scalar_lea.vmem %s3, %s304
      %p306 = pneg %p119
      %p307 = pneg %p116
      %p308 = scmp.lt.s32.totalorder %s23, 0
      %s309 = scalar_select %p308, %s23, 0
      %s310 = scalar_lea.vmem %s4, %s309
      %p311 = pneg %p145
      %p312 = pneg %p142
      %p313 = scmp.lt.s32.totalorder %s23, 0
      %s314 = scalar_select %p313, %s23, 0
      %s315 = smul.addr %s314, 4
      %s316 = scalar_lea.vmem %s5, %s315
      %p317 = pneg %p171
      %p318 = pneg %p168
      %p319 = scmp.lt.s32.totalorder %s23, 0
      %s320 = scalar_select %p319, %s23, 0
      %s321 = scalar_lea.vmem %s6, %s320
      %p322 = pneg %p197
      %p323 = pneg %p194
      %p324 = pneg %p225
      %p325 = pneg %p222
      %p326 = scmp.lt.s32.totalorder %s22, 1
      %s327 = scalar_select %p326, %s22, 1
      %p328 = scmp.lt.s32.totalorder %s23, 0
      %s329 = scalar_select %p328, %s23, 0
      %s330 = smul.addr %s327, 8
      %s331 = sadd.s32 %s329, %s330
      %s332 = smul.addr %s331, 4
      %s333 = scalar_lea.vmem %s7, %s332
      %p334 = scmp.lt.s32.totalorder %s22, 1
      %s335 = scalar_select %p334, %s22, 1
      %s336 = smul.addr %s335, 72
      %s337 = smul.addr %s336, 4
      %s338 = scalar_lea.vmem %s0, %s337
      %p339 = scmp.lt.s32.totalorder %s23, 0
      %s340 = scalar_select %p339, %s23, 0
      %s341 = smul.addr %s340, 4
      %s342 = scalar_lea.vmem %s3, %s341
      %p343 = scmp.lt.s32.totalorder %s23, 0
      %s344 = scalar_select %p343, %s23, 0
      %s345 = scalar_lea.vmem %s4, %s344
      %p346 = scmp.lt.s32.totalorder %s23, 0
      %s347 = scalar_select %p346, %s23, 0
      %s348 = smul.addr %s347, 4
      %s349 = scalar_lea.vmem %s5, %s348
      %p350 = scmp.lt.s32.totalorder %s23, 0
      %s351 = scalar_select %p350, %s23, 0
      %s352 = scalar_lea.vmem %s6, %s351
      %p353 = scmp.lt.s32.totalorder %s22, 1
      %s354 = scalar_select %p353, %s22, 1
      %p355 = scmp.lt.s32.totalorder %s23, 0
      %s356 = scalar_select %p355, %s23, 0
      %s357 = smul.addr %s354, 8
      %s358 = sadd.s32 %s356, %s357
      %s359 = smul.addr %s358, 4
      %s360 = scalar_lea.vmem %s7, %s359
      %p362 = scmp.eq.s32.totalorder %s23, 0
      // Predicated region
      $region49: #{basic_block_forward.1} parent=47 // pred_check
        %p363 = pneg %p362
      $region50: #{basic_block_forward.1} parent=47 // pred_check_branch
        %365 = sbr.rel (%p363) target = $region52
      $region51: #{basic_block_forward.1} parent=47 // pred_region
        %366 = vst [vmem:[#allocation2] sm:$0xf] 0
        %367 = vst [vmem:[#allocation2 + $0x4] sm:$0x1] 0
        %368 = vst [vmem:[#allocation2 + $0x8] sm:$0xf] 0
        %369 = vst [vmem:[#allocation2 + $0xc] sm:$0x1] 0
        %370 = vst [vmem:[#allocation2 + $0x10] sm:$0xf] 0
        %371 = vst [vmem:[#allocation2 + $0x14] sm:$0x1] 0
        %372 = vst [vmem:[#allocation2 + $0x18] sm:$0xf] 0
        %373 = vst [vmem:[#allocation2 + $0x1c] sm:$0x1] 0
        %374 = vst [vmem:[#allocation2 + $0x20] sm:$0xf] 0
        %375 = vst [vmem:[#allocation2 + $0x24] sm:$0x1] 0
        %376 = vst [vmem:[#allocation2 + $0x28] sm:$0xf] 0
        %377 = vst [vmem:[#allocation2 + $0x2c] sm:$0x1] 0
        %378 = vst [vmem:[#allocation2 + $0x30] sm:$0xf] 0
        %379 = vst [vmem:[#allocation2 + $0x34] sm:$0x1] 0
        %380 = vst [vmem:[#allocation2 + $0x38] sm:$0xf] 0
        %381 = vst [vmem:[#allocation2 + $0x3c] sm:$0x1] 0
        %382 = vst [vmem:[#allocation2 + $0x40] sm:$0xf] 0
        %383 = vst [vmem:[#allocation2 + $0x44] sm:$0x1] 0
        %384 = vst [vmem:[#allocation2 + $0x48] sm:$0xf] 0
        %385 = vst [vmem:[#allocation2 + $0x4c] sm:$0x1] 0
        %v386 = vld [vmem:[%s338] sm:$0xf]
        %v387 = vld [vmem:[%s338 + $0x4] sm:$0x1]
        %v388 = vld [vmem:[%s338 + $0x8] sm:$0xf]
        %v389 = vld [vmem:[%s338 + $0xc] sm:$0x1]
        %v390 = vld [vmem:[%s338 + $0x10] sm:$0xf]
        %v391 = vld [vmem:[%s338 + $0x14] sm:$0x1]
        %v392 = vld [vmem:[%s338 + $0x18] sm:$0xf]
        %v393 = vld [vmem:[%s338 + $0x1c] sm:$0x1]
        %v394 = vld [vmem:[%s338 + $0x20] sm:$0xf]
        %v395 = vld [vmem:[%s338 + $0x24] sm:$0x1]
        %v396 = vld [vmem:[%s338 + $0x28] sm:$0xf]
        %v397 = vld [vmem:[%s338 + $0x2c] sm:$0x1]
        %v398 = vld [vmem:[%s338 + $0x30] sm:$0xf]
        %v399 = vld [vmem:[%s338 + $0x34] sm:$0x1]
        %v400 = vld [vmem:[%s338 + $0x38] sm:$0xf]
        %v401 = vld [vmem:[%s338 + $0x3c] sm:$0x1]
        %v418 = vrot.slane %v386, 3
        %v419 = vrot.slane %v387, 3
        %v420 = vrot.slane %v388, 3
        %v421 = vrot.slane %v389, 3
        %v422 = vrot.slane %v390, 3
        %v423 = vrot.slane %v391, 3
        %v424 = vrot.slane %v392, 3
        %v425 = vrot.slane %v393, 3
        %v426 = vrot.slane %v394, 3
        %v427 = vrot.slane %v395, 3
        %v428 = vrot.slane %v396, 3
        %v429 = vrot.slane %v397, 3
        %v430 = vrot.slane %v398, 3
        %v431 = vrot.slane %v399, 3
        %v432 = vrot.slane %v400, 3
        %v433 = vrot.slane %v401, 3
        %vm434 = vcmask 1040384
        %v437 = vsel %vm434, %v386, %v418
        %vm439 = vcmask 1041409
        %v440 = vsel %vm439, %v386, %v418
        %v442 = vrot.slane %v440, 1
        %vm443 = vcmask 1042434
        %v444 = vsel %vm443, %v386, %v418
        %v446 = vrot.slane %v444, 2
        %vm447 = vcmask 1043459
        %v448 = vsel %vm447, %v386, %v418
        %v450 = vrot.slane %v448, 3
        %v453 = vsel %vm434, %v387, %v419
        %v457 = vsel %vm434, %v388, %v420
        %v459 = vsel %vm439, %v388, %v420
        %v461 = vrot.slane %v459, 1
        %v462 = vsel %vm443, %v388, %v420
        %v464 = vrot.slane %v462, 2
        %v465 = vsel %vm447, %v388, %v420
        %v467 = vrot.slane %v465, 3
        %v470 = vsel %vm434, %v389, %v421
        %v474 = vsel %vm434, %v390, %v422
        %v476 = vsel %vm439, %v390, %v422
        %v478 = vrot.slane %v476, 1
        %v479 = vsel %vm443, %v390, %v422
        %v481 = vrot.slane %v479, 2
        %v482 = vsel %vm447, %v390, %v422
        %v484 = vrot.slane %v482, 3
        %v487 = vsel %vm434, %v391, %v423
        %v491 = vsel %vm434, %v392, %v424
        %v493 = vsel %vm439, %v392, %v424
        %v495 = vrot.slane %v493, 1
        %v496 = vsel %vm443, %v392, %v424
        %v498 = vrot.slane %v496, 2
        %v499 = vsel %vm447, %v392, %v424
        %v501 = vrot.slane %v499, 3
        %v504 = vsel %vm434, %v393, %v425
        %v508 = vsel %vm434, %v394, %v426
        %v510 = vsel %vm439, %v394, %v426
        %v512 = vrot.slane %v510, 1
        %v513 = vsel %vm443, %v394, %v426
        %v515 = vrot.slane %v513, 2
        %v516 = vsel %vm447, %v394, %v426
        %v518 = vrot.slane %v516, 3
        %v521 = vsel %vm434, %v395, %v427
        %v525 = vsel %vm434, %v396, %v428
        %v527 = vsel %vm439, %v396, %v428
        %v529 = vrot.slane %v527, 1
        %v530 = vsel %vm443, %v396, %v428
        %v532 = vrot.slane %v530, 2
        %v533 = vsel %vm447, %v396, %v428
        %v535 = vrot.slane %v533, 3
        %v538 = vsel %vm434, %v397, %v429
        %v542 = vsel %vm434, %v398, %v430
        %v544 = vsel %vm439, %v398, %v430
        %v546 = vrot.slane %v544, 1
        %v547 = vsel %vm443, %v398, %v430
        %v549 = vrot.slane %v547, 2
        %v550 = vsel %vm447, %v398, %v430
        %v552 = vrot.slane %v550, 3
        %v555 = vsel %vm434, %v399, %v431
        %v559 = vsel %vm434, %v400, %v432
        %v561 = vsel %vm439, %v400, %v432
        %v563 = vrot.slane %v561, 1
        %v564 = vsel %vm443, %v400, %v432
        %v566 = vrot.slane %v564, 2
        %v567 = vsel %vm447, %v400, %v432
        %v569 = vrot.slane %v567, 3
        %v572 = vsel %vm434, %v401, %v433
        %v574 = vunpack.i.l.s16 %v437
        %v575 = vunpack.i.h.s16 %v437
        %v576 = vunpack.i.l.s16 %v442
        %v577 = vunpack.i.h.s16 %v442
        %v578 = vunpack.i.l.s16 %v446
        %v579 = vunpack.i.h.s16 %v446
        %v580 = vunpack.i.l.s16 %v450
        %v581 = vunpack.i.h.s16 %v450
        %v582 = vunpack.i.l.s16 %v453
        %v583 = vunpack.i.l.s16 %v457
        %v584 = vunpack.i.h.s16 %v457
        %v585 = vunpack.i.l.s16 %v461
        %v586 = vunpack.i.h.s16 %v461
        %v587 = vunpack.i.l.s16 %v464
        %v588 = vunpack.i.h.s16 %v464
        %v589 = vunpack.i.l.s16 %v467
        %v590 = vunpack.i.h.s16 %v467
        %v591 = vunpack.i.l.s16 %v470
        %v592 = vunpack.i.l.s16 %v474
        %v593 = vunpack.i.h.s16 %v474
        %v594 = vunpack.i.l.s16 %v478
        %v595 = vunpack.i.h.s16 %v478
        %v596 = vunpack.i.l.s16 %v481
        %v597 = vunpack.i.h.s16 %v481
        %v598 = vunpack.i.l.s16 %v484
        %v599 = vunpack.i.h.s16 %v484
        %v600 = vunpack.i.l.s16 %v487
        %v601 = vunpack.i.l.s16 %v491
        %v602 = vunpack.i.h.s16 %v491
        %v603 = vunpack.i.l.s16 %v495
        %v604 = vunpack.i.h.s16 %v495
        %v605 = vunpack.i.l.s16 %v498
        %v606 = vunpack.i.h.s16 %v498
        %v607 = vunpack.i.l.s16 %v501
        %v608 = vunpack.i.h.s16 %v501
        %v609 = vunpack.i.l.s16 %v504
        %v610 = vunpack.i.l.s16 %v508
        %v611 = vunpack.i.h.s16 %v508
        %v612 = vunpack.i.l.s16 %v512
        %v613 = vunpack.i.h.s16 %v512
        %v614 = vunpack.i.l.s16 %v515
        %v615 = vunpack.i.h.s16 %v515
        %v616 = vunpack.i.l.s16 %v518
        %v617 = vunpack.i.h.s16 %v518
        %v618 = vunpack.i.l.s16 %v521
        %v619 = vunpack.i.l.s16 %v525
        %v620 = vunpack.i.h.s16 %v525
        %v621 = vunpack.i.l.s16 %v529
        %v622 = vunpack.i.h.s16 %v529
        %v623 = vunpack.i.l.s16 %v532
        %v624 = vunpack.i.h.s16 %v532
        %v625 = vunpack.i.l.s16 %v535
        %v626 = vunpack.i.h.s16 %v535
        %v627 = vunpack.i.l.s16 %v538
        %v628 = vunpack.i.l.s16 %v542
        %v629 = vunpack.i.h.s16 %v542
        %v630 = vunpack.i.l.s16 %v546
        %v631 = vunpack.i.h.s16 %v546
        %v632 = vunpack.i.l.s16 %v549
        %v633 = vunpack.i.h.s16 %v549
        %v634 = vunpack.i.l.s16 %v552
        %v635 = vunpack.i.h.s16 %v552
        %v636 = vunpack.i.l.s16 %v555
        %v637 = vunpack.i.l.s16 %v559
        %v638 = vunpack.i.h.s16 %v559
        %v639 = vunpack.i.l.s16 %v563
        %v640 = vunpack.i.h.s16 %v563
        %v641 = vunpack.i.l.s16 %v566
        %v642 = vunpack.i.h.s16 %v566
        %v643 = vunpack.i.l.s16 %v569
        %v644 = vunpack.i.h.s16 %v569
        %v645 = vunpack.i.l.s16 %v572
        %v646 = vld [vmem:[%s1] sm:$0xf]
        %v647 = vld [vmem:[%s1 + $0x4] sm:$0xf]
        %v648 = vld [vmem:[%s1 + $0x8] sm:$0xf]
        %v649 = vld [vmem:[%s1 + $0xc] sm:$0xf]
        %v650 = vld [vmem:[%s1 + $0x10] sm:$0xf]
        %v651 = vld [vmem:[%s1 + $0x14] sm:$0xf]
        %v652 = vld [vmem:[%s1 + $0x18] sm:$0xf]
        %v653 = vld [vmem:[%s1 + $0x1c] sm:$0xf]
        %v654 = vld [vmem:[%s1 + $0x20] sm:$0xf]
        %v655 = vld [vmem:[%s1 + $0x24] sm:$0xf]
        %v656 = vld [vmem:[%s1 + $0x28] sm:$0xf]
        %v657 = vld [vmem:[%s1 + $0x2c] sm:$0xf]
        %v658 = vld [vmem:[%s1 + $0x30] sm:$0xf]
        %v659 = vld [vmem:[%s1 + $0x34] sm:$0xf]
        %v660 = vld [vmem:[%s1 + $0x38] sm:$0xf]
        %v661 = vld [vmem:[%s1 + $0x3c] sm:$0xf]
        %v662 = vpack.i.b16 %v575, %v574
        %v663 = vpack.i.b16 %v577, %v576
        %v664 = vpack.i.b16 %v579, %v578
        %v665 = vpack.i.b16 %v581, %v580
        %v666 = vpack.i.b16 %v583, %v582
        %v667 = vpack.i.b16 %v585, %v584
        %v668 = vpack.i.b16 %v587, %v586
        %v669 = vpack.i.b16 %v589, %v588
        %v670 = vpack.i.b16 %v591, %v590
        %v671 = vpack.i.b16 %v593, %v592
        %v672 = vpack.i.b16 %v595, %v594
        %v673 = vpack.i.b16 %v597, %v596
        %v674 = vpack.i.b16 %v599, %v598
        %v675 = vpack.i.b16 %v601, %v600
        %v676 = vpack.i.b16 %v603, %v602
        %v677 = vpack.i.b16 %v605, %v604
        %v678 = vpack.i.b16 %v607, %v606
        %v679 = vpack.i.b16 %v609, %v608
        %v680 = vpack.i.b16 %v611, %v610
        %v681 = vpack.i.b16 %v613, %v612
        %v682 = vpack.i.b16 %v615, %v614
        %v683 = vpack.i.b16 %v617, %v616
        %v684 = vpack.i.b16 %v619, %v618
        %v685 = vpack.i.b16 %v621, %v620
        %v686 = vpack.i.b16 %v623, %v622
        %v687 = vpack.i.b16 %v625, %v624
        %v688 = vpack.i.b16 %v627, %v626
        %v689 = vpack.i.b16 %v629, %v628
        %v690 = vpack.i.b16 %v631, %v630
        %v691 = vpack.i.b16 %v633, %v632
        %v692 = vpack.i.b16 %v635, %v634
        %v693 = vpack.i.b16 %v637, %v636
        %v694 = vpack.i.b16 %v639, %v638
        %v695 = vpack.i.b16 %v641, %v640
        %v696 = vpack.i.b16 %v643, %v642
        %v697 = vpack.i.b16 %v645, %v644
        %699 = vst [vmem:[#allocation1] ss:$9 sm:$0xff] %v662
        %s701 = scalar_lea.vmem [#allocation1], 1
        %702 = vst [vmem:[%s701] ss:$9 sm:$0xff] %v663
        %s704 = scalar_lea.vmem [#allocation1], 2
        %705 = vst [vmem:[%s704] ss:$9 sm:$0xff] %v664
        %s707 = scalar_lea.vmem [#allocation1], 3
        %708 = vst [vmem:[%s707] ss:$9 sm:$0xff] %v665
        %s710 = scalar_lea.vmem [#allocation1], 4
        %711 = vst [vmem:[%s710] ss:$9 sm:$0xff] %v666
        %s713 = scalar_lea.vmem [#allocation1], 5
        %714 = vst [vmem:[%s713] ss:$9 sm:$0xff] %v667
        %s716 = scalar_lea.vmem [#allocation1], 6
        %717 = vst [vmem:[%s716] ss:$9 sm:$0xff] %v668
        %s719 = scalar_lea.vmem [#allocation1], 7
        %720 = vst [vmem:[%s719] ss:$9 sm:$0xff] %v669
        %v721 = vld [vmem:[#allocation1] sm:$0xff]
        %723 = vst [vmem:[#allocation1] ss:$9 sm:$0xff] %v670
        %725 = vst [vmem:[%s701] ss:$9 sm:$0xff] %v671
        %727 = vst [vmem:[%s704] ss:$9 sm:$0xff] %v672
        %729 = vst [vmem:[%s707] ss:$9 sm:$0xff] %v673
        %731 = vst [vmem:[%s710] ss:$9 sm:$0xff] %v674
        %733 = vst [vmem:[%s713] ss:$9 sm:$0xff] %v675
        %735 = vst [vmem:[%s716] ss:$9 sm:$0xff] %v676
        %737 = vst [vmem:[%s719] ss:$9 sm:$0xff] %v677
        %v738 = vld [vmem:[#allocation1] sm:$0xff]
        %740 = vst [vmem:[#allocation1] ss:$9 sm:$0xff] %v678
        %742 = vst [vmem:[%s701] ss:$9 sm:$0xff] %v679
        %744 = vst [vmem:[%s704] ss:$9 sm:$0xff] %v680
        %746 = vst [vmem:[%s707] ss:$9 sm:$0xff] %v681
        %748 = vst [vmem:[%s710] ss:$9 sm:$0xff] %v682
        %750 = vst [vmem:[%s713] ss:$9 sm:$0xff] %v683
        %752 = vst [vmem:[%s716] ss:$9 sm:$0xff] %v684
        %754 = vst [vmem:[%s719] ss:$9 sm:$0xff] %v685
        %v755 = vld [vmem:[#allocation1] sm:$0xff]
        %757 = vst [vmem:[#allocation1] ss:$9 sm:$0xff] %v686
        %759 = vst [vmem:[%s701] ss:$9 sm:$0xff] %v687
        %761 = vst [vmem:[%s704] ss:$9 sm:$0xff] %v688
        %763 = vst [vmem:[%s707] ss:$9 sm:$0xff] %v689
        %765 = vst [vmem:[%s710] ss:$9 sm:$0xff] %v690
        %767 = vst [vmem:[%s713] ss:$9 sm:$0xff] %v691
        %769 = vst [vmem:[%s716] ss:$9 sm:$0xff] %v692
        %771 = vst [vmem:[%s719] ss:$9 sm:$0xff] %v693
        %v772 = vld [vmem:[#allocation1] sm:$0xff]
        %774 = vst [vmem:[#allocation1] ss:$9 sm:$0xff] %v694
        %776 = vst [vmem:[%s701] ss:$9 sm:$0xff] %v695
        %778 = vst [vmem:[%s704] ss:$9 sm:$0xff] %v696
        %780 = vst [vmem:[%s707] ss:$9 sm:$0xff] %v697
        %v781 = vld [vmem:[#allocation1] sm:$0xff]
        %v803 = vunpack.c.l.b16 %v646
        %v804 = vunpack.c.l.b16 %v647
        %v805 = vunpack.c.l.b16 %v648
        %v806 = vunpack.c.l.b16 %v649
        %v807 = vunpack.c.l.b16 %v650
        %v808 = vunpack.c.l.b16 %v651
        %v809 = vunpack.c.l.b16 %v652
        %v810 = vunpack.c.l.b16 %v653
        %v811 = vunpack.c.l.b16 %v654
        %v812 = vunpack.c.l.b16 %v655
        %v813 = vunpack.c.l.b16 %v656
        %v814 = vunpack.c.l.b16 %v657
        %v815 = vunpack.c.l.b16 %v658
        %v816 = vunpack.c.l.b16 %v659
        %v817 = vunpack.c.l.b16 %v660
        %v818 = vunpack.c.l.b16 %v661
        %v819 = vpack.c.b16 %v804, %v803
        %v820 = vpack.c.b16 %v806, %v805
        %v821 = vpack.c.b16 %v808, %v807
        %v822 = vpack.c.b16 %v810, %v809
        %v823 = vpack.c.b16 %v812, %v811
        %v824 = vpack.c.b16 %v814, %v813
        %v825 = vpack.c.b16 %v816, %v815
        %v826 = vpack.c.b16 %v818, %v817
        %835 = vmatpush.bf16.msra.mxu0 %v826
        %836 = vmatpush.bf16.msra.mxu0 %v825
        %837 = vmatpush.bf16.msra.mxu0 %v824
        %838 = vmatpush.bf16.msra.mxu0 %v823
        %839 = vmatpush.bf16.msra.mxu0 %v822
        %840 = vmatpush.bf16.msra.mxu0 %v821
        %841 = vmatpush.bf16.msra.mxu0 %v820
        %842 = vmatpush.bf16.msra.mxu0 %v819
        %843 = vmatmul.bf16.gmra.mxu0 %v721
        %v844 = vpop.f32.mrf.mxu0
        %v845 = vadd.f32 0.0, %v844
        %v846 = vpop.f32.mrf.mxu0
        %v847 = vadd.f32 0.0, %v846
        %848 = vmatmul.bf16.gmra.mxu0 %v738
        %v849 = vpop.f32.mrf.mxu0
        %v850 = vadd.f32 0.0, %v849
        %v851 = vpop.f32.mrf.mxu0
        %v852 = vadd.f32 0.0, %v851
        %853 = vmatmul.bf16.gmra.mxu0 %v755
        %v854 = vpop.f32.mrf.mxu0
        %v855 = vadd.f32 0.0, %v854
        %v856 = vpop.f32.mrf.mxu0
        %v857 = vadd.f32 0.0, %v856
        %858 = vmatmul.bf16.gmra.mxu0 %v772
        %v859 = vpop.f32.mrf.mxu0
        %v860 = vadd.f32 0.0, %v859
        %v861 = vpop.f32.mrf.mxu0
        %v862 = vadd.f32 0.0, %v861
        %863 = vmatmul.bf16.gmra.mxu0 %v781
        %v864 = vpop.f32.mrf.mxu0
        %v865 = vadd.f32 0.0, %v864
        %v866 = vpop.f32.mrf.mxu0
        %867 = vdwg.mxu0
        %v877 = vrot.slane %v845, 1
        %v878 = vrot.slane %v845, 2
        %v879 = vrot.slane %v845, 3
        %v880 = vrot.slane %v845, 4
        %v881 = vrot.slane %v845, 5
        %v882 = vrot.slane %v845, 6
        %v883 = vrot.slane %v845, 7
        %v884 = vrot.slane %v847, 1
        %v885 = vrot.slane %v847, 2
        %v886 = vrot.slane %v847, 3
        %v887 = vrot.slane %v847, 4
        %v888 = vrot.slane %v847, 5
        %v889 = vrot.slane %v847, 6
        %v890 = vrot.slane %v847, 7
        %v891 = vrot.slane %v850, 2
        %v892 = vrot.slane %v850, 3
        %v893 = vrot.slane %v850, 4
        %v894 = vrot.slane %v850, 5
        %v895 = vrot.slane %v850, 6
        %v896 = vrot.slane %v850, 7
        %v897 = vrot.slane %v852, 1
        %v898 = vrot.slane %v852, 3
        %v899 = vrot.slane %v852, 4
        %v900 = vrot.slane %v852, 5
        %v901 = vrot.slane %v852, 6
        %v902 = vrot.slane %v852, 7
        %v903 = vrot.slane %v855, 1
        %v904 = vrot.slane %v855, 2
        %v905 = vrot.slane %v855, 4
        %v906 = vrot.slane %v855, 5
        %v907 = vrot.slane %v855, 6
        %v908 = vrot.slane %v855, 7
        %v909 = vrot.slane %v857, 1
        %v910 = vrot.slane %v857, 2
        %v911 = vrot.slane %v857, 3
        %v912 = vrot.slane %v857, 5
        %v913 = vrot.slane %v857, 6
        %v914 = vrot.slane %v857, 7
        %v915 = vrot.slane %v860, 1
        %v916 = vrot.slane %v860, 2
        %v917 = vrot.slane %v860, 3
        %v918 = vrot.slane %v860, 4
        %v919 = vrot.slane %v860, 6
        %v920 = vrot.slane %v860, 7
        %v921 = vrot.slane %v862, 1
        %v922 = vrot.slane %v862, 2
        %v923 = vrot.slane %v862, 3
        %v924 = vrot.slane %v862, 4
        %v925 = vrot.slane %v862, 5
        %v926 = vrot.slane %v862, 7
        %v927 = vrot.slane %v865, 1
        %v928 = vrot.slane %v865, 2
        %v929 = vrot.slane %v865, 3
        %v930 = vrot.slane %v865, 4
        %v931 = vrot.slane %v865, 5
        %v932 = vrot.slane %v865, 6
        %s989 = scalar_lea.vmem %s338, 72
        %v990 = vld [vmem:[%s989] sm:$0xf]
        %v991 = vld [vmem:[%s989 + $0x4] sm:$0x1]
        %v992 = vld [vmem:[%s989 + $0x8] sm:$0xf]
        %v993 = vld [vmem:[%s989 + $0xc] sm:$0x1]
        %v994 = vld [vmem:[%s989 + $0x10] sm:$0xf]
        %v995 = vld [vmem:[%s989 + $0x14] sm:$0x1]
        %v996 = vld [vmem:[%s989 + $0x18] sm:$0xf]
        %v997 = vld [vmem:[%s989 + $0x1c] sm:$0x1]
        %v998 = vld [vmem:[%s989 + $0x20] sm:$0xf]
        %v999 = vld [vmem:[%s989 + $0x24] sm:$0x1]
        %v1000 = vld [vmem:[%s989 + $0x28] sm:$0xf]
        %v1001 = vld [vmem:[%s989 + $0x2c] sm:$0x1]
        %v1002 = vld [vmem:[%s989 + $0x30] sm:$0xf]
        %v1003 = vld [vmem:[%s989 + $0x34] sm:$0x1]
        %v1004 = vld [vmem:[%s989 + $0x38] sm:$0xf]
        %v1005 = vld [vmem:[%s989 + $0x3c] sm:$0x1]
        %v1022 = vrot.slane %v990, 3
        %v1023 = vrot.slane %v991, 3
        %v1024 = vrot.slane %v992, 3
        %v1025 = vrot.slane %v993, 3
        %v1026 = vrot.slane %v994, 3
        %v1027 = vrot.slane %v995, 3
        %v1028 = vrot.slane %v996, 3
        %v1029 = vrot.slane %v997, 3
        %v1030 = vrot.slane %v998, 3
        %v1031 = vrot.slane %v999, 3
        %v1032 = vrot.slane %v1000, 3
        %v1033 = vrot.slane %v1001, 3
        %v1034 = vrot.slane %v1002, 3
        %v1035 = vrot.slane %v1003, 3
        %v1036 = vrot.slane %v1004, 3
        %v1037 = vrot.slane %v1005, 3
        %v1040 = vsel %vm434, %v990, %v1022
        %v1042 = vsel %vm439, %v990, %v1022
        %v1044 = vrot.slane %v1042, 1
        %v1045 = vsel %vm443, %v990, %v1022
        %v1047 = vrot.slane %v1045, 2
        %v1048 = vsel %vm447, %v990, %v1022
        %v1050 = vrot.slane %v1048, 3
        %v1053 = vsel %vm434, %v991, %v1023
        %v1057 = vsel %vm434, %v992, %v1024
        %v1059 = vsel %vm439, %v992, %v1024
        %v1061 = vrot.slane %v1059, 1
        %v1062 = vsel %vm443, %v992, %v1024
        %v1064 = vrot.slane %v1062, 2
        %v1065 = vsel %vm447, %v992, %v1024
        %v1067 = vrot.slane %v1065, 3
        %v1070 = vsel %vm434, %v993, %v1025
        %v1074 = vsel %vm434, %v994, %v1026
        %v1076 = vsel %vm439, %v994, %v1026
        %v1078 = vrot.slane %v1076, 1
        %v1079 = vsel %vm443, %v994, %v1026
        %v1081 = vrot.slane %v1079, 2
        %v1082 = vsel %vm447, %v994, %v1026
        %v1084 = vrot.slane %v1082, 3
        %v1087 = vsel %vm434, %v995, %v1027
        %v1091 = vsel %vm434, %v996, %v1028
        %v1093 = vsel %vm439, %v996, %v1028
        %v1095 = vrot.slane %v1093, 1
        %v1096 = vsel %vm443, %v996, %v1028
        %v1098 = vrot.slane %v1096, 2
        %v1099 = vsel %vm447, %v996, %v1028
        %v1101 = vrot.slane %v1099, 3
        %v1104 = vsel %vm434, %v997, %v1029
        %v1108 = vsel %vm434, %v998, %v1030
        %v1110 = vsel %vm439, %v998, %v1030
        %v1112 = vrot.slane %v1110, 1
        %v1113 = vsel %vm443, %v998, %v1030
        %v1115 = vrot.slane %v1113, 2
        %v1116 = vsel %vm447, %v998, %v1030
        %v1118 = vrot.slane %v1116, 3
        %v1121 = vsel %vm434, %v999, %v1031
        %v1125 = vsel %vm434, %v1000, %v1032
        %v1127 = vsel %vm439, %v1000, %v1032
        %v1129 = vrot.slane %v1127, 1
        %v1130 = vsel %vm443, %v1000, %v1032
        %v1132 = vrot.slane %v1130, 2
        %v1133 = vsel %vm447, %v1000, %v1032
        %v1135 = vrot.slane %v1133, 3
        %v1138 = vsel %vm434, %v1001, %v1033
        %v1142 = vsel %vm434, %v1002, %v1034
        %v1144 = vsel %vm439, %v1002, %v1034
        %v1146 = vrot.slane %v1144, 1
        %v1147 = vsel %vm443, %v1002, %v1034
        %v1149 = vrot.slane %v1147, 2
        %v1150 = vsel %vm447, %v1002, %v1034
        %v1152 = vrot.slane %v1150, 3
        %v1155 = vsel %vm434, %v1003, %v1035
        %v1159 = vsel %vm434, %v1004, %v1036
        %v1161 = vsel %vm439, %v1004, %v1036
        %v1163 = vrot.slane %v1161, 1
        %v1164 = vsel %vm443, %v1004, %v1036
        %v1166 = vrot.slane %v1164, 2
        %v1167 = vsel %vm447, %v1004, %v1036
        %v1169 = vrot.slane %v1167, 3
        %v1172 = vsel %vm434, %v1005, %v1037
        %v1174 = vunpack.i.l.s16 %v1040
        %v1175 = vunpack.i.h.s16 %v1040
        %v1176 = vunpack.i.l.s16 %v1044
        %v1177 = vunpack.i.h.s16 %v1044
        %v1178 = vunpack.i.l.s16 %v1047
        %v1179 = vunpack.i.h.s16 %v1047
        %v1180 = vunpack.i.l.s16 %v1050
        %v1181 = vunpack.i.h.s16 %v1050
        %v1182 = vunpack.i.l.s16 %v1053
        %v1183 = vunpack.i.l.s16 %v1057
        %v1184 = vunpack.i.h.s16 %v1057
        %v1185 = vunpack.i.l.s16 %v1061
        %v1186 = vunpack.i.h.s16 %v1061
        %v1187 = vunpack.i.l.s16 %v1064
        %v1188 = vunpack.i.h.s16 %v1064
        %v1189 = vunpack.i.l.s16 %v1067
        %v1190 = vunpack.i.h.s16 %v1067
        %v1191 = vunpack.i.l.s16 %v1070
        %v1192 = vunpack.i.l.s16 %v1074
        %v1193 = vunpack.i.h.s16 %v1074
        %v1194 = vunpack.i.l.s16 %v1078
        %v1195 = vunpack.i.h.s16 %v1078
        %v1196 = vunpack.i.l.s16 %v1081
        %v1197 = vunpack.i.h.s16 %v1081
        %v1198 = vunpack.i.l.s16 %v1084
        %v1199 = vunpack.i.h.s16 %v1084
        %v1200 = vunpack.i.l.s16 %v1087
        %v1201 = vunpack.i.l.s16 %v1091
        %v1202 = vunpack.i.h.s16 %v1091
        %v1203 = vunpack.i.l.s16 %v1095
        %v1204 = vunpack.i.h.s16 %v1095
        %v1205 = vunpack.i.l.s16 %v1098
        %v1206 = vunpack.i.h.s16 %v1098
        %v1207 = vunpack.i.l.s16 %v1101
        %v1208 = vunpack.i.h.s16 %v1101
        %v1209 = vunpack.i.l.s16 %v1104
        %v1210 = vunpack.i.l.s16 %v1108
        %v1211 = vunpack.i.h.s16 %v1108
        %v1212 = vunpack.i.l.s16 %v1112
        %v1213 = vunpack.i.h.s16 %v1112
        %v1214 = vunpack.i.l.s16 %v1115
        %v1215 = vunpack.i.h.s16 %v1115
        %v1216 = vunpack.i.l.s16 %v1118
        %v1217 = vunpack.i.h.s16 %v1118
        %v1218 = vunpack.i.l.s16 %v1121
        %v1219 = vunpack.i.l.s16 %v1125
        %v1220 = vunpack.i.h.s16 %v1125
        %v1221 = vunpack.i.l.s16 %v1129
        %v1222 = vunpack.i.h.s16 %v1129
        %v1223 = vunpack.i.l.s16 %v1132
        %v1224 = vunpack.i.h.s16 %v1132
        %v1225 = vunpack.i.l.s16 %v1135
        %v1226 = vunpack.i.h.s16 %v1135
        %v1227 = vunpack.i.l.s16 %v1138
        %v1228 = vunpack.i.l.s16 %v1142
        %v1229 = vunpack.i.h.s16 %v1142
        %v1230 = vunpack.i.l.s16 %v1146
        %v1231 = vunpack.i.h.s16 %v1146
        %v1232 = vunpack.i.l.s16 %v1149
        %v1233 = vunpack.i.h.s16 %v1149
        %v1234 = vunpack.i.l.s16 %v1152
        %v1235 = vunpack.i.h.s16 %v1152
        %v1236 = vunpack.i.l.s16 %v1155
        %v1237 = vunpack.i.l.s16 %v1159
        %v1238 = vunpack.i.h.s16 %v1159
        %v1239 = vunpack.i.l.s16 %v1163
        %v1240 = vunpack.i.h.s16 %v1163
        %v1241 = vunpack.i.l.s16 %v1166
        %v1242 = vunpack.i.h.s16 %v1166
        %v1243 = vunpack.i.l.s16 %v1169
        %v1244 = vunpack.i.h.s16 %v1169
        %v1245 = vunpack.i.l.s16 %v1172
        %s1246 = scalar_lea.vmem %s1, 64
        %v1247 = vld [vmem:[%s1246] sm:$0xf]
        %v1248 = vld [vmem:[%s1246 + $0x4] sm:$0xf]
        %v1249 = vld [vmem:[%s1246 + $0x8] sm:$0xf]
        %v1250 = vld [vmem:[%s1246 + $0xc] sm:$0xf]
        %v1251 = vld [vmem:[%s1246 + $0x10] sm:$0xf]
        %v1252 = vld [vmem:[%s1246 + $0x14] sm:$0xf]
        %v1253 = vld [vmem:[%s1246 + $0x18] sm:$0xf]
        %v1254 = vld [vmem:[%s1246 + $0x1c] sm:$0xf]
        %v1255 = vld [vmem:[%s1246 + $0x20] sm:$0xf]
        %v1256 = vld [vmem:[%s1246 + $0x24] sm:$0xf]
        %v1257 = vld [vmem:[%s1246 + $0x28] sm:$0xf]
        %v1258 = vld [vmem:[%s1246 + $0x2c] sm:$0xf]
        %v1259 = vld [vmem:[%s1246 + $0x30] sm:$0xf]
        %v1260 = vld [vmem:[%s1246 + $0x34] sm:$0xf]
        %v1261 = vld [vmem:[%s1246 + $0x38] sm:$0xf]
        %v1262 = vld [vmem:[%s1246 + $0x3c] sm:$0xf]
        %v1263 = vpack.i.b16 %v1175, %v1174
        %v1264 = vpack.i.b16 %v1177, %v1176
        %v1265 = vpack.i.b16 %v1179, %v1178
        %v1266 = vpack.i.b16 %v1181, %v1180
        %v1267 = vpack.i.b16 %v1183, %v1182
        %v1268 = vpack.i.b16 %v1185, %v1184
        %v1269 = vpack.i.b16 %v1187, %v1186
        %v1270 = vpack.i.b16 %v1189, %v1188
        %v1271 = vpack.i.b16 %v1191, %v1190
        %v1272 = vpack.i.b16 %v1193, %v1192
        %v1273 = vpack.i.b16 %v1195, %v1194
        %v1274 = vpack.i.b16 %v1197, %v1196
        %v1275 = vpack.i.b16 %v1199, %v1198
        %v1276 = vpack.i.b16 %v1201, %v1200
        %v1277 = vpack.i.b16 %v1203, %v1202
        %v1278 = vpack.i.b16 %v1205, %v1204
        %v1279 = vpack.i.b16 %v1207, %v1206
        %v1280 = vpack.i.b16 %v1209, %v1208
        %v1281 = vpack.i.b16 %v1211, %v1210
        %v1282 = vpack.i.b16 %v1213, %v1212
        %v1283 = vpack.i.b16 %v1215, %v1214
        %v1284 = vpack.i.b16 %v1217, %v1216
        %v1285 = vpack.i.b16 %v1219, %v1218
        %v1286 = vpack.i.b16 %v1221, %v1220
        %v1287 = vpack.i.b16 %v1223, %v1222
        %v1288 = vpack.i.b16 %v1225, %v1224
        %v1289 = vpack.i.b16 %v1227, %v1226
        %v1290 = vpack.i.b16 %v1229, %v1228
        %v1291 = vpack.i.b16 %v1231, %v1230
        %v1292 = vpack.i.b16 %v1233, %v1232
        %v1293 = vpack.i.b16 %v1235, %v1234
        %v1294 = vpack.i.b16 %v1237, %v1236
        %v1295 = vpack.i.b16 %v1239, %v1238
        %v1296 = vpack.i.b16 %v1241, %v1240
        %v1297 = vpack.i.b16 %v1243, %v1242
        %v1298 = vpack.i.b16 %v1245, %v1244
        %1300 = vst [vmem:[#allocation1] ss:$9 sm:$0xff] %v1263
        %s1302 = scalar_lea.vmem [#allocation1], 1
        %1303 = vst [vmem:[%s1302] ss:$9 sm:$0xff] %v1264
        %s1305 = scalar_lea.vmem [#allocation1], 2
        %1306 = vst [vmem:[%s1305] ss:$9 sm:$0xff] %v1265
        %s1308 = scalar_lea.vmem [#allocation1], 3
        %1309 = vst [vmem:[%s1308] ss:$9 sm:$0xff] %v1266
        %s1311 = scalar_lea.vmem [#allocation1], 4
        %1312 = vst [vmem:[%s1311] ss:$9 sm:$0xff] %v1267
        %s1314 = scalar_lea.vmem [#allocation1], 5
        %1315 = vst [vmem:[%s1314] ss:$9 sm:$0xff] %v1268
        %s1317 = scalar_lea.vmem [#allocation1], 6
        %1318 = vst [vmem:[%s1317] ss:$9 sm:$0xff] %v1269
        %s1320 = scalar_lea.vmem [#allocation1], 7
        %1321 = vst [vmem:[%s1320] ss:$9 sm:$0xff] %v1270
        %v1322 = vld [vmem:[#allocation1] sm:$0xff]
        %1324 = vst [vmem:[#allocation1] ss:$9 sm:$0xff] %v1271
        %1326 = vst [vmem:[%s1302] ss:$9 sm:$0xff] %v1272
        %1328 = vst [vmem:[%s1305] ss:$9 sm:$0xff] %v1273
        %1330 = vst [vmem:[%s1308] ss:$9 sm:$0xff] %v1274
        %1332 = vst [vmem:[%s1311] ss:$9 sm:$0xff] %v1275
        %1334 = vst [vmem:[%s1314] ss:$9 sm:$0xff] %v1276
        %1336 = vst [vmem:[%s1317] ss:$9 sm:$0xff] %v1277
        %1338 = vst [vmem:[%s1320] ss:$9 sm:$0xff] %v1278
        %v1339 = vld [vmem:[#allocation1] sm:$0xff]
        %1341 = vst [vmem:[#allocation1] ss:$9 sm:$0xff] %v1279
        %1343 = vst [vmem:[%s1302] ss:$9 sm:$0xff] %v1280
        %1345 = vst [vmem:[%s1305] ss:$9 sm:$0xff] %v1281
        %1347 = vst [vmem:[%s1308] ss:$9 sm:$0xff] %v1282
        %1349 = vst [vmem:[%s1311] ss:$9 sm:$0xff] %v1283
        %1351 = vst [vmem:[%s1314] ss:$9 sm:$0xff] %v1284
        %1353 = vst [vmem:[%s1317] ss:$9 sm:$0xff] %v1285
        %1355 = vst [vmem:[%s1320] ss:$9 sm:$0xff] %v1286
        %v1356 = vld [vmem:[#allocation1] sm:$0xff]
        %1358 = vst [vmem:[#allocation1] ss:$9 sm:$0xff] %v1287
        %1360 = vst [vmem:[%s1302] ss:$9 sm:$0xff] %v1288
        %1362 = vst [vmem:[%s1305] ss:$9 sm:$0xff] %v1289
        %1364 = vst [vmem:[%s1308] ss:$9 sm:$0xff] %v1290
        %1366 = vst [vmem:[%s1311] ss:$9 sm:$0xff] %v1291
        %1368 = vst [vmem:[%s1314] ss:$9 sm:$0xff] %v1292
        %1370 = vst [vmem:[%s1317] ss:$9 sm:$0xff] %v1293
        %1372 = vst [vmem:[%s1320] ss:$9 sm:$0xff] %v1294
        %v1373 = vld [vmem:[#allocation1] sm:$0xff]
        %1375 = vst [vmem:[#allocation1] ss:$9 sm:$0xff] %v1295
        %1377 = vst [vmem:[%s1302] ss:$9 sm:$0xff] %v1296
        %1379 = vst [vmem:[%s1305] ss:$9 sm:$0xff] %v1297
        %1381 = vst [vmem:[%s1308] ss:$9 sm:$0xff] %v1298
        %v1382 = vld [vmem:[#allocation1] sm:$0xff]
        %v1404 = vunpack.c.l.b16 %v1247
        %v1405 = vunpack.c.l.b16 %v1248
        %v1406 = vunpack.c.l.b16 %v1249
        %v1407 = vunpack.c.l.b16 %v1250
        %v1408 = vunpack.c.l.b16 %v1251
        %v1409 = vunpack.c.l.b16 %v1252
        %v1410 = vunpack.c.l.b16 %v1253
        %v1411 = vunpack.c.l.b16 %v1254
        %v1412 = vunpack.c.l.b16 %v1255
        %v1413 = vunpack.c.l.b16 %v1256
        %v1414 = vunpack.c.l.b16 %v1257
        %v1415 = vunpack.c.l.b16 %v1258
        %v1416 = vunpack.c.l.b16 %v1259
        %v1417 = vunpack.c.l.b16 %v1260
        %v1418 = vunpack.c.l.b16 %v1261
        %v1419 = vunpack.c.l.b16 %v1262
        %v1420 = vpack.c.b16 %v1405, %v1404
        %v1421 = vpack.c.b16 %v1407, %v1406
        %v1422 = vpack.c.b16 %v1409, %v1408
        %v1423 = vpack.c.b16 %v1411, %v1410
        %v1424 = vpack.c.b16 %v1413, %v1412
        %v1425 = vpack.c.b16 %v1415, %v1414
        %v1426 = vpack.c.b16 %v1417, %v1416
        %v1427 = vpack.c.b16 %v1419, %v1418
        %1436 = vmatpush.bf16.msra.mxu0 %v1427
        %1437 = vmatpush.bf16.msra.mxu0 %v1426
        %1438 = vmatpush.bf16.msra.mxu0 %v1425
        %1439 = vmatpush.bf16.msra.mxu0 %v1424
        %1440 = vmatpush.bf16.msra.mxu0 %v1423
        %1441 = vmatpush.bf16.msra.mxu0 %v1422
        %1442 = vmatpush.bf16.msra.mxu0 %v1421
        %1443 = vmatpush.bf16.msra.mxu0 %v1420
        %1444 = vmatmul.bf16.gmra.mxu0 %v1322
        %v1445 = vpop.f32.mrf.mxu0
        %v1446 = vadd.f32 0.0, %v1445
        %v1447 = vpop.f32.mrf.mxu0
        %v1448 = vadd.f32 0.0, %v1447
        %1449 = vmatmul.bf16.gmra.mxu0 %v1339
        %v1450 = vpop.f32.mrf.mxu0
        %v1451 = vadd.f32 0.0, %v1450
        %v1452 = vpop.f32.mrf.mxu0
        %v1453 = vadd.f32 0.0, %v1452
        %1454 = vmatmul.bf16.gmra.mxu0 %v1356
        %v1455 = vpop.f32.mrf.mxu0
        %v1456 = vadd.f32 0.0, %v1455
        %v1457 = vpop.f32.mrf.mxu0
        %v1458 = vadd.f32 0.0, %v1457
        %1459 = vmatmul.bf16.gmra.mxu0 %v1373
        %v1460 = vpop.f32.mrf.mxu0
        %v1461 = vadd.f32 0.0, %v1460
        %v1462 = vpop.f32.mrf.mxu0
        %v1463 = vadd.f32 0.0, %v1462
        %1464 = vmatmul.bf16.gmra.mxu0 %v1382
        %v1465 = vpop.f32.mrf.mxu0
        %v1466 = vadd.f32 0.0, %v1465
        %v1467 = vpop.f32.mrf.mxu0
        %1468 = vdwg.mxu0
        %v1478 = vrot.slane %v1446, 1
        %v1479 = vrot.slane %v1446, 2
        %v1480 = vrot.slane %v1446, 3
        %v1481 = vrot.slane %v1446, 4
        %v1482 = vrot.slane %v1446, 5
        %v1483 = vrot.slane %v1446, 6
        %v1484 = vrot.slane %v1446, 7
        %v1485 = vrot.slane %v1448, 1
        %v1486 = vrot.slane %v1448, 2
        %v1487 = vrot.slane %v1448, 3
        %v1488 = vrot.slane %v1448, 4
        %v1489 = vrot.slane %v1448, 5
        %v1490 = vrot.slane %v1448, 6
        %v1491 = vrot.slane %v1448, 7
        %v1492 = vrot.slane %v1451, 2
        %v1493 = vrot.slane %v1451, 3
        %v1494 = vrot.slane %v1451, 4
        %v1495 = vrot.slane %v1451, 5
        %v1496 = vrot.slane %v1451, 6
        %v1497 = vrot.slane %v1451, 7
        %v1498 = vrot.slane %v1453, 1
        %v1499 = vrot.slane %v1453, 3
        %v1500 = vrot.slane %v1453, 4
        %v1501 = vrot.slane %v1453, 5
        %v1502 = vrot.slane %v1453, 6
        %v1503 = vrot.slane %v1453, 7
        %v1504 = vrot.slane %v1456, 1
        %v1505 = vrot.slane %v1456, 2
        %v1506 = vrot.slane %v1456, 4
        %v1507 = vrot.slane %v1456, 5
        %v1508 = vrot.slane %v1456, 6
        %v1509 = vrot.slane %v1456, 7
        %v1510 = vrot.slane %v1458, 1
        %v1511 = vrot.slane %v1458, 2
        %v1512 = vrot.slane %v1458, 3
        %v1513 = vrot.slane %v1458, 5
        %v1514 = vrot.slane %v1458, 6
        %v1515 = vrot.slane %v1458, 7
        %v1516 = vrot.slane %v1461, 1
        %v1517 = vrot.slane %v1461, 2
        %v1518 = vrot.slane %v1461, 3
        %v1519 = vrot.slane %v1461, 4
        %v1520 = vrot.slane %v1461, 6
        %v1521 = vrot.slane %v1461, 7
        %v1522 = vrot.slane %v1463, 1
        %v1523 = vrot.slane %v1463, 2
        %v1524 = vrot.slane %v1463, 3
        %v1525 = vrot.slane %v1463, 4
        %v1526 = vrot.slane %v1463, 5
        %v1527 = vrot.slane %v1463, 7
        %v1528 = vrot.slane %v1466, 1
        %v1529 = vrot.slane %v1466, 2
        %v1530 = vrot.slane %v1466, 3
        %v1531 = vrot.slane %v1466, 4
        %v1532 = vrot.slane %v1466, 5
        %v1533 = vrot.slane %v1466, 6
        %v1590 = vadd.f32 %v845, %v1446
        %v1591 = vadd.f32 %v877, %v1478
        %v1592 = vadd.f32 %v878, %v1479
        %v1593 = vadd.f32 %v879, %v1480
        %v1594 = vadd.f32 %v880, %v1481
        %v1595 = vadd.f32 %v881, %v1482
        %v1596 = vadd.f32 %v882, %v1483
        %v1597 = vadd.f32 %v883, %v1484
        %v1598 = vadd.f32 %v884, %v1485
        %v1599 = vadd.f32 %v885, %v1486
        %v1600 = vadd.f32 %v886, %v1487
        %v1601 = vadd.f32 %v887, %v1488
        %v1602 = vadd.f32 %v888, %v1489
        %v1603 = vadd.f32 %v889, %v1490
        %v1604 = vadd.f32 %v890, %v1491
        %v1605 = vadd.f32 %v850, %v1451
        %v1606 = vadd.f32 %v891, %v1492
        %v1607 = vadd.f32 %v892, %v1493
        %v1608 = vadd.f32 %v893, %v1494
        %v1609 = vadd.f32 %v894, %v1495
        %v1610 = vadd.f32 %v895, %v1496
        %v1611 = vadd.f32 %v896, %v1497
        %v1612 = vadd.f32 %v852, %v1453
        %v1613 = vadd.f32 %v897, %v1498
        %v1614 = vadd.f32 %v898, %v1499
        %v1615 = vadd.f32 %v899, %v1500
        %v1616 = vadd.f32 %v900, %v1501
        %v1617 = vadd.f32 %v901, %v1502
        %v1618 = vadd.f32 %v902, %v1503
        %v1619 = vadd.f32 %v855, %v1456
        %v1620 = vadd.f32 %v903, %v1504
        %v1621 = vadd.f32 %v904, %v1505
        %v1622 = vadd.f32 %v905, %v1506
        %v1623 = vadd.f32 %v906, %v1507
        %v1624 = vadd.f32 %v907, %v1508
        %v1625 = vadd.f32 %v908, %v1509
        %v1626 = vadd.f32 %v857, %v1458
        %v1627 = vadd.f32 %v909, %v1510
        %v1628 = vadd.f32 %v910, %v1511
        %v1629 = vadd.f32 %v911, %v1512
        %v1630 = vadd.f32 %v912, %v1513
        %v1631 = vadd.f32 %v913, %v1514
        %v1632 = vadd.f32 %v914, %v1515
        %v1633 = vadd.f32 %v860, %v1461
        %v1634 = vadd.f32 %v915, %v1516
        %v1635 = vadd.f32 %v916, %v1517
        %v1636 = vadd.f32 %v917, %v1518
        %v1637 = vadd.f32 %v918, %v1519
        %v1638 = vadd.f32 %v919, %v1520
        %v1639 = vadd.f32 %v920, %v1521
        %v1640 = vadd.f32 %v862, %v1463
        %v1641 = vadd.f32 %v921, %v1522
        %v1642 = vadd.f32 %v922, %v1523
        %v1643 = vadd.f32 %v923, %v1524
        %v1644 = vadd.f32 %v924, %v1525
        %v1645 = vadd.f32 %v925, %v1526
        %v1646 = vadd.f32 %v926, %v1527
        %v1647 = vadd.f32 %v865, %v1466
        %v1648 = vadd.f32 %v927, %v1528
        %v1649 = vadd.f32 %v928, %v1529
        %v1650 = vadd.f32 %v929, %v1530
        %v1651 = vadd.f32 %v930, %v1531
        %v1652 = vadd.f32 %v931, %v1532
        %v1653 = vadd.f32 %v932, %v1533
        %s1654 = scalar_lea.vmem %s1, 128
        %v1655 = vld [vmem:[%s1654] sm:$0xf]
        %v1656 = vld [vmem:[%s1654 + $0x4] sm:$0xf]
        %v1657 = vld [vmem:[%s1654 + $0x8] sm:$0xf]
        %v1658 = vld [vmem:[%s1654 + $0xc] sm:$0xf]
        %v1659 = vld [vmem:[%s1654 + $0x10] sm:$0xf]
        %v1660 = vld [vmem:[%s1654 + $0x14] sm:$0xf]
        %v1661 = vld [vmem:[%s1654 + $0x18] sm:$0xf]
        %v1662 = vld [vmem:[%s1654 + $0x1c] sm:$0xf]
        %v1663 = vld [vmem:[%s1654 + $0x20] sm:$0xf]
        %v1664 = vld [vmem:[%s1654 + $0x24] sm:$0xf]
        %v1665 = vld [vmem:[%s1654 + $0x28] sm:$0xf]
        %v1666 = vld [vmem:[%s1654 + $0x2c] sm:$0xf]
        %v1667 = vld [vmem:[%s1654 + $0x30] sm:$0xf]
        %v1668 = vld [vmem:[%s1654 + $0x34] sm:$0xf]
        %v1669 = vld [vmem:[%s1654 + $0x38] sm:$0xf]
        %v1670 = vld [vmem:[%s1654 + $0x3c] sm:$0xf]
        %1671 = vst [vmem:[#allocation1] ss:$9 sm:$0xff] %v662
        %s1672 = scalar_lea.vmem [#allocation1], 1
        %1673 = vst [vmem:[%s1672] ss:$9 sm:$0xff] %v663
        %s1674 = scalar_lea.vmem [#allocation1], 2
        %1675 = vst [vmem:[%s1674] ss:$9 sm:$0xff] %v664
        %s1676 = scalar_lea.vmem [#allocation1], 3
        %1677 = vst [vmem:[%s1676] ss:$9 sm:$0xff] %v665
        %s1678 = scalar_lea.vmem [#allocation1], 4
        %1679 = vst [vmem:[%s1678] ss:$9 sm:$0xff] %v666
        %s1680 = scalar_lea.vmem [#allocation1], 5
        %1681 = vst [vmem:[%s1680] ss:$9 sm:$0xff] %v667
        %s1682 = scalar_lea.vmem [#allocation1], 6
        %1683 = vst [vmem:[%s1682] ss:$9 sm:$0xff] %v668
        %s1684 = scalar_lea.vmem [#allocation1], 7
        %1685 = vst [vmem:[%s1684] ss:$9 sm:$0xff] %v669
        %v1686 = vld [vmem:[#allocation1] sm:$0xff]
        %1687 = vst [vmem:[#allocation1] ss:$9 sm:$0xff] %v670
        %1688 = vst [vmem:[%s1672] ss:$9 sm:$0xff] %v671
        %1689 = vst [vmem:[%s1674] ss:$9 sm:$0xff] %v672
        %1690 = vst [vmem:[%s1676] ss:$9 sm:$0xff] %v673
        %1691 = vst [vmem:[%s1678] ss:$9 sm:$0xff] %v674
        %1692 = vst [vmem:[%s1680] ss:$9 sm:$0xff] %v675
        %1693 = vst [vmem:[%s1682] ss:$9 sm:$0xff] %v676
        %1694 = vst [vmem:[%s1684] ss:$9 sm:$0xff] %v677
        %v1695 = vld [vmem:[#allocation1] sm:$0xff]
        %1696 = vst [vmem:[#allocation1] ss:$9 sm:$0xff] %v678
        %1697 = vst [vmem:[%s1672] ss:$9 sm:$0xff] %v679
        %1698 = vst [vmem:[%s1674] ss:$9 sm:$0xff] %v680
        %1699 = vst [vmem:[%s1676] ss:$9 sm:$0xff] %v681
        %1700 = vst [vmem:[%s1678] ss:$9 sm:$0xff] %v682
        %1701 = vst [vmem:[%s1680] ss:$9 sm:$0xff] %v683
        %1702 = vst [vmem:[%s1682] ss:$9 sm:$0xff] %v684
        %1703 = vst [vmem:[%s1684] ss:$9 sm:$0xff] %v685
        %v1704 = vld [vmem:[#allocation1] sm:$0xff]
        %1705 = vst [vmem:[#allocation1] ss:$9 sm:$0xff] %v686
        %1706 = vst [vmem:[%s1672] ss:$9 sm:$0xff] %v687
        %1707 = vst [vmem:[%s1674] ss:$9 sm:$0xff] %v688
        %1708 = vst [vmem:[%s1676] ss:$9 sm:$0xff] %v689
        %1709 = vst [vmem:[%s1678] ss:$9 sm:$0xff] %v690
        %1710 = vst [vmem:[%s1680] ss:$9 sm:$0xff] %v691
        %1711 = vst [vmem:[%s1682] ss:$9 sm:$0xff] %v692
        %1712 = vst [vmem:[%s1684] ss:$9 sm:$0xff] %v693
        %v1713 = vld [vmem:[#allocation1] sm:$0xff]
        %1714 = vst [vmem:[#allocation1] ss:$9 sm:$0xff] %v694
        %1715 = vst [vmem:[%s1672] ss:$9 sm:$0xff] %v695
        %1716 = vst [vmem:[%s1674] ss:$9 sm:$0xff] %v696
        %1717 = vst [vmem:[%s1676] ss:$9 sm:$0xff] %v697
        %v1718 = vld [vmem:[#allocation1] sm:$0xff]
        %v1740 = vunpack.c.l.b16 %v1655
        %v1741 = vunpack.c.l.b16 %v1656
        %v1742 = vunpack.c.l.b16 %v1657
        %v1743 = vunpack.c.l.b16 %v1658
        %v1744 = vunpack.c.l.b16 %v1659
        %v1745 = vunpack.c.l.b16 %v1660
        %v1746 = vunpack.c.l.b16 %v1661
        %v1747 = vunpack.c.l.b16 %v1662
        %v1748 = vunpack.c.l.b16 %v1663
        %v1749 = vunpack.c.l.b16 %v1664
        %v1750 = vunpack.c.l.b16 %v1665
        %v1751 = vunpack.c.l.b16 %v1666
        %v1752 = vunpack.c.l.b16 %v1667
        %v1753 = vunpack.c.l.b16 %v1668
        %v1754 = vunpack.c.l.b16 %v1669
        %v1755 = vunpack.c.l.b16 %v1670
        %v1756 = vpack.c.b16 %v1741, %v1740
        %v1757 = vpack.c.b16 %v1743, %v1742
        %v1758 = vpack.c.b16 %v1745, %v1744
        %v1759 = vpack.c.b16 %v1747, %v1746
        %v1760 = vpack.c.b16 %v1749, %v1748
        %v1761 = vpack.c.b16 %v1751, %v1750
        %v1762 = vpack.c.b16 %v1753, %v1752
        %v1763 = vpack.c.b16 %v1755, %v1754
        %1772 = vmatpush.bf16.msra.mxu0 %v1763
        %1773 = vmatpush.bf16.msra.mxu0 %v1762
        %1774 = vmatpush.bf16.msra.mxu0 %v1761
        %1775 = vmatpush.bf16.msra.mxu0 %v1760
        %1776 = vmatpush.bf16.msra.mxu0 %v1759
        %1777 = vmatpush.bf16.msra.mxu0 %v1758
        %1778 = vmatpush.bf16.msra.mxu0 %v1757
        %1779 = vmatpush.bf16.msra.mxu0 %v1756
        %1780 = vmatmul.bf16.gmra.mxu0 %v1686
        %v1781 = vpop.f32.mrf.mxu0
        %v1782 = vadd.f32 0.0, %v1781
        %v1783 = vpop.f32.mrf.mxu0
        %v1784 = vadd.f32 0.0, %v1783
        %1785 = vmatmul.bf16.gmra.mxu0 %v1695
        %v1786 = vpop.f32.mrf.mxu0
        %v1787 = vadd.f32 0.0, %v1786
        %v1788 = vpop.f32.mrf.mxu0
        %v1789 = vadd.f32 0.0, %v1788
        %1790 = vmatmul.bf16.gmra.mxu0 %v1704
        %v1791 = vpop.f32.mrf.mxu0
        %v1792 = vadd.f32 0.0, %v1791
        %v1793 = vpop.f32.mrf.mxu0
        %v1794 = vadd.f32 0.0, %v1793
        %1795 = vmatmul.bf16.gmra.mxu0 %v1713
        %v1796 = vpop.f32.mrf.mxu0
        %v1797 = vadd.f32 0.0, %v1796
        %v1798 = vpop.f32.mrf.mxu0
        %v1799 = vadd.f32 0.0, %v1798
        %1800 = vmatmul.bf16.gmra.mxu0 %v1718
        %v1801 = vpop.f32.mrf.mxu0
        %v1802 = vadd.f32 0.0, %v1801
        %v1803 = vpop.f32.mrf.mxu0
        %1804 = vdwg.mxu0
        %v1814 = vrot.slane %v1782, 1
        %v1815 = vrot.slane %v1782, 2
        %v1816 = vrot.slane %v1782, 3
        %v1817 = vrot.slane %v1782, 4
        %v1818 = vrot.slane %v1782, 5
        %v1819 = vrot.slane %v1782, 6
        %v1820 = vrot.slane %v1782, 7
        %v1821 = vrot.slane %v1784, 2
        %v1822 = vrot.slane %v1784, 3
        %v1823 = vrot.slane %v1784, 4
        %v1824 = vrot.slane %v1784, 5
        %v1825 = vrot.slane %v1784, 6
        %v1826 = vrot.slane %v1784, 7
        %v1827 = vrot.slane %v1787, 1
        %v1828 = vrot.slane %v1787, 3
        %v1829 = vrot.slane %v1787, 4
        %v1830 = vrot.slane %v1787, 5
        %v1831 = vrot.slane %v1787, 6
        %v1832 = vrot.slane %v1787, 7
        %v1833 = vrot.slane %v1789, 1
        %v1834 = vrot.slane %v1789, 2
        %v1835 = vrot.slane %v1789, 4
        %v1836 = vrot.slane %v1789, 5
        %v1837 = vrot.slane %v1789, 6
        %v1838 = vrot.slane %v1789, 7
        %v1839 = vrot.slane %v1792, 1
        %v1840 = vrot.slane %v1792, 2
        %v1841 = vrot.slane %v1792, 3
        %v1842 = vrot.slane %v1792, 5
        %v1843 = vrot.slane %v1792, 6
        %v1844 = vrot.slane %v1792, 7
        %v1845 = vrot.slane %v1794, 1
        %v1846 = vrot.slane %v1794, 2
        %v1847 = vrot.slane %v1794, 3
        %v1848 = vrot.slane %v1794, 4
        %v1849 = vrot.slane %v1794, 6
        %v1850 = vrot.slane %v1794, 7
        %v1851 = vrot.slane %v1797, 1
        %v1852 = vrot.slane %v1797, 2
        %v1853 = vrot.slane %v1797, 3
        %v1854 = vrot.slane %v1797, 4
        %v1855 = vrot.slane %v1797, 5
        %v1856 = vrot.slane %v1797, 7
        %v1857 = vrot.slane %v1799, 1
        %v1858 = vrot.slane %v1799, 2
        %v1859 = vrot.slane %v1799, 3
        %v1860 = vrot.slane %v1799, 4
        %v1861 = vrot.slane %v1799, 5
        %v1862 = vrot.slane %v1799, 6
        %v1863 = vrot.slane %v1802, 1
        %v1864 = vrot.slane %v1802, 2
        %v1865 = vrot.slane %v1802, 3
        %v1866 = vrot.slane %v1802, 4
        %v1867 = vrot.slane %v1802, 5
        %v1868 = vrot.slane %v1802, 6
        %v1869 = vrot.slane %v1802, 7
        %v1926 = vadd.f32 %v1590, %v1814
        %v1927 = vadd.f32 %v1591, %v1815
        %v1928 = vadd.f32 %v1592, %v1816
        %v1929 = vadd.f32 %v1593, %v1817
        %v1930 = vadd.f32 %v1594, %v1818
        %v1931 = vadd.f32 %v1595, %v1819
        %v1932 = vadd.f32 %v1596, %v1820
        %v1933 = vadd.f32 %v1597, %v1784
        %v1934 = vadd.f32 %v1598, %v1821
        %v1935 = vadd.f32 %v1599, %v1822
        %v1936 = vadd.f32 %v1600, %v1823
        %v1937 = vadd.f32 %v1601, %v1824
        %v1938 = vadd.f32 %v1602, %v1825
        %v1939 = vadd.f32 %v1603, %v1826
        %v1940 = vadd.f32 %v1604, %v1787
        %v1941 = vadd.f32 %v1605, %v1827
        %v1942 = vadd.f32 %v1606, %v1828
        %v1943 = vadd.f32 %v1607, %v1829
        %v1944 = vadd.f32 %v1608, %v1830
        %v1945 = vadd.f32 %v1609, %v1831
        %v1946 = vadd.f32 %v1610, %v1832
        %v1947 = vadd.f32 %v1611, %v1789
        %v1948 = vadd.f32 %v1612, %v1833
        %v1949 = vadd.f32 %v1613, %v1834
        %v1950 = vadd.f32 %v1614, %v1835
        %v1951 = vadd.f32 %v1615, %v1836
        %v1952 = vadd.f32 %v1616, %v1837
        %v1953 = vadd.f32 %v1617, %v1838
        %v1954 = vadd.f32 %v1618, %v1792
        %v1955 = vadd.f32 %v1619, %v1839
        %v1956 = vadd.f32 %v1620, %v1840
        %v1957 = vadd.f32 %v1621, %v1841
        %v1958 = vadd.f32 %v1622, %v1842
        %v1959 = vadd.f32 %v1623, %v1843
        %v1960 = vadd.f32 %v1624, %v1844
        %v1961 = vadd.f32 %v1625, %v1794
        %v1962 = vadd.f32 %v1626, %v1845
        %v1963 = vadd.f32 %v1627, %v1846
        %v1964 = vadd.f32 %v1628, %v1847
        %v1965 = vadd.f32 %v1629, %v1848
        %v1966 = vadd.f32 %v1630, %v1849
        %v1967 = vadd.f32 %v1631, %v1850
        %v1968 = vadd.f32 %v1632, %v1797
        %v1969 = vadd.f32 %v1633, %v1851
        %v1970 = vadd.f32 %v1634, %v1852
        %v1971 = vadd.f32 %v1635, %v1853
        %v1972 = vadd.f32 %v1636, %v1854
        %v1973 = vadd.f32 %v1637, %v1855
        %v1974 = vadd.f32 %v1638, %v1856
        %v1975 = vadd.f32 %v1639, %v1799
        %v1976 = vadd.f32 %v1640, %v1857
        %v1977 = vadd.f32 %v1641, %v1858
        %v1978 = vadd.f32 %v1642, %v1859
        %v1979 = vadd.f32 %v1643, %v1860
        %v1980 = vadd.f32 %v1644, %v1861
        %v1981 = vadd.f32 %v1645, %v1862
        %v1982 = vadd.f32 %v1646, %v1802
        %v1983 = vadd.f32 %v1647, %v1863
        %v1984 = vadd.f32 %v1648, %v1864
        %v1985 = vadd.f32 %v1649, %v1865
        %v1986 = vadd.f32 %v1650, %v1866
        %v1987 = vadd.f32 %v1651, %v1867
        %v1988 = vadd.f32 %v1652, %v1868
        %v1989 = vadd.f32 %v1653, %v1869
        %s1990 = scalar_lea.vmem %s338, 144
        %v1991 = vld [vmem:[%s1990] sm:$0xf]
        %v1992 = vld [vmem:[%s1990 + $0x4] sm:$0x1]
        %v1993 = vld [vmem:[%s1990 + $0x8] sm:$0xf]
        %v1994 = vld [vmem:[%s1990 + $0xc] sm:$0x1]
        %v1995 = vld [vmem:[%s1990 + $0x10] sm:$0xf]
        %v1996 = vld [vmem:[%s1990 + $0x14] sm:$0x1]
        %v1997 = vld [vmem:[%s1990 + $0x18] sm:$0xf]
        %v1998 = vld [vmem:[%s1990 + $0x1c] sm:$0x1]
        %v1999 = vld [vmem:[%s1990 + $0x20] sm:$0xf]
        %v2000 = vld [vmem:[%s1990 + $0x24] sm:$0x1]
        %v2001 = vld [vmem:[%s1990 + $0x28] sm:$0xf]
        %v2002 = vld [vmem:[%s1990 + $0x2c] sm:$0x1]
        %v2003 = vld [vmem:[%s1990 + $0x30] sm:$0xf]
        %v2004 = vld [vmem:[%s1990 + $0x34] sm:$0x1]
        %v2005 = vld [vmem:[%s1990 + $0x38] sm:$0xf]
        %v2006 = vld [vmem:[%s1990 + $0x3c] sm:$0x1]
        %v2023 = vrot.slane %v1991, 3
        %v2024 = vrot.slane %v1992, 3
        %v2025 = vrot.slane %v1993, 3
        %v2026 = vrot.slane %v1994, 3
        %v2027 = vrot.slane %v1995, 3
        %v2028 = vrot.slane %v1996, 3
        %v2029 = vrot.slane %v1997, 3
        %v2030 = vrot.slane %v1998, 3
        %v2031 = vrot.slane %v1999, 3
        %v2032 = vrot.slane %v2000, 3
        %v2033 = vrot.slane %v2001, 3
        %v2034 = vrot.slane %v2002, 3
        %v2035 = vrot.slane %v2003, 3
        %v2036 = vrot.slane %v2004, 3
        %v2037 = vrot.slane %v2005, 3
        %v2038 = vrot.slane %v2006, 3
        %v2041 = vsel %vm434, %v1991, %v2023
        %v2043 = vsel %vm439, %v1991, %v2023
        %v2045 = vrot.slane %v2043, 1
        %v2046 = vsel %vm443, %v1991, %v2023
        %v2048 = vrot.slane %v2046, 2
        %v2049 = vsel %vm447, %v1991, %v2023
        %v2051 = vrot.slane %v2049, 3
        %v2054 = vsel %vm434, %v1992, %v2024
        %v2058 = vsel %vm434, %v1993, %v2025
        %v2060 = vsel %vm439, %v1993, %v2025
        %v2062 = vrot.slane %v2060, 1
        %v2063 = vsel %vm443, %v1993, %v2025
        %v2065 = vrot.slane %v2063, 2
        %v2066 = vsel %vm447, %v1993, %v2025
        %v2068 = vrot.slane %v2066, 3
        %v2071 = vsel %vm434, %v1994, %v2026
        %v2075 = vsel %vm434, %v1995, %v2027
        %v2077 = vsel %vm439, %v1995, %v2027
        %v2079 = vrot.slane %v2077, 1
        %v2080 = vsel %vm443, %v1995, %v2027
        %v2082 = vrot.slane %v2080, 2
        %v2083 = vsel %vm447, %v1995, %v2027
        %v2085 = vrot.slane %v2083, 3
        %v2088 = vsel %vm434, %v1996, %v2028
        %v2092 = vsel %vm434, %v1997, %v2029
        %v2094 = vsel %vm439, %v1997, %v2029
        %v2096 = vrot.slane %v2094, 1
        %v2097 = vsel %vm443, %v1997, %v2029
        %v2099 = vrot.slane %v2097, 2
        %v2100 = vsel %vm447, %v1997, %v2029
        %v2102 = vrot.slane %v2100, 3
        %v2105 = vsel %vm434, %v1998, %v2030
        %v2109 = vsel %vm434, %v1999, %v2031
        %v2111 = vsel %vm439, %v1999, %v2031
        %v2113 = vrot.slane %v2111, 1
        %v2114 = vsel %vm443, %v1999, %v2031
        %v2116 = vrot.slane %v2114, 2
        %v2117 = vsel %vm447, %v1999, %v2031
        %v2119 = vrot.slane %v2117, 3
        %v2122 = vsel %vm434, %v2000, %v2032
        %v2126 = vsel %vm434, %v2001, %v2033
        %v2128 = vsel %vm439, %v2001, %v2033
        %v2130 = vrot.slane %v2128, 1
        %v2131 = vsel %vm443, %v2001, %v2033
        %v2133 = vrot.slane %v2131, 2
        %v2134 = vsel %vm447, %v2001, %v2033
        %v2136 = vrot.slane %v2134, 3
        %v2139 = vsel %vm434, %v2002, %v2034
        %v2143 = vsel %vm434, %v2003, %v2035
        %v2145 = vsel %vm439, %v2003, %v2035
        %v2147 = vrot.slane %v2145, 1
        %v2148 = vsel %vm443, %v2003, %v2035
        %v2150 = vrot.slane %v2148, 2
        %v2151 = vsel %vm447, %v2003, %v2035
        %v2153 = vrot.slane %v2151, 3
        %v2156 = vsel %vm434, %v2004, %v2036
        %v2160 = vsel %vm434, %v2005, %v2037
        %v2162 = vsel %vm439, %v2005, %v2037
        %v2164 = vrot.slane %v2162, 1
        %v2165 = vsel %vm443, %v2005, %v2037
        %v2167 = vrot.slane %v2165, 2
        %v2168 = vsel %vm447, %v2005, %v2037
        %v2170 = vrot.slane %v2168, 3
        %v2173 = vsel %vm434, %v2006, %v2038
        %v2175 = vunpack.i.l.s16 %v2041
        %v2176 = vunpack.i.h.s16 %v2041
        %v2177 = vunpack.i.l.s16 %v2045
        %v2178 = vunpack.i.h.s16 %v2045
        %v2179 = vunpack.i.l.s16 %v2048
        %v2180 = vunpack.i.h.s16 %v2048
        %v2181 = vunpack.i.l.s16 %v2051
        %v2182 = vunpack.i.h.s16 %v2051
        %v2183 = vunpack.i.l.s16 %v2054
        %v2184 = vunpack.i.l.s16 %v2058
        %v2185 = vunpack.i.h.s16 %v2058
        %v2186 = vunpack.i.l.s16 %v2062
        %v2187 = vunpack.i.h.s16 %v2062
        %v2188 = vunpack.i.l.s16 %v2065
        %v2189 = vunpack.i.h.s16 %v2065
        %v2190 = vunpack.i.l.s16 %v2068
        %v2191 = vunpack.i.h.s16 %v2068
        %v2192 = vunpack.i.l.s16 %v2071
        %v2193 = vunpack.i.l.s16 %v2075
        %v2194 = vunpack.i.h.s16 %v2075
        %v2195 = vunpack.i.l.s16 %v2079
        %v2196 = vunpack.i.h.s16 %v2079
        %v2197 = vunpack.i.l.s16 %v2082
        %v2198 = vunpack.i.h.s16 %v2082
        %v2199 = vunpack.i.l.s16 %v2085
        %v2200 = vunpack.i.h.s16 %v2085
        %v2201 = vunpack.i.l.s16 %v2088
        %v2202 = vunpack.i.l.s16 %v2092
        %v2203 = vunpack.i.h.s16 %v2092
        %v2204 = vunpack.i.l.s16 %v2096
        %v2205 = vunpack.i.h.s16 %v2096
        %v2206 = vunpack.i.l.s16 %v2099
        %v2207 = vunpack.i.h.s16 %v2099
        %v2208 = vunpack.i.l.s16 %v2102
        %v2209 = vunpack.i.h.s16 %v2102
        %v2210 = vunpack.i.l.s16 %v2105
        %v2211 = vunpack.i.l.s16 %v2109
        %v2212 = vunpack.i.h.s16 %v2109
        %v2213 = vunpack.i.l.s16 %v2113
        %v2214 = vunpack.i.h.s16 %v2113
        %v2215 = vunpack.i.l.s16 %v2116
        %v2216 = vunpack.i.h.s16 %v2116
        %v2217 = vunpack.i.l.s16 %v2119
        %v2218 = vunpack.i.h.s16 %v2119
        %v2219 = vunpack.i.l.s16 %v2122
        %v2220 = vunpack.i.l.s16 %v2126
        %v2221 = vunpack.i.h.s16 %v2126
        %v2222 = vunpack.i.l.s16 %v2130
        %v2223 = vunpack.i.h.s16 %v2130
        %v2224 = vunpack.i.l.s16 %v2133
        %v2225 = vunpack.i.h.s16 %v2133
        %v2226 = vunpack.i.l.s16 %v2136
        %v2227 = vunpack.i.h.s16 %v2136
        %v2228 = vunpack.i.l.s16 %v2139
        %v2229 = vunpack.i.l.s16 %v2143
        %v2230 = vunpack.i.h.s16 %v2143
        %v2231 = vunpack.i.l.s16 %v2147
        %v2232 = vunpack.i.h.s16 %v2147
        %v2233 = vunpack.i.l.s16 %v2150
        %v2234 = vunpack.i.h.s16 %v2150
        %v2235 = vunpack.i.l.s16 %v2153
        %v2236 = vunpack.i.h.s16 %v2153
        %v2237 = vunpack.i.l.s16 %v2156
        %v2238 = vunpack.i.l.s16 %v2160
        %v2239 = vunpack.i.h.s16 %v2160
        %v2240 = vunpack.i.l.s16 %v2164
        %v2241 = vunpack.i.h.s16 %v2164
        %v2242 = vunpack.i.l.s16 %v2167
        %v2243 = vunpack.i.h.s16 %v2167
        %v2244 = vunpack.i.l.s16 %v2170
        %v2245 = vunpack.i.h.s16 %v2170
        %v2246 = vunpack.i.l.s16 %v2173
        %s2247 = scalar_lea.vmem %s1, 192
        %v2248 = vld [vmem:[%s2247] sm:$0xf]
        %v2249 = vld [vmem:[%s2247 + $0x4] sm:$0xf]
        %v2250 = vld [vmem:[%s2247 + $0x8] sm:$0xf]
        %v2251 = vld [vmem:[%s2247 + $0xc] sm:$0xf]
        %v2252 = vld [vmem:[%s2247 + $0x10] sm:$0xf]
        %v2253 = vld [vmem:[%s2247 + $0x14] sm:$0xf]
        %v2254 = vld [vmem:[%s2247 + $0x18] sm:$0xf]
        %v2255 = vld [vmem:[%s2247 + $0x1c] sm:$0xf]
        %v2256 = vld [vmem:[%s2247 + $0x20] sm:$0xf]
        %v2257 = vld [vmem:[%s2247 + $0x24] sm:$0xf]
        %v2258 = vld [vmem:[%s2247 + $0x28] sm:$0xf]
        %v2259 = vld [vmem:[%s2247 + $0x2c] sm:$0xf]
        %v2260 = vld [vmem:[%s2247 + $0x30] sm:$0xf]
        %v2261 = vld [vmem:[%s2247 + $0x34] sm:$0xf]
        %v2262 = vld [vmem:[%s2247 + $0x38] sm:$0xf]
        %v2263 = vld [vmem:[%s2247 + $0x3c] sm:$0xf]
        %v2264 = vpack.i.b16 %v2176, %v2175
        %v2265 = vpack.i.b16 %v2178, %v2177
        %v2266 = vpack.i.b16 %v2180, %v2179
        %v2267 = vpack.i.b16 %v2182, %v2181
        %v2268 = vpack.i.b16 %v2184, %v2183
        %v2269 = vpack.i.b16 %v2186, %v2185
        %v2270 = vpack.i.b16 %v2188, %v2187
        %v2271 = vpack.i.b16 %v2190, %v2189
        %v2272 = vpack.i.b16 %v2192, %v2191
        %v2273 = vpack.i.b16 %v2194, %v2193
        %v2274 = vpack.i.b16 %v2196, %v2195
        %v2275 = vpack.i.b16 %v2198, %v2197
        %v2276 = vpack.i.b16 %v2200, %v2199
        %v2277 = vpack.i.b16 %v2202, %v2201
        %v2278 = vpack.i.b16 %v2204, %v2203
        %v2279 = vpack.i.b16 %v2206, %v2205
        %v2280 = vpack.i.b16 %v2208, %v2207
        %v2281 = vpack.i.b16 %v2210, %v2209
        %v2282 = vpack.i.b16 %v2212, %v2211
        %v2283 = vpack.i.b16 %v2214, %v2213
        %v2284 = vpack.i.b16 %v2216, %v2215
        %v2285 = vpack.i.b16 %v2218, %v2217
        %v2286 = vpack.i.b16 %v2220, %v2219
        %v2287 = vpack.i.b16 %v2222, %v2221
        %v2288 = vpack.i.b16 %v2224, %v2223
        %v2289 = vpack.i.b16 %v2226, %v2225
        %v2290 = vpack.i.b16 %v2228, %v2227
        %v2291 = vpack.i.b16 %v2230, %v2229
        %v2292 = vpack.i.b16 %v2232, %v2231
        %v2293 = vpack.i.b16 %v2234, %v2233
        %v2294 = vpack.i.b16 %v2236, %v2235
        %v2295 = vpack.i.b16 %v2238, %v2237
        %v2296 = vpack.i.b16 %v2240, %v2239
        %v2297 = vpack.i.b16 %v2242, %v2241
        %v2298 = vpack.i.b16 %v2244, %v2243
        %v2299 = vpack.i.b16 %v2246, %v2245
        %2301 = vst [vmem:[#allocation1] ss:$9 sm:$0xff] %v2264
        %s2303 = scalar_lea.vmem [#allocation1], 1
        %2304 = vst [vmem:[%s2303] ss:$9 sm:$0xff] %v2265
        %s2306 = scalar_lea.vmem [#allocation1], 2
        %2307 = vst [vmem:[%s2306] ss:$9 sm:$0xff] %v2266
        %s2309 = scalar_lea.vmem [#allocation1], 3
        %2310 = vst [vmem:[%s2309] ss:$9 sm:$0xff] %v2267
        %s2312 = scalar_lea.vmem [#allocation1], 4
        %2313 = vst [vmem:[%s2312] ss:$9 sm:$0xff] %v2268
        %s2315 = scalar_lea.vmem [#allocation1], 5
        %2316 = vst [vmem:[%s2315] ss:$9 sm:$0xff] %v2269
        %s2318 = scalar_lea.vmem [#allocation1], 6
        %2319 = vst [vmem:[%s2318] ss:$9 sm:$0xff] %v2270
        %s2321 = scalar_lea.vmem [#allocation1], 7
        %2322 = vst [vmem:[%s2321] ss:$9 sm:$0xff] %v2271
        %v2323 = vld [vmem:[#allocation1] sm:$0xff]
        %2325 = vst [vmem:[#allocation1] ss:$9 sm:$0xff] %v2272
        %2327 = vst [vmem:[%s2303] ss:$9 sm:$0xff] %v2273
        %2329 = vst [vmem:[%s2306] ss:$9 sm:$0xff] %v2274
        %2331 = vst [vmem:[%s2309] ss:$9 sm:$0xff] %v2275
        %2333 = vst [vmem:[%s2312] ss:$9 sm:$0xff] %v2276
        %2335 = vst [vmem:[%s2315] ss:$9 sm:$0xff] %v2277
        %2337 = vst [vmem:[%s2318] ss:$9 sm:$0xff] %v2278
        %2339 = vst [vmem:[%s2321] ss:$9 sm:$0xff] %v2279
        %v2340 = vld [vmem:[#allocation1] sm:$0xff]
        %2342 = vst [vmem:[#allocation1] ss:$9 sm:$0xff] %v2280
        %2344 = vst [vmem:[%s2303] ss:$9 sm:$0xff] %v2281
        %2346 = vst [vmem:[%s2306] ss:$9 sm:$0xff] %v2282
        %2348 = vst [vmem:[%s2309] ss:$9 sm:$0xff] %v2283
        %2350 = vst [vmem:[%s2312] ss:$9 sm:$0xff] %v2284
        %2352 = vst [vmem:[%s2315] ss:$9 sm:$0xff] %v2285
        %2354 = vst [vmem:[%s2318] ss:$9 sm:$0xff] %v2286
        %2356 = vst [vmem:[%s2321] ss:$9 sm:$0xff] %v2287
        %v2357 = vld [vmem:[#allocation1] sm:$0xff]
        %2359 = vst [vmem:[#allocation1] ss:$9 sm:$0xff] %v2288
        %2361 = vst [vmem:[%s2303] ss:$9 sm:$0xff] %v2289
        %2363 = vst [vmem:[%s2306] ss:$9 sm:$0xff] %v2290
        %2365 = vst [vmem:[%s2309] ss:$9 sm:$0xff] %v2291
        %2367 = vst [vmem:[%s2312] ss:$9 sm:$0xff] %v2292
        %2369 = vst [vmem:[%s2315] ss:$9 sm:$0xff] %v2293
        %2371 = vst [vmem:[%s2318] ss:$9 sm:$0xff] %v2294
        %2373 = vst [vmem:[%s2321] ss:$9 sm:$0xff] %v2295
        %v2374 = vld [vmem:[#allocation1] sm:$0xff]
        %2376 = vst [vmem:[#allocation1] ss:$9 sm:$0xff] %v2296
        %2378 = vst [vmem:[%s2303] ss:$9 sm:$0xff] %v2297
        %2380 = vst [vmem:[%s2306] ss:$9 sm:$0xff] %v2298
        %2382 = vst [vmem:[%s2309] ss:$9 sm:$0xff] %v2299
        %v2383 = vld [vmem:[#allocation1] sm:$0xff]
        %v2405 = vunpack.c.l.b16 %v2248
        %v2406 = vunpack.c.l.b16 %v2249
        %v2407 = vunpack.c.l.b16 %v2250
        %v2408 = vunpack.c.l.b16 %v2251
        %v2409 = vunpack.c.l.b16 %v2252
        %v2410 = vunpack.c.l.b16 %v2253
        %v2411 = vunpack.c.l.b16 %v2254
        %v2412 = vunpack.c.l.b16 %v2255
        %v2413 = vunpack.c.l.b16 %v2256
        %v2414 = vunpack.c.l.b16 %v2257
        %v2415 = vunpack.c.l.b16 %v2258
        %v2416 = vunpack.c.l.b16 %v2259
        %v2417 = vunpack.c.l.b16 %v2260
        %v2418 = vunpack.c.l.b16 %v2261
        %v2419 = vunpack.c.l.b16 %v2262
        %v2420 = vunpack.c.l.b16 %v2263
        %v2421 = vpack.c.b16 %v2406, %v2405
        %v2422 = vpack.c.b16 %v2408, %v2407
        %v2423 = vpack.c.b16 %v2410, %v2409
        %v2424 = vpack.c.b16 %v2412, %v2411
        %v2425 = vpack.c.b16 %v2414, %v2413
        %v2426 = vpack.c.b16 %v2416, %v2415
        %v2427 = vpack.c.b16 %v2418, %v2417
        %v2428 = vpack.c.b16 %v2420, %v2419
        %2437 = vmatpush.bf16.msra.mxu0 %v2428
        %2438 = vmatpush.bf16.msra.mxu0 %v2427
        %2439 = vmatpush.bf16.msra.mxu0 %v2426
        %2440 = vmatpush.bf16.msra.mxu0 %v2425
        %2441 = vmatpush.bf16.msra.mxu0 %v2424
        %2442 = vmatpush.bf16.msra.mxu0 %v2423
        %2443 = vmatpush.bf16.msra.mxu0 %v2422
        %2444 = vmatpush.bf16.msra.mxu0 %v2421
        %2445 = vmatmul.bf16.gmra.mxu0 %v2323
        %v2446 = vpop.f32.mrf.mxu0
        %v2447 = vadd.f32 0.0, %v2446
        %v2448 = vpop.f32.mrf.mxu0
        %v2449 = vadd.f32 0.0, %v2448
        %2450 = vmatmul.bf16.gmra.mxu0 %v2340
        %v2451 = vpop.f32.mrf.mxu0
        %v2452 = vadd.f32 0.0, %v2451
        %v2453 = vpop.f32.mrf.mxu0
        %v2454 = vadd.f32 0.0, %v2453
        %2455 = vmatmul.bf16.gmra.mxu0 %v2357
        %v2456 = vpop.f32.mrf.mxu0
        %v2457 = vadd.f32 0.0, %v2456
        %v2458 = vpop.f32.mrf.mxu0
        %v2459 = vadd.f32 0.0, %v2458
        %2460 = vmatmul.bf16.gmra.mxu0 %v2374
        %v2461 = vpop.f32.mrf.mxu0
        %v2462 = vadd.f32 0.0, %v2461
        %v2463 = vpop.f32.mrf.mxu0
        %v2464 = vadd.f32 0.0, %v2463
        %2465 = vmatmul.bf16.gmra.mxu0 %v2383
        %v2466 = vpop.f32.mrf.mxu0
        %v2467 = vadd.f32 0.0, %v2466
        %v2468 = vpop.f32.mrf.mxu0
        %2469 = vdwg.mxu0
        %v2479 = vrot.slane %v2447, 1
        %v2480 = vrot.slane %v2447, 2
        %v2481 = vrot.slane %v2447, 3
        %v2482 = vrot.slane %v2447, 4
        %v2483 = vrot.slane %v2447, 5
        %v2484 = vrot.slane %v2447, 6
        %v2485 = vrot.slane %v2447, 7
        %v2486 = vrot.slane %v2449, 1
        %v2487 = vrot.slane %v2449, 2
        %v2488 = vrot.slane %v2449, 3
        %v2489 = vrot.slane %v2449, 4
        %v2490 = vrot.slane %v2449, 5
        %v2491 = vrot.slane %v2449, 6
        %v2492 = vrot.slane %v2449, 7
        %v2493 = vrot.slane %v2452, 2
        %v2494 = vrot.slane %v2452, 3
        %v2495 = vrot.slane %v2452, 4
        %v2496 = vrot.slane %v2452, 5
        %v2497 = vrot.slane %v2452, 6
        %v2498 = vrot.slane %v2452, 7
        %v2499 = vrot.slane %v2454, 1
        %v2500 = vrot.slane %v2454, 3
        %v2501 = vrot.slane %v2454, 4
        %v2502 = vrot.slane %v2454, 5
        %v2503 = vrot.slane %v2454, 6
        %v2504 = vrot.slane %v2454, 7
        %v2505 = vrot.slane %v2457, 1
        %v2506 = vrot.slane %v2457, 2
        %v2507 = vrot.slane %v2457, 4
        %v2508 = vrot.slane %v2457, 5
        %v2509 = vrot.slane %v2457, 6
        %v2510 = vrot.slane %v2457, 7
        %v2511 = vrot.slane %v2459, 1
        %v2512 = vrot.slane %v2459, 2
        %v2513 = vrot.slane %v2459, 3
        %v2514 = vrot.slane %v2459, 5
        %v2515 = vrot.slane %v2459, 6
        %v2516 = vrot.slane %v2459, 7
        %v2517 = vrot.slane %v2462, 1
        %v2518 = vrot.slane %v2462, 2
        %v2519 = vrot.slane %v2462, 3
        %v2520 = vrot.slane %v2462, 4
        %v2521 = vrot.slane %v2462, 6
        %v2522 = vrot.slane %v2462, 7
        %v2523 = vrot.slane %v2464, 1
        %v2524 = vrot.slane %v2464, 2
        %v2525 = vrot.slane %v2464, 3
        %v2526 = vrot.slane %v2464, 4
        %v2527 = vrot.slane %v2464, 5
        %v2528 = vrot.slane %v2464, 7
        %v2529 = vrot.slane %v2467, 1
        %v2530 = vrot.slane %v2467, 2
        %v2531 = vrot.slane %v2467, 3
        %v2532 = vrot.slane %v2467, 4
        %v2533 = vrot.slane %v2467, 5
        %v2534 = vrot.slane %v2467, 6
        %v2591 = vadd.f32 %v1926, %v2447
        %v2592 = vadd.f32 %v1927, %v2479
        %v2593 = vadd.f32 %v1928, %v2480
        %v2594 = vadd.f32 %v1929, %v2481
        %v2595 = vadd.f32 %v1930, %v2482
        %v2596 = vadd.f32 %v1931, %v2483
        %v2597 = vadd.f32 %v1932, %v2484
        %v2598 = vadd.f32 %v1933, %v2485
        %v2599 = vadd.f32 %v1934, %v2486
        %v2600 = vadd.f32 %v1935, %v2487
        %v2601 = vadd.f32 %v1936, %v2488
        %v2602 = vadd.f32 %v1937, %v2489
        %v2603 = vadd.f32 %v1938, %v2490
        %v2604 = vadd.f32 %v1939, %v2491
        %v2605 = vadd.f32 %v1940, %v2492
        %v2606 = vadd.f32 %v1941, %v2452
        %v2607 = vadd.f32 %v1942, %v2493
        %v2608 = vadd.f32 %v1943, %v2494
        %v2609 = vadd.f32 %v1944, %v2495
        %v2610 = vadd.f32 %v1945, %v2496
        %v2611 = vadd.f32 %v1946, %v2497
        %v2612 = vadd.f32 %v1947, %v2498
        %v2613 = vadd.f32 %v1948, %v2454
        %v2614 = vadd.f32 %v1949, %v2499
        %v2615 = vadd.f32 %v1950, %v2500
        %v2616 = vadd.f32 %v1951, %v2501
        %v2617 = vadd.f32 %v1952, %v2502
        %v2618 = vadd.f32 %v1953, %v2503
        %v2619 = vadd.f32 %v1954, %v2504
        %v2620 = vadd.f32 %v1955, %v2457
        %v2621 = vadd.f32 %v1956, %v2505
        %v2622 = vadd.f32 %v1957, %v2506
        %v2623 = vadd.f32 %v1958, %v2507
        %v2624 = vadd.f32 %v1959, %v2508
        %v2625 = vadd.f32 %v1960, %v2509
        %v2626 = vadd.f32 %v1961, %v2510
        %v2627 = vadd.f32 %v1962, %v2459
        %v2628 = vadd.f32 %v1963, %v2511
        %v2629 = vadd.f32 %v1964, %v2512
        %v2630 = vadd.f32 %v1965, %v2513
        %v2631 = vadd.f32 %v1966, %v2514
        %v2632 = vadd.f32 %v1967, %v2515
        %v2633 = vadd.f32 %v1968, %v2516
        %v2634 = vadd.f32 %v1969, %v2462
        %v2635 = vadd.f32 %v1970, %v2517
        %v2636 = vadd.f32 %v1971, %v2518
        %v2637 = vadd.f32 %v1972, %v2519
        %v2638 = vadd.f32 %v1973, %v2520
        %v2639 = vadd.f32 %v1974, %v2521
        %v2640 = vadd.f32 %v1975, %v2522
        %v2641 = vadd.f32 %v1976, %v2464
        %v2642 = vadd.f32 %v1977, %v2523
        %v2643 = vadd.f32 %v1978, %v2524
        %v2644 = vadd.f32 %v1979, %v2525
        %v2645 = vadd.f32 %v1980, %v2526
        %v2646 = vadd.f32 %v1981, %v2527
        %v2647 = vadd.f32 %v1982, %v2528
        %v2648 = vadd.f32 %v1983, %v2467
        %v2649 = vadd.f32 %v1984, %v2529
        %v2650 = vadd.f32 %v1985, %v2530
        %v2651 = vadd.f32 %v1986, %v2531
        %v2652 = vadd.f32 %v1987, %v2532
        %v2653 = vadd.f32 %v1988, %v2533
        %v2654 = vadd.f32 %v1989, %v2534
        %s2655 = scalar_lea.vmem %s338, 216
        %v2656 = vld [vmem:[%s2655] sm:$0xf]
        %v2657 = vld [vmem:[%s2655 + $0x4] sm:$0x1]
        %v2658 = vld [vmem:[%s2655 + $0x8] sm:$0xf]
        %v2659 = vld [vmem:[%s2655 + $0xc] sm:$0x1]
        %v2660 = vld [vmem:[%s2655 + $0x10] sm:$0xf]
        %v2661 = vld [vmem:[%s2655 + $0x14] sm:$0x1]
        %v2662 = vld [vmem:[%s2655 + $0x18] sm:$0xf]
        %v2663 = vld [vmem:[%s2655 + $0x1c] sm:$0x1]
        %v2664 = vld [vmem:[%s2655 + $0x20] sm:$0xf]
        %v2665 = vld [vmem:[%s2655 + $0x24] sm:$0x1]
        %v2666 = vld [vmem:[%s2655 + $0x28] sm:$0xf]
        %v2667 = vld [vmem:[%s2655 + $0x2c] sm:$0x1]
        %v2668 = vld [vmem:[%s2655 + $0x30] sm:$0xf]
        %v2669 = vld [vmem:[%s2655 + $0x34] sm:$0x1]
        %v2670 = vld [vmem:[%s2655 + $0x38] sm:$0xf]
        %v2671 = vld [vmem:[%s2655 + $0x3c] sm:$0x1]
        %v2688 = vrot.slane %v2656, 3
        %v2689 = vrot.slane %v2657, 3
        %v2690 = vrot.slane %v2658, 3
        %v2691 = vrot.slane %v2659, 3
        %v2692 = vrot.slane %v2660, 3
        %v2693 = vrot.slane %v2661, 3
        %v2694 = vrot.slane %v2662, 3
        %v2695 = vrot.slane %v2663, 3
        %v2696 = vrot.slane %v2664, 3
        %v2697 = vrot.slane %v2665, 3
        %v2698 = vrot.slane %v2666, 3
        %v2699 = vrot.slane %v2667, 3
        %v2700 = vrot.slane %v2668, 3
        %v2701 = vrot.slane %v2669, 3
        %v2702 = vrot.slane %v2670, 3
        %v2703 = vrot.slane %v2671, 3
        %v2706 = vsel %vm434, %v2656, %v2688
        %v2708 = vsel %vm439, %v2656, %v2688
        %v2710 = vrot.slane %v2708, 1
        %v2711 = vsel %vm443, %v2656, %v2688
        %v2713 = vrot.slane %v2711, 2
        %v2714 = vsel %vm447, %v2656, %v2688
        %v2716 = vrot.slane %v2714, 3
        %v2719 = vsel %vm434, %v2657, %v2689
        %v2723 = vsel %vm434, %v2658, %v2690
        %v2725 = vsel %vm439, %v2658, %v2690
        %v2727 = vrot.slane %v2725, 1
        %v2728 = vsel %vm443, %v2658, %v2690
        %v2730 = vrot.slane %v2728, 2
        %v2731 = vsel %vm447, %v2658, %v2690
        %v2733 = vrot.slane %v2731, 3
        %v2736 = vsel %vm434, %v2659, %v2691
        %v2740 = vsel %vm434, %v2660, %v2692
        %v2742 = vsel %vm439, %v2660, %v2692
        %v2744 = vrot.slane %v2742, 1
        %v2745 = vsel %vm443, %v2660, %v2692
        %v2747 = vrot.slane %v2745, 2
        %v2748 = vsel %vm447, %v2660, %v2692
        %v2750 = vrot.slane %v2748, 3
        %v2753 = vsel %vm434, %v2661, %v2693
        %v2757 = vsel %vm434, %v2662, %v2694
        %v2759 = vsel %vm439, %v2662, %v2694
        %v2761 = vrot.slane %v2759, 1
        %v2762 = vsel %vm443, %v2662, %v2694
        %v2764 = vrot.slane %v2762, 2
        %v2765 = vsel %vm447, %v2662, %v2694
        %v2767 = vrot.slane %v2765, 3
        %v2770 = vsel %vm434, %v2663, %v2695
        %v2774 = vsel %vm434, %v2664, %v2696
        %v2776 = vsel %vm439, %v2664, %v2696
        %v2778 = vrot.slane %v2776, 1
        %v2779 = vsel %vm443, %v2664, %v2696
        %v2781 = vrot.slane %v2779, 2
        %v2782 = vsel %vm447, %v2664, %v2696
        %v2784 = vrot.slane %v2782, 3
        %v2787 = vsel %vm434, %v2665, %v2697
        %v2791 = vsel %vm434, %v2666, %v2698
        %v2793 = vsel %vm439, %v2666, %v2698
        %v2795 = vrot.slane %v2793, 1
        %v2796 = vsel %vm443, %v2666, %v2698
        %v2798 = vrot.slane %v2796, 2
        %v2799 = vsel %vm447, %v2666, %v2698
        %v2801 = vrot.slane %v2799, 3
        %v2804 = vsel %vm434, %v2667, %v2699
        %v2808 = vsel %vm434, %v2668, %v2700
        %v2810 = vsel %vm439, %v2668, %v2700
        %v2812 = vrot.slane %v2810, 1
        %v2813 = vsel %vm443, %v2668, %v2700
        %v2815 = vrot.slane %v2813, 2
        %v2816 = vsel %vm447, %v2668, %v2700
        %v2818 = vrot.slane %v2816, 3
        %v2821 = vsel %vm434, %v2669, %v2701
        %v2825 = vsel %vm434, %v2670, %v2702
        %v2827 = vsel %vm439, %v2670, %v2702
        %v2829 = vrot.slane %v2827, 1
        %v2830 = vsel %vm443, %v2670, %v2702
        %v2832 = vrot.slane %v2830, 2
        %v2833 = vsel %vm447, %v2670, %v2702
        %v2835 = vrot.slane %v2833, 3
        %v2838 = vsel %vm434, %v2671, %v2703
        %v2840 = vunpack.i.l.s16 %v2706
        %v2841 = vunpack.i.h.s16 %v2706
        %v2842 = vunpack.i.l.s16 %v2710
        %v2843 = vunpack.i.h.s16 %v2710
        %v2844 = vunpack.i.l.s16 %v2713
        %v2845 = vunpack.i.h.s16 %v2713
        %v2846 = vunpack.i.l.s16 %v2716
        %v2847 = vunpack.i.h.s16 %v2716
        %v2848 = vunpack.i.l.s16 %v2719
        %v2849 = vunpack.i.l.s16 %v2723
        %v2850 = vunpack.i.h.s16 %v2723
        %v2851 = vunpack.i.l.s16 %v2727
        %v2852 = vunpack.i.h.s16 %v2727
        %v2853 = vunpack.i.l.s16 %v2730
        %v2854 = vunpack.i.h.s16 %v2730
        %v2855 = vunpack.i.l.s16 %v2733
        %v2856 = vunpack.i.h.s16 %v2733
        %v2857 = vunpack.i.l.s16 %v2736
        %v2858 = vunpack.i.l.s16 %v2740
        %v2859 = vunpack.i.h.s16 %v2740
        %v2860 = vunpack.i.l.s16 %v2744
        %v2861 = vunpack.i.h.s16 %v2744
        %v2862 = vunpack.i.l.s16 %v2747
        %v2863 = vunpack.i.h.s16 %v2747
        %v2864 = vunpack.i.l.s16 %v2750
        %v2865 = vunpack.i.h.s16 %v2750
        %v2866 = vunpack.i.l.s16 %v2753
        %v2867 = vunpack.i.l.s16 %v2757
        %v2868 = vunpack.i.h.s16 %v2757
        %v2869 = vunpack.i.l.s16 %v2761
        %v2870 = vunpack.i.h.s16 %v2761
        %v2871 = vunpack.i.l.s16 %v2764
        %v2872 = vunpack.i.h.s16 %v2764
        %v2873 = vunpack.i.l.s16 %v2767
        %v2874 = vunpack.i.h.s16 %v2767
        %v2875 = vunpack.i.l.s16 %v2770
        %v2876 = vunpack.i.l.s16 %v2774
        %v2877 = vunpack.i.h.s16 %v2774
        %v2878 = vunpack.i.l.s16 %v2778
        %v2879 = vunpack.i.h.s16 %v2778
        %v2880 = vunpack.i.l.s16 %v2781
        %v2881 = vunpack.i.h.s16 %v2781
        %v2882 = vunpack.i.l.s16 %v2784
        %v2883 = vunpack.i.h.s16 %v2784
        %v2884 = vunpack.i.l.s16 %v2787
        %v2885 = vunpack.i.l.s16 %v2791
        %v2886 = vunpack.i.h.s16 %v2791
        %v2887 = vunpack.i.l.s16 %v2795
        %v2888 = vunpack.i.h.s16 %v2795
        %v2889 = vunpack.i.l.s16 %v2798
        %v2890 = vunpack.i.h.s16 %v2798
        %v2891 = vunpack.i.l.s16 %v2801
        %v2892 = vunpack.i.h.s16 %v2801
        %v2893 = vunpack.i.l.s16 %v2804
        %v2894 = vunpack.i.l.s16 %v2808
        %v2895 = vunpack.i.h.s16 %v2808
        %v2896 = vunpack.i.l.s16 %v2812
        %v2897 = vunpack.i.h.s16 %v2812
        %v2898 = vunpack.i.l.s16 %v2815
        %v2899 = vunpack.i.h.s16 %v2815
        %v2900 = vunpack.i.l.s16 %v2818
        %v2901 = vunpack.i.h.s16 %v2818
        %v2902 = vunpack.i.l.s16 %v2821
        %v2903 = vunpack.i.l.s16 %v2825
        %v2904 = vunpack.i.h.s16 %v2825
        %v2905 = vunpack.i.l.s16 %v2829
        %v2906 = vunpack.i.h.s16 %v2829
        %v2907 = vunpack.i.l.s16 %v2832
        %v2908 = vunpack.i.h.s16 %v2832
        %v2909 = vunpack.i.l.s16 %v2835
        %v2910 = vunpack.i.h.s16 %v2835
        %v2911 = vunpack.i.l.s16 %v2838
        %s2912 = scalar_lea.vmem %s1, 256
        %v2913 = vld [vmem:[%s2912] sm:$0xf]
        %v2914 = vld [vmem:[%s2912 + $0x4] sm:$0xf]
        %v2915 = vld [vmem:[%s2912 + $0x8] sm:$0xf]
        %v2916 = vld [vmem:[%s2912 + $0xc] sm:$0xf]
        %v2917 = vld [vmem:[%s2912 + $0x10] sm:$0xf]
        %v2918 = vld [vmem:[%s2912 + $0x14] sm:$0xf]
        %v2919 = vld [vmem:[%s2912 + $0x18] sm:$0xf]
        %v2920 = vld [vmem:[%s2912 + $0x1c] sm:$0xf]
        %v2921 = vld [vmem:[%s2912 + $0x20] sm:$0xf]
        %v2922 = vld [vmem:[%s2912 + $0x24] sm:$0xf]
        %v2923 = vld [vmem:[%s2912 + $0x28] sm:$0xf]
        %v2924 = vld [vmem:[%s2912 + $0x2c] sm:$0xf]
        %v2925 = vld [vmem:[%s2912 + $0x30] sm:$0xf]
        %v2926 = vld [vmem:[%s2912 + $0x34] sm:$0xf]
        %v2927 = vld [vmem:[%s2912 + $0x38] sm:$0xf]
        %v2928 = vld [vmem:[%s2912 + $0x3c] sm:$0xf]
        %v2929 = vpack.i.b16 %v2841, %v2840
        %v2930 = vpack.i.b16 %v2843, %v2842
        %v2931 = vpack.i.b16 %v2845, %v2844
        %v2932 = vpack.i.b16 %v2847, %v2846
        %v2933 = vpack.i.b16 %v2849, %v2848
        %v2934 = vpack.i.b16 %v2851, %v2850
        %v2935 = vpack.i.b16 %v2853, %v2852
        %v2936 = vpack.i.b16 %v2855, %v2854
        %v2937 = vpack.i.b16 %v2857, %v2856
        %v2938 = vpack.i.b16 %v2859, %v2858
        %v2939 = vpack.i.b16 %v2861, %v2860
        %v2940 = vpack.i.b16 %v2863, %v2862
        %v2941 = vpack.i.b16 %v2865, %v2864
        %v2942 = vpack.i.b16 %v2867, %v2866
        %v2943 = vpack.i.b16 %v2869, %v2868
        %v2944 = vpack.i.b16 %v2871, %v2870
        %v2945 = vpack.i.b16 %v2873, %v2872
        %v2946 = vpack.i.b16 %v2875, %v2874
        %v2947 = vpack.i.b16 %v2877, %v2876
        %v2948 = vpack.i.b16 %v2879, %v2878
        %v2949 = vpack.i.b16 %v2881, %v2880
        %v2950 = vpack.i.b16 %v2883, %v2882
        %v2951 = vpack.i.b16 %v2885, %v2884
        %v2952 = vpack.i.b16 %v2887, %v2886
        %v2953 = vpack.i.b16 %v2889, %v2888
        %v2954 = vpack.i.b16 %v2891, %v2890
        %v2955 = vpack.i.b16 %v2893, %v2892
        %v2956 = vpack.i.b16 %v2895, %v2894
        %v2957 = vpack.i.b16 %v2897, %v2896
        %v2958 = vpack.i.b16 %v2899, %v2898
        %v2959 = vpack.i.b16 %v2901, %v2900
        %v2960 = vpack.i.b16 %v2903, %v2902
        %v2961 = vpack.i.b16 %v2905, %v2904
        %v2962 = vpack.i.b16 %v2907, %v2906
        %v2963 = vpack.i.b16 %v2909, %v2908
        %v2964 = vpack.i.b16 %v2911, %v2910
        %2966 = vst [vmem:[#allocation1] ss:$9 sm:$0xff] %v2929
        %s2968 = scalar_lea.vmem [#allocation1], 1
        %2969 = vst [vmem:[%s2968] ss:$9 sm:$0xff] %v2930
        %s2971 = scalar_lea.vmem [#allocation1], 2
        %2972 = vst [vmem:[%s2971] ss:$9 sm:$0xff] %v2931
        %s2974 = scalar_lea.vmem [#allocation1], 3
        %2975 = vst [vmem:[%s2974] ss:$9 sm:$0xff] %v2932
        %s2977 = scalar_lea.vmem [#allocation1], 4
        %2978 = vst [vmem:[%s2977] ss:$9 sm:$0xff] %v2933
        %s2980 = scalar_lea.vmem [#allocation1], 5
        %2981 = vst [vmem:[%s2980] ss:$9 sm:$0xff] %v2934
        %s2983 = scalar_lea.vmem [#allocation1], 6
        %2984 = vst [vmem:[%s2983] ss:$9 sm:$0xff] %v2935
        %s2986 = scalar_lea.vmem [#allocation1], 7
        %2987 = vst [vmem:[%s2986] ss:$9 sm:$0xff] %v2936
        %v2988 = vld [vmem:[#allocation1] sm:$0xff]
        %2990 = vst [vmem:[#allocation1] ss:$9 sm:$0xff] %v2937
        %2992 = vst [vmem:[%s2968] ss:$9 sm:$0xff] %v2938
        %2994 = vst [vmem:[%s2971] ss:$9 sm:$0xff] %v2939
        %2996 = vst [vmem:[%s2974] ss:$9 sm:$0xff] %v2940
        %2998 = vst [vmem:[%s2977] ss:$9 sm:$0xff] %v2941
        %3000 = vst [vmem:[%s2980] ss:$9 sm:$0xff] %v2942
        %3002 = vst [vmem:[%s2983] ss:$9 sm:$0xff] %v2943
        %3004 = vst [vmem:[%s2986] ss:$9 sm:$0xff] %v2944
        %v3005 = vld [vmem:[#allocation1] sm:$0xff]
        %3007 = vst [vmem:[#allocation1] ss:$9 sm:$0xff] %v2945
        %3009 = vst [vmem:[%s2968] ss:$9 sm:$0xff] %v2946
        %3011 = vst [vmem:[%s2971] ss:$9 sm:$0xff] %v2947
        %3013 = vst [vmem:[%s2974] ss:$9 sm:$0xff] %v2948
        %3015 = vst [vmem:[%s2977] ss:$9 sm:$0xff] %v2949
        %3017 = vst [vmem:[%s2980] ss:$9 sm:$0xff] %v2950
        %3019 = vst [vmem:[%s2983] ss:$9 sm:$0xff] %v2951
        %3021 = vst [vmem:[%s2986] ss:$9 sm:$0xff] %v2952
        %v3022 = vld [vmem:[#allocation1] sm:$0xff]
        %3024 = vst [vmem:[#allocation1] ss:$9 sm:$0xff] %v2953
        %3026 = vst [vmem:[%s2968] ss:$9 sm:$0xff] %v2954
        %3028 = vst [vmem:[%s2971] ss:$9 sm:$0xff] %v2955
        %3030 = vst [vmem:[%s2974] ss:$9 sm:$0xff] %v2956
        %3032 = vst [vmem:[%s2977] ss:$9 sm:$0xff] %v2957
        %3034 = vst [vmem:[%s2980] ss:$9 sm:$0xff] %v2958
        %3036 = vst [vmem:[%s2983] ss:$9 sm:$0xff] %v2959
        %3038 = vst [vmem:[%s2986] ss:$9 sm:$0xff] %v2960
        %v3039 = vld [vmem:[#allocation1] sm:$0xff]
        %3041 = vst [vmem:[#allocation1] ss:$9 sm:$0xff] %v2961
        %3043 = vst [vmem:[%s2968] ss:$9 sm:$0xff] %v2962
        %3045 = vst [vmem:[%s2971] ss:$9 sm:$0xff] %v2963
        %3047 = vst [vmem:[%s2974] ss:$9 sm:$0xff] %v2964
        %v3048 = vld [vmem:[#allocation1] sm:$0xff]
        %v3070 = vunpack.c.l.b16 %v2913
        %v3071 = vunpack.c.l.b16 %v2914
        %v3072 = vunpack.c.l.b16 %v2915
        %v3073 = vunpack.c.l.b16 %v2916
        %v3074 = vunpack.c.l.b16 %v2917
        %v3075 = vunpack.c.l.b16 %v2918
        %v3076 = vunpack.c.l.b16 %v2919
        %v3077 = vunpack.c.l.b16 %v2920
        %v3078 = vunpack.c.l.b16 %v2921
        %v3079 = vunpack.c.l.b16 %v2922
        %v3080 = vunpack.c.l.b16 %v2923
        %v3081 = vunpack.c.l.b16 %v2924
        %v3082 = vunpack.c.l.b16 %v2925
        %v3083 = vunpack.c.l.b16 %v2926
        %v3084 = vunpack.c.l.b16 %v2927
        %v3085 = vunpack.c.l.b16 %v2928
        %v3086 = vpack.c.b16 %v3071, %v3070
        %v3087 = vpack.c.b16 %v3073, %v3072
        %v3088 = vpack.c.b16 %v3075, %v3074
        %v3089 = vpack.c.b16 %v3077, %v3076
        %v3090 = vpack.c.b16 %v3079, %v3078
        %v3091 = vpack.c.b16 %v3081, %v3080
        %v3092 = vpack.c.b16 %v3083, %v3082
        %v3093 = vpack.c.b16 %v3085, %v3084
        %3102 = vmatpush.bf16.msra.mxu0 %v3093
        %3103 = vmatpush.bf16.msra.mxu0 %v3092
        %3104 = vmatpush.bf16.msra.mxu0 %v3091
        %3105 = vmatpush.bf16.msra.mxu0 %v3090
        %3106 = vmatpush.bf16.msra.mxu0 %v3089
        %3107 = vmatpush.bf16.msra.mxu0 %v3088
        %3108 = vmatpush.bf16.msra.mxu0 %v3087
        %3109 = vmatpush.bf16.msra.mxu0 %v3086
        %3110 = vmatmul.bf16.gmra.mxu0 %v2988
        %v3111 = vpop.f32.mrf.mxu0
        %v3112 = vadd.f32 0.0, %v3111
        %v3113 = vpop.f32.mrf.mxu0
        %v3114 = vadd.f32 0.0, %v3113
        %3115 = vmatmul.bf16.gmra.mxu0 %v3005
        %v3116 = vpop.f32.mrf.mxu0
        %v3117 = vadd.f32 0.0, %v3116
        %v3118 = vpop.f32.mrf.mxu0
        %v3119 = vadd.f32 0.0, %v3118
        %3120 = vmatmul.bf16.gmra.mxu0 %v3022
        %v3121 = vpop.f32.mrf.mxu0
        %v3122 = vadd.f32 0.0, %v3121
        %v3123 = vpop.f32.mrf.mxu0
        %v3124 = vadd.f32 0.0, %v3123
        %3125 = vmatmul.bf16.gmra.mxu0 %v3039
        %v3126 = vpop.f32.mrf.mxu0
        %v3127 = vadd.f32 0.0, %v3126
        %v3128 = vpop.f32.mrf.mxu0
        %v3129 = vadd.f32 0.0, %v3128
        %3130 = vmatmul.bf16.gmra.mxu0 %v3048
        %v3131 = vpop.f32.mrf.mxu0
        %v3132 = vadd.f32 0.0, %v3131
        %v3133 = vpop.f32.mrf.mxu0
        %3134 = vdwg.mxu0
        %v3144 = vrot.slane %v3112, 1
        %v3145 = vrot.slane %v3112, 2
        %v3146 = vrot.slane %v3112, 3
        %v3147 = vrot.slane %v3112, 4
        %v3148 = vrot.slane %v3112, 5
        %v3149 = vrot.slane %v3112, 6
        %v3150 = vrot.slane %v3112, 7
        %v3151 = vrot.slane %v3114, 1
        %v3152 = vrot.slane %v3114, 2
        %v3153 = vrot.slane %v3114, 3
        %v3154 = vrot.slane %v3114, 4
        %v3155 = vrot.slane %v3114, 5
        %v3156 = vrot.slane %v3114, 6
        %v3157 = vrot.slane %v3114, 7
        %v3158 = vrot.slane %v3117, 2
        %v3159 = vrot.slane %v3117, 3
        %v3160 = vrot.slane %v3117, 4
        %v3161 = vrot.slane %v3117, 5
        %v3162 = vrot.slane %v3117, 6
        %v3163 = vrot.slane %v3117, 7
        %v3164 = vrot.slane %v3119, 1
        %v3165 = vrot.slane %v3119, 3
        %v3166 = vrot.slane %v3119, 4
        %v3167 = vrot.slane %v3119, 5
        %v3168 = vrot.slane %v3119, 6
        %v3169 = vrot.slane %v3119, 7
        %v3170 = vrot.slane %v3122, 1
        %v3171 = vrot.slane %v3122, 2
        %v3172 = vrot.slane %v3122, 4
        %v3173 = vrot.slane %v3122, 5
        %v3174 = vrot.slane %v3122, 6
        %v3175 = vrot.slane %v3122, 7
        %v3176 = vrot.slane %v3124, 1
        %v3177 = vrot.slane %v3124, 2
        %v3178 = vrot.slane %v3124, 3
        %v3179 = vrot.slane %v3124, 5
        %v3180 = vrot.slane %v3124, 6
        %v3181 = vrot.slane %v3124, 7
        %v3182 = vrot.slane %v3127, 1
        %v3183 = vrot.slane %v3127, 2
        %v3184 = vrot.slane %v3127, 3
        %v3185 = vrot.slane %v3127, 4
        %v3186 = vrot.slane %v3127, 6
        %v3187 = vrot.slane %v3127, 7
        %v3188 = vrot.slane %v3129, 1
        %v3189 = vrot.slane %v3129, 2
        %v3190 = vrot.slane %v3129, 3
        %v3191 = vrot.slane %v3129, 4
        %v3192 = vrot.slane %v3129, 5
        %v3193 = vrot.slane %v3129, 7
        %v3194 = vrot.slane %v3132, 1
        %v3195 = vrot.slane %v3132, 2
        %v3196 = vrot.slane %v3132, 3
        %v3197 = vrot.slane %v3132, 4
        %v3198 = vrot.slane %v3132, 5
        %v3199 = vrot.slane %v3132, 6
        %v3256 = vadd.f32 %v2591, %v3112
        %v3257 = vadd.f32 %v2592, %v3144
        %v3258 = vadd.f32 %v2593, %v3145
        %v3259 = vadd.f32 %v2594, %v3146
        %v3260 = vadd.f32 %v2595, %v3147
        %v3261 = vadd.f32 %v2596, %v3148
        %v3262 = vadd.f32 %v2597, %v3149
        %v3263 = vadd.f32 %v2598, %v3150
        %v3264 = vadd.f32 %v2599, %v3151
        %v3265 = vadd.f32 %v2600, %v3152
        %v3266 = vadd.f32 %v2601, %v3153
        %v3267 = vadd.f32 %v2602, %v3154
        %v3268 = vadd.f32 %v2603, %v3155
        %v3269 = vadd.f32 %v2604, %v3156
        %v3270 = vadd.f32 %v2605, %v3157
        %v3271 = vadd.f32 %v2606, %v3117
        %v3272 = vadd.f32 %v2607, %v3158
        %v3273 = vadd.f32 %v2608, %v3159
        %v3274 = vadd.f32 %v2609, %v3160
        %v3275 = vadd.f32 %v2610, %v3161
        %v3276 = vadd.f32 %v2611, %v3162
        %v3277 = vadd.f32 %v2612, %v3163
        %v3278 = vadd.f32 %v2613, %v3119
        %v3279 = vadd.f32 %v2614, %v3164
        %v3280 = vadd.f32 %v2615, %v3165
        %v3281 = vadd.f32 %v2616, %v3166
        %v3282 = vadd.f32 %v2617, %v3167
        %v3283 = vadd.f32 %v2618, %v3168
        %v3284 = vadd.f32 %v2619, %v3169
        %v3285 = vadd.f32 %v2620, %v3122
        %v3286 = vadd.f32 %v2621, %v3170
        %v3287 = vadd.f32 %v2622, %v3171
        %v3288 = vadd.f32 %v2623, %v3172
        %v3289 = vadd.f32 %v2624, %v3173
        %v3290 = vadd.f32 %v2625, %v3174
        %v3291 = vadd.f32 %v2626, %v3175
        %v3292 = vadd.f32 %v2627, %v3124
        %v3293 = vadd.f32 %v2628, %v3176
        %v3294 = vadd.f32 %v2629, %v3177
        %v3295 = vadd.f32 %v2630, %v3178
        %v3296 = vadd.f32 %v2631, %v3179
        %v3297 = vadd.f32 %v2632, %v3180
        %v3298 = vadd.f32 %v2633, %v3181
        %v3299 = vadd.f32 %v2634, %v3127
        %v3300 = vadd.f32 %v2635, %v3182
        %v3301 = vadd.f32 %v2636, %v3183
        %v3302 = vadd.f32 %v2637, %v3184
        %v3303 = vadd.f32 %v2638, %v3185
        %v3304 = vadd.f32 %v2639, %v3186
        %v3305 = vadd.f32 %v2640, %v3187
        %v3306 = vadd.f32 %v2641, %v3129
        %v3307 = vadd.f32 %v2642, %v3188
        %v3308 = vadd.f32 %v2643, %v3189
        %v3309 = vadd.f32 %v2644, %v3190
        %v3310 = vadd.f32 %v2645, %v3191
        %v3311 = vadd.f32 %v2646, %v3192
        %v3312 = vadd.f32 %v2647, %v3193
        %v3313 = vadd.f32 %v2648, %v3132
        %v3314 = vadd.f32 %v2649, %v3194
        %v3315 = vadd.f32 %v2650, %v3195
        %v3316 = vadd.f32 %v2651, %v3196
        %v3317 = vadd.f32 %v2652, %v3197
        %v3318 = vadd.f32 %v2653, %v3198
        %v3319 = vadd.f32 %v2654, %v3199
        %s3320 = scalar_lea.vmem %s1, 320
        %v3321 = vld [vmem:[%s3320] sm:$0xf]
        %v3322 = vld [vmem:[%s3320 + $0x4] sm:$0xf]
        %v3323 = vld [vmem:[%s3320 + $0x8] sm:$0xf]
        %v3324 = vld [vmem:[%s3320 + $0xc] sm:$0xf]
        %v3325 = vld [vmem:[%s3320 + $0x10] sm:$0xf]
        %v3326 = vld [vmem:[%s3320 + $0x14] sm:$0xf]
        %v3327 = vld [vmem:[%s3320 + $0x18] sm:$0xf]
        %v3328 = vld [vmem:[%s3320 + $0x1c] sm:$0xf]
        %v3329 = vld [vmem:[%s3320 + $0x20] sm:$0xf]
        %v3330 = vld [vmem:[%s3320 + $0x24] sm:$0xf]
        %v3331 = vld [vmem:[%s3320 + $0x28] sm:$0xf]
        %v3332 = vld [vmem:[%s3320 + $0x2c] sm:$0xf]
        %v3333 = vld [vmem:[%s3320 + $0x30] sm:$0xf]
        %v3334 = vld [vmem:[%s3320 + $0x34] sm:$0xf]
        %v3335 = vld [vmem:[%s3320 + $0x38] sm:$0xf]
        %v3336 = vld [vmem:[%s3320 + $0x3c] sm:$0xf]
        %3337 = vst [vmem:[#allocation1] ss:$9 sm:$0xff] %v2264
        %s3338 = scalar_lea.vmem [#allocation1], 1
        %3339 = vst [vmem:[%s3338] ss:$9 sm:$0xff] %v2265
        %s3340 = scalar_lea.vmem [#allocation1], 2
        %3341 = vst [vmem:[%s3340] ss:$9 sm:$0xff] %v2266
        %s3342 = scalar_lea.vmem [#allocation1], 3
        %3343 = vst [vmem:[%s3342] ss:$9 sm:$0xff] %v2267
        %s3344 = scalar_lea.vmem [#allocation1], 4
        %3345 = vst [vmem:[%s3344] ss:$9 sm:$0xff] %v2268
        %s3346 = scalar_lea.vmem [#allocation1], 5
        %3347 = vst [vmem:[%s3346] ss:$9 sm:$0xff] %v2269
        %s3348 = scalar_lea.vmem [#allocation1], 6
        %3349 = vst [vmem:[%s3348] ss:$9 sm:$0xff] %v2270
        %s3350 = scalar_lea.vmem [#allocation1], 7
        %3351 = vst [vmem:[%s3350] ss:$9 sm:$0xff] %v2271
        %v3352 = vld [vmem:[#allocation1] sm:$0xff]
        %3353 = vst [vmem:[#allocation1] ss:$9 sm:$0xff] %v2272
        %3354 = vst [vmem:[%s3338] ss:$9 sm:$0xff] %v2273
        %3355 = vst [vmem:[%s3340] ss:$9 sm:$0xff] %v2274
        %3356 = vst [vmem:[%s3342] ss:$9 sm:$0xff] %v2275
        %3357 = vst [vmem:[%s3344] ss:$9 sm:$0xff] %v2276
        %3358 = vst [vmem:[%s3346] ss:$9 sm:$0xff] %v2277
        %3359 = vst [vmem:[%s3348] ss:$9 sm:$0xff] %v2278
        %3360 = vst [vmem:[%s3350] ss:$9 sm:$0xff] %v2279
        %v3361 = vld [vmem:[#allocation1] sm:$0xff]
        %3362 = vst [vmem:[#allocation1] ss:$9 sm:$0xff] %v2280
        %3363 = vst [vmem:[%s3338] ss:$9 sm:$0xff] %v2281
        %3364 = vst [vmem:[%s3340] ss:$9 sm:$0xff] %v2282
        %3365 = vst [vmem:[%s3342] ss:$9 sm:$0xff] %v2283
        %3366 = vst [vmem:[%s3344] ss:$9 sm:$0xff] %v2284
        %3367 = vst [vmem:[%s3346] ss:$9 sm:$0xff] %v2285
        %3368 = vst [vmem:[%s3348] ss:$9 sm:$0xff] %v2286
        %3369 = vst [vmem:[%s3350] ss:$9 sm:$0xff] %v2287
        %v3370 = vld [vmem:[#allocation1] sm:$0xff]
        %3371 = vst [vmem:[#allocation1] ss:$9 sm:$0xff] %v2288
        %3372 = vst [vmem:[%s3338] ss:$9 sm:$0xff] %v2289
        %3373 = vst [vmem:[%s3340] ss:$9 sm:$0xff] %v2290
        %3374 = vst [vmem:[%s3342] ss:$9 sm:$0xff] %v2291
        %3375 = vst [vmem:[%s3344] ss:$9 sm:$0xff] %v2292
        %3376 = vst [vmem:[%s3346] ss:$9 sm:$0xff] %v2293
        %3377 = vst [vmem:[%s3348] ss:$9 sm:$0xff] %v2294
        %3378 = vst [vmem:[%s3350] ss:$9 sm:$0xff] %v2295
        %v3379 = vld [vmem:[#allocation1] sm:$0xff]
        %3380 = vst [vmem:[#allocation1] ss:$9 sm:$0xff] %v2296
        %3381 = vst [vmem:[%s3338] ss:$9 sm:$0xff] %v2297
        %3382 = vst [vmem:[%s3340] ss:$9 sm:$0xff] %v2298
        %3383 = vst [vmem:[%s3342] ss:$9 sm:$0xff] %v2299
        %v3384 = vld [vmem:[#allocation1] sm:$0xff]
        %v3406 = vunpack.c.l.b16 %v3321
        %v3407 = vunpack.c.l.b16 %v3322
        %v3408 = vunpack.c.l.b16 %v3323
        %v3409 = vunpack.c.l.b16 %v3324
        %v3410 = vunpack.c.l.b16 %v3325
        %v3411 = vunpack.c.l.b16 %v3326
        %v3412 = vunpack.c.l.b16 %v3327
        %v3413 = vunpack.c.l.b16 %v3328
        %v3414 = vunpack.c.l.b16 %v3329
        %v3415 = vunpack.c.l.b16 %v3330
        %v3416 = vunpack.c.l.b16 %v3331
        %v3417 = vunpack.c.l.b16 %v3332
        %v3418 = vunpack.c.l.b16 %v3333
        %v3419 = vunpack.c.l.b16 %v3334
        %v3420 = vunpack.c.l.b16 %v3335
        %v3421 = vunpack.c.l.b16 %v3336
        %v3422 = vpack.c.b16 %v3407, %v3406
        %v3423 = vpack.c.b16 %v3409, %v3408
        %v3424 = vpack.c.b16 %v3411, %v3410
        %v3425 = vpack.c.b16 %v3413, %v3412
        %v3426 = vpack.c.b16 %v3415, %v3414
        %v3427 = vpack.c.b16 %v3417, %v3416
        %v3428 = vpack.c.b16 %v3419, %v3418
        %v3429 = vpack.c.b16 %v3421, %v3420
        %3438 = vmatpush.bf16.msra.mxu0 %v3429
        %3439 = vmatpush.bf16.msra.mxu0 %v3428
        %3440 = vmatpush.bf16.msra.mxu0 %v3427
        %3441 = vmatpush.bf16.msra.mxu0 %v3426
        %3442 = vmatpush.bf16.msra.mxu0 %v3425
        %3443 = vmatpush.bf16.msra.mxu0 %v3424
        %3444 = vmatpush.bf16.msra.mxu0 %v3423
        %3445 = vmatpush.bf16.msra.mxu0 %v3422
        %3446 = vmatmul.bf16.gmra.mxu0 %v3352
        %v3447 = vpop.f32.mrf.mxu0
        %v3448 = vadd.f32 0.0, %v3447
        %v3449 = vpop.f32.mrf.mxu0
        %v3450 = vadd.f32 0.0, %v3449
        %3451 = vmatmul.bf16.gmra.mxu0 %v3361
        %v3452 = vpop.f32.mrf.mxu0
        %v3453 = vadd.f32 0.0, %v3452
        %v3454 = vpop.f32.mrf.mxu0
        %v3455 = vadd.f32 0.0, %v3454
        %3456 = vmatmul.bf16.gmra.mxu0 %v3370
        %v3457 = vpop.f32.mrf.mxu0
        %v3458 = vadd.f32 0.0, %v3457
        %v3459 = vpop.f32.mrf.mxu0
        %v3460 = vadd.f32 0.0, %v3459
        %3461 = vmatmul.bf16.gmra.mxu0 %v3379
        %v3462 = vpop.f32.mrf.mxu0
        %v3463 = vadd.f32 0.0, %v3462
        %v3464 = vpop.f32.mrf.mxu0
        %v3465 = vadd.f32 0.0, %v3464
        %3466 = vmatmul.bf16.gmra.mxu0 %v3384
        %v3467 = vpop.f32.mrf.mxu0
        %v3468 = vadd.f32 0.0, %v3467
        %v3469 = vpop.f32.mrf.mxu0
        %3470 = vdwg.mxu0
        %v3480 = vrot.slane %v3448, 1
        %v3481 = vrot.slane %v3448, 2
        %v3482 = vrot.slane %v3448, 3
        %v3483 = vrot.slane %v3448, 4
        %v3484 = vrot.slane %v3448, 5
        %v3485 = vrot.slane %v3448, 6
        %v3486 = vrot.slane %v3448, 7
        %v3487 = vrot.slane %v3450, 2
        %v3488 = vrot.slane %v3450, 3
        %v3489 = vrot.slane %v3450, 4
        %v3490 = vrot.slane %v3450, 5
        %v3491 = vrot.slane %v3450, 6
        %v3492 = vrot.slane %v3450, 7
        %v3493 = vrot.slane %v3453, 1
        %v3494 = vrot.slane %v3453, 3
        %v3495 = vrot.slane %v3453, 4
        %v3496 = vrot.slane %v3453, 5
        %v3497 = vrot.slane %v3453, 6
        %v3498 = vrot.slane %v3453, 7
        %v3499 = vrot.slane %v3455, 1
        %v3500 = vrot.slane %v3455, 2
        %v3501 = vrot.slane %v3455, 4
        %v3502 = vrot.slane %v3455, 5
        %v3503 = vrot.slane %v3455, 6
        %v3504 = vrot.slane %v3455, 7
        %v3505 = vrot.slane %v3458, 1
        %v3506 = vrot.slane %v3458, 2
        %v3507 = vrot.slane %v3458, 3
        %v3508 = vrot.slane %v3458, 5
        %v3509 = vrot.slane %v3458, 6
        %v3510 = vrot.slane %v3458, 7
        %v3511 = vrot.slane %v3460, 1
        %v3512 = vrot.slane %v3460, 2
        %v3513 = vrot.slane %v3460, 3
        %v3514 = vrot.slane %v3460, 4
        %v3515 = vrot.slane %v3460, 6
        %v3516 = vrot.slane %v3460, 7
        %v3517 = vrot.slane %v3463, 1
        %v3518 = vrot.slane %v3463, 2
        %v3519 = vrot.slane %v3463, 3
        %v3520 = vrot.slane %v3463, 4
        %v3521 = vrot.slane %v3463, 5
        %v3522 = vrot.slane %v3463, 7
        %v3523 = vrot.slane %v3465, 1
        %v3524 = vrot.slane %v3465, 2
        %v3525 = vrot.slane %v3465, 3
        %v3526 = vrot.slane %v3465, 4
        %v3527 = vrot.slane %v3465, 5
        %v3528 = vrot.slane %v3465, 6
        %v3529 = vrot.slane %v3468, 1
        %v3530 = vrot.slane %v3468, 2
        %v3531 = vrot.slane %v3468, 3
        %v3532 = vrot.slane %v3468, 4
        %v3533 = vrot.slane %v3468, 5
        %v3534 = vrot.slane %v3468, 6
        %v3535 = vrot.slane %v3468, 7
        %v3592 = vadd.f32 %v3256, %v3480
        %v3593 = vadd.f32 %v3257, %v3481
        %v3594 = vadd.f32 %v3258, %v3482
        %v3595 = vadd.f32 %v3259, %v3483
        %v3596 = vadd.f32 %v3260, %v3484
        %v3597 = vadd.f32 %v3261, %v3485
        %v3598 = vadd.f32 %v3262, %v3486
        %v3599 = vadd.f32 %v3263, %v3450
        %v3600 = vadd.f32 %v3264, %v3487
        %v3601 = vadd.f32 %v3265, %v3488
        %v3602 = vadd.f32 %v3266, %v3489
        %v3603 = vadd.f32 %v3267, %v3490
        %v3604 = vadd.f32 %v3268, %v3491
        %v3605 = vadd.f32 %v3269, %v3492
        %v3606 = vadd.f32 %v3270, %v3453
        %v3607 = vadd.f32 %v3271, %v3493
        %v3608 = vadd.f32 %v3272, %v3494
        %v3609 = vadd.f32 %v3273, %v3495
        %v3610 = vadd.f32 %v3274, %v3496
        %v3611 = vadd.f32 %v3275, %v3497
        %v3612 = vadd.f32 %v3276, %v3498
        %v3613 = vadd.f32 %v3277, %v3455
        %v3614 = vadd.f32 %v3278, %v3499
        %v3615 = vadd.f32 %v3279, %v3500
        %v3616 = vadd.f32 %v3280, %v3501
        %v3617 = vadd.f32 %v3281, %v3502
        %v3618 = vadd.f32 %v3282, %v3503
        %v3619 = vadd.f32 %v3283, %v3504
        %v3620 = vadd.f32 %v3284, %v3458
        %v3621 = vadd.f32 %v3285, %v3505
        %v3622 = vadd.f32 %v3286, %v3506
        %v3623 = vadd.f32 %v3287, %v3507
        %v3624 = vadd.f32 %v3288, %v3508
        %v3625 = vadd.f32 %v3289, %v3509
        %v3626 = vadd.f32 %v3290, %v3510
        %v3627 = vadd.f32 %v3291, %v3460
        %v3628 = vadd.f32 %v3292, %v3511
        %v3629 = vadd.f32 %v3293, %v3512
        %v3630 = vadd.f32 %v3294, %v3513
        %v3631 = vadd.f32 %v3295, %v3514
        %v3632 = vadd.f32 %v3296, %v3515
        %v3633 = vadd.f32 %v3297, %v3516
        %v3634 = vadd.f32 %v3298, %v3463
        %v3635 = vadd.f32 %v3299, %v3517
        %v3636 = vadd.f32 %v3300, %v3518
        %v3637 = vadd.f32 %v3301, %v3519
        %v3638 = vadd.f32 %v3302, %v3520
        %v3639 = vadd.f32 %v3303, %v3521
        %v3640 = vadd.f32 %v3304, %v3522
        %v3641 = vadd.f32 %v3305, %v3465
        %v3642 = vadd.f32 %v3306, %v3523
        %v3643 = vadd.f32 %v3307, %v3524
        %v3644 = vadd.f32 %v3308, %v3525
        %v3645 = vadd.f32 %v3309, %v3526
        %v3646 = vadd.f32 %v3310, %v3527
        %v3647 = vadd.f32 %v3311, %v3528
        %v3648 = vadd.f32 %v3312, %v3468
        %v3649 = vadd.f32 %v3313, %v3529
        %v3650 = vadd.f32 %v3314, %v3530
        %v3651 = vadd.f32 %v3315, %v3531
        %v3652 = vadd.f32 %v3316, %v3532
        %v3653 = vadd.f32 %v3317, %v3533
        %v3654 = vadd.f32 %v3318, %v3534
        %v3655 = vadd.f32 %v3319, %v3535
        %s3656 = scalar_lea.vmem %s338, 8
        %v3657 = vld [vmem:[%s3656] sm:$0xf]
        %v3658 = vld [vmem:[%s3656 + $0x4] sm:$0x1]
        %v3659 = vld [vmem:[%s3656 + $0x8] sm:$0xf]
        %v3660 = vld [vmem:[%s3656 + $0xc] sm:$0x1]
        %v3661 = vld [vmem:[%s3656 + $0x10] sm:$0xf]
        %v3662 = vld [vmem:[%s3656 + $0x14] sm:$0x1]
        %v3663 = vld [vmem:[%s3656 + $0x18] sm:$0xf]
        %v3664 = vld [vmem:[%s3656 + $0x1c] sm:$0x1]
        %v3665 = vld [vmem:[%s3656 + $0x20] sm:$0xf]
        %v3666 = vld [vmem:[%s3656 + $0x24] sm:$0x1]
        %v3667 = vld [vmem:[%s3656 + $0x28] sm:$0xf]
        %v3668 = vld [vmem:[%s3656 + $0x2c] sm:$0x1]
        %v3669 = vld [vmem:[%s3656 + $0x30] sm:$0xf]
        %v3670 = vld [vmem:[%s3656 + $0x34] sm:$0x1]
        %v3671 = vld [vmem:[%s3656 + $0x38] sm:$0xf]
        %v3672 = vld [vmem:[%s3656 + $0x3c] sm:$0x1]
        %v3689 = vrot.slane %v3657, 3
        %v3690 = vrot.slane %v3658, 3
        %v3691 = vrot.slane %v3659, 3
        %v3692 = vrot.slane %v3660, 3
        %v3693 = vrot.slane %v3661, 3
        %v3694 = vrot.slane %v3662, 3
        %v3695 = vrot.slane %v3663, 3
        %v3696 = vrot.slane %v3664, 3
        %v3697 = vrot.slane %v3665, 3
        %v3698 = vrot.slane %v3666, 3
        %v3699 = vrot.slane %v3667, 3
        %v3700 = vrot.slane %v3668, 3
        %v3701 = vrot.slane %v3669, 3
        %v3702 = vrot.slane %v3670, 3
        %v3703 = vrot.slane %v3671, 3
        %v3704 = vrot.slane %v3672, 3
        %v3707 = vsel %vm434, %v3657, %v3689
        %v3709 = vsel %vm439, %v3657, %v3689
        %v3711 = vrot.slane %v3709, 1
        %v3712 = vsel %vm443, %v3657, %v3689
        %v3714 = vrot.slane %v3712, 2
        %v3715 = vsel %vm447, %v3657, %v3689
        %v3717 = vrot.slane %v3715, 3
        %v3720 = vsel %vm434, %v3658, %v3690
        %v3724 = vsel %vm434, %v3659, %v3691
        %v3726 = vsel %vm439, %v3659, %v3691
        %v3728 = vrot.slane %v3726, 1
        %v3729 = vsel %vm443, %v3659, %v3691
        %v3731 = vrot.slane %v3729, 2
        %v3732 = vsel %vm447, %v3659, %v3691
        %v3734 = vrot.slane %v3732, 3
        %v3737 = vsel %vm434, %v3660, %v3692
        %v3741 = vsel %vm434, %v3661, %v3693
        %v3743 = vsel %vm439, %v3661, %v3693
        %v3745 = vrot.slane %v3743, 1
        %v3746 = vsel %vm443, %v3661, %v3693
        %v3748 = vrot.slane %v3746, 2
        %v3749 = vsel %vm447, %v3661, %v3693
        %v3751 = vrot.slane %v3749, 3
        %v3754 = vsel %vm434, %v3662, %v3694
        %v3758 = vsel %vm434, %v3663, %v3695
        %v3760 = vsel %vm439, %v3663, %v3695
        %v3762 = vrot.slane %v3760, 1
        %v3763 = vsel %vm443, %v3663, %v3695
        %v3765 = vrot.slane %v3763, 2
        %v3766 = vsel %vm447, %v3663, %v3695
        %v3768 = vrot.slane %v3766, 3
        %v3771 = vsel %vm434, %v3664, %v3696
        %v3775 = vsel %vm434, %v3665, %v3697
        %v3777 = vsel %vm439, %v3665, %v3697
        %v3779 = vrot.slane %v3777, 1
        %v3780 = vsel %vm443, %v3665, %v3697
        %v3782 = vrot.slane %v3780, 2
        %v3783 = vsel %vm447, %v3665, %v3697
        %v3785 = vrot.slane %v3783, 3
        %v3788 = vsel %vm434, %v3666, %v3698
        %v3792 = vsel %vm434, %v3667, %v3699
        %v3794 = vsel %vm439, %v3667, %v3699
        %v3796 = vrot.slane %v3794, 1
        %v3797 = vsel %vm443, %v3667, %v3699
        %v3799 = vrot.slane %v3797, 2
        %v3800 = vsel %vm447, %v3667, %v3699
        %v3802 = vrot.slane %v3800, 3
        %v3805 = vsel %vm434, %v3668, %v3700
        %v3809 = vsel %vm434, %v3669, %v3701
        %v3811 = vsel %vm439, %v3669, %v3701
        %v3813 = vrot.slane %v3811, 1
        %v3814 = vsel %vm443, %v3669, %v3701
        %v3816 = vrot.slane %v3814, 2
        %v3817 = vsel %vm447, %v3669, %v3701
        %v3819 = vrot.slane %v3817, 3
        %v3822 = vsel %vm434, %v3670, %v3702
        %v3826 = vsel %vm434, %v3671, %v3703
        %v3828 = vsel %vm439, %v3671, %v3703
        %v3830 = vrot.slane %v3828, 1
        %v3831 = vsel %vm443, %v3671, %v3703
        %v3833 = vrot.slane %v3831, 2
        %v3834 = vsel %vm447, %v3671, %v3703
        %v3836 = vrot.slane %v3834, 3
        %v3839 = vsel %vm434, %v3672, %v3704
        %v3841 = vunpack.i.l.s16 %v3707
        %v3842 = vunpack.i.h.s16 %v3707
        %v3843 = vunpack.i.l.s16 %v3711
        %v3844 = vunpack.i.h.s16 %v3711
        %v3845 = vunpack.i.l.s16 %v3714
        %v3846 = vunpack.i.h.s16 %v3714
        %v3847 = vunpack.i.l.s16 %v3717
        %v3848 = vunpack.i.h.s16 %v3717
        %v3849 = vunpack.i.l.s16 %v3720
        %v3850 = vunpack.i.l.s16 %v3724
        %v3851 = vunpack.i.h.s16 %v3724
        %v3852 = vunpack.i.l.s16 %v3728
        %v3853 = vunpack.i.h.s16 %v3728
        %v3854 = vunpack.i.l.s16 %v3731
        %v3855 = vunpack.i.h.s16 %v3731
        %v3856 = vunpack.i.l.s16 %v3734
        %v3857 = vunpack.i.h.s16 %v3734
        %v3858 = vunpack.i.l.s16 %v3737
        %v3859 = vunpack.i.l.s16 %v3741
        %v3860 = vunpack.i.h.s16 %v3741
        %v3861 = vunpack.i.l.s16 %v3745
        %v3862 = vunpack.i.h.s16 %v3745
        %v3863 = vunpack.i.l.s16 %v3748
        %v3864 = vunpack.i.h.s16 %v3748
        %v3865 = vunpack.i.l.s16 %v3751
        %v3866 = vunpack.i.h.s16 %v3751
        %v3867 = vunpack.i.l.s16 %v3754
        %v3868 = vunpack.i.l.s16 %v3758
        %v3869 = vunpack.i.h.s16 %v3758
        %v3870 = vunpack.i.l.s16 %v3762
        %v3871 = vunpack.i.h.s16 %v3762
        %v3872 = vunpack.i.l.s16 %v3765
        %v3873 = vunpack.i.h.s16 %v3765
        %v3874 = vunpack.i.l.s16 %v3768
        %v3875 = vunpack.i.h.s16 %v3768
        %v3876 = vunpack.i.l.s16 %v3771
        %v3877 = vunpack.i.l.s16 %v3775
        %v3878 = vunpack.i.h.s16 %v3775
        %v3879 = vunpack.i.l.s16 %v3779
        %v3880 = vunpack.i.h.s16 %v3779
        %v3881 = vunpack.i.l.s16 %v3782
        %v3882 = vunpack.i.h.s16 %v3782
        %v3883 = vunpack.i.l.s16 %v3785
        %v3884 = vunpack.i.h.s16 %v3785
        %v3885 = vunpack.i.l.s16 %v3788
        %v3886 = vunpack.i.l.s16 %v3792
        %v3887 = vunpack.i.h.s16 %v3792
        %v3888 = vunpack.i.l.s16 %v3796
        %v3889 = vunpack.i.h.s16 %v3796
        %v3890 = vunpack.i.l.s16 %v3799
        %v3891 = vunpack.i.h.s16 %v3799
        %v3892 = vunpack.i.l.s16 %v3802
        %v3893 = vunpack.i.h.s16 %v3802
        %v3894 = vunpack.i.l.s16 %v3805
        %v3895 = vunpack.i.l.s16 %v3809
        %v3896 = vunpack.i.h.s16 %v3809
        %v3897 = vunpack.i.l.s16 %v3813
        %v3898 = vunpack.i.h.s16 %v3813
        %v3899 = vunpack.i.l.s16 %v3816
        %v3900 = vunpack.i.h.s16 %v3816
        %v3901 = vunpack.i.l.s16 %v3819
        %v3902 = vunpack.i.h.s16 %v3819
        %v3903 = vunpack.i.l.s16 %v3822
        %v3904 = vunpack.i.l.s16 %v3826
        %v3905 = vunpack.i.h.s16 %v3826
        %v3906 = vunpack.i.l.s16 %v3830
        %v3907 = vunpack.i.h.s16 %v3830
        %v3908 = vunpack.i.l.s16 %v3833
        %v3909 = vunpack.i.h.s16 %v3833
        %v3910 = vunpack.i.l.s16 %v3836
        %v3911 = vunpack.i.h.s16 %v3836
        %v3912 = vunpack.i.l.s16 %v3839
        %s3913 = scalar_lea.vmem %s1, 384
        %v3914 = vld [vmem:[%s3913] sm:$0xf]
        %v3915 = vld [vmem:[%s3913 + $0x4] sm:$0xf]
        %v3916 = vld [vmem:[%s3913 + $0x8] sm:$0xf]
        %v3917 = vld [vmem:[%s3913 + $0xc] sm:$0xf]
        %v3918 = vld [vmem:[%s3913 + $0x10] sm:$0xf]
        %v3919 = vld [vmem:[%s3913 + $0x14] sm:$0xf]
        %v3920 = vld [vmem:[%s3913 + $0x18] sm:$0xf]
        %v3921 = vld [vmem:[%s3913 + $0x1c] sm:$0xf]
        %v3922 = vld [vmem:[%s3913 + $0x20] sm:$0xf]
        %v3923 = vld [vmem:[%s3913 + $0x24] sm:$0xf]
        %v3924 = vld [vmem:[%s3913 + $0x28] sm:$0xf]
        %v3925 = vld [vmem:[%s3913 + $0x2c] sm:$0xf]
        %v3926 = vld [vmem:[%s3913 + $0x30] sm:$0xf]
        %v3927 = vld [vmem:[%s3913 + $0x34] sm:$0xf]
        %v3928 = vld [vmem:[%s3913 + $0x38] sm:$0xf]
        %v3929 = vld [vmem:[%s3913 + $0x3c] sm:$0xf]
        %v3930 = vpack.i.b16 %v3842, %v3841
        %v3931 = vpack.i.b16 %v3844, %v3843
        %v3932 = vpack.i.b16 %v3846, %v3845
        %v3933 = vpack.i.b16 %v3848, %v3847
        %v3934 = vpack.i.b16 %v3850, %v3849
        %v3935 = vpack.i.b16 %v3852, %v3851
        %v3936 = vpack.i.b16 %v3854, %v3853
        %v3937 = vpack.i.b16 %v3856, %v3855
        %v3938 = vpack.i.b16 %v3858, %v3857
        %v3939 = vpack.i.b16 %v3860, %v3859
        %v3940 = vpack.i.b16 %v3862, %v3861
        %v3941 = vpack.i.b16 %v3864, %v3863
        %v3942 = vpack.i.b16 %v3866, %v3865
        %v3943 = vpack.i.b16 %v3868, %v3867
        %v3944 = vpack.i.b16 %v3870, %v3869
        %v3945 = vpack.i.b16 %v3872, %v3871
        %v3946 = vpack.i.b16 %v3874, %v3873
        %v3947 = vpack.i.b16 %v3876, %v3875
        %v3948 = vpack.i.b16 %v3878, %v3877
        %v3949 = vpack.i.b16 %v3880, %v3879
        %v3950 = vpack.i.b16 %v3882, %v3881
        %v3951 = vpack.i.b16 %v3884, %v3883
        %v3952 = vpack.i.b16 %v3886, %v3885
        %v3953 = vpack.i.b16 %v3888, %v3887
        %v3954 = vpack.i.b16 %v3890, %v3889
        %v3955 = vpack.i.b16 %v3892, %v3891
        %v3956 = vpack.i.b16 %v3894, %v3893
        %v3957 = vpack.i.b16 %v3896, %v3895
        %v3958 = vpack.i.b16 %v3898, %v3897
        %v3959 = vpack.i.b16 %v3900, %v3899
        %v3960 = vpack.i.b16 %v3902, %v3901
        %v3961 = vpack.i.b16 %v3904, %v3903
        %v3962 = vpack.i.b16 %v3906, %v3905
        %v3963 = vpack.i.b16 %v3908, %v3907
        %v3964 = vpack.i.b16 %v3910, %v3909
        %v3965 = vpack.i.b16 %v3912, %v3911
        %3967 = vst [vmem:[#allocation1] ss:$9 sm:$0xff] %v3930
        %s3969 = scalar_lea.vmem [#allocation1], 1
        %3970 = vst [vmem:[%s3969] ss:$9 sm:$0xff] %v3931
        %s3972 = scalar_lea.vmem [#allocation1], 2
        %3973 = vst [vmem:[%s3972] ss:$9 sm:$0xff] %v3932
        %s3975 = scalar_lea.vmem [#allocation1], 3
        %3976 = vst [vmem:[%s3975] ss:$9 sm:$0xff] %v3933
        %s3978 = scalar_lea.vmem [#allocation1], 4
        %3979 = vst [vmem:[%s3978] ss:$9 sm:$0xff] %v3934
        %s3981 = scalar_lea.vmem [#allocation1], 5
        %3982 = vst [vmem:[%s3981] ss:$9 sm:$0xff] %v3935
        %s3984 = scalar_lea.vmem [#allocation1], 6
        %3985 = vst [vmem:[%s3984] ss:$9 sm:$0xff] %v3936
        %s3987 = scalar_lea.vmem [#allocation1], 7
        %3988 = vst [vmem:[%s3987] ss:$9 sm:$0xff] %v3937
        %v3989 = vld [vmem:[#allocation1] sm:$0xff]
        %3991 = vst [vmem:[#allocation1] ss:$9 sm:$0xff] %v3938
        %3993 = vst [vmem:[%s3969] ss:$9 sm:$0xff] %v3939
        %3995 = vst [vmem:[%s3972] ss:$9 sm:$0xff] %v3940
        %3997 = vst [vmem:[%s3975] ss:$9 sm:$0xff] %v3941
        %3999 = vst [vmem:[%s3978] ss:$9 sm:$0xff] %v3942
        %4001 = vst [vmem:[%s3981] ss:$9 sm:$0xff] %v3943
        %4003 = vst [vmem:[%s3984] ss:$9 sm:$0xff] %v3944
        %4005 = vst [vmem:[%s3987] ss:$9 sm:$0xff] %v3945
        %v4006 = vld [vmem:[#allocation1] sm:$0xff]
        %4008 = vst [vmem:[#allocation1] ss:$9 sm:$0xff] %v3946
        %4010 = vst [vmem:[%s3969] ss:$9 sm:$0xff] %v3947
        %4012 = vst [vmem:[%s3972] ss:$9 sm:$0xff] %v3948
        %4014 = vst [vmem:[%s3975] ss:$9 sm:$0xff] %v3949
        %4016 = vst [vmem:[%s3978] ss:$9 sm:$0xff] %v3950
        %4018 = vst [vmem:[%s3981] ss:$9 sm:$0xff] %v3951
        %4020 = vst [vmem:[%s3984] ss:$9 sm:$0xff] %v3952
        %4022 = vst [vmem:[%s3987] ss:$9 sm:$0xff] %v3953
        %v4023 = vld [vmem:[#allocation1] sm:$0xff]
        %4025 = vst [vmem:[#allocation1] ss:$9 sm:$0xff] %v3954
        %4027 = vst [vmem:[%s3969] ss:$9 sm:$0xff] %v3955
        %4029 = vst [vmem:[%s3972] ss:$9 sm:$0xff] %v3956
        %4031 = vst [vmem:[%s3975] ss:$9 sm:$0xff] %v3957
        %4033 = vst [vmem:[%s3978] ss:$9 sm:$0xff] %v3958
        %4035 = vst [vmem:[%s3981] ss:$9 sm:$0xff] %v3959
        %4037 = vst [vmem:[%s3984] ss:$9 sm:$0xff] %v3960
        %4039 = vst [vmem:[%s3987] ss:$9 sm:$0xff] %v3961
        %v4040 = vld [vmem:[#allocation1] sm:$0xff]
        %4042 = vst [vmem:[#allocation1] ss:$9 sm:$0xff] %v3962
        %4044 = vst [vmem:[%s3969] ss:$9 sm:$0xff] %v3963
        %4046 = vst [vmem:[%s3972] ss:$9 sm:$0xff] %v3964
        %4048 = vst [vmem:[%s3975] ss:$9 sm:$0xff] %v3965
        %v4049 = vld [vmem:[#allocation1] sm:$0xff]
        %v4071 = vunpack.c.l.b16 %v3914
        %v4072 = vunpack.c.l.b16 %v3915
        %v4073 = vunpack.c.l.b16 %v3916
        %v4074 = vunpack.c.l.b16 %v3917
        %v4075 = vunpack.c.l.b16 %v3918
        %v4076 = vunpack.c.l.b16 %v3919
        %v4077 = vunpack.c.l.b16 %v3920
        %v4078 = vunpack.c.l.b16 %v3921
        %v4079 = vunpack.c.l.b16 %v3922
        %v4080 = vunpack.c.l.b16 %v3923
        %v4081 = vunpack.c.l.b16 %v3924
        %v4082 = vunpack.c.l.b16 %v3925
        %v4083 = vunpack.c.l.b16 %v3926
        %v4084 = vunpack.c.l.b16 %v3927
        %v4085 = vunpack.c.l.b16 %v3928
        %v4086 = vunpack.c.l.b16 %v3929
        %v4087 = vpack.c.b16 %v4072, %v4071
        %v4088 = vpack.c.b16 %v4074, %v4073
        %v4089 = vpack.c.b16 %v4076, %v4075
        %v4090 = vpack.c.b16 %v4078, %v4077
        %v4091 = vpack.c.b16 %v4080, %v4079
        %v4092 = vpack.c.b16 %v4082, %v4081
        %v4093 = vpack.c.b16 %v4084, %v4083
        %v4094 = vpack.c.b16 %v4086, %v4085
        %4103 = vmatpush.bf16.msra.mxu0 %v4094
        %4104 = vmatpush.bf16.msra.mxu0 %v4093
        %4105 = vmatpush.bf16.msra.mxu0 %v4092
        %4106 = vmatpush.bf16.msra.mxu0 %v4091
        %4107 = vmatpush.bf16.msra.mxu0 %v4090
        %4108 = vmatpush.bf16.msra.mxu0 %v4089
        %4109 = vmatpush.bf16.msra.mxu0 %v4088
        %4110 = vmatpush.bf16.msra.mxu0 %v4087
        %4111 = vmatmul.bf16.gmra.mxu0 %v3989
        %v4112 = vpop.f32.mrf.mxu0
        %v4113 = vadd.f32 0.0, %v4112
        %v4114 = vpop.f32.mrf.mxu0
        %v4115 = vadd.f32 0.0, %v4114
        %4116 = vmatmul.bf16.gmra.mxu0 %v4006
        %v4117 = vpop.f32.mrf.mxu0
        %v4118 = vadd.f32 0.0, %v4117
        %v4119 = vpop.f32.mrf.mxu0
        %v4120 = vadd.f32 0.0, %v4119
        %4121 = vmatmul.bf16.gmra.mxu0 %v4023
        %v4122 = vpop.f32.mrf.mxu0
        %v4123 = vadd.f32 0.0, %v4122
        %v4124 = vpop.f32.mrf.mxu0
        %v4125 = vadd.f32 0.0, %v4124
        %4126 = vmatmul.bf16.gmra.mxu0 %v4040
        %v4127 = vpop.f32.mrf.mxu0
        %v4128 = vadd.f32 0.0, %v4127
        %v4129 = vpop.f32.mrf.mxu0
        %v4130 = vadd.f32 0.0, %v4129
        %4131 = vmatmul.bf16.gmra.mxu0 %v4049
        %v4132 = vpop.f32.mrf.mxu0
        %v4133 = vadd.f32 0.0, %v4132
        %v4134 = vpop.f32.mrf.mxu0
        %4135 = vdwg.mxu0
        %v4145 = vrot.slane %v4113, 1
        %v4146 = vrot.slane %v4113, 2
        %v4147 = vrot.slane %v4113, 3
        %v4148 = vrot.slane %v4113, 4
        %v4149 = vrot.slane %v4113, 5
        %v4150 = vrot.slane %v4113, 6
        %v4151 = vrot.slane %v4113, 7
        %v4152 = vrot.slane %v4115, 1
        %v4153 = vrot.slane %v4115, 2
        %v4154 = vrot.slane %v4115, 3
        %v4155 = vrot.slane %v4115, 4
        %v4156 = vrot.slane %v4115, 5
        %v4157 = vrot.slane %v4115, 6
        %v4158 = vrot.slane %v4115, 7
        %v4159 = vrot.slane %v4118, 2
        %v4160 = vrot.slane %v4118, 3
        %v4161 = vrot.slane %v4118, 4
        %v4162 = vrot.slane %v4118, 5
        %v4163 = vrot.slane %v4118, 6
        %v4164 = vrot.slane %v4118, 7
        %v4165 = vrot.slane %v4120, 1
        %v4166 = vrot.slane %v4120, 3
        %v4167 = vrot.slane %v4120, 4
        %v4168 = vrot.slane %v4120, 5
        %v4169 = vrot.slane %v4120, 6
        %v4170 = vrot.slane %v4120, 7
        %v4171 = vrot.slane %v4123, 1
        %v4172 = vrot.slane %v4123, 2
        %v4173 = vrot.slane %v4123, 4
        %v4174 = vrot.slane %v4123, 5
        %v4175 = vrot.slane %v4123, 6
        %v4176 = vrot.slane %v4123, 7
        %v4177 = vrot.slane %v4125, 1
        %v4178 = vrot.slane %v4125, 2
        %v4179 = vrot.slane %v4125, 3
        %v4180 = vrot.slane %v4125, 5
        %v4181 = vrot.slane %v4125, 6
        %v4182 = vrot.slane %v4125, 7
        %v4183 = vrot.slane %v4128, 1
        %v4184 = vrot.slane %v4128, 2
        %v4185 = vrot.slane %v4128, 3
        %v4186 = vrot.slane %v4128, 4
        %v4187 = vrot.slane %v4128, 6
        %v4188 = vrot.slane %v4128, 7
        %v4189 = vrot.slane %v4130, 1
        %v4190 = vrot.slane %v4130, 2
        %v4191 = vrot.slane %v4130, 3
        %v4192 = vrot.slane %v4130, 4
        %v4193 = vrot.slane %v4130, 5
        %v4194 = vrot.slane %v4130, 7
        %v4195 = vrot.slane %v4133, 1
        %v4196 = vrot.slane %v4133, 2
        %v4197 = vrot.slane %v4133, 3
        %v4198 = vrot.slane %v4133, 4
        %v4199 = vrot.slane %v4133, 5
        %v4200 = vrot.slane %v4133, 6
        %v4257 = vadd.f32 %v3592, %v4113
        %v4258 = vadd.f32 %v3593, %v4145
        %v4259 = vadd.f32 %v3594, %v4146
        %v4260 = vadd.f32 %v3595, %v4147
        %v4261 = vadd.f32 %v3596, %v4148
        %v4262 = vadd.f32 %v3597, %v4149
        %v4263 = vadd.f32 %v3598, %v4150
        %v4264 = vadd.f32 %v3599, %v4151
        %v4265 = vadd.f32 %v3600, %v4152
        %v4266 = vadd.f32 %v3601, %v4153
        %v4267 = vadd.f32 %v3602, %v4154
        %v4268 = vadd.f32 %v3603, %v4155
        %v4269 = vadd.f32 %v3604, %v4156
        %v4270 = vadd.f32 %v3605, %v4157
        %v4271 = vadd.f32 %v3606, %v4158
        %v4272 = vadd.f32 %v3607, %v4118
        %v4273 = vadd.f32 %v3608, %v4159
        %v4274 = vadd.f32 %v3609, %v4160
        %v4275 = vadd.f32 %v3610, %v4161
        %v4276 = vadd.f32 %v3611, %v4162
        %v4277 = vadd.f32 %v3612, %v4163
        %v4278 = vadd.f32 %v3613, %v4164
        %v4279 = vadd.f32 %v3614, %v4120
        %v4280 = vadd.f32 %v3615, %v4165
        %v4281 = vadd.f32 %v3616, %v4166
        %v4282 = vadd.f32 %v3617, %v4167
        %v4283 = vadd.f32 %v3618, %v4168
        %v4284 = vadd.f32 %v3619, %v4169
        %v4285 = vadd.f32 %v3620, %v4170
        %v4286 = vadd.f32 %v3621, %v4123
        %v4287 = vadd.f32 %v3622, %v4171
        %v4288 = vadd.f32 %v3623, %v4172
        %v4289 = vadd.f32 %v3624, %v4173
        %v4290 = vadd.f32 %v3625, %v4174
        %v4291 = vadd.f32 %v3626, %v4175
        %v4292 = vadd.f32 %v3627, %v4176
        %v4293 = vadd.f32 %v3628, %v4125
        %v4294 = vadd.f32 %v3629, %v4177
        %v4295 = vadd.f32 %v3630, %v4178
        %v4296 = vadd.f32 %v3631, %v4179
        %v4297 = vadd.f32 %v3632, %v4180
        %v4298 = vadd.f32 %v3633, %v4181
        %v4299 = vadd.f32 %v3634, %v4182
        %v4300 = vadd.f32 %v3635, %v4128
        %v4301 = vadd.f32 %v3636, %v4183
        %v4302 = vadd.f32 %v3637, %v4184
        %v4303 = vadd.f32 %v3638, %v4185
        %v4304 = vadd.f32 %v3639, %v4186
        %v4305 = vadd.f32 %v3640, %v4187
        %v4306 = vadd.f32 %v3641, %v4188
        %v4307 = vadd.f32 %v3642, %v4130
        %v4308 = vadd.f32 %v3643, %v4189
        %v4309 = vadd.f32 %v3644, %v4190
        %v4310 = vadd.f32 %v3645, %v4191
        %v4311 = vadd.f32 %v3646, %v4192
        %v4312 = vadd.f32 %v3647, %v4193
        %v4313 = vadd.f32 %v3648, %v4194
        %v4314 = vadd.f32 %v3649, %v4133
        %v4315 = vadd.f32 %v3650, %v4195
        %v4316 = vadd.f32 %v3651, %v4196
        %v4317 = vadd.f32 %v3652, %v4197
        %v4318 = vadd.f32 %v3653, %v4198
        %v4319 = vadd.f32 %v3654, %v4199
        %v4320 = vadd.f32 %v3655, %v4200
        %s4321 = scalar_lea.vmem %s338, 80
        %v4322 = vld [vmem:[%s4321] sm:$0xf]
        %v4323 = vld [vmem:[%s4321 + $0x4] sm:$0x1]
        %v4324 = vld [vmem:[%s4321 + $0x8] sm:$0xf]
        %v4325 = vld [vmem:[%s4321 + $0xc] sm:$0x1]
        %v4326 = vld [vmem:[%s4321 + $0x10] sm:$0xf]
        %v4327 = vld [vmem:[%s4321 + $0x14] sm:$0x1]
        %v4328 = vld [vmem:[%s4321 + $0x18] sm:$0xf]
        %v4329 = vld [vmem:[%s4321 + $0x1c] sm:$0x1]
        %v4330 = vld [vmem:[%s4321 + $0x20] sm:$0xf]
        %v4331 = vld [vmem:[%s4321 + $0x24] sm:$0x1]
        %v4332 = vld [vmem:[%s4321 + $0x28] sm:$0xf]
        %v4333 = vld [vmem:[%s4321 + $0x2c] sm:$0x1]
        %v4334 = vld [vmem:[%s4321 + $0x30] sm:$0xf]
        %v4335 = vld [vmem:[%s4321 + $0x34] sm:$0x1]
        %v4336 = vld [vmem:[%s4321 + $0x38] sm:$0xf]
        %v4337 = vld [vmem:[%s4321 + $0x3c] sm:$0x1]
        %v4354 = vrot.slane %v4322, 3
        %v4355 = vrot.slane %v4323, 3
        %v4356 = vrot.slane %v4324, 3
        %v4357 = vrot.slane %v4325, 3
        %v4358 = vrot.slane %v4326, 3
        %v4359 = vrot.slane %v4327, 3
        %v4360 = vrot.slane %v4328, 3
        %v4361 = vrot.slane %v4329, 3
        %v4362 = vrot.slane %v4330, 3
        %v4363 = vrot.slane %v4331, 3
        %v4364 = vrot.slane %v4332, 3
        %v4365 = vrot.slane %v4333, 3
        %v4366 = vrot.slane %v4334, 3
        %v4367 = vrot.slane %v4335, 3
        %v4368 = vrot.slane %v4336, 3
        %v4369 = vrot.slane %v4337, 3
        %v4372 = vsel %vm434, %v4322, %v4354
        %v4374 = vsel %vm439, %v4322, %v4354
        %v4376 = vrot.slane %v4374, 1
        %v4377 = vsel %vm443, %v4322, %v4354
        %v4379 = vrot.slane %v4377, 2
        %v4380 = vsel %vm447, %v4322, %v4354
        %v4382 = vrot.slane %v4380, 3
        %v4385 = vsel %vm434, %v4323, %v4355
        %v4389 = vsel %vm434, %v4324, %v4356
        %v4391 = vsel %vm439, %v4324, %v4356
        %v4393 = vrot.slane %v4391, 1
        %v4394 = vsel %vm443, %v4324, %v4356
        %v4396 = vrot.slane %v4394, 2
        %v4397 = vsel %vm447, %v4324, %v4356
        %v4399 = vrot.slane %v4397, 3
        %v4402 = vsel %vm434, %v4325, %v4357
        %v4406 = vsel %vm434, %v4326, %v4358
        %v4408 = vsel %vm439, %v4326, %v4358
        %v4410 = vrot.slane %v4408, 1
        %v4411 = vsel %vm443, %v4326, %v4358
        %v4413 = vrot.slane %v4411, 2
        %v4414 = vsel %vm447, %v4326, %v4358
        %v4416 = vrot.slane %v4414, 3
        %v4419 = vsel %vm434, %v4327, %v4359
        %v4423 = vsel %vm434, %v4328, %v4360
        %v4425 = vsel %vm439, %v4328, %v4360
        %v4427 = vrot.slane %v4425, 1
        %v4428 = vsel %vm443, %v4328, %v4360
        %v4430 = vrot.slane %v4428, 2
        %v4431 = vsel %vm447, %v4328, %v4360
        %v4433 = vrot.slane %v4431, 3
        %v4436 = vsel %vm434, %v4329, %v4361
        %v4440 = vsel %vm434, %v4330, %v4362
        %v4442 = vsel %vm439, %v4330, %v4362
        %v4444 = vrot.slane %v4442, 1
        %v4445 = vsel %vm443, %v4330, %v4362
        %v4447 = vrot.slane %v4445, 2
        %v4448 = vsel %vm447, %v4330, %v4362
        %v4450 = vrot.slane %v4448, 3
        %v4453 = vsel %vm434, %v4331, %v4363
        %v4457 = vsel %vm434, %v4332, %v4364
        %v4459 = vsel %vm439, %v4332, %v4364
        %v4461 = vrot.slane %v4459, 1
        %v4462 = vsel %vm443, %v4332, %v4364
        %v4464 = vrot.slane %v4462, 2
        %v4465 = vsel %vm447, %v4332, %v4364
        %v4467 = vrot.slane %v4465, 3
        %v4470 = vsel %vm434, %v4333, %v4365
        %v4474 = vsel %vm434, %v4334, %v4366
        %v4476 = vsel %vm439, %v4334, %v4366
        %v4478 = vrot.slane %v4476, 1
        %v4479 = vsel %vm443, %v4334, %v4366
        %v4481 = vrot.slane %v4479, 2
        %v4482 = vsel %vm447, %v4334, %v4366
        %v4484 = vrot.slane %v4482, 3
        %v4487 = vsel %vm434, %v4335, %v4367
        %v4491 = vsel %vm434, %v4336, %v4368
        %v4493 = vsel %vm439, %v4336, %v4368
        %v4495 = vrot.slane %v4493, 1
        %v4496 = vsel %vm443, %v4336, %v4368
        %v4498 = vrot.slane %v4496, 2
        %v4499 = vsel %vm447, %v4336, %v4368
        %v4501 = vrot.slane %v4499, 3
        %v4504 = vsel %vm434, %v4337, %v4369
        %v4506 = vunpack.i.l.s16 %v4372
        %v4507 = vunpack.i.h.s16 %v4372
        %v4508 = vunpack.i.l.s16 %v4376
        %v4509 = vunpack.i.h.s16 %v4376
        %v4510 = vunpack.i.l.s16 %v4379
        %v4511 = vunpack.i.h.s16 %v4379
        %v4512 = vunpack.i.l.s16 %v4382
        %v4513 = vunpack.i.h.s16 %v4382
        %v4514 = vunpack.i.l.s16 %v4385
        %v4515 = vunpack.i.l.s16 %v4389
        %v4516 = vunpack.i.h.s16 %v4389
        %v4517 = vunpack.i.l.s16 %v4393
        %v4518 = vunpack.i.h.s16 %v4393
        %v4519 = vunpack.i.l.s16 %v4396
        %v4520 = vunpack.i.h.s16 %v4396
        %v4521 = vunpack.i.l.s16 %v4399
        %v4522 = vunpack.i.h.s16 %v4399
        %v4523 = vunpack.i.l.s16 %v4402
        %v4524 = vunpack.i.l.s16 %v4406
        %v4525 = vunpack.i.h.s16 %v4406
        %v4526 = vunpack.i.l.s16 %v4410
        %v4527 = vunpack.i.h.s16 %v4410
        %v4528 = vunpack.i.l.s16 %v4413
        %v4529 = vunpack.i.h.s16 %v4413
        %v4530 = vunpack.i.l.s16 %v4416
        %v4531 = vunpack.i.h.s16 %v4416
        %v4532 = vunpack.i.l.s16 %v4419
        %v4533 = vunpack.i.l.s16 %v4423
        %v4534 = vunpack.i.h.s16 %v4423
        %v4535 = vunpack.i.l.s16 %v4427
        %v4536 = vunpack.i.h.s16 %v4427
        %v4537 = vunpack.i.l.s16 %v4430
        %v4538 = vunpack.i.h.s16 %v4430
        %v4539 = vunpack.i.l.s16 %v4433
        %v4540 = vunpack.i.h.s16 %v4433
        %v4541 = vunpack.i.l.s16 %v4436
        %v4542 = vunpack.i.l.s16 %v4440
        %v4543 = vunpack.i.h.s16 %v4440
        %v4544 = vunpack.i.l.s16 %v4444
        %v4545 = vunpack.i.h.s16 %v4444
        %v4546 = vunpack.i.l.s16 %v4447
        %v4547 = vunpack.i.h.s16 %v4447
        %v4548 = vunpack.i.l.s16 %v4450
        %v4549 = vunpack.i.h.s16 %v4450
        %v4550 = vunpack.i.l.s16 %v4453
        %v4551 = vunpack.i.l.s16 %v4457
        %v4552 = vunpack.i.h.s16 %v4457
        %v4553 = vunpack.i.l.s16 %v4461
        %v4554 = vunpack.i.h.s16 %v4461
        %v4555 = vunpack.i.l.s16 %v4464
        %v4556 = vunpack.i.h.s16 %v4464
        %v4557 = vunpack.i.l.s16 %v4467
        %v4558 = vunpack.i.h.s16 %v4467
        %v4559 = vunpack.i.l.s16 %v4470
        %v4560 = vunpack.i.l.s16 %v4474
        %v4561 = vunpack.i.h.s16 %v4474
        %v4562 = vunpack.i.l.s16 %v4478
        %v4563 = vunpack.i.h.s16 %v4478
        %v4564 = vunpack.i.l.s16 %v4481
        %v4565 = vunpack.i.h.s16 %v4481
        %v4566 = vunpack.i.l.s16 %v4484
        %v4567 = vunpack.i.h.s16 %v4484
        %v4568 = vunpack.i.l.s16 %v4487
        %v4569 = vunpack.i.l.s16 %v4491
        %v4570 = vunpack.i.h.s16 %v4491
        %v4571 = vunpack.i.l.s16 %v4495
        %v4572 = vunpack.i.h.s16 %v4495
        %v4573 = vunpack.i.l.s16 %v4498
        %v4574 = vunpack.i.h.s16 %v4498
        %v4575 = vunpack.i.l.s16 %v4501
        %v4576 = vunpack.i.h.s16 %v4501
        %v4577 = vunpack.i.l.s16 %v4504
        %s4578 = scalar_lea.vmem %s1, 448
        %v4579 = vld [vmem:[%s4578] sm:$0xf]
        %v4580 = vld [vmem:[%s4578 + $0x4] sm:$0xf]
        %v4581 = vld [vmem:[%s4578 + $0x8] sm:$0xf]
        %v4582 = vld [vmem:[%s4578 + $0xc] sm:$0xf]
        %v4583 = vld [vmem:[%s4578 + $0x10] sm:$0xf]
        %v4584 = vld [vmem:[%s4578 + $0x14] sm:$0xf]
        %v4585 = vld [vmem:[%s4578 + $0x18] sm:$0xf]
        %v4586 = vld [vmem:[%s4578 + $0x1c] sm:$0xf]
        %v4587 = vld [vmem:[%s4578 + $0x20] sm:$0xf]
        %v4588 = vld [vmem:[%s4578 + $0x24] sm:$0xf]
        %v4589 = vld [vmem:[%s4578 + $0x28] sm:$0xf]
        %v4590 = vld [vmem:[%s4578 + $0x2c] sm:$0xf]
        %v4591 = vld [vmem:[%s4578 + $0x30] sm:$0xf]
        %v4592 = vld [vmem:[%s4578 + $0x34] sm:$0xf]
        %v4593 = vld [vmem:[%s4578 + $0x38] sm:$0xf]
        %v4594 = vld [vmem:[%s4578 + $0x3c] sm:$0xf]
        %v4595 = vpack.i.b16 %v4507, %v4506
        %v4596 = vpack.i.b16 %v4509, %v4508
        %v4597 = vpack.i.b16 %v4511, %v4510
        %v4598 = vpack.i.b16 %v4513, %v4512
        %v4599 = vpack.i.b16 %v4515, %v4514
        %v4600 = vpack.i.b16 %v4517, %v4516
        %v4601 = vpack.i.b16 %v4519, %v4518
        %v4602 = vpack.i.b16 %v4521, %v4520
        %v4603 = vpack.i.b16 %v4523, %v4522
        %v4604 = vpack.i.b16 %v4525, %v4524
        %v4605 = vpack.i.b16 %v4527, %v4526
        %v4606 = vpack.i.b16 %v4529, %v4528
        %v4607 = vpack.i.b16 %v4531, %v4530
        %v4608 = vpack.i.b16 %v4533, %v4532
        %v4609 = vpack.i.b16 %v4535, %v4534
        %v4610 = vpack.i.b16 %v4537, %v4536
        %v4611 = vpack.i.b16 %v4539, %v4538
        %v4612 = vpack.i.b16 %v4541, %v4540
        %v4613 = vpack.i.b16 %v4543, %v4542
        %v4614 = vpack.i.b16 %v4545, %v4544
        %v4615 = vpack.i.b16 %v4547, %v4546
        %v4616 = vpack.i.b16 %v4549, %v4548
        %v4617 = vpack.i.b16 %v4551, %v4550
        %v4618 = vpack.i.b16 %v4553, %v4552
        %v4619 = vpack.i.b16 %v4555, %v4554
        %v4620 = vpack.i.b16 %v4557, %v4556
        %v4621 = vpack.i.b16 %v4559, %v4558
        %v4622 = vpack.i.b16 %v4561, %v4560
        %v4623 = vpack.i.b16 %v4563, %v4562
        %v4624 = vpack.i.b16 %v4565, %v4564
        %v4625 = vpack.i.b16 %v4567, %v4566
        %v4626 = vpack.i.b16 %v4569, %v4568
        %v4627 = vpack.i.b16 %v4571, %v4570
        %v4628 = vpack.i.b16 %v4573, %v4572
        %v4629 = vpack.i.b16 %v4575, %v4574
        %v4630 = vpack.i.b16 %v4577, %v4576
        %4632 = vst [vmem:[#allocation1] ss:$9 sm:$0xff] %v4595
        %s4634 = scalar_lea.vmem [#allocation1], 1
        %4635 = vst [vmem:[%s4634] ss:$9 sm:$0xff] %v4596
        %s4637 = scalar_lea.vmem [#allocation1], 2
        %4638 = vst [vmem:[%s4637] ss:$9 sm:$0xff] %v4597
        %s4640 = scalar_lea.vmem [#allocation1], 3
        %4641 = vst [vmem:[%s4640] ss:$9 sm:$0xff] %v4598
        %s4643 = scalar_lea.vmem [#allocation1], 4
        %4644 = vst [vmem:[%s4643] ss:$9 sm:$0xff] %v4599
        %s4646 = scalar_lea.vmem [#allocation1], 5
        %4647 = vst [vmem:[%s4646] ss:$9 sm:$0xff] %v4600
        %s4649 = scalar_lea.vmem [#allocation1], 6
        %4650 = vst [vmem:[%s4649] ss:$9 sm:$0xff] %v4601
        %s4652 = scalar_lea.vmem [#allocation1], 7
        %4653 = vst [vmem:[%s4652] ss:$9 sm:$0xff] %v4602
        %v4654 = vld [vmem:[#allocation1] sm:$0xff]
        %4656 = vst [vmem:[#allocation1] ss:$9 sm:$0xff] %v4603
        %4658 = vst [vmem:[%s4634] ss:$9 sm:$0xff] %v4604
        %4660 = vst [vmem:[%s4637] ss:$9 sm:$0xff] %v4605
        %4662 = vst [vmem:[%s4640] ss:$9 sm:$0xff] %v4606
        %4664 = vst [vmem:[%s4643] ss:$9 sm:$0xff] %v4607
        %4666 = vst [vmem:[%s4646] ss:$9 sm:$0xff] %v4608
        %4668 = vst [vmem:[%s4649] ss:$9 sm:$0xff] %v4609
        %4670 = vst [vmem:[%s4652] ss:$9 sm:$0xff] %v4610
        %v4671 = vld [vmem:[#allocation1] sm:$0xff]
        %4673 = vst [vmem:[#allocation1] ss:$9 sm:$0xff] %v4611
        %4675 = vst [vmem:[%s4634] ss:$9 sm:$0xff] %v4612
        %4677 = vst [vmem:[%s4637] ss:$9 sm:$0xff] %v4613
        %4679 = vst [vmem:[%s4640] ss:$9 sm:$0xff] %v4614
        %4681 = vst [vmem:[%s4643] ss:$9 sm:$0xff] %v4615
        %4683 = vst [vmem:[%s4646] ss:$9 sm:$0xff] %v4616
        %4685 = vst [vmem:[%s4649] ss:$9 sm:$0xff] %v4617
        %4687 = vst [vmem:[%s4652] ss:$9 sm:$0xff] %v4618
        %v4688 = vld [vmem:[#allocation1] sm:$0xff]
        %4690 = vst [vmem:[#allocation1] ss:$9 sm:$0xff] %v4619
        %4692 = vst [vmem:[%s4634] ss:$9 sm:$0xff] %v4620
        %4694 = vst [vmem:[%s4637] ss:$9 sm:$0xff] %v4621
        %4696 = vst [vmem:[%s4640] ss:$9 sm:$0xff] %v4622
        %4698 = vst [vmem:[%s4643] ss:$9 sm:$0xff] %v4623
        %4700 = vst [vmem:[%s4646] ss:$9 sm:$0xff] %v4624
        %4702 = vst [vmem:[%s4649] ss:$9 sm:$0xff] %v4625
        %4704 = vst [vmem:[%s4652] ss:$9 sm:$0xff] %v4626
        %v4705 = vld [vmem:[#allocation1] sm:$0xff]
        %4707 = vst [vmem:[#allocation1] ss:$9 sm:$0xff] %v4627
        %4709 = vst [vmem:[%s4634] ss:$9 sm:$0xff] %v4628
        %4711 = vst [vmem:[%s4637] ss:$9 sm:$0xff] %v4629
        %4713 = vst [vmem:[%s4640] ss:$9 sm:$0xff] %v4630
        %v4714 = vld [vmem:[#allocation1] sm:$0xff]
        %v4736 = vunpack.c.l.b16 %v4579
        %v4737 = vunpack.c.l.b16 %v4580
        %v4738 = vunpack.c.l.b16 %v4581
        %v4739 = vunpack.c.l.b16 %v4582
        %v4740 = vunpack.c.l.b16 %v4583
        %v4741 = vunpack.c.l.b16 %v4584
        %v4742 = vunpack.c.l.b16 %v4585
        %v4743 = vunpack.c.l.b16 %v4586
        %v4744 = vunpack.c.l.b16 %v4587
        %v4745 = vunpack.c.l.b16 %v4588
        %v4746 = vunpack.c.l.b16 %v4589
        %v4747 = vunpack.c.l.b16 %v4590
        %v4748 = vunpack.c.l.b16 %v4591
        %v4749 = vunpack.c.l.b16 %v4592
        %v4750 = vunpack.c.l.b16 %v4593
        %v4751 = vunpack.c.l.b16 %v4594
        %v4752 = vpack.c.b16 %v4737, %v4736
        %v4753 = vpack.c.b16 %v4739, %v4738
        %v4754 = vpack.c.b16 %v4741, %v4740
        %v4755 = vpack.c.b16 %v4743, %v4742
        %v4756 = vpack.c.b16 %v4745, %v4744
        %v4757 = vpack.c.b16 %v4747, %v4746
        %v4758 = vpack.c.b16 %v4749, %v4748
        %v4759 = vpack.c.b16 %v4751, %v4750
        %4768 = vmatpush.bf16.msra.mxu0 %v4759
        %4769 = vmatpush.bf16.msra.mxu0 %v4758
        %4770 = vmatpush.bf16.msra.mxu0 %v4757
        %4771 = vmatpush.bf16.msra.mxu0 %v4756
        %4772 = vmatpush.bf16.msra.mxu0 %v4755
        %4773 = vmatpush.bf16.msra.mxu0 %v4754
        %4774 = vmatpush.bf16.msra.mxu0 %v4753
        %4775 = vmatpush.bf16.msra.mxu0 %v4752
        %4776 = vmatmul.bf16.gmra.mxu0 %v4654
        %v4777 = vpop.f32.mrf.mxu0
        %v4778 = vadd.f32 0.0, %v4777
        %v4779 = vpop.f32.mrf.mxu0
        %v4780 = vadd.f32 0.0, %v4779
        %4781 = vmatmul.bf16.gmra.mxu0 %v4671
        %v4782 = vpop.f32.mrf.mxu0
        %v4783 = vadd.f32 0.0, %v4782
        %v4784 = vpop.f32.mrf.mxu0
        %v4785 = vadd.f32 0.0, %v4784
        %4786 = vmatmul.bf16.gmra.mxu0 %v4688
        %v4787 = vpop.f32.mrf.mxu0
        %v4788 = vadd.f32 0.0, %v4787
        %v4789 = vpop.f32.mrf.mxu0
        %v4790 = vadd.f32 0.0, %v4789
        %4791 = vmatmul.bf16.gmra.mxu0 %v4705
        %v4792 = vpop.f32.mrf.mxu0
        %v4793 = vadd.f32 0.0, %v4792
        %v4794 = vpop.f32.mrf.mxu0
        %v4795 = vadd.f32 0.0, %v4794
        %4796 = vmatmul.bf16.gmra.mxu0 %v4714
        %v4797 = vpop.f32.mrf.mxu0
        %v4798 = vadd.f32 0.0, %v4797
        %v4799 = vpop.f32.mrf.mxu0
        %4800 = vdwg.mxu0
        %v4810 = vrot.slane %v4778, 1
        %v4811 = vrot.slane %v4778, 2
        %v4812 = vrot.slane %v4778, 3
        %v4813 = vrot.slane %v4778, 4
        %v4814 = vrot.slane %v4778, 5
        %v4815 = vrot.slane %v4778, 6
        %v4816 = vrot.slane %v4778, 7
        %v4817 = vrot.slane %v4780, 1
        %v4818 = vrot.slane %v4780, 2
        %v4819 = vrot.slane %v4780, 3
        %v4820 = vrot.slane %v4780, 4
        %v4821 = vrot.slane %v4780, 5
        %v4822 = vrot.slane %v4780, 6
        %v4823 = vrot.slane %v4780, 7
        %v4824 = vrot.slane %v4783, 2
        %v4825 = vrot.slane %v4783, 3
        %v4826 = vrot.slane %v4783, 4
        %v4827 = vrot.slane %v4783, 5
        %v4828 = vrot.slane %v4783, 6
        %v4829 = vrot.slane %v4783, 7
        %v4830 = vrot.slane %v4785, 1
        %v4831 = vrot.slane %v4785, 3
        %v4832 = vrot.slane %v4785, 4
        %v4833 = vrot.slane %v4785, 5
        %v4834 = vrot.slane %v4785, 6
        %v4835 = vrot.slane %v4785, 7
        %v4836 = vrot.slane %v4788, 1
        %v4837 = vrot.slane %v4788, 2
        %v4838 = vrot.slane %v4788, 4
        %v4839 = vrot.slane %v4788, 5
        %v4840 = vrot.slane %v4788, 6
        %v4841 = vrot.slane %v4788, 7
        %v4842 = vrot.slane %v4790, 1
        %v4843 = vrot.slane %v4790, 2
        %v4844 = vrot.slane %v4790, 3
        %v4845 = vrot.slane %v4790, 5
        %v4846 = vrot.slane %v4790, 6
        %v4847 = vrot.slane %v4790, 7
        %v4848 = vrot.slane %v4793, 1
        %v4849 = vrot.slane %v4793, 2
        %v4850 = vrot.slane %v4793, 3
        %v4851 = vrot.slane %v4793, 4
        %v4852 = vrot.slane %v4793, 6
        %v4853 = vrot.slane %v4793, 7
        %v4854 = vrot.slane %v4795, 1
        %v4855 = vrot.slane %v4795, 2
        %v4856 = vrot.slane %v4795, 3
        %v4857 = vrot.slane %v4795, 4
        %v4858 = vrot.slane %v4795, 5
        %v4859 = vrot.slane %v4795, 7
        %v4860 = vrot.slane %v4798, 1
        %v4861 = vrot.slane %v4798, 2
        %v4862 = vrot.slane %v4798, 3
        %v4863 = vrot.slane %v4798, 4
        %v4864 = vrot.slane %v4798, 5
        %v4865 = vrot.slane %v4798, 6
        %v4922 = vadd.f32 %v4257, %v4778
        %v4923 = vadd.f32 %v4258, %v4810
        %v4924 = vadd.f32 %v4259, %v4811
        %v4925 = vadd.f32 %v4260, %v4812
        %v4926 = vadd.f32 %v4261, %v4813
        %v4927 = vadd.f32 %v4262, %v4814
        %v4928 = vadd.f32 %v4263, %v4815
        %v4929 = vadd.f32 %v4264, %v4816
        %v4930 = vadd.f32 %v4265, %v4817
        %v4931 = vadd.f32 %v4266, %v4818
        %v4932 = vadd.f32 %v4267, %v4819
        %v4933 = vadd.f32 %v4268, %v4820
        %v4934 = vadd.f32 %v4269, %v4821
        %v4935 = vadd.f32 %v4270, %v4822
        %v4936 = vadd.f32 %v4271, %v4823
        %v4937 = vadd.f32 %v4272, %v4783
        %v4938 = vadd.f32 %v4273, %v4824
        %v4939 = vadd.f32 %v4274, %v4825
        %v4940 = vadd.f32 %v4275, %v4826
        %v4941 = vadd.f32 %v4276, %v4827
        %v4942 = vadd.f32 %v4277, %v4828
        %v4943 = vadd.f32 %v4278, %v4829
        %v4944 = vadd.f32 %v4279, %v4785
        %v4945 = vadd.f32 %v4280, %v4830
        %v4946 = vadd.f32 %v4281, %v4831
        %v4947 = vadd.f32 %v4282, %v4832
        %v4948 = vadd.f32 %v4283, %v4833
        %v4949 = vadd.f32 %v4284, %v4834
        %v4950 = vadd.f32 %v4285, %v4835
        %v4951 = vadd.f32 %v4286, %v4788
        %v4952 = vadd.f32 %v4287, %v4836
        %v4953 = vadd.f32 %v4288, %v4837
        %v4954 = vadd.f32 %v4289, %v4838
        %v4955 = vadd.f32 %v4290, %v4839
        %v4956 = vadd.f32 %v4291, %v4840
        %v4957 = vadd.f32 %v4292, %v4841
        %v4958 = vadd.f32 %v4293, %v4790
        %v4959 = vadd.f32 %v4294, %v4842
        %v4960 = vadd.f32 %v4295, %v4843
        %v4961 = vadd.f32 %v4296, %v4844
        %v4962 = vadd.f32 %v4297, %v4845
        %v4963 = vadd.f32 %v4298, %v4846
        %v4964 = vadd.f32 %v4299, %v4847
        %v4965 = vadd.f32 %v4300, %v4793
        %v4966 = vadd.f32 %v4301, %v4848
        %v4967 = vadd.f32 %v4302, %v4849
        %v4968 = vadd.f32 %v4303, %v4850
        %v4969 = vadd.f32 %v4304, %v4851
        %v4970 = vadd.f32 %v4305, %v4852
        %v4971 = vadd.f32 %v4306, %v4853
        %v4972 = vadd.f32 %v4307, %v4795
        %v4973 = vadd.f32 %v4308, %v4854
        %v4974 = vadd.f32 %v4309, %v4855
        %v4975 = vadd.f32 %v4310, %v4856
        %v4976 = vadd.f32 %v4311, %v4857
        %v4977 = vadd.f32 %v4312, %v4858
        %v4978 = vadd.f32 %v4313, %v4859
        %v4979 = vadd.f32 %v4314, %v4798
        %v4980 = vadd.f32 %v4315, %v4860
        %v4981 = vadd.f32 %v4316, %v4861
        %v4982 = vadd.f32 %v4317, %v4862
        %v4983 = vadd.f32 %v4318, %v4863
        %v4984 = vadd.f32 %v4319, %v4864
        %v4985 = vadd.f32 %v4320, %v4865
        %s4986 = scalar_lea.vmem %s1, 512
        %v4987 = vld [vmem:[%s4986] sm:$0xf]
        %v4988 = vld [vmem:[%s4986 + $0x4] sm:$0xf]
        %v4989 = vld [vmem:[%s4986 + $0x8] sm:$0xf]
        %v4990 = vld [vmem:[%s4986 + $0xc] sm:$0xf]
        %v4991 = vld [vmem:[%s4986 + $0x10] sm:$0xf]
        %v4992 = vld [vmem:[%s4986 + $0x14] sm:$0xf]
        %v4993 = vld [vmem:[%s4986 + $0x18] sm:$0xf]
        %v4994 = vld [vmem:[%s4986 + $0x1c] sm:$0xf]
        %v4995 = vld [vmem:[%s4986 + $0x20] sm:$0xf]
        %v4996 = vld [vmem:[%s4986 + $0x24] sm:$0xf]
        %v4997 = vld [vmem:[%s4986 + $0x28] sm:$0xf]
        %v4998 = vld [vmem:[%s4986 + $0x2c] sm:$0xf]
        %v4999 = vld [vmem:[%s4986 + $0x30] sm:$0xf]
        %v5000 = vld [vmem:[%s4986 + $0x34] sm:$0xf]
        %v5001 = vld [vmem:[%s4986 + $0x38] sm:$0xf]
        %v5002 = vld [vmem:[%s4986 + $0x3c] sm:$0xf]
        %5003 = vst [vmem:[#allocation1] ss:$9 sm:$0xff] %v3930
        %s5004 = scalar_lea.vmem [#allocation1], 1
        %5005 = vst [vmem:[%s5004] ss:$9 sm:$0xff] %v3931
        %s5006 = scalar_lea.vmem [#allocation1], 2
        %5007 = vst [vmem:[%s5006] ss:$9 sm:$0xff] %v3932
        %s5008 = scalar_lea.vmem [#allocation1], 3
        %5009 = vst [vmem:[%s5008] ss:$9 sm:$0xff] %v3933
        %s5010 = scalar_lea.vmem [#allocation1], 4
        %5011 = vst [vmem:[%s5010] ss:$9 sm:$0xff] %v3934
        %s5012 = scalar_lea.vmem [#allocation1], 5
        %5013 = vst [vmem:[%s5012] ss:$9 sm:$0xff] %v3935
        %s5014 = scalar_lea.vmem [#allocation1], 6
        %5015 = vst [vmem:[%s5014] ss:$9 sm:$0xff] %v3936
        %s5016 = scalar_lea.vmem [#allocation1], 7
        %5017 = vst [vmem:[%s5016] ss:$9 sm:$0xff] %v3937
        %v5018 = vld [vmem:[#allocation1] sm:$0xff]
        %5019 = vst [vmem:[#allocation1] ss:$9 sm:$0xff] %v3938
        %5020 = vst [vmem:[%s5004] ss:$9 sm:$0xff] %v3939
        %5021 = vst [vmem:[%s5006] ss:$9 sm:$0xff] %v3940
        %5022 = vst [vmem:[%s5008] ss:$9 sm:$0xff] %v3941
        %5023 = vst [vmem:[%s5010] ss:$9 sm:$0xff] %v3942
        %5024 = vst [vmem:[%s5012] ss:$9 sm:$0xff] %v3943
        %5025 = vst [vmem:[%s5014] ss:$9 sm:$0xff] %v3944
        %5026 = vst [vmem:[%s5016] ss:$9 sm:$0xff] %v3945
        %v5027 = vld [vmem:[#allocation1] sm:$0xff]
        %5028 = vst [vmem:[#allocation1] ss:$9 sm:$0xff] %v3946
        %5029 = vst [vmem:[%s5004] ss:$9 sm:$0xff] %v3947
        %5030 = vst [vmem:[%s5006] ss:$9 sm:$0xff] %v3948
        %5031 = vst [vmem:[%s5008] ss:$9 sm:$0xff] %v3949
        %5032 = vst [vmem:[%s5010] ss:$9 sm:$0xff] %v3950
        %5033 = vst [vmem:[%s5012] ss:$9 sm:$0xff] %v3951
        %5034 = vst [vmem:[%s5014] ss:$9 sm:$0xff] %v3952
        %5035 = vst [vmem:[%s5016] ss:$9 sm:$0xff] %v3953
        %v5036 = vld [vmem:[#allocation1] sm:$0xff]
        %5037 = vst [vmem:[#allocation1] ss:$9 sm:$0xff] %v3954
        %5038 = vst [vmem:[%s5004] ss:$9 sm:$0xff] %v3955
        %5039 = vst [vmem:[%s5006] ss:$9 sm:$0xff] %v3956
        %5040 = vst [vmem:[%s5008] ss:$9 sm:$0xff] %v3957
        %5041 = vst [vmem:[%s5010] ss:$9 sm:$0xff] %v3958
        %5042 = vst [vmem:[%s5012] ss:$9 sm:$0xff] %v3959
        %5043 = vst [vmem:[%s5014] ss:$9 sm:$0xff] %v3960
        %5044 = vst [vmem:[%s5016] ss:$9 sm:$0xff] %v3961
        %v5045 = vld [vmem:[#allocation1] sm:$0xff]
        %5046 = vst [vmem:[#allocation1] ss:$9 sm:$0xff] %v3962
        %5047 = vst [vmem:[%s5004] ss:$9 sm:$0xff] %v3963
        %5048 = vst [vmem:[%s5006] ss:$9 sm:$0xff] %v3964
        %5049 = vst [vmem:[%s5008] ss:$9 sm:$0xff] %v3965
        %v5050 = vld [vmem:[#allocation1] sm:$0xff]
        %v5072 = vunpack.c.l.b16 %v4987
        %v5073 = vunpack.c.l.b16 %v4988
        %v5074 = vunpack.c.l.b16 %v4989
        %v5075 = vunpack.c.l.b16 %v4990
        %v5076 = vunpack.c.l.b16 %v4991
        %v5077 = vunpack.c.l.b16 %v4992
        %v5078 = vunpack.c.l.b16 %v4993
        %v5079 = vunpack.c.l.b16 %v4994
        %v5080 = vunpack.c.l.b16 %v4995
        %v5081 = vunpack.c.l.b16 %v4996
        %v5082 = vunpack.c.l.b16 %v4997
        %v5083 = vunpack.c.l.b16 %v4998
        %v5084 = vunpack.c.l.b16 %v4999
        %v5085 = vunpack.c.l.b16 %v5000
        %v5086 = vunpack.c.l.b16 %v5001
        %v5087 = vunpack.c.l.b16 %v5002
        %v5088 = vpack.c.b16 %v5073, %v5072
        %v5089 = vpack.c.b16 %v5075, %v5074
        %v5090 = vpack.c.b16 %v5077, %v5076
        %v5091 = vpack.c.b16 %v5079, %v5078
        %v5092 = vpack.c.b16 %v5081, %v5080
        %v5093 = vpack.c.b16 %v5083, %v5082
        %v5094 = vpack.c.b16 %v5085, %v5084
        %v5095 = vpack.c.b16 %v5087, %v5086
        %5104 = vmatpush.bf16.msra.mxu0 %v5095
        %5105 = vmatpush.bf16.msra.mxu0 %v5094
        %5106 = vmatpush.bf16.msra.mxu0 %v5093
        %5107 = vmatpush.bf16.msra.mxu0 %v5092
        %5108 = vmatpush.bf16.msra.mxu0 %v5091
        %5109 = vmatpush.bf16.msra.mxu0 %v5090
        %5110 = vmatpush.bf16.msra.mxu0 %v5089
        %5111 = vmatpush.bf16.msra.mxu0 %v5088
        %5112 = vmatmul.bf16.gmra.mxu0 %v5018
        %v5113 = vpop.f32.mrf.mxu0
        %v5114 = vadd.f32 0.0, %v5113
        %v5115 = vpop.f32.mrf.mxu0
        %v5116 = vadd.f32 0.0, %v5115
        %5117 = vmatmul.bf16.gmra.mxu0 %v5027
        %v5118 = vpop.f32.mrf.mxu0
        %v5119 = vadd.f32 0.0, %v5118
        %v5120 = vpop.f32.mrf.mxu0
        %v5121 = vadd.f32 0.0, %v5120
        %5122 = vmatmul.bf16.gmra.mxu0 %v5036
        %v5123 = vpop.f32.mrf.mxu0
        %v5124 = vadd.f32 0.0, %v5123
        %v5125 = vpop.f32.mrf.mxu0
        %v5126 = vadd.f32 0.0, %v5125
        %5127 = vmatmul.bf16.gmra.mxu0 %v5045
        %v5128 = vpop.f32.mrf.mxu0
        %v5129 = vadd.f32 0.0, %v5128
        %v5130 = vpop.f32.mrf.mxu0
        %v5131 = vadd.f32 0.0, %v5130
        %5132 = vmatmul.bf16.gmra.mxu0 %v5050
        %v5133 = vpop.f32.mrf.mxu0
        %v5134 = vadd.f32 0.0, %v5133
        %v5135 = vpop.f32.mrf.mxu0
        %5136 = vdwg.mxu0
        %v5146 = vrot.slane %v5114, 1
        %v5147 = vrot.slane %v5114, 2
        %v5148 = vrot.slane %v5114, 3
        %v5149 = vrot.slane %v5114, 4
        %v5150 = vrot.slane %v5114, 5
        %v5151 = vrot.slane %v5114, 6
        %v5152 = vrot.slane %v5114, 7
        %v5153 = vrot.slane %v5116, 2
        %v5154 = vrot.slane %v5116, 3
        %v5155 = vrot.slane %v5116, 4
        %v5156 = vrot.slane %v5116, 5
        %v5157 = vrot.slane %v5116, 6
        %v5158 = vrot.slane %v5116, 7
        %v5159 = vrot.slane %v5119, 1
        %v5160 = vrot.slane %v5119, 3
        %v5161 = vrot.slane %v5119, 4
        %v5162 = vrot.slane %v5119, 5
        %v5163 = vrot.slane %v5119, 6
        %v5164 = vrot.slane %v5119, 7
        %v5165 = vrot.slane %v5121, 1
        %v5166 = vrot.slane %v5121, 2
        %v5167 = vrot.slane %v5121, 4
        %v5168 = vrot.slane %v5121, 5
        %v5169 = vrot.slane %v5121, 6
        %v5170 = vrot.slane %v5121, 7
        %v5171 = vrot.slane %v5124, 1
        %v5172 = vrot.slane %v5124, 2
        %v5173 = vrot.slane %v5124, 3
        %v5174 = vrot.slane %v5124, 5
        %v5175 = vrot.slane %v5124, 6
        %v5176 = vrot.slane %v5124, 7
        %v5177 = vrot.slane %v5126, 1
        %v5178 = vrot.slane %v5126, 2
        %v5179 = vrot.slane %v5126, 3
        %v5180 = vrot.slane %v5126, 4
        %v5181 = vrot.slane %v5126, 6
        %v5182 = vrot.slane %v5126, 7
        %v5183 = vrot.slane %v5129, 1
        %v5184 = vrot.slane %v5129, 2
        %v5185 = vrot.slane %v5129, 3
        %v5186 = vrot.slane %v5129, 4
        %v5187 = vrot.slane %v5129, 5
        %v5188 = vrot.slane %v5129, 7
        %v5189 = vrot.slane %v5131, 1
        %v5190 = vrot.slane %v5131, 2
        %v5191 = vrot.slane %v5131, 3
        %v5192 = vrot.slane %v5131, 4
        %v5193 = vrot.slane %v5131, 5
        %v5194 = vrot.slane %v5131, 6
        %v5195 = vrot.slane %v5134, 1
        %v5196 = vrot.slane %v5134, 2
        %v5197 = vrot.slane %v5134, 3
        %v5198 = vrot.slane %v5134, 4
        %v5199 = vrot.slane %v5134, 5
        %v5200 = vrot.slane %v5134, 6
        %v5201 = vrot.slane %v5134, 7
        %v5258 = vadd.f32 %v4922, %v5146
        %v5259 = vadd.f32 %v4923, %v5147
        %v5260 = vadd.f32 %v4924, %v5148
        %v5261 = vadd.f32 %v4925, %v5149
        %v5262 = vadd.f32 %v4926, %v5150
        %v5263 = vadd.f32 %v4927, %v5151
        %v5264 = vadd.f32 %v4928, %v5152
        %v5265 = vadd.f32 %v4929, %v5116
        %v5266 = vadd.f32 %v4930, %v5153
        %v5267 = vadd.f32 %v4931, %v5154
        %v5268 = vadd.f32 %v4932, %v5155
        %v5269 = vadd.f32 %v4933, %v5156
        %v5270 = vadd.f32 %v4934, %v5157
        %v5271 = vadd.f32 %v4935, %v5158
        %v5272 = vadd.f32 %v4936, %v5119
        %v5273 = vadd.f32 %v4937, %v5159
        %v5274 = vadd.f32 %v4938, %v5160
        %v5275 = vadd.f32 %v4939, %v5161
        %v5276 = vadd.f32 %v4940, %v5162
        %v5277 = vadd.f32 %v4941, %v5163
        %v5278 = vadd.f32 %v4942, %v5164
        %v5279 = vadd.f32 %v4943, %v5121
        %v5280 = vadd.f32 %v4944, %v5165
        %v5281 = vadd.f32 %v4945, %v5166
        %v5282 = vadd.f32 %v4946, %v5167
        %v5283 = vadd.f32 %v4947, %v5168
        %v5284 = vadd.f32 %v4948, %v5169
        %v5285 = vadd.f32 %v4949, %v5170
        %v5286 = vadd.f32 %v4950, %v5124
        %v5287 = vadd.f32 %v4951, %v5171
        %v5288 = vadd.f32 %v4952, %v5172
        %v5289 = vadd.f32 %v4953, %v5173
        %v5290 = vadd.f32 %v4954, %v5174
        %v5291 = vadd.f32 %v4955, %v5175
        %v5292 = vadd.f32 %v4956, %v5176
        %v5293 = vadd.f32 %v4957, %v5126
        %v5294 = vadd.f32 %v4958, %v5177
        %v5295 = vadd.f32 %v4959, %v5178
        %v5296 = vadd.f32 %v4960, %v5179
        %v5297 = vadd.f32 %v4961, %v5180
        %v5298 = vadd.f32 %v4962, %v5181
        %v5299 = vadd.f32 %v4963, %v5182
        %v5300 = vadd.f32 %v4964, %v5129
        %v5301 = vadd.f32 %v4965, %v5183
        %v5302 = vadd.f32 %v4966, %v5184
        %v5303 = vadd.f32 %v4967, %v5185
        %v5304 = vadd.f32 %v4968, %v5186
        %v5305 = vadd.f32 %v4969, %v5187
        %v5306 = vadd.f32 %v4970, %v5188
        %v5307 = vadd.f32 %v4971, %v5131
        %v5308 = vadd.f32 %v4972, %v5189
        %v5309 = vadd.f32 %v4973, %v5190
        %v5310 = vadd.f32 %v4974, %v5191
        %v5311 = vadd.f32 %v4975, %v5192
        %v5312 = vadd.f32 %v4976, %v5193
        %v5313 = vadd.f32 %v4977, %v5194
        %v5314 = vadd.f32 %v4978, %v5134
        %v5315 = vadd.f32 %v4979, %v5195
        %v5316 = vadd.f32 %v4980, %v5196
        %v5317 = vadd.f32 %v4981, %v5197
        %v5318 = vadd.f32 %v4982, %v5198
        %v5319 = vadd.f32 %v4983, %v5199
        %v5320 = vadd.f32 %v4984, %v5200
        %v5321 = vadd.f32 %v4985, %v5201
        %v5322 = vld [vmem:[%s2] sm:$0x1]
        %v5324 = vperm.slane %v5322, 0
        %v5326 = vrot.slane %v5324, 1
        %v5327 = vrot.slane %v5324, 2
        %v5328 = vrot.slane %v5324, 3
        %v5329 = vrot.slane %v5324, 4
        %v5330 = vrot.slane %v5324, 5
        %v5331 = vrot.slane %v5324, 6
        %v5332 = vrot.slane %v5324, 7
        %v5340 = vadd.f32 %v5258, %v5324
        %v5341 = vadd.f32 %v5259, %v5326
        %v5342 = vadd.f32 %v5260, %v5327
        %v5343 = vadd.f32 %v5261, %v5328
        %v5344 = vadd.f32 %v5262, %v5329
        %v5345 = vadd.f32 %v5263, %v5330
        %v5346 = vadd.f32 %v5264, %v5331
        %v5347 = vadd.f32 %v5265, %v5332
        %v5348 = vadd.f32 %v5266, %v5324
        %v5349 = vadd.f32 %v5267, %v5326
        %v5350 = vadd.f32 %v5268, %v5327
        %v5351 = vadd.f32 %v5269, %v5328
        %v5352 = vadd.f32 %v5270, %v5329
        %v5353 = vadd.f32 %v5271, %v5330
        %v5354 = vadd.f32 %v5272, %v5331
        %v5355 = vadd.f32 %v5273, %v5332
        %v5356 = vadd.f32 %v5274, %v5324
        %v5357 = vadd.f32 %v5275, %v5326
        %v5358 = vadd.f32 %v5276, %v5327
        %v5359 = vadd.f32 %v5277, %v5328
        %v5360 = vadd.f32 %v5278, %v5329
        %v5361 = vadd.f32 %v5279, %v5330
        %v5362 = vadd.f32 %v5280, %v5331
        %v5363 = vadd.f32 %v5281, %v5332
        %v5364 = vadd.f32 %v5282, %v5324
        %v5365 = vadd.f32 %v5283, %v5326
        %v5366 = vadd.f32 %v5284, %v5327
        %v5367 = vadd.f32 %v5285, %v5328
        %v5368 = vadd.f32 %v5286, %v5329
        %v5369 = vadd.f32 %v5287, %v5330
        %v5370 = vadd.f32 %v5288, %v5331
        %v5371 = vadd.f32 %v5289, %v5332
        %v5372 = vadd.f32 %v5290, %v5324
        %v5373 = vadd.f32 %v5291, %v5326
        %v5374 = vadd.f32 %v5292, %v5327
        %v5375 = vadd.f32 %v5293, %v5328
        %v5376 = vadd.f32 %v5294, %v5329
        %v5377 = vadd.f32 %v5295, %v5330
        %v5378 = vadd.f32 %v5296, %v5331
        %v5379 = vadd.f32 %v5297, %v5332
        %v5380 = vadd.f32 %v5298, %v5324
        %v5381 = vadd.f32 %v5299, %v5326
        %v5382 = vadd.f32 %v5300, %v5327
        %v5383 = vadd.f32 %v5301, %v5328
        %v5384 = vadd.f32 %v5302, %v5329
        %v5385 = vadd.f32 %v5303, %v5330
        %v5386 = vadd.f32 %v5304, %v5331
        %v5387 = vadd.f32 %v5305, %v5332
        %v5388 = vadd.f32 %v5306, %v5324
        %v5389 = vadd.f32 %v5307, %v5326
        %v5390 = vadd.f32 %v5308, %v5327
        %v5391 = vadd.f32 %v5309, %v5328
        %v5392 = vadd.f32 %v5310, %v5329
        %v5393 = vadd.f32 %v5311, %v5330
        %v5394 = vadd.f32 %v5312, %v5331
        %v5395 = vadd.f32 %v5313, %v5332
        %v5396 = vadd.f32 %v5314, %v5324
        %v5397 = vadd.f32 %v5315, %v5326
        %v5398 = vadd.f32 %v5316, %v5327
        %v5399 = vadd.f32 %v5317, %v5328
        %v5400 = vadd.f32 %v5318, %v5329
        %v5401 = vadd.f32 %v5319, %v5330
        %v5402 = vadd.f32 %v5320, %v5331
        %v5403 = vadd.f32 %v5321, %v5332
        %v5404 = vmax.f32 %v5340, 0.0
        %v5405 = vmax.f32 %v5341, 0.0
        %v5406 = vmax.f32 %v5342, 0.0
        %v5407 = vmax.f32 %v5343, 0.0
        %v5408 = vmax.f32 %v5344, 0.0
        %v5409 = vmax.f32 %v5345, 0.0
        %v5410 = vmax.f32 %v5346, 0.0
        %v5411 = vmax.f32 %v5347, 0.0
        %v5412 = vmax.f32 %v5348, 0.0
        %v5413 = vmax.f32 %v5349, 0.0
        %v5414 = vmax.f32 %v5350, 0.0
        %v5415 = vmax.f32 %v5351, 0.0
        %v5416 = vmax.f32 %v5352, 0.0
        %v5417 = vmax.f32 %v5353, 0.0
        %v5418 = vmax.f32 %v5354, 0.0
        %v5419 = vmax.f32 %v5355, 0.0
        %v5420 = vmax.f32 %v5356, 0.0
        %v5421 = vmax.f32 %v5357, 0.0
        %v5422 = vmax.f32 %v5358, 0.0
        %v5423 = vmax.f32 %v5359, 0.0
        %v5424 = vmax.f32 %v5360, 0.0
        %v5425 = vmax.f32 %v5361, 0.0
        %v5426 = vmax.f32 %v5362, 0.0
        %v5427 = vmax.f32 %v5363, 0.0
        %v5428 = vmax.f32 %v5364, 0.0
        %v5429 = vmax.f32 %v5365, 0.0
        %v5430 = vmax.f32 %v5366, 0.0
        %v5431 = vmax.f32 %v5367, 0.0
        %v5432 = vmax.f32 %v5368, 0.0
        %v5433 = vmax.f32 %v5369, 0.0
        %v5434 = vmax.f32 %v5370, 0.0
        %v5435 = vmax.f32 %v5371, 0.0
        %v5436 = vmax.f32 %v5372, 0.0
        %v5437 = vmax.f32 %v5373, 0.0
        %v5438 = vmax.f32 %v5374, 0.0
        %v5439 = vmax.f32 %v5375, 0.0
        %v5440 = vmax.f32 %v5376, 0.0
        %v5441 = vmax.f32 %v5377, 0.0
        %v5442 = vmax.f32 %v5378, 0.0
        %v5443 = vmax.f32 %v5379, 0.0
        %v5444 = vmax.f32 %v5380, 0.0
        %v5445 = vmax.f32 %v5381, 0.0
        %v5446 = vmax.f32 %v5382, 0.0
        %v5447 = vmax.f32 %v5383, 0.0
        %v5448 = vmax.f32 %v5384, 0.0
        %v5449 = vmax.f32 %v5385, 0.0
        %v5450 = vmax.f32 %v5386, 0.0
        %v5451 = vmax.f32 %v5387, 0.0
        %v5452 = vmax.f32 %v5388, 0.0
        %v5453 = vmax.f32 %v5389, 0.0
        %v5454 = vmax.f32 %v5390, 0.0
        %v5455 = vmax.f32 %v5391, 0.0
        %v5456 = vmax.f32 %v5392, 0.0
        %v5457 = vmax.f32 %v5393, 0.0
        %v5458 = vmax.f32 %v5394, 0.0
        %v5459 = vmax.f32 %v5395, 0.0
        %v5460 = vmax.f32 %v5396, 0.0
        %v5461 = vmax.f32 %v5397, 0.0
        %v5462 = vmax.f32 %v5398, 0.0
        %v5463 = vmax.f32 %v5399, 0.0
        %v5464 = vmax.f32 %v5400, 0.0
        %v5465 = vmax.f32 %v5401, 0.0
        %v5466 = vmax.f32 %v5402, 0.0
        %v5467 = vmax.f32 %v5403, 0.0
        %5532 = vst [vmem:[#allocation1] ss:$9 sm:$0xff] %v5404
        %s5533 = scalar_lea.vmem [#allocation1], 1
        %5534 = vst [vmem:[%s5533] ss:$9 sm:$0xff] %v5405
        %s5535 = scalar_lea.vmem [#allocation1], 2
        %5536 = vst [vmem:[%s5535] ss:$9 sm:$0xff] %v5406
        %s5537 = scalar_lea.vmem [#allocation1], 3
        %5538 = vst [vmem:[%s5537] ss:$9 sm:$0xff] %v5407
        %s5539 = scalar_lea.vmem [#allocation1], 4
        %5540 = vst [vmem:[%s5539] ss:$9 sm:$0xff] %v5408
        %s5541 = scalar_lea.vmem [#allocation1], 5
        %5542 = vst [vmem:[%s5541] ss:$9 sm:$0xff] %v5409
        %s5543 = scalar_lea.vmem [#allocation1], 6
        %5544 = vst [vmem:[%s5543] ss:$9 sm:$0xff] %v5410
        %s5545 = scalar_lea.vmem [#allocation1], 7
        %5546 = vst [vmem:[%s5545] ss:$9 sm:$0xff] %v5411
        %v5547 = vld [vmem:[#allocation1] sm:$0xff]
        %5548 = vst [vmem:[#allocation1] ss:$9 sm:$0xff] %v5412
        %5549 = vst [vmem:[%s5533] ss:$9 sm:$0xff] %v5413
        %5550 = vst [vmem:[%s5535] ss:$9 sm:$0xff] %v5414
        %5551 = vst [vmem:[%s5537] ss:$9 sm:$0xff] %v5415
        %5552 = vst [vmem:[%s5539] ss:$9 sm:$0xff] %v5416
        %5553 = vst [vmem:[%s5541] ss:$9 sm:$0xff] %v5417
        %5554 = vst [vmem:[%s5543] ss:$9 sm:$0xff] %v5418
        %5555 = vst [vmem:[%s5545] ss:$9 sm:$0xff] %v5419
        %v5556 = vld [vmem:[#allocation1] sm:$0xff]
        %5557 = vst [vmem:[#allocation1] ss:$9 sm:$0xff] %v5420
        %5558 = vst [vmem:[%s5533] ss:$9 sm:$0xff] %v5421
        %5559 = vst [vmem:[%s5535] ss:$9 sm:$0xff] %v5422
        %5560 = vst [vmem:[%s5537] ss:$9 sm:$0xff] %v5423
        %5561 = vst [vmem:[%s5539] ss:$9 sm:$0xff] %v5424
        %5562 = vst [vmem:[%s5541] ss:$9 sm:$0xff] %v5425
        %5563 = vst [vmem:[%s5543] ss:$9 sm:$0xff] %v5426
        %5564 = vst [vmem:[%s5545] ss:$9 sm:$0xff] %v5427
        %v5565 = vld [vmem:[#allocation1] sm:$0xff]
        %5566 = vst [vmem:[#allocation1] ss:$9 sm:$0xff] %v5428
        %5567 = vst [vmem:[%s5533] ss:$9 sm:$0xff] %v5429
        %5568 = vst [vmem:[%s5535] ss:$9 sm:$0xff] %v5430
        %5569 = vst [vmem:[%s5537] ss:$9 sm:$0xff] %v5431
        %5570 = vst [vmem:[%s5539] ss:$9 sm:$0xff] %v5432
        %5571 = vst [vmem:[%s5541] ss:$9 sm:$0xff] %v5433
        %5572 = vst [vmem:[%s5543] ss:$9 sm:$0xff] %v5434
        %5573 = vst [vmem:[%s5545] ss:$9 sm:$0xff] %v5435
        %v5574 = vld [vmem:[#allocation1] sm:$0xff]
        %5575 = vst [vmem:[#allocation1] ss:$9 sm:$0xff] %v5436
        %5576 = vst [vmem:[%s5533] ss:$9 sm:$0xff] %v5437
        %5577 = vst [vmem:[%s5535] ss:$9 sm:$0xff] %v5438
        %5578 = vst [vmem:[%s5537] ss:$9 sm:$0xff] %v5439
        %5579 = vst [vmem:[%s5539] ss:$9 sm:$0xff] %v5440
        %5580 = vst [vmem:[%s5541] ss:$9 sm:$0xff] %v5441
        %5581 = vst [vmem:[%s5543] ss:$9 sm:$0xff] %v5442
        %5582 = vst [vmem:[%s5545] ss:$9 sm:$0xff] %v5443
        %v5583 = vld [vmem:[#allocation1] sm:$0xff]
        %5584 = vst [vmem:[#allocation1] ss:$9 sm:$0xff] %v5444
        %5585 = vst [vmem:[%s5533] ss:$9 sm:$0xff] %v5445
        %5586 = vst [vmem:[%s5535] ss:$9 sm:$0xff] %v5446
        %5587 = vst [vmem:[%s5537] ss:$9 sm:$0xff] %v5447
        %5588 = vst [vmem:[%s5539] ss:$9 sm:$0xff] %v5448
        %5589 = vst [vmem:[%s5541] ss:$9 sm:$0xff] %v5449
        %5590 = vst [vmem:[%s5543] ss:$9 sm:$0xff] %v5450
        %5591 = vst [vmem:[%s5545] ss:$9 sm:$0xff] %v5451
        %v5592 = vld [vmem:[#allocation1] sm:$0xff]
        %5593 = vst [vmem:[#allocation1] ss:$9 sm:$0xff] %v5452
        %5594 = vst [vmem:[%s5533] ss:$9 sm:$0xff] %v5453
        %5595 = vst [vmem:[%s5535] ss:$9 sm:$0xff] %v5454
        %5596 = vst [vmem:[%s5537] ss:$9 sm:$0xff] %v5455
        %5597 = vst [vmem:[%s5539] ss:$9 sm:$0xff] %v5456
        %5598 = vst [vmem:[%s5541] ss:$9 sm:$0xff] %v5457
        %5599 = vst [vmem:[%s5543] ss:$9 sm:$0xff] %v5458
        %5600 = vst [vmem:[%s5545] ss:$9 sm:$0xff] %v5459
        %v5601 = vld [vmem:[#allocation1] sm:$0xff]
        %5602 = vst [vmem:[#allocation1] ss:$9 sm:$0xff] %v5460
        %5603 = vst [vmem:[%s5533] ss:$9 sm:$0xff] %v5461
        %5604 = vst [vmem:[%s5535] ss:$9 sm:$0xff] %v5462
        %5605 = vst [vmem:[%s5537] ss:$9 sm:$0xff] %v5463
        %5606 = vst [vmem:[%s5539] ss:$9 sm:$0xff] %v5464
        %5607 = vst [vmem:[%s5541] ss:$9 sm:$0xff] %v5465
        %5608 = vst [vmem:[%s5543] ss:$9 sm:$0xff] %v5466
        %5609 = vst [vmem:[%s5545] ss:$9 sm:$0xff] %v5467
        %v5610 = vld [vmem:[#allocation1] sm:$0xff]
        %v5619 = vpack.c.bf16 %v5547, %v5547
        %v5620 = vpack.c.bf16 %v5556, %v5556
        %v5621 = vpack.c.bf16 %v5565, %v5565
        %v5622 = vpack.c.bf16 %v5574, %v5574
        %v5623 = vpack.c.bf16 %v5583, %v5583
        %v5624 = vpack.c.bf16 %v5592, %v5592
        %v5625 = vpack.c.bf16 %v5601, %v5601
        %v5626 = vpack.c.bf16 %v5610, %v5610
        %v5628 = vshrl.u32 %v5619, 16
        %v5630 = vrot.slane %v5628, 7
        %v5631 = vshll.u32 %v5619, 16
        %v5633 = vor.u32 %v5630, %v5631
        %v5634 = vrot.slane %v5630, 4
        %v5636 = vshrl.u32 %v5620, 16
        %v5638 = vrot.slane %v5636, 7
        %v5639 = vshll.u32 %v5620, 16
        %v5641 = vor.u32 %v5638, %v5639
        %v5642 = vrot.slane %v5638, 4
        %v5644 = vshrl.u32 %v5621, 16
        %v5646 = vrot.slane %v5644, 7
        %v5647 = vshll.u32 %v5621, 16
        %v5649 = vor.u32 %v5646, %v5647
        %v5650 = vrot.slane %v5646, 4
        %v5652 = vshrl.u32 %v5622, 16
        %v5654 = vrot.slane %v5652, 7
        %v5655 = vshll.u32 %v5622, 16
        %v5657 = vor.u32 %v5654, %v5655
        %v5658 = vrot.slane %v5654, 4
        %v5660 = vshrl.u32 %v5623, 16
        %v5662 = vrot.slane %v5660, 7
        %v5663 = vshll.u32 %v5623, 16
        %v5665 = vor.u32 %v5662, %v5663
        %v5666 = vrot.slane %v5662, 4
        %v5668 = vshrl.u32 %v5624, 16
        %v5670 = vrot.slane %v5668, 7
        %v5671 = vshll.u32 %v5624, 16
        %v5673 = vor.u32 %v5670, %v5671
        %v5674 = vrot.slane %v5670, 4
        %v5676 = vshrl.u32 %v5625, 16
        %v5678 = vrot.slane %v5676, 7
        %v5679 = vshll.u32 %v5625, 16
        %v5681 = vor.u32 %v5678, %v5679
        %v5682 = vrot.slane %v5678, 4
        %v5684 = vshrl.u32 %v5626, 16
        %v5686 = vrot.slane %v5684, 7
        %v5687 = vshll.u32 %v5626, 16
        %v5689 = vor.u32 %v5686, %v5687
        %v5690 = vrot.slane %v5686, 4
        %s5707 = scalar_lea.vmem [#allocation2], 8
        %vm5708 = vcmask 1043456
        %vm5709 = vsmask.f32 7938
        %vm5710 = vmand %vm5708, %vm5709
        %v5711 = vld [vmem:[%s5707] sm:$0xf]
        %v5712 = vsel %vm5710, %v5633, %v5711
        %5713 = vst [vmem:[%s5707] sm:$0xf] %v5712
        %vm5714 = vcmask 1040384
        %vm5715 = vsmask.f32 256
        %vm5716 = vmand %vm5714, %vm5715
        %v5717 = vld [vmem:[%s5707 + $0x4] sm:$0x1]
        %v5718 = vsel %vm5716, %v5634, %v5717
        %5719 = vst [vmem:[%s5707 + $0x4] sm:$0x1] %v5718
        %v5720 = vld [vmem:[%s5707 + $0x8] sm:$0xf]
        %v5721 = vsel %vm5710, %v5641, %v5720
        %5722 = vst [vmem:[%s5707 + $0x8] sm:$0xf] %v5721
        %v5723 = vld [vmem:[%s5707 + $0xc] sm:$0x1]
        %v5724 = vsel %vm5716, %v5642, %v5723
        %5725 = vst [vmem:[%s5707 + $0xc] sm:$0x1] %v5724
        %v5726 = vld [vmem:[%s5707 + $0x10] sm:$0xf]
        %v5727 = vsel %vm5710, %v5649, %v5726
        %5728 = vst [vmem:[%s5707 + $0x10] sm:$0xf] %v5727
        %v5729 = vld [vmem:[%s5707 + $0x14] sm:$0x1]
        %v5730 = vsel %vm5716, %v5650, %v5729
        %5731 = vst [vmem:[%s5707 + $0x14] sm:$0x1] %v5730
        %v5732 = vld [vmem:[%s5707 + $0x18] sm:$0xf]
        %v5733 = vsel %vm5710, %v5657, %v5732
        %5734 = vst [vmem:[%s5707 + $0x18] sm:$0xf] %v5733
        %v5735 = vld [vmem:[%s5707 + $0x1c] sm:$0x1]
        %v5736 = vsel %vm5716, %v5658, %v5735
        %5737 = vst [vmem:[%s5707 + $0x1c] sm:$0x1] %v5736
        %v5738 = vld [vmem:[%s5707 + $0x20] sm:$0xf]
        %v5739 = vsel %vm5710, %v5665, %v5738
        %5740 = vst [vmem:[%s5707 + $0x20] sm:$0xf] %v5739
        %v5741 = vld [vmem:[%s5707 + $0x24] sm:$0x1]
        %v5742 = vsel %vm5716, %v5666, %v5741
        %5743 = vst [vmem:[%s5707 + $0x24] sm:$0x1] %v5742
        %v5744 = vld [vmem:[%s5707 + $0x28] sm:$0xf]
        %v5745 = vsel %vm5710, %v5673, %v5744
        %5746 = vst [vmem:[%s5707 + $0x28] sm:$0xf] %v5745
        %v5747 = vld [vmem:[%s5707 + $0x2c] sm:$0x1]
        %v5748 = vsel %vm5716, %v5674, %v5747
        %5749 = vst [vmem:[%s5707 + $0x2c] sm:$0x1] %v5748
        %v5750 = vld [vmem:[%s5707 + $0x30] sm:$0xf]
        %v5751 = vsel %vm5710, %v5681, %v5750
        %5752 = vst [vmem:[%s5707 + $0x30] sm:$0xf] %v5751
        %v5753 = vld [vmem:[%s5707 + $0x34] sm:$0x1]
        %v5754 = vsel %vm5716, %v5682, %v5753
        %5755 = vst [vmem:[%s5707 + $0x34] sm:$0x1] %v5754
        %v5756 = vld [vmem:[%s5707 + $0x38] sm:$0xf]
        %v5757 = vsel %vm5710, %v5689, %v5756
        %5758 = vst [vmem:[%s5707 + $0x38] sm:$0xf] %v5757
        %v5759 = vld [vmem:[%s5707 + $0x3c] sm:$0x1]
        %v5760 = vsel %vm5716, %v5690, %v5759
        %5761 = vst [vmem:[%s5707 + $0x3c] sm:$0x1] %v5760
      $region52: #{basic_block_forward.1} parent=47 // pred_fallthru
        _
      %v5762 = vld [vmem:[#allocation2] sm:$0xf]
      %v5763 = vld [vmem:[#allocation2 + $0x4] sm:$0x1]
      %v5764 = vld [vmem:[#allocation2 + $0x8] sm:$0xf]
      %v5765 = vld [vmem:[#allocation2 + $0xc] sm:$0x1]
      %v5766 = vld [vmem:[#allocation2 + $0x10] sm:$0xf]
      %v5767 = vld [vmem:[#allocation2 + $0x14] sm:$0x1]
      %v5768 = vld [vmem:[#allocation2 + $0x18] sm:$0xf]
      %v5769 = vld [vmem:[#allocation2 + $0x1c] sm:$0x1]
      %v5770 = vld [vmem:[#allocation2 + $0x20] sm:$0xf]
      %v5771 = vld [vmem:[#allocation2 + $0x24] sm:$0x1]
      %v5772 = vld [vmem:[#allocation2 + $0x28] sm:$0xf]
      %v5773 = vld [vmem:[#allocation2 + $0x2c] sm:$0x1]
      %v5774 = vld [vmem:[#allocation2 + $0x30] sm:$0xf]
      %v5775 = vld [vmem:[#allocation2 + $0x34] sm:$0x1]
      %v5776 = vld [vmem:[#allocation2 + $0x38] sm:$0xf]
      %v5777 = vld [vmem:[#allocation2 + $0x3c] sm:$0x1]
      %v5794 = vrot.slane %v5762, 3
      %v5795 = vrot.slane %v5763, 3
      %v5796 = vrot.slane %v5764, 3
      %v5797 = vrot.slane %v5765, 3
      %v5798 = vrot.slane %v5766, 3
      %v5799 = vrot.slane %v5767, 3
      %v5800 = vrot.slane %v5768, 3
      %v5801 = vrot.slane %v5769, 3
      %v5802 = vrot.slane %v5770, 3
      %v5803 = vrot.slane %v5771, 3
      %v5804 = vrot.slane %v5772, 3
      %v5805 = vrot.slane %v5773, 3
      %v5806 = vrot.slane %v5774, 3
      %v5807 = vrot.slane %v5775, 3
      %v5808 = vrot.slane %v5776, 3
      %v5809 = vrot.slane %v5777, 3
      %vm5810 = vcmask 1040384
      %v5813 = vsel %vm5810, %v5762, %v5794
      %vm5814 = vcmask 1041409
      %v5815 = vsel %vm5814, %v5762, %v5794
      %v5817 = vrot.slane %v5815, 1
      %vm5818 = vcmask 1042434
      %v5819 = vsel %vm5818, %v5762, %v5794
      %v5821 = vrot.slane %v5819, 2
      %vm5822 = vcmask 1043459
      %v5823 = vsel %vm5822, %v5762, %v5794
      %v5825 = vrot.slane %v5823, 3
      %v5828 = vsel %vm5810, %v5763, %v5795
      %v5831 = vsel %vm5810, %v5764, %v5796
      %v5832 = vsel %vm5814, %v5764, %v5796
      %v5834 = vrot.slane %v5832, 1
      %v5835 = vsel %vm5818, %v5764, %v5796
      %v5837 = vrot.slane %v5835, 2
      %v5838 = vsel %vm5822, %v5764, %v5796
      %v5840 = vrot.slane %v5838, 3
      %v5843 = vsel %vm5810, %v5765, %v5797
      %v5846 = vsel %vm5810, %v5766, %v5798
      %v5847 = vsel %vm5814, %v5766, %v5798
      %v5849 = vrot.slane %v5847, 1
      %v5850 = vsel %vm5818, %v5766, %v5798
      %v5852 = vrot.slane %v5850, 2
      %v5853 = vsel %vm5822, %v5766, %v5798
      %v5855 = vrot.slane %v5853, 3
      %v5858 = vsel %vm5810, %v5767, %v5799
      %v5861 = vsel %vm5810, %v5768, %v5800
      %v5862 = vsel %vm5814, %v5768, %v5800
      %v5864 = vrot.slane %v5862, 1
      %v5865 = vsel %vm5818, %v5768, %v5800
      %v5867 = vrot.slane %v5865, 2
      %v5868 = vsel %vm5822, %v5768, %v5800
      %v5870 = vrot.slane %v5868, 3
      %v5873 = vsel %vm5810, %v5769, %v5801
      %v5876 = vsel %vm5810, %v5770, %v5802
      %v5877 = vsel %vm5814, %v5770, %v5802
      %v5879 = vrot.slane %v5877, 1
      %v5880 = vsel %vm5818, %v5770, %v5802
      %v5882 = vrot.slane %v5880, 2
      %v5883 = vsel %vm5822, %v5770, %v5802
      %v5885 = vrot.slane %v5883, 3
      %v5888 = vsel %vm5810, %v5771, %v5803
      %v5891 = vsel %vm5810, %v5772, %v5804
      %v5892 = vsel %vm5814, %v5772, %v5804
      %v5894 = vrot.slane %v5892, 1
      %v5895 = vsel %vm5818, %v5772, %v5804
      %v5897 = vrot.slane %v5895, 2
      %v5898 = vsel %vm5822, %v5772, %v5804
      %v5900 = vrot.slane %v5898, 3
      %v5903 = vsel %vm5810, %v5773, %v5805
      %v5906 = vsel %vm5810, %v5774, %v5806
      %v5907 = vsel %vm5814, %v5774, %v5806
      %v5909 = vrot.slane %v5907, 1
      %v5910 = vsel %vm5818, %v5774, %v5806
      %v5912 = vrot.slane %v5910, 2
      %v5913 = vsel %vm5822, %v5774, %v5806
      %v5915 = vrot.slane %v5913, 3
      %v5918 = vsel %vm5810, %v5775, %v5807
      %v5921 = vsel %vm5810, %v5776, %v5808
      %v5922 = vsel %vm5814, %v5776, %v5808
      %v5924 = vrot.slane %v5922, 1
      %v5925 = vsel %vm5818, %v5776, %v5808
      %v5927 = vrot.slane %v5925, 2
      %v5928 = vsel %vm5822, %v5776, %v5808
      %v5930 = vrot.slane %v5928, 3
      %v5933 = vsel %vm5810, %v5777, %v5809
      %v5934 = vld [vmem:[%s342] sm:$0xf]
      %v5935 = vld [vmem:[%s342 + $0x4] sm:$0xf]
      %v5936 = vld [vmem:[%s342 + $0x8] sm:$0xf]
      %v5937 = vld [vmem:[%s342 + $0xc] sm:$0xf]
      %v5938 = vld [vmem:[%s342 + $0x10] sm:$0xf]
      %v5939 = vld [vmem:[%s342 + $0x14] sm:$0xf]
      %v5940 = vld [vmem:[%s342 + $0x18] sm:$0xf]
      %v5941 = vld [vmem:[%s342 + $0x1c] sm:$0xf]
      %v5942 = vld [vmem:[%s342 + $0x20] sm:$0xf]
      %v5943 = vld [vmem:[%s342 + $0x24] sm:$0xf]
      %v5944 = vld [vmem:[%s342 + $0x28] sm:$0xf]
      %v5945 = vld [vmem:[%s342 + $0x2c] sm:$0xf]
      %v5946 = vld [vmem:[%s342 + $0x30] sm:$0xf]
      %v5947 = vld [vmem:[%s342 + $0x34] sm:$0xf]
      %v5948 = vld [vmem:[%s342 + $0x38] sm:$0xf]
      %v5949 = vld [vmem:[%s342 + $0x3c] sm:$0xf]
      %5950 = vst [vmem:[#allocation1] ss:$9 sm:$0xff] %v5813
      %s5952 = scalar_lea.vmem [#allocation1], 1
      %5953 = vst [vmem:[%s5952] ss:$9 sm:$0xff] %v5817
      %s5955 = scalar_lea.vmem [#allocation1], 2
      %5956 = vst [vmem:[%s5955] ss:$9 sm:$0xff] %v5821
      %s5958 = scalar_lea.vmem [#allocation1], 3
      %5959 = vst [vmem:[%s5958] ss:$9 sm:$0xff] %v5825
      %s5960 = scalar_lea.vmem [#allocation1], 4
      %5961 = vst [vmem:[%s5960] ss:$9 sm:$0xff] %v5828
      %s5962 = scalar_lea.vmem [#allocation1], 5
      %5963 = vst [vmem:[%s5962] ss:$9 sm:$0xff] %v5831
      %s5965 = scalar_lea.vmem [#allocation1], 6
      %5966 = vst [vmem:[%s5965] ss:$9 sm:$0xff] %v5834
      %s5968 = scalar_lea.vmem [#allocation1], 7
      %5969 = vst [vmem:[%s5968] ss:$9 sm:$0xff] %v5837
      %v5970 = vld [vmem:[#allocation1] sm:$0xff]
      %5972 = vst [vmem:[#allocation1] ss:$9 sm:$0xff] %v5840
      %5973 = vst [vmem:[%s5952] ss:$9 sm:$0xff] %v5843
      %5974 = vst [vmem:[%s5955] ss:$9 sm:$0xff] %v5846
      %5976 = vst [vmem:[%s5958] ss:$9 sm:$0xff] %v5849
      %5978 = vst [vmem:[%s5960] ss:$9 sm:$0xff] %v5852
      %5980 = vst [vmem:[%s5962] ss:$9 sm:$0xff] %v5855
      %5981 = vst [vmem:[%s5965] ss:$9 sm:$0xff] %v5858
      %5982 = vst [vmem:[%s5968] ss:$9 sm:$0xff] %v5861
      %v5983 = vld [vmem:[#allocation1] sm:$0xff]
      %5985 = vst [vmem:[#allocation1] ss:$9 sm:$0xff] %v5864
      %5987 = vst [vmem:[%s5952] ss:$9 sm:$0xff] %v5867
      %5989 = vst [vmem:[%s5955] ss:$9 sm:$0xff] %v5870
      %5990 = vst [vmem:[%s5958] ss:$9 sm:$0xff] %v5873
      %5991 = vst [vmem:[%s5960] ss:$9 sm:$0xff] %v5876
      %5993 = vst [vmem:[%s5962] ss:$9 sm:$0xff] %v5879
      %5995 = vst [vmem:[%s5965] ss:$9 sm:$0xff] %v5882
      %5997 = vst [vmem:[%s5968] ss:$9 sm:$0xff] %v5885
      %v5998 = vld [vmem:[#allocation1] sm:$0xff]
      %5999 = vst [vmem:[#allocation1] ss:$9 sm:$0xff] %v5888
      %6000 = vst [vmem:[%s5952] ss:$9 sm:$0xff] %v5891
      %6002 = vst [vmem:[%s5955] ss:$9 sm:$0xff] %v5894
      %6004 = vst [vmem:[%s5958] ss:$9 sm:$0xff] %v5897
      %6006 = vst [vmem:[%s5960] ss:$9 sm:$0xff] %v5900
      %6007 = vst [vmem:[%s5962] ss:$9 sm:$0xff] %v5903
      %6008 = vst [vmem:[%s5965] ss:$9 sm:$0xff] %v5906
      %6010 = vst [vmem:[%s5968] ss:$9 sm:$0xff] %v5909
      %v6011 = vld [vmem:[#allocation1] sm:$0xff]
      %6013 = vst [vmem:[#allocation1] ss:$9 sm:$0xff] %v5912
      %6015 = vst [vmem:[%s5952] ss:$9 sm:$0xff] %v5915
      %6016 = vst [vmem:[%s5955] ss:$9 sm:$0xff] %v5918
      %6017 = vst [vmem:[%s5958] ss:$9 sm:$0xff] %v5921
      %6019 = vst [vmem:[%s5960] ss:$9 sm:$0xff] %v5924
      %6021 = vst [vmem:[%s5962] ss:$9 sm:$0xff] %v5927
      %6023 = vst [vmem:[%s5965] ss:$9 sm:$0xff] %v5930
      %6024 = vst [vmem:[%s5968] ss:$9 sm:$0xff] %v5933
      %v6025 = vld [vmem:[#allocation1] sm:$0xff]
      %v6047 = vunpack.c.l.b16 %v5934
      %v6048 = vunpack.c.l.b16 %v5935
      %v6049 = vunpack.c.l.b16 %v5936
      %v6050 = vunpack.c.l.b16 %v5937
      %v6051 = vunpack.c.l.b16 %v5938
      %v6052 = vunpack.c.l.b16 %v5939
      %v6053 = vunpack.c.l.b16 %v5940
      %v6054 = vunpack.c.l.b16 %v5941
      %v6055 = vunpack.c.l.b16 %v5942
      %v6056 = vunpack.c.l.b16 %v5943
      %v6057 = vunpack.c.l.b16 %v5944
      %v6058 = vunpack.c.l.b16 %v5945
      %v6059 = vunpack.c.l.b16 %v5946
      %v6060 = vunpack.c.l.b16 %v5947
      %v6061 = vunpack.c.l.b16 %v5948
      %v6062 = vunpack.c.l.b16 %v5949
      %v6063 = vpack.c.b16 %v6048, %v6047
      %v6064 = vpack.c.b16 %v6050, %v6049
      %v6065 = vpack.c.b16 %v6052, %v6051
      %v6066 = vpack.c.b16 %v6054, %v6053
      %v6067 = vpack.c.b16 %v6056, %v6055
      %v6068 = vpack.c.b16 %v6058, %v6057
      %v6069 = vpack.c.b16 %v6060, %v6059
      %v6070 = vpack.c.b16 %v6062, %v6061
      %6079 = vmatpush.bf16.msra.mxu0 %v6070
      %6080 = vmatpush.bf16.msra.mxu0 %v6069
      %6081 = vmatpush.bf16.msra.mxu0 %v6068
      %6082 = vmatpush.bf16.msra.mxu0 %v6067
      %6083 = vmatpush.bf16.msra.mxu0 %v6066
      %6084 = vmatpush.bf16.msra.mxu0 %v6065
      %6085 = vmatpush.bf16.msra.mxu0 %v6064
      %6086 = vmatpush.bf16.msra.mxu0 %v6063
      %6087 = vmatmul.bf16.gmra.mxu0 %v5970
      %v6088 = vpop.f32.mrf.mxu0
      %v6089 = vadd.f32 0.0, %v6088
      %v6090 = vpop.f32.mrf.mxu0
      %v6091 = vadd.f32 0.0, %v6090
      %6092 = vmatmul.bf16.gmra.mxu0 %v5983
      %v6093 = vpop.f32.mrf.mxu0
      %v6094 = vadd.f32 0.0, %v6093
      %v6095 = vpop.f32.mrf.mxu0
      %v6096 = vadd.f32 0.0, %v6095
      %6097 = vmatmul.bf16.gmra.mxu0 %v5998
      %v6098 = vpop.f32.mrf.mxu0
      %v6099 = vadd.f32 0.0, %v6098
      %v6100 = vpop.f32.mrf.mxu0
      %v6101 = vadd.f32 0.0, %v6100
      %6102 = vmatmul.bf16.gmra.mxu0 %v6011
      %v6103 = vpop.f32.mrf.mxu0
      %v6104 = vadd.f32 0.0, %v6103
      %v6105 = vpop.f32.mrf.mxu0
      %v6106 = vadd.f32 0.0, %v6105
      %6107 = vmatmul.bf16.gmra.mxu0 %v6025
      %v6108 = vpop.f32.mrf.mxu0
      %v6109 = vadd.f32 0.0, %v6108
      %v6110 = vpop.f32.mrf.mxu0
      %v6111 = vadd.f32 0.0, %v6110
      %6112 = vdwg.mxu0
      %v6123 = vrot.slane %v6089, 2
      %v6124 = vrot.slane %v6089, 4
      %v6125 = vrot.slane %v6089, 6
      %v6126 = vrot.slane %v6091, 2
      %v6127 = vrot.slane %v6091, 4
      %v6128 = vrot.slane %v6091, 6
      %v6129 = vrot.slane %v6094, 4
      %v6130 = vrot.slane %v6094, 6
      %v6131 = vrot.slane %v6096, 2
      %v6132 = vrot.slane %v6096, 6
      %v6133 = vrot.slane %v6099, 2
      %v6134 = vrot.slane %v6099, 4
      %v6135 = vrot.slane %v6101, 2
      %v6136 = vrot.slane %v6101, 4
      %v6137 = vrot.slane %v6101, 6
      %v6138 = vrot.slane %v6104, 2
      %v6139 = vrot.slane %v6104, 4
      %v6140 = vrot.slane %v6104, 6
      %v6141 = vrot.slane %v6106, 4
      %v6142 = vrot.slane %v6106, 6
      %v6143 = vrot.slane %v6109, 2
      %v6144 = vrot.slane %v6109, 6
      %v6145 = vrot.slane %v6111, 2
      %v6146 = vrot.slane %v6111, 4
      %s6171 = scalar_lea.vmem %s342, 64
      %v6172 = vld [vmem:[%s6171] sm:$0xf]
      %v6173 = vld [vmem:[%s6171 + $0x4] sm:$0xf]
      %v6174 = vld [vmem:[%s6171 + $0x8] sm:$0xf]
      %v6175 = vld [vmem:[%s6171 + $0xc] sm:$0xf]
      %v6176 = vld [vmem:[%s6171 + $0x10] sm:$0xf]
      %v6177 = vld [vmem:[%s6171 + $0x14] sm:$0xf]
      %v6178 = vld [vmem:[%s6171 + $0x18] sm:$0xf]
      %v6179 = vld [vmem:[%s6171 + $0x1c] sm:$0xf]
      %v6180 = vld [vmem:[%s6171 + $0x20] sm:$0xf]
      %v6181 = vld [vmem:[%s6171 + $0x24] sm:$0xf]
      %v6182 = vld [vmem:[%s6171 + $0x28] sm:$0xf]
      %v6183 = vld [vmem:[%s6171 + $0x2c] sm:$0xf]
      %v6184 = vld [vmem:[%s6171 + $0x30] sm:$0xf]
      %v6185 = vld [vmem:[%s6171 + $0x34] sm:$0xf]
      %v6186 = vld [vmem:[%s6171 + $0x38] sm:$0xf]
      %v6187 = vld [vmem:[%s6171 + $0x3c] sm:$0xf]
      %6188 = vst [vmem:[#allocation1] ss:$9 sm:$0xff] %v5813
      %s6189 = scalar_lea.vmem [#allocation1], 1
      %6190 = vst [vmem:[%s6189] ss:$9 sm:$0xff] %v5817
      %s6191 = scalar_lea.vmem [#allocation1], 2
      %6192 = vst [vmem:[%s6191] ss:$9 sm:$0xff] %v5821
      %s6193 = scalar_lea.vmem [#allocation1], 3
      %6194 = vst [vmem:[%s6193] ss:$9 sm:$0xff] %v5825
      %s6195 = scalar_lea.vmem [#allocation1], 4
      %6196 = vst [vmem:[%s6195] ss:$9 sm:$0xff] %v5828
      %s6197 = scalar_lea.vmem [#allocation1], 5
      %6198 = vst [vmem:[%s6197] ss:$9 sm:$0xff] %v5831
      %s6199 = scalar_lea.vmem [#allocation1], 6
      %6200 = vst [vmem:[%s6199] ss:$9 sm:$0xff] %v5834
      %s6201 = scalar_lea.vmem [#allocation1], 7
      %6202 = vst [vmem:[%s6201] ss:$9 sm:$0xff] %v5837
      %v6203 = vld [vmem:[#allocation1] sm:$0xff]
      %6204 = vst [vmem:[#allocation1] ss:$9 sm:$0xff] %v5840
      %6205 = vst [vmem:[%s6189] ss:$9 sm:$0xff] %v5843
      %6206 = vst [vmem:[%s6191] ss:$9 sm:$0xff] %v5846
      %6207 = vst [vmem:[%s6193] ss:$9 sm:$0xff] %v5849
      %6208 = vst [vmem:[%s6195] ss:$9 sm:$0xff] %v5852
      %6209 = vst [vmem:[%s6197] ss:$9 sm:$0xff] %v5855
      %6210 = vst [vmem:[%s6199] ss:$9 sm:$0xff] %v5858
      %6211 = vst [vmem:[%s6201] ss:$9 sm:$0xff] %v5861
      %v6212 = vld [vmem:[#allocation1] sm:$0xff]
      %6213 = vst [vmem:[#allocation1] ss:$9 sm:$0xff] %v5864
      %6214 = vst [vmem:[%s6189] ss:$9 sm:$0xff] %v5867
      %6215 = vst [vmem:[%s6191] ss:$9 sm:$0xff] %v5870
      %6216 = vst [vmem:[%s6193] ss:$9 sm:$0xff] %v5873
      %6217 = vst [vmem:[%s6195] ss:$9 sm:$0xff] %v5876
      %6218 = vst [vmem:[%s6197] ss:$9 sm:$0xff] %v5879
      %6219 = vst [vmem:[%s6199] ss:$9 sm:$0xff] %v5882
      %6220 = vst [vmem:[%s6201] ss:$9 sm:$0xff] %v5885
      %v6221 = vld [vmem:[#allocation1] sm:$0xff]
      %6222 = vst [vmem:[#allocation1] ss:$9 sm:$0xff] %v5888
      %6223 = vst [vmem:[%s6189] ss:$9 sm:$0xff] %v5891
      %6224 = vst [vmem:[%s6191] ss:$9 sm:$0xff] %v5894
      %6225 = vst [vmem:[%s6193] ss:$9 sm:$0xff] %v5897
      %6226 = vst [vmem:[%s6195] ss:$9 sm:$0xff] %v5900
      %6227 = vst [vmem:[%s6197] ss:$9 sm:$0xff] %v5903
      %6228 = vst [vmem:[%s6199] ss:$9 sm:$0xff] %v5906
      %6229 = vst [vmem:[%s6201] ss:$9 sm:$0xff] %v5909
      %v6230 = vld [vmem:[#allocation1] sm:$0xff]
      %6231 = vst [vmem:[#allocation1] ss:$9 sm:$0xff] %v5912
      %6232 = vst [vmem:[%s6189] ss:$9 sm:$0xff] %v5915
      %6233 = vst [vmem:[%s6191] ss:$9 sm:$0xff] %v5918
      %6234 = vst [vmem:[%s6193] ss:$9 sm:$0xff] %v5921
      %6235 = vst [vmem:[%s6195] ss:$9 sm:$0xff] %v5924
      %6236 = vst [vmem:[%s6197] ss:$9 sm:$0xff] %v5927
      %6237 = vst [vmem:[%s6199] ss:$9 sm:$0xff] %v5930
      %6238 = vst [vmem:[%s6201] ss:$9 sm:$0xff] %v5933
      %v6239 = vld [vmem:[#allocation1] sm:$0xff]
      %v6261 = vunpack.c.l.b16 %v6172
      %v6262 = vunpack.c.l.b16 %v6173
      %v6263 = vunpack.c.l.b16 %v6174
      %v6264 = vunpack.c.l.b16 %v6175
      %v6265 = vunpack.c.l.b16 %v6176
      %v6266 = vunpack.c.l.b16 %v6177
      %v6267 = vunpack.c.l.b16 %v6178
      %v6268 = vunpack.c.l.b16 %v6179
      %v6269 = vunpack.c.l.b16 %v6180
      %v6270 = vunpack.c.l.b16 %v6181
      %v6271 = vunpack.c.l.b16 %v6182
      %v6272 = vunpack.c.l.b16 %v6183
      %v6273 = vunpack.c.l.b16 %v6184
      %v6274 = vunpack.c.l.b16 %v6185
      %v6275 = vunpack.c.l.b16 %v6186
      %v6276 = vunpack.c.l.b16 %v6187
      %v6277 = vpack.c.b16 %v6262, %v6261
      %v6278 = vpack.c.b16 %v6264, %v6263
      %v6279 = vpack.c.b16 %v6266, %v6265
      %v6280 = vpack.c.b16 %v6268, %v6267
      %v6281 = vpack.c.b16 %v6270, %v6269
      %v6282 = vpack.c.b16 %v6272, %v6271
      %v6283 = vpack.c.b16 %v6274, %v6273
      %v6284 = vpack.c.b16 %v6276, %v6275
      %6293 = vmatpush.bf16.msra.mxu0 %v6284
      %6294 = vmatpush.bf16.msra.mxu0 %v6283
      %6295 = vmatpush.bf16.msra.mxu0 %v6282
      %6296 = vmatpush.bf16.msra.mxu0 %v6281
      %6297 = vmatpush.bf16.msra.mxu0 %v6280
      %6298 = vmatpush.bf16.msra.mxu0 %v6279
      %6299 = vmatpush.bf16.msra.mxu0 %v6278
      %6300 = vmatpush.bf16.msra.mxu0 %v6277
      %6301 = vmatmul.bf16.gmra.mxu0 %v6203
      %v6302 = vpop.f32.mrf.mxu0
      %v6303 = vadd.f32 0.0, %v6302
      %v6304 = vpop.f32.mrf.mxu0
      %v6305 = vadd.f32 0.0, %v6304
      %6306 = vmatmul.bf16.gmra.mxu0 %v6212
      %v6307 = vpop.f32.mrf.mxu0
      %v6308 = vadd.f32 0.0, %v6307
      %v6309 = vpop.f32.mrf.mxu0
      %v6310 = vadd.f32 0.0, %v6309
      %6311 = vmatmul.bf16.gmra.mxu0 %v6221
      %v6312 = vpop.f32.mrf.mxu0
      %v6313 = vadd.f32 0.0, %v6312
      %v6314 = vpop.f32.mrf.mxu0
      %v6315 = vadd.f32 0.0, %v6314
      %6316 = vmatmul.bf16.gmra.mxu0 %v6230
      %v6317 = vpop.f32.mrf.mxu0
      %v6318 = vadd.f32 0.0, %v6317
      %v6319 = vpop.f32.mrf.mxu0
      %v6320 = vadd.f32 0.0, %v6319
      %6321 = vmatmul.bf16.gmra.mxu0 %v6239
      %v6322 = vpop.f32.mrf.mxu0
      %v6323 = vadd.f32 0.0, %v6322
      %v6324 = vpop.f32.mrf.mxu0
      %v6325 = vadd.f32 0.0, %v6324
      %6326 = vdwg.mxu0
      %v6337 = vrot.slane %v6303, 2
      %v6338 = vrot.slane %v6303, 4
      %v6339 = vrot.slane %v6303, 6
      %v6340 = vrot.slane %v6305, 2
      %v6341 = vrot.slane %v6305, 4
      %v6342 = vrot.slane %v6305, 6
      %v6343 = vrot.slane %v6308, 2
      %v6344 = vrot.slane %v6308, 4
      %v6345 = vrot.slane %v6308, 6
      %v6346 = vrot.slane %v6310, 2
      %v6347 = vrot.slane %v6310, 4
      %v6348 = vrot.slane %v6310, 6
      %v6349 = vrot.slane %v6313, 2
      %v6350 = vrot.slane %v6313, 4
      %v6351 = vrot.slane %v6313, 6
      %v6352 = vrot.slane %v6315, 2
      %v6353 = vrot.slane %v6315, 4
      %v6354 = vrot.slane %v6315, 6
      %v6355 = vrot.slane %v6318, 2
      %v6356 = vrot.slane %v6318, 4
      %v6357 = vrot.slane %v6318, 6
      %v6358 = vrot.slane %v6320, 2
      %v6359 = vrot.slane %v6320, 4
      %v6360 = vrot.slane %v6320, 6
      %v6361 = vrot.slane %v6323, 2
      %v6362 = vrot.slane %v6323, 4
      %v6363 = vrot.slane %v6323, 6
      %v6364 = vrot.slane %v6325, 2
      %v6365 = vrot.slane %v6325, 4
      %v6366 = vrot.slane %v6325, 6
      %vm6367 = vmor %vm5810, %vm5818
      %vm6368 = vcmask 1044484
      %vm6369 = vmor %vm6367, %vm6368
      %vm6370 = vcmask 1046534
      %vm6371 = vmor %vm6369, %vm6370
      %v6372 = vrot.slane %v6303, 7
      %v6373 = vrot.slane %v6372, 2
      %v6374 = vrot.slane %v6337, 7
      %v6375 = vsel %vm6371, %v6373, %v6374
      %v6376 = vrot.slane %v6374, 2
      %v6377 = vrot.slane %v6338, 7
      %v6378 = vsel %vm6371, %v6376, %v6377
      %v6379 = vrot.slane %v6377, 2
      %v6380 = vrot.slane %v6339, 7
      %v6381 = vsel %vm6371, %v6379, %v6380
      %v6382 = vrot.slane %v6380, 2
      %v6383 = vrot.slane %v6305, 7
      %v6384 = vsel %vm6371, %v6382, %v6383
      %v6385 = vrot.slane %v6340, 7
      %v6386 = vrot.slane %v6385, 2
      %v6387 = vrot.slane %v6341, 7
      %v6388 = vsel %vm6371, %v6386, %v6387
      %v6389 = vrot.slane %v6387, 2
      %v6390 = vrot.slane %v6342, 7
      %v6391 = vsel %vm6371, %v6389, %v6390
      %v6392 = vrot.slane %v6390, 2
      %v6393 = vrot.slane %v6308, 7
      %v6394 = vsel %vm6371, %v6392, %v6393
      %v6395 = vrot.slane %v6393, 2
      %v6396 = vrot.slane %v6343, 7
      %v6397 = vsel %vm6371, %v6395, %v6396
      %v6398 = vrot.slane %v6344, 7
      %v6399 = vrot.slane %v6398, 2
      %v6400 = vrot.slane %v6345, 7
      %v6401 = vsel %vm6371, %v6399, %v6400
      %v6402 = vrot.slane %v6400, 2
      %v6403 = vrot.slane %v6310, 7
      %v6404 = vsel %vm6371, %v6402, %v6403
      %v6405 = vrot.slane %v6403, 2
      %v6406 = vrot.slane %v6346, 7
      %v6407 = vsel %vm6371, %v6405, %v6406
      %v6408 = vrot.slane %v6406, 2
      %v6409 = vrot.slane %v6347, 7
      %v6410 = vsel %vm6371, %v6408, %v6409
      %v6411 = vrot.slane %v6348, 7
      %v6412 = vrot.slane %v6411, 2
      %v6413 = vrot.slane %v6313, 7
      %v6414 = vsel %vm6371, %v6412, %v6413
      %v6415 = vrot.slane %v6413, 2
      %v6416 = vrot.slane %v6349, 7
      %v6417 = vsel %vm6371, %v6415, %v6416
      %v6418 = vrot.slane %v6416, 2
      %v6419 = vrot.slane %v6350, 7
      %v6420 = vsel %vm6371, %v6418, %v6419
      %v6421 = vrot.slane %v6419, 2
      %v6422 = vrot.slane %v6351, 7
      %v6423 = vsel %vm6371, %v6421, %v6422
      %v6424 = vrot.slane %v6315, 7
      %v6425 = vrot.slane %v6424, 2
      %v6426 = vrot.slane %v6352, 7
      %v6427 = vsel %vm6371, %v6425, %v6426
      %v6428 = vrot.slane %v6426, 2
      %v6429 = vrot.slane %v6353, 7
      %v6430 = vsel %vm6371, %v6428, %v6429
      %v6431 = vrot.slane %v6429, 2
      %v6432 = vrot.slane %v6354, 7
      %v6433 = vsel %vm6371, %v6431, %v6432
      %v6434 = vrot.slane %v6432, 2
      %v6435 = vrot.slane %v6318, 7
      %v6436 = vsel %vm6371, %v6434, %v6435
      %v6437 = vrot.slane %v6355, 7
      %v6438 = vrot.slane %v6437, 2
      %v6439 = vrot.slane %v6356, 7
      %v6440 = vsel %vm6371, %v6438, %v6439
      %v6441 = vrot.slane %v6439, 2
      %v6442 = vrot.slane %v6357, 7
      %v6443 = vsel %vm6371, %v6441, %v6442
      %v6444 = vrot.slane %v6442, 2
      %v6445 = vrot.slane %v6320, 7
      %v6446 = vsel %vm6371, %v6444, %v6445
      %v6447 = vrot.slane %v6445, 2
      %v6448 = vrot.slane %v6358, 7
      %v6449 = vsel %vm6371, %v6447, %v6448
      %v6450 = vrot.slane %v6359, 7
      %v6451 = vrot.slane %v6450, 2
      %v6452 = vrot.slane %v6360, 7
      %v6453 = vsel %vm6371, %v6451, %v6452
      %v6454 = vrot.slane %v6452, 2
      %v6455 = vrot.slane %v6323, 7
      %v6456 = vsel %vm6371, %v6454, %v6455
      %v6457 = vrot.slane %v6455, 2
      %v6458 = vrot.slane %v6361, 7
      %v6459 = vsel %vm6371, %v6457, %v6458
      %v6460 = vrot.slane %v6458, 2
      %v6461 = vrot.slane %v6362, 7
      %v6462 = vsel %vm6371, %v6460, %v6461
      %v6463 = vrot.slane %v6363, 7
      %v6464 = vrot.slane %v6463, 2
      %v6465 = vrot.slane %v6325, 7
      %v6466 = vsel %vm6371, %v6464, %v6465
      %v6467 = vrot.slane %v6465, 2
      %v6468 = vrot.slane %v6364, 7
      %v6469 = vsel %vm6371, %v6467, %v6468
      %v6470 = vrot.slane %v6468, 2
      %v6471 = vrot.slane %v6365, 7
      %v6472 = vsel %vm6371, %v6470, %v6471
      %v6473 = vrot.slane %v6471, 2
      %v6474 = vrot.slane %v6366, 7
      %v6475 = vsel %vm6371, %v6473, %v6474
      %v6508 = vadd.f32 %v6089, %v6375
      %v6509 = vadd.f32 %v6123, %v6378
      %v6510 = vadd.f32 %v6124, %v6381
      %v6511 = vadd.f32 %v6125, %v6384
      %v6512 = vadd.f32 %v6126, %v6388
      %v6513 = vadd.f32 %v6127, %v6391
      %v6514 = vadd.f32 %v6128, %v6394
      %v6515 = vadd.f32 %v6094, %v6397
      %v6516 = vadd.f32 %v6129, %v6401
      %v6517 = vadd.f32 %v6130, %v6404
      %v6518 = vadd.f32 %v6096, %v6407
      %v6519 = vadd.f32 %v6131, %v6410
      %v6520 = vadd.f32 %v6132, %v6414
      %v6521 = vadd.f32 %v6099, %v6417
      %v6522 = vadd.f32 %v6133, %v6420
      %v6523 = vadd.f32 %v6134, %v6423
      %v6524 = vadd.f32 %v6101, %v6427
      %v6525 = vadd.f32 %v6135, %v6430
      %v6526 = vadd.f32 %v6136, %v6433
      %v6527 = vadd.f32 %v6137, %v6436
      %v6528 = vadd.f32 %v6138, %v6440
      %v6529 = vadd.f32 %v6139, %v6443
      %v6530 = vadd.f32 %v6140, %v6446
      %v6531 = vadd.f32 %v6106, %v6449
      %v6532 = vadd.f32 %v6141, %v6453
      %v6533 = vadd.f32 %v6142, %v6456
      %v6534 = vadd.f32 %v6109, %v6459
      %v6535 = vadd.f32 %v6143, %v6462
      %v6536 = vadd.f32 %v6144, %v6466
      %v6537 = vadd.f32 %v6111, %v6469
      %v6538 = vadd.f32 %v6145, %v6472
      %v6539 = vadd.f32 %v6146, %v6475
      %s6540 = scalar_lea.vmem %s342, 128
      %v6541 = vld [vmem:[%s6540] sm:$0xf]
      %v6542 = vld [vmem:[%s6540 + $0x4] sm:$0xf]
      %v6543 = vld [vmem:[%s6540 + $0x8] sm:$0xf]
      %v6544 = vld [vmem:[%s6540 + $0xc] sm:$0xf]
      %v6545 = vld [vmem:[%s6540 + $0x10] sm:$0xf]
      %v6546 = vld [vmem:[%s6540 + $0x14] sm:$0xf]
      %v6547 = vld [vmem:[%s6540 + $0x18] sm:$0xf]
      %v6548 = vld [vmem:[%s6540 + $0x1c] sm:$0xf]
      %v6549 = vld [vmem:[%s6540 + $0x20] sm:$0xf]
      %v6550 = vld [vmem:[%s6540 + $0x24] sm:$0xf]
      %v6551 = vld [vmem:[%s6540 + $0x28] sm:$0xf]
      %v6552 = vld [vmem:[%s6540 + $0x2c] sm:$0xf]
      %v6553 = vld [vmem:[%s6540 + $0x30] sm:$0xf]
      %v6554 = vld [vmem:[%s6540 + $0x34] sm:$0xf]
      %v6555 = vld [vmem:[%s6540 + $0x38] sm:$0xf]
      %v6556 = vld [vmem:[%s6540 + $0x3c] sm:$0xf]
      %6557 = vst [vmem:[#allocation1] ss:$9 sm:$0xff] %v5813
      %s6558 = scalar_lea.vmem [#allocation1], 1
      %6559 = vst [vmem:[%s6558] ss:$9 sm:$0xff] %v5817
      %s6560 = scalar_lea.vmem [#allocation1], 2
      %6561 = vst [vmem:[%s6560] ss:$9 sm:$0xff] %v5821
      %s6562 = scalar_lea.vmem [#allocation1], 3
      %6563 = vst [vmem:[%s6562] ss:$9 sm:$0xff] %v5825
      %s6564 = scalar_lea.vmem [#allocation1], 4
      %6565 = vst [vmem:[%s6564] ss:$9 sm:$0xff] %v5828
      %s6566 = scalar_lea.vmem [#allocation1], 5
      %6567 = vst [vmem:[%s6566] ss:$9 sm:$0xff] %v5831
      %s6568 = scalar_lea.vmem [#allocation1], 6
      %6569 = vst [vmem:[%s6568] ss:$9 sm:$0xff] %v5834
      %s6570 = scalar_lea.vmem [#allocation1], 7
      %6571 = vst [vmem:[%s6570] ss:$9 sm:$0xff] %v5837
      %v6572 = vld [vmem:[#allocation1] sm:$0xff]
      %6573 = vst [vmem:[#allocation1] ss:$9 sm:$0xff] %v5840
      %6574 = vst [vmem:[%s6558] ss:$9 sm:$0xff] %v5843
      %6575 = vst [vmem:[%s6560] ss:$9 sm:$0xff] %v5846
      %6576 = vst [vmem:[%s6562] ss:$9 sm:$0xff] %v5849
      %6577 = vst [vmem:[%s6564] ss:$9 sm:$0xff] %v5852
      %6578 = vst [vmem:[%s6566] ss:$9 sm:$0xff] %v5855
      %6579 = vst [vmem:[%s6568] ss:$9 sm:$0xff] %v5858
      %6580 = vst [vmem:[%s6570] ss:$9 sm:$0xff] %v5861
      %v6581 = vld [vmem:[#allocation1] sm:$0xff]
      %6582 = vst [vmem:[#allocation1] ss:$9 sm:$0xff] %v5864
      %6583 = vst [vmem:[%s6558] ss:$9 sm:$0xff] %v5867
      %6584 = vst [vmem:[%s6560] ss:$9 sm:$0xff] %v5870
      %6585 = vst [vmem:[%s6562] ss:$9 sm:$0xff] %v5873
      %6586 = vst [vmem:[%s6564] ss:$9 sm:$0xff] %v5876
      %6587 = vst [vmem:[%s6566] ss:$9 sm:$0xff] %v5879
      %6588 = vst [vmem:[%s6568] ss:$9 sm:$0xff] %v5882
      %6589 = vst [vmem:[%s6570] ss:$9 sm:$0xff] %v5885
      %v6590 = vld [vmem:[#allocation1] sm:$0xff]
      %6591 = vst [vmem:[#allocation1] ss:$9 sm:$0xff] %v5888
      %6592 = vst [vmem:[%s6558] ss:$9 sm:$0xff] %v5891
      %6593 = vst [vmem:[%s6560] ss:$9 sm:$0xff] %v5894
      %6594 = vst [vmem:[%s6562] ss:$9 sm:$0xff] %v5897
      %6595 = vst [vmem:[%s6564] ss:$9 sm:$0xff] %v5900
      %6596 = vst [vmem:[%s6566] ss:$9 sm:$0xff] %v5903
      %6597 = vst [vmem:[%s6568] ss:$9 sm:$0xff] %v5906
      %6598 = vst [vmem:[%s6570] ss:$9 sm:$0xff] %v5909
      %v6599 = vld [vmem:[#allocation1] sm:$0xff]
      %6600 = vst [vmem:[#allocation1] ss:$9 sm:$0xff] %v5912
      %6601 = vst [vmem:[%s6558] ss:$9 sm:$0xff] %v5915
      %6602 = vst [vmem:[%s6560] ss:$9 sm:$0xff] %v5918
      %6603 = vst [vmem:[%s6562] ss:$9 sm:$0xff] %v5921
      %6604 = vst [vmem:[%s6564] ss:$9 sm:$0xff] %v5924
      %6605 = vst [vmem:[%s6566] ss:$9 sm:$0xff] %v5927
      %6606 = vst [vmem:[%s6568] ss:$9 sm:$0xff] %v5930
      %6607 = vst [vmem:[%s6570] ss:$9 sm:$0xff] %v5933
      %v6608 = vld [vmem:[#allocation1] sm:$0xff]
      %v6630 = vunpack.c.l.b16 %v6541
      %v6631 = vunpack.c.l.b16 %v6542
      %v6632 = vunpack.c.l.b16 %v6543
      %v6633 = vunpack.c.l.b16 %v6544
      %v6634 = vunpack.c.l.b16 %v6545
      %v6635 = vunpack.c.l.b16 %v6546
      %v6636 = vunpack.c.l.b16 %v6547
      %v6637 = vunpack.c.l.b16 %v6548
      %v6638 = vunpack.c.l.b16 %v6549
      %v6639 = vunpack.c.l.b16 %v6550
      %v6640 = vunpack.c.l.b16 %v6551
      %v6641 = vunpack.c.l.b16 %v6552
      %v6642 = vunpack.c.l.b16 %v6553
      %v6643 = vunpack.c.l.b16 %v6554
      %v6644 = vunpack.c.l.b16 %v6555
      %v6645 = vunpack.c.l.b16 %v6556
      %v6646 = vpack.c.b16 %v6631, %v6630
      %v6647 = vpack.c.b16 %v6633, %v6632
      %v6648 = vpack.c.b16 %v6635, %v6634
      %v6649 = vpack.c.b16 %v6637, %v6636
      %v6650 = vpack.c.b16 %v6639, %v6638
      %v6651 = vpack.c.b16 %v6641, %v6640
      %v6652 = vpack.c.b16 %v6643, %v6642
      %v6653 = vpack.c.b16 %v6645, %v6644
      %6662 = vmatpush.bf16.msra.mxu0 %v6653
      %6663 = vmatpush.bf16.msra.mxu0 %v6652
      %6664 = vmatpush.bf16.msra.mxu0 %v6651
      %6665 = vmatpush.bf16.msra.mxu0 %v6650
      %6666 = vmatpush.bf16.msra.mxu0 %v6649
      %6667 = vmatpush.bf16.msra.mxu0 %v6648
      %6668 = vmatpush.bf16.msra.mxu0 %v6647
      %6669 = vmatpush.bf16.msra.mxu0 %v6646
      %6670 = vmatmul.bf16.gmra.mxu0 %v6572
      %v6671 = vpop.f32.mrf.mxu0
      %v6672 = vadd.f32 0.0, %v6671
      %v6673 = vpop.f32.mrf.mxu0
      %v6674 = vadd.f32 0.0, %v6673
      %6675 = vmatmul.bf16.gmra.mxu0 %v6581
      %v6676 = vpop.f32.mrf.mxu0
      %v6677 = vadd.f32 0.0, %v6676
      %v6678 = vpop.f32.mrf.mxu0
      %v6679 = vadd.f32 0.0, %v6678
      %6680 = vmatmul.bf16.gmra.mxu0 %v6590
      %v6681 = vpop.f32.mrf.mxu0
      %v6682 = vadd.f32 0.0, %v6681
      %v6683 = vpop.f32.mrf.mxu0
      %v6684 = vadd.f32 0.0, %v6683
      %6685 = vmatmul.bf16.gmra.mxu0 %v6599
      %v6686 = vpop.f32.mrf.mxu0
      %v6687 = vadd.f32 0.0, %v6686
      %v6688 = vpop.f32.mrf.mxu0
      %v6689 = vadd.f32 0.0, %v6688
      %6690 = vmatmul.bf16.gmra.mxu0 %v6608
      %v6691 = vpop.f32.mrf.mxu0
      %v6692 = vadd.f32 0.0, %v6691
      %v6693 = vpop.f32.mrf.mxu0
      %v6694 = vadd.f32 0.0, %v6693
      %6695 = vdwg.mxu0
      %v6706 = vrot.slane %v6672, 2
      %v6707 = vrot.slane %v6672, 4
      %v6708 = vrot.slane %v6672, 6
      %v6709 = vrot.slane %v6674, 4
      %v6710 = vrot.slane %v6674, 6
      %v6711 = vrot.slane %v6677, 2
      %v6712 = vrot.slane %v6677, 6
      %v6713 = vrot.slane %v6679, 2
      %v6714 = vrot.slane %v6679, 4
      %v6715 = vrot.slane %v6682, 2
      %v6716 = vrot.slane %v6682, 4
      %v6717 = vrot.slane %v6682, 6
      %v6718 = vrot.slane %v6684, 2
      %v6719 = vrot.slane %v6684, 4
      %v6720 = vrot.slane %v6684, 6
      %v6721 = vrot.slane %v6687, 4
      %v6722 = vrot.slane %v6687, 6
      %v6723 = vrot.slane %v6689, 2
      %v6724 = vrot.slane %v6689, 6
      %v6725 = vrot.slane %v6692, 2
      %v6726 = vrot.slane %v6692, 4
      %v6727 = vrot.slane %v6694, 2
      %v6728 = vrot.slane %v6694, 4
      %v6729 = vrot.slane %v6694, 6
      %v6754 = vadd.f32 %v6508, %v6706
      %v6755 = vadd.f32 %v6509, %v6707
      %v6756 = vadd.f32 %v6510, %v6708
      %v6757 = vadd.f32 %v6511, %v6674
      %v6758 = vadd.f32 %v6512, %v6709
      %v6759 = vadd.f32 %v6513, %v6710
      %v6760 = vadd.f32 %v6514, %v6677
      %v6761 = vadd.f32 %v6515, %v6711
      %v6762 = vadd.f32 %v6516, %v6712
      %v6763 = vadd.f32 %v6517, %v6679
      %v6764 = vadd.f32 %v6518, %v6713
      %v6765 = vadd.f32 %v6519, %v6714
      %v6766 = vadd.f32 %v6520, %v6682
      %v6767 = vadd.f32 %v6521, %v6715
      %v6768 = vadd.f32 %v6522, %v6716
      %v6769 = vadd.f32 %v6523, %v6717
      %v6770 = vadd.f32 %v6524, %v6718
      %v6771 = vadd.f32 %v6525, %v6719
      %v6772 = vadd.f32 %v6526, %v6720
      %v6773 = vadd.f32 %v6527, %v6687
      %v6774 = vadd.f32 %v6528, %v6721
      %v6775 = vadd.f32 %v6529, %v6722
      %v6776 = vadd.f32 %v6530, %v6689
      %v6777 = vadd.f32 %v6531, %v6723
      %v6778 = vadd.f32 %v6532, %v6724
      %v6779 = vadd.f32 %v6533, %v6692
      %v6780 = vadd.f32 %v6534, %v6725
      %v6781 = vadd.f32 %v6535, %v6726
      %v6782 = vadd.f32 %v6536, %v6694
      %v6783 = vadd.f32 %v6537, %v6727
      %v6784 = vadd.f32 %v6538, %v6728
      %v6785 = vadd.f32 %v6539, %v6729
      %s6786 = scalar_lea.vmem [#allocation2], 8
      %v6787 = vld [vmem:[%s6786] sm:$0xf]
      %v6788 = vld [vmem:[%s6786 + $0x4] sm:$0x1]
      %v6789 = vld [vmem:[%s6786 + $0x8] sm:$0xf]
      %v6790 = vld [vmem:[%s6786 + $0xc] sm:$0x1]
      %v6791 = vld [vmem:[%s6786 + $0x10] sm:$0xf]
      %v6792 = vld [vmem:[%s6786 + $0x14] sm:$0x1]
      %v6793 = vld [vmem:[%s6786 + $0x18] sm:$0xf]
      %v6794 = vld [vmem:[%s6786 + $0x1c] sm:$0x1]
      %v6795 = vld [vmem:[%s6786 + $0x20] sm:$0xf]
      %v6796 = vld [vmem:[%s6786 + $0x24] sm:$0x1]
      %v6797 = vld [vmem:[%s6786 + $0x28] sm:$0xf]
      %v6798 = vld [vmem:[%s6786 + $0x2c] sm:$0x1]
      %v6799 = vld [vmem:[%s6786 + $0x30] sm:$0xf]
      %v6800 = vld [vmem:[%s6786 + $0x34] sm:$0x1]
      %v6801 = vld [vmem:[%s6786 + $0x38] sm:$0xf]
      %v6802 = vld [vmem:[%s6786 + $0x3c] sm:$0x1]
      %v6819 = vrot.slane %v6787, 3
      %v6820 = vrot.slane %v6788, 3
      %v6821 = vrot.slane %v6789, 3
      %v6822 = vrot.slane %v6790, 3
      %v6823 = vrot.slane %v6791, 3
      %v6824 = vrot.slane %v6792, 3
      %v6825 = vrot.slane %v6793, 3
      %v6826 = vrot.slane %v6794, 3
      %v6827 = vrot.slane %v6795, 3
      %v6828 = vrot.slane %v6796, 3
      %v6829 = vrot.slane %v6797, 3
      %v6830 = vrot.slane %v6798, 3
      %v6831 = vrot.slane %v6799, 3
      %v6832 = vrot.slane %v6800, 3
      %v6833 = vrot.slane %v6801, 3
      %v6834 = vrot.slane %v6802, 3
      %v6837 = vsel %vm5810, %v6787, %v6819
      %v6838 = vsel %vm5814, %v6787, %v6819
      %v6840 = vrot.slane %v6838, 1
      %v6841 = vsel %vm5818, %v6787, %v6819
      %v6843 = vrot.slane %v6841, 2
      %v6844 = vsel %vm5822, %v6787, %v6819
      %v6846 = vrot.slane %v6844, 3
      %v6849 = vsel %vm5810, %v6788, %v6820
      %v6852 = vsel %vm5810, %v6789, %v6821
      %v6853 = vsel %vm5814, %v6789, %v6821
      %v6855 = vrot.slane %v6853, 1
      %v6856 = vsel %vm5818, %v6789, %v6821
      %v6858 = vrot.slane %v6856, 2
      %v6859 = vsel %vm5822, %v6789, %v6821
      %v6861 = vrot.slane %v6859, 3
      %v6864 = vsel %vm5810, %v6790, %v6822
      %v6867 = vsel %vm5810, %v6791, %v6823
      %v6868 = vsel %vm5814, %v6791, %v6823
      %v6870 = vrot.slane %v6868, 1
      %v6871 = vsel %vm5818, %v6791, %v6823
      %v6873 = vrot.slane %v6871, 2
      %v6874 = vsel %vm5822, %v6791, %v6823
      %v6876 = vrot.slane %v6874, 3
      %v6879 = vsel %vm5810, %v6792, %v6824
      %v6882 = vsel %vm5810, %v6793, %v6825
      %v6883 = vsel %vm5814, %v6793, %v6825
      %v6885 = vrot.slane %v6883, 1
      %v6886 = vsel %vm5818, %v6793, %v6825
      %v6888 = vrot.slane %v6886, 2
      %v6889 = vsel %vm5822, %v6793, %v6825
      %v6891 = vrot.slane %v6889, 3
      %v6894 = vsel %vm5810, %v6794, %v6826
      %v6897 = vsel %vm5810, %v6795, %v6827
      %v6898 = vsel %vm5814, %v6795, %v6827
      %v6900 = vrot.slane %v6898, 1
      %v6901 = vsel %vm5818, %v6795, %v6827
      %v6903 = vrot.slane %v6901, 2
      %v6904 = vsel %vm5822, %v6795, %v6827
      %v6906 = vrot.slane %v6904, 3
      %v6909 = vsel %vm5810, %v6796, %v6828
      %v6912 = vsel %vm5810, %v6797, %v6829
      %v6913 = vsel %vm5814, %v6797, %v6829
      %v6915 = vrot.slane %v6913, 1
      %v6916 = vsel %vm5818, %v6797, %v6829
      %v6918 = vrot.slane %v6916, 2
      %v6919 = vsel %vm5822, %v6797, %v6829
      %v6921 = vrot.slane %v6919, 3
      %v6924 = vsel %vm5810, %v6798, %v6830
      %v6927 = vsel %vm5810, %v6799, %v6831
      %v6928 = vsel %vm5814, %v6799, %v6831
      %v6930 = vrot.slane %v6928, 1
      %v6931 = vsel %vm5818, %v6799, %v6831
      %v6933 = vrot.slane %v6931, 2
      %v6934 = vsel %vm5822, %v6799, %v6831
      %v6936 = vrot.slane %v6934, 3
      %v6939 = vsel %vm5810, %v6800, %v6832
      %v6942 = vsel %vm5810, %v6801, %v6833
      %v6943 = vsel %vm5814, %v6801, %v6833
      %v6945 = vrot.slane %v6943, 1
      %v6946 = vsel %vm5818, %v6801, %v6833
      %v6948 = vrot.slane %v6946, 2
      %v6949 = vsel %vm5822, %v6801, %v6833
      %v6951 = vrot.slane %v6949, 3
      %v6954 = vsel %vm5810, %v6802, %v6834
      %s6955 = scalar_lea.vmem %s342, 192
      %v6956 = vld [vmem:[%s6955] sm:$0xf]
      %v6957 = vld [vmem:[%s6955 + $0x4] sm:$0xf]
      %v6958 = vld [vmem:[%s6955 + $0x8] sm:$0xf]
      %v6959 = vld [vmem:[%s6955 + $0xc] sm:$0xf]
      %v6960 = vld [vmem:[%s6955 + $0x10] sm:$0xf]
      %v6961 = vld [vmem:[%s6955 + $0x14] sm:$0xf]
      %v6962 = vld [vmem:[%s6955 + $0x18] sm:$0xf]
      %v6963 = vld [vmem:[%s6955 + $0x1c] sm:$0xf]
      %v6964 = vld [vmem:[%s6955 + $0x20] sm:$0xf]
      %v6965 = vld [vmem:[%s6955 + $0x24] sm:$0xf]
      %v6966 = vld [vmem:[%s6955 + $0x28] sm:$0xf]
      %v6967 = vld [vmem:[%s6955 + $0x2c] sm:$0xf]
      %v6968 = vld [vmem:[%s6955 + $0x30] sm:$0xf]
      %v6969 = vld [vmem:[%s6955 + $0x34] sm:$0xf]
      %v6970 = vld [vmem:[%s6955 + $0x38] sm:$0xf]
      %v6971 = vld [vmem:[%s6955 + $0x3c] sm:$0xf]
      %6972 = vst [vmem:[#allocation1] ss:$9 sm:$0xff] %v6837
      %s6974 = scalar_lea.vmem [#allocation1], 1
      %6975 = vst [vmem:[%s6974] ss:$9 sm:$0xff] %v6840
      %s6977 = scalar_lea.vmem [#allocation1], 2
      %6978 = vst [vmem:[%s6977] ss:$9 sm:$0xff] %v6843
      %s6980 = scalar_lea.vmem [#allocation1], 3
      %6981 = vst [vmem:[%s6980] ss:$9 sm:$0xff] %v6846
      %s6982 = scalar_lea.vmem [#allocation1], 4
      %6983 = vst [vmem:[%s6982] ss:$9 sm:$0xff] %v6849
      %s6984 = scalar_lea.vmem [#allocation1], 5
      %6985 = vst [vmem:[%s6984] ss:$9 sm:$0xff] %v6852
      %s6987 = scalar_lea.vmem [#allocation1], 6
      %6988 = vst [vmem:[%s6987] ss:$9 sm:$0xff] %v6855
      %s6990 = scalar_lea.vmem [#allocation1], 7
      %6991 = vst [vmem:[%s6990] ss:$9 sm:$0xff] %v6858
      %v6992 = vld [vmem:[#allocation1] sm:$0xff]
      %6994 = vst [vmem:[#allocation1] ss:$9 sm:$0xff] %v6861
      %6995 = vst [vmem:[%s6974] ss:$9 sm:$0xff] %v6864
      %6996 = vst [vmem:[%s6977] ss:$9 sm:$0xff] %v6867
      %6998 = vst [vmem:[%s6980] ss:$9 sm:$0xff] %v6870
      %7000 = vst [vmem:[%s6982] ss:$9 sm:$0xff] %v6873
      %7002 = vst [vmem:[%s6984] ss:$9 sm:$0xff] %v6876
      %7003 = vst [vmem:[%s6987] ss:$9 sm:$0xff] %v6879
      %7004 = vst [vmem:[%s6990] ss:$9 sm:$0xff] %v6882
      %v7005 = vld [vmem:[#allocation1] sm:$0xff]
      %7007 = vst [vmem:[#allocation1] ss:$9 sm:$0xff] %v6885
      %7009 = vst [vmem:[%s6974] ss:$9 sm:$0xff] %v6888
      %7011 = vst [vmem:[%s6977] ss:$9 sm:$0xff] %v6891
      %7012 = vst [vmem:[%s6980] ss:$9 sm:$0xff] %v6894
      %7013 = vst [vmem:[%s6982] ss:$9 sm:$0xff] %v6897
      %7015 = vst [vmem:[%s6984] ss:$9 sm:$0xff] %v6900
      %7017 = vst [vmem:[%s6987] ss:$9 sm:$0xff] %v6903
      %7019 = vst [vmem:[%s6990] ss:$9 sm:$0xff] %v6906
      %v7020 = vld [vmem:[#allocation1] sm:$0xff]
      %7021 = vst [vmem:[#allocation1] ss:$9 sm:$0xff] %v6909
      %7022 = vst [vmem:[%s6974] ss:$9 sm:$0xff] %v6912
      %7024 = vst [vmem:[%s6977] ss:$9 sm:$0xff] %v6915
      %7026 = vst [vmem:[%s6980] ss:$9 sm:$0xff] %v6918
      %7028 = vst [vmem:[%s6982] ss:$9 sm:$0xff] %v6921
      %7029 = vst [vmem:[%s6984] ss:$9 sm:$0xff] %v6924
      %7030 = vst [vmem:[%s6987] ss:$9 sm:$0xff] %v6927
      %7032 = vst [vmem:[%s6990] ss:$9 sm:$0xff] %v6930
      %v7033 = vld [vmem:[#allocation1] sm:$0xff]
      %7035 = vst [vmem:[#allocation1] ss:$9 sm:$0xff] %v6933
      %7037 = vst [vmem:[%s6974] ss:$9 sm:$0xff] %v6936
      %7038 = vst [vmem:[%s6977] ss:$9 sm:$0xff] %v6939
      %7039 = vst [vmem:[%s6980] ss:$9 sm:$0xff] %v6942
      %7041 = vst [vmem:[%s6982] ss:$9 sm:$0xff] %v6945
      %7043 = vst [vmem:[%s6984] ss:$9 sm:$0xff] %v6948
      %7045 = vst [vmem:[%s6987] ss:$9 sm:$0xff] %v6951
      %7046 = vst [vmem:[%s6990] ss:$9 sm:$0xff] %v6954
      %v7047 = vld [vmem:[#allocation1] sm:$0xff]
      %v7069 = vunpack.c.l.b16 %v6956
      %v7070 = vunpack.c.l.b16 %v6957
      %v7071 = vunpack.c.l.b16 %v6958
      %v7072 = vunpack.c.l.b16 %v6959
      %v7073 = vunpack.c.l.b16 %v6960
      %v7074 = vunpack.c.l.b16 %v6961
      %v7075 = vunpack.c.l.b16 %v6962
      %v7076 = vunpack.c.l.b16 %v6963
      %v7077 = vunpack.c.l.b16 %v6964
      %v7078 = vunpack.c.l.b16 %v6965
      %v7079 = vunpack.c.l.b16 %v6966
      %v7080 = vunpack.c.l.b16 %v6967
      %v7081 = vunpack.c.l.b16 %v6968
      %v7082 = vunpack.c.l.b16 %v6969
      %v7083 = vunpack.c.l.b16 %v6970
      %v7084 = vunpack.c.l.b16 %v6971
      %v7085 = vpack.c.b16 %v7070, %v7069
      %v7086 = vpack.c.b16 %v7072, %v7071
      %v7087 = vpack.c.b16 %v7074, %v7073
      %v7088 = vpack.c.b16 %v7076, %v7075
      %v7089 = vpack.c.b16 %v7078, %v7077
      %v7090 = vpack.c.b16 %v7080, %v7079
      %v7091 = vpack.c.b16 %v7082, %v7081
      %v7092 = vpack.c.b16 %v7084, %v7083
      %7101 = vmatpush.bf16.msra.mxu0 %v7092
      %7102 = vmatpush.bf16.msra.mxu0 %v7091
      %7103 = vmatpush.bf16.msra.mxu0 %v7090
      %7104 = vmatpush.bf16.msra.mxu0 %v7089
      %7105 = vmatpush.bf16.msra.mxu0 %v7088
      %7106 = vmatpush.bf16.msra.mxu0 %v7087
      %7107 = vmatpush.bf16.msra.mxu0 %v7086
      %7108 = vmatpush.bf16.msra.mxu0 %v7085
      %7109 = vmatmul.bf16.gmra.mxu0 %v6992
      %v7110 = vpop.f32.mrf.mxu0
      %v7111 = vadd.f32 0.0, %v7110
      %v7112 = vpop.f32.mrf.mxu0
      %v7113 = vadd.f32 0.0, %v7112
      %7114 = vmatmul.bf16.gmra.mxu0 %v7005
      %v7115 = vpop.f32.mrf.mxu0
      %v7116 = vadd.f32 0.0, %v7115
      %v7117 = vpop.f32.mrf.mxu0
      %v7118 = vadd.f32 0.0, %v7117
      %7119 = vmatmul.bf16.gmra.mxu0 %v7020
      %v7120 = vpop.f32.mrf.mxu0
      %v7121 = vadd.f32 0.0, %v7120
      %v7122 = vpop.f32.mrf.mxu0
      %v7123 = vadd.f32 0.0, %v7122
      %7124 = vmatmul.bf16.gmra.mxu0 %v7033
      %v7125 = vpop.f32.mrf.mxu0
      %v7126 = vadd.f32 0.0, %v7125
      %v7127 = vpop.f32.mrf.mxu0
      %v7128 = vadd.f32 0.0, %v7127
      %7129 = vmatmul.bf16.gmra.mxu0 %v7047
      %v7130 = vpop.f32.mrf.mxu0
      %v7131 = vadd.f32 0.0, %v7130
      %v7132 = vpop.f32.mrf.mxu0
      %v7133 = vadd.f32 0.0, %v7132
      %7134 = vdwg.mxu0
      %v7145 = vrot.slane %v7111, 2
      %v7146 = vrot.slane %v7111, 4
      %v7147 = vrot.slane %v7111, 6
      %v7148 = vrot.slane %v7113, 2
      %v7149 = vrot.slane %v7113, 4
      %v7150 = vrot.slane %v7113, 6
      %v7151 = vrot.slane %v7116, 4
      %v7152 = vrot.slane %v7116, 6
      %v7153 = vrot.slane %v7118, 2
      %v7154 = vrot.slane %v7118, 6
      %v7155 = vrot.slane %v7121, 2
      %v7156 = vrot.slane %v7121, 4
      %v7157 = vrot.slane %v7123, 2
      %v7158 = vrot.slane %v7123, 4
      %v7159 = vrot.slane %v7123, 6
      %v7160 = vrot.slane %v7126, 2
      %v7161 = vrot.slane %v7126, 4
      %v7162 = vrot.slane %v7126, 6
      %v7163 = vrot.slane %v7128, 4
      %v7164 = vrot.slane %v7128, 6
      %v7165 = vrot.slane %v7131, 2
      %v7166 = vrot.slane %v7131, 6
      %v7167 = vrot.slane %v7133, 2
      %v7168 = vrot.slane %v7133, 4
      %v7193 = vadd.f32 %v6754, %v7111
      %v7194 = vadd.f32 %v6755, %v7145
      %v7195 = vadd.f32 %v6756, %v7146
      %v7196 = vadd.f32 %v6757, %v7147
      %v7197 = vadd.f32 %v6758, %v7148
      %v7198 = vadd.f32 %v6759, %v7149
      %v7199 = vadd.f32 %v6760, %v7150
      %v7200 = vadd.f32 %v6761, %v7116
      %v7201 = vadd.f32 %v6762, %v7151
      %v7202 = vadd.f32 %v6763, %v7152
      %v7203 = vadd.f32 %v6764, %v7118
      %v7204 = vadd.f32 %v6765, %v7153
      %v7205 = vadd.f32 %v6766, %v7154
      %v7206 = vadd.f32 %v6767, %v7121
      %v7207 = vadd.f32 %v6768, %v7155
      %v7208 = vadd.f32 %v6769, %v7156
      %v7209 = vadd.f32 %v6770, %v7123
      %v7210 = vadd.f32 %v6771, %v7157
      %v7211 = vadd.f32 %v6772, %v7158
      %v7212 = vadd.f32 %v6773, %v7159
      %v7213 = vadd.f32 %v6774, %v7160
      %v7214 = vadd.f32 %v6775, %v7161
      %v7215 = vadd.f32 %v6776, %v7162
      %v7216 = vadd.f32 %v6777, %v7128
      %v7217 = vadd.f32 %v6778, %v7163
      %v7218 = vadd.f32 %v6779, %v7164
      %v7219 = vadd.f32 %v6780, %v7131
      %v7220 = vadd.f32 %v6781, %v7165
      %v7221 = vadd.f32 %v6782, %v7166
      %v7222 = vadd.f32 %v6783, %v7133
      %v7223 = vadd.f32 %v6784, %v7167
      %v7224 = vadd.f32 %v6785, %v7168
      %s7225 = scalar_lea.vmem %s342, 256
      %v7226 = vld [vmem:[%s7225] sm:$0xf]
      %v7227 = vld [vmem:[%s7225 + $0x4] sm:$0xf]
      %v7228 = vld [vmem:[%s7225 + $0x8] sm:$0xf]
      %v7229 = vld [vmem:[%s7225 + $0xc] sm:$0xf]
      %v7230 = vld [vmem:[%s7225 + $0x10] sm:$0xf]
      %v7231 = vld [vmem:[%s7225 + $0x14] sm:$0xf]
      %v7232 = vld [vmem:[%s7225 + $0x18] sm:$0xf]
      %v7233 = vld [vmem:[%s7225 + $0x1c] sm:$0xf]
      %v7234 = vld [vmem:[%s7225 + $0x20] sm:$0xf]
      %v7235 = vld [vmem:[%s7225 + $0x24] sm:$0xf]
      %v7236 = vld [vmem:[%s7225 + $0x28] sm:$0xf]
      %v7237 = vld [vmem:[%s7225 + $0x2c] sm:$0xf]
      %v7238 = vld [vmem:[%s7225 + $0x30] sm:$0xf]
      %v7239 = vld [vmem:[%s7225 + $0x34] sm:$0xf]
      %v7240 = vld [vmem:[%s7225 + $0x38] sm:$0xf]
      %v7241 = vld [vmem:[%s7225 + $0x3c] sm:$0xf]
      %7242 = vst [vmem:[#allocation1] ss:$9 sm:$0xff] %v6837
      %s7243 = scalar_lea.vmem [#allocation1], 1
      %7244 = vst [vmem:[%s7243] ss:$9 sm:$0xff] %v6840
      %s7245 = scalar_lea.vmem [#allocation1], 2
      %7246 = vst [vmem:[%s7245] ss:$9 sm:$0xff] %v6843
      %s7247 = scalar_lea.vmem [#allocation1], 3
      %7248 = vst [vmem:[%s7247] ss:$9 sm:$0xff] %v6846
      %s7249 = scalar_lea.vmem [#allocation1], 4
      %7250 = vst [vmem:[%s7249] ss:$9 sm:$0xff] %v6849
      %s7251 = scalar_lea.vmem [#allocation1], 5
      %7252 = vst [vmem:[%s7251] ss:$9 sm:$0xff] %v6852
      %s7253 = scalar_lea.vmem [#allocation1], 6
      %7254 = vst [vmem:[%s7253] ss:$9 sm:$0xff] %v6855
      %s7255 = scalar_lea.vmem [#allocation1], 7
      %7256 = vst [vmem:[%s7255] ss:$9 sm:$0xff] %v6858
      %v7257 = vld [vmem:[#allocation1] sm:$0xff]
      %7258 = vst [vmem:[#allocation1] ss:$9 sm:$0xff] %v6861
      %7259 = vst [vmem:[%s7243] ss:$9 sm:$0xff] %v6864
      %7260 = vst [vmem:[%s7245] ss:$9 sm:$0xff] %v6867
      %7261 = vst [vmem:[%s7247] ss:$9 sm:$0xff] %v6870
      %7262 = vst [vmem:[%s7249] ss:$9 sm:$0xff] %v6873
      %7263 = vst [vmem:[%s7251] ss:$9 sm:$0xff] %v6876
      %7264 = vst [vmem:[%s7253] ss:$9 sm:$0xff] %v6879
      %7265 = vst [vmem:[%s7255] ss:$9 sm:$0xff] %v6882
      %v7266 = vld [vmem:[#allocation1] sm:$0xff]
      %7267 = vst [vmem:[#allocation1] ss:$9 sm:$0xff] %v6885
      %7268 = vst [vmem:[%s7243] ss:$9 sm:$0xff] %v6888
      %7269 = vst [vmem:[%s7245] ss:$9 sm:$0xff] %v6891
      %7270 = vst [vmem:[%s7247] ss:$9 sm:$0xff] %v6894
      %7271 = vst [vmem:[%s7249] ss:$9 sm:$0xff] %v6897
      %7272 = vst [vmem:[%s7251] ss:$9 sm:$0xff] %v6900
      %7273 = vst [vmem:[%s7253] ss:$9 sm:$0xff] %v6903
      %7274 = vst [vmem:[%s7255] ss:$9 sm:$0xff] %v6906
      %v7275 = vld [vmem:[#allocation1] sm:$0xff]
      %7276 = vst [vmem:[#allocation1] ss:$9 sm:$0xff] %v6909
      %7277 = vst [vmem:[%s7243] ss:$9 sm:$0xff] %v6912
      %7278 = vst [vmem:[%s7245] ss:$9 sm:$0xff] %v6915
      %7279 = vst [vmem:[%s7247] ss:$9 sm:$0xff] %v6918
      %7280 = vst [vmem:[%s7249] ss:$9 sm:$0xff] %v6921
      %7281 = vst [vmem:[%s7251] ss:$9 sm:$0xff] %v6924
      %7282 = vst [vmem:[%s7253] ss:$9 sm:$0xff] %v6927
      %7283 = vst [vmem:[%s7255] ss:$9 sm:$0xff] %v6930
      %v7284 = vld [vmem:[#allocation1] sm:$0xff]
      %7285 = vst [vmem:[#allocation1] ss:$9 sm:$0xff] %v6933
      %7286 = vst [vmem:[%s7243] ss:$9 sm:$0xff] %v6936
      %7287 = vst [vmem:[%s7245] ss:$9 sm:$0xff] %v6939
      %7288 = vst [vmem:[%s7247] ss:$9 sm:$0xff] %v6942
      %7289 = vst [vmem:[%s7249] ss:$9 sm:$0xff] %v6945
      %7290 = vst [vmem:[%s7251] ss:$9 sm:$0xff] %v6948
      %7291 = vst [vmem:[%s7253] ss:$9 sm:$0xff] %v6951
      %7292 = vst [vmem:[%s7255] ss:$9 sm:$0xff] %v6954
      %v7293 = vld [vmem:[#allocation1] sm:$0xff]
      %v7315 = vunpack.c.l.b16 %v7226
      %v7316 = vunpack.c.l.b16 %v7227
      %v7317 = vunpack.c.l.b16 %v7228
      %v7318 = vunpack.c.l.b16 %v7229
      %v7319 = vunpack.c.l.b16 %v7230
      %v7320 = vunpack.c.l.b16 %v7231
      %v7321 = vunpack.c.l.b16 %v7232
      %v7322 = vunpack.c.l.b16 %v7233
      %v7323 = vunpack.c.l.b16 %v7234
      %v7324 = vunpack.c.l.b16 %v7235
      %v7325 = vunpack.c.l.b16 %v7236
      %v7326 = vunpack.c.l.b16 %v7237
      %v7327 = vunpack.c.l.b16 %v7238
      %v7328 = vunpack.c.l.b16 %v7239
      %v7329 = vunpack.c.l.b16 %v7240
      %v7330 = vunpack.c.l.b16 %v7241
      %v7331 = vpack.c.b16 %v7316, %v7315
      %v7332 = vpack.c.b16 %v7318, %v7317
      %v7333 = vpack.c.b16 %v7320, %v7319
      %v7334 = vpack.c.b16 %v7322, %v7321
      %v7335 = vpack.c.b16 %v7324, %v7323
      %v7336 = vpack.c.b16 %v7326, %v7325
      %v7337 = vpack.c.b16 %v7328, %v7327
      %v7338 = vpack.c.b16 %v7330, %v7329
      %7347 = vmatpush.bf16.msra.mxu0 %v7338
      %7348 = vmatpush.bf16.msra.mxu0 %v7337
      %7349 = vmatpush.bf16.msra.mxu0 %v7336
      %7350 = vmatpush.bf16.msra.mxu0 %v7335
      %7351 = vmatpush.bf16.msra.mxu0 %v7334
      %7352 = vmatpush.bf16.msra.mxu0 %v7333
      %7353 = vmatpush.bf16.msra.mxu0 %v7332
      %7354 = vmatpush.bf16.msra.mxu0 %v7331
      %7355 = vmatmul.bf16.gmra.mxu0 %v7257
      %v7356 = vpop.f32.mrf.mxu0
      %v7357 = vadd.f32 0.0, %v7356
      %v7358 = vpop.f32.mrf.mxu0
      %v7359 = vadd.f32 0.0, %v7358
      %7360 = vmatmul.bf16.gmra.mxu0 %v7266
      %v7361 = vpop.f32.mrf.mxu0
      %v7362 = vadd.f32 0.0, %v7361
      %v7363 = vpop.f32.mrf.mxu0
      %v7364 = vadd.f32 0.0, %v7363
      %7365 = vmatmul.bf16.gmra.mxu0 %v7275
      %v7366 = vpop.f32.mrf.mxu0
      %v7367 = vadd.f32 0.0, %v7366
      %v7368 = vpop.f32.mrf.mxu0
      %v7369 = vadd.f32 0.0, %v7368
      %7370 = vmatmul.bf16.gmra.mxu0 %v7284
      %v7371 = vpop.f32.mrf.mxu0
      %v7372 = vadd.f32 0.0, %v7371
      %v7373 = vpop.f32.mrf.mxu0
      %v7374 = vadd.f32 0.0, %v7373
      %7375 = vmatmul.bf16.gmra.mxu0 %v7293
      %v7376 = vpop.f32.mrf.mxu0
      %v7377 = vadd.f32 0.0, %v7376
      %v7378 = vpop.f32.mrf.mxu0
      %v7379 = vadd.f32 0.0, %v7378
      %7380 = vdwg.mxu0
      %v7391 = vrot.slane %v7357, 2
      %v7392 = vrot.slane %v7357, 4
      %v7393 = vrot.slane %v7357, 6
      %v7394 = vrot.slane %v7359, 2
      %v7395 = vrot.slane %v7359, 4
      %v7396 = vrot.slane %v7359, 6
      %v7397 = vrot.slane %v7362, 2
      %v7398 = vrot.slane %v7362, 4
      %v7399 = vrot.slane %v7362, 6
      %v7400 = vrot.slane %v7364, 2
      %v7401 = vrot.slane %v7364, 4
      %v7402 = vrot.slane %v7364, 6
      %v7403 = vrot.slane %v7367, 2
      %v7404 = vrot.slane %v7367, 4
      %v7405 = vrot.slane %v7367, 6
      %v7406 = vrot.slane %v7369, 2
      %v7407 = vrot.slane %v7369, 4
      %v7408 = vrot.slane %v7369, 6
      %v7409 = vrot.slane %v7372, 2
      %v7410 = vrot.slane %v7372, 4
      %v7411 = vrot.slane %v7372, 6
      %v7412 = vrot.slane %v7374, 2
      %v7413 = vrot.slane %v7374, 4
      %v7414 = vrot.slane %v7374, 6
      %v7415 = vrot.slane %v7377, 2
      %v7416 = vrot.slane %v7377, 4
      %v7417 = vrot.slane %v7377, 6
      %v7418 = vrot.slane %v7379, 2
      %v7419 = vrot.slane %v7379, 4
      %v7420 = vrot.slane %v7379, 6
      %v7421 = vrot.slane %v7357, 7
      %v7422 = vrot.slane %v7421, 2
      %v7423 = vrot.slane %v7391, 7
      %v7424 = vsel %vm6371, %v7422, %v7423
      %v7425 = vrot.slane %v7423, 2
      %v7426 = vrot.slane %v7392, 7
      %v7427 = vsel %vm6371, %v7425, %v7426
      %v7428 = vrot.slane %v7426, 2
      %v7429 = vrot.slane %v7393, 7
      %v7430 = vsel %vm6371, %v7428, %v7429
      %v7431 = vrot.slane %v7429, 2
      %v7432 = vrot.slane %v7359, 7
      %v7433 = vsel %vm6371, %v7431, %v7432
      %v7434 = vrot.slane %v7394, 7
      %v7435 = vrot.slane %v7434, 2
      %v7436 = vrot.slane %v7395, 7
      %v7437 = vsel %vm6371, %v7435, %v7436
      %v7438 = vrot.slane %v7436, 2
      %v7439 = vrot.slane %v7396, 7
      %v7440 = vsel %vm6371, %v7438, %v7439
      %v7441 = vrot.slane %v7439, 2
      %v7442 = vrot.slane %v7362, 7
      %v7443 = vsel %vm6371, %v7441, %v7442
      %v7444 = vrot.slane %v7442, 2
      %v7445 = vrot.slane %v7397, 7
      %v7446 = vsel %vm6371, %v7444, %v7445
      %v7447 = vrot.slane %v7398, 7
      %v7448 = vrot.slane %v7447, 2
      %v7449 = vrot.slane %v7399, 7
      %v7450 = vsel %vm6371, %v7448, %v7449
      %v7451 = vrot.slane %v7449, 2
      %v7452 = vrot.slane %v7364, 7
      %v7453 = vsel %vm6371, %v7451, %v7452
      %v7454 = vrot.slane %v7452, 2
      %v7455 = vrot.slane %v7400, 7
      %v7456 = vsel %vm6371, %v7454, %v7455
      %v7457 = vrot.slane %v7455, 2
      %v7458 = vrot.slane %v7401, 7
      %v7459 = vsel %vm6371, %v7457, %v7458
      %v7460 = vrot.slane %v7402, 7
      %v7461 = vrot.slane %v7460, 2
      %v7462 = vrot.slane %v7367, 7
      %v7463 = vsel %vm6371, %v7461, %v7462
      %v7464 = vrot.slane %v7462, 2
      %v7465 = vrot.slane %v7403, 7
      %v7466 = vsel %vm6371, %v7464, %v7465
      %v7467 = vrot.slane %v7465, 2
      %v7468 = vrot.slane %v7404, 7
      %v7469 = vsel %vm6371, %v7467, %v7468
      %v7470 = vrot.slane %v7468, 2
      %v7471 = vrot.slane %v7405, 7
      %v7472 = vsel %vm6371, %v7470, %v7471
      %v7473 = vrot.slane %v7369, 7
      %v7474 = vrot.slane %v7473, 2
      %v7475 = vrot.slane %v7406, 7
      %v7476 = vsel %vm6371, %v7474, %v7475
      %v7477 = vrot.slane %v7475, 2
      %v7478 = vrot.slane %v7407, 7
      %v7479 = vsel %vm6371, %v7477, %v7478
      %v7480 = vrot.slane %v7478, 2
      %v7481 = vrot.slane %v7408, 7
      %v7482 = vsel %vm6371, %v7480, %v7481
      %v7483 = vrot.slane %v7481, 2
      %v7484 = vrot.slane %v7372, 7
      %v7485 = vsel %vm6371, %v7483, %v7484
      %v7486 = vrot.slane %v7409, 7
      %v7487 = vrot.slane %v7486, 2
      %v7488 = vrot.slane %v7410, 7
      %v7489 = vsel %vm6371, %v7487, %v7488
      %v7490 = vrot.slane %v7488, 2
      %v7491 = vrot.slane %v7411, 7
      %v7492 = vsel %vm6371, %v7490, %v7491
      %v7493 = vrot.slane %v7491, 2
      %v7494 = vrot.slane %v7374, 7
      %v7495 = vsel %vm6371, %v7493, %v7494
      %v7496 = vrot.slane %v7494, 2
      %v7497 = vrot.slane %v7412, 7
      %v7498 = vsel %vm6371, %v7496, %v7497
      %v7499 = vrot.slane %v7413, 7
      %v7500 = vrot.slane %v7499, 2
      %v7501 = vrot.slane %v7414, 7
      %v7502 = vsel %vm6371, %v7500, %v7501
      %v7503 = vrot.slane %v7501, 2
      %v7504 = vrot.slane %v7377, 7
      %v7505 = vsel %vm6371, %v7503, %v7504
      %v7506 = vrot.slane %v7504, 2
      %v7507 = vrot.slane %v7415, 7
      %v7508 = vsel %vm6371, %v7506, %v7507
      %v7509 = vrot.slane %v7507, 2
      %v7510 = vrot.slane %v7416, 7
      %v7511 = vsel %vm6371, %v7509, %v7510
      %v7512 = vrot.slane %v7417, 7
      %v7513 = vrot.slane %v7512, 2
      %v7514 = vrot.slane %v7379, 7
      %v7515 = vsel %vm6371, %v7513, %v7514
      %v7516 = vrot.slane %v7514, 2
      %v7517 = vrot.slane %v7418, 7
      %v7518 = vsel %vm6371, %v7516, %v7517
      %v7519 = vrot.slane %v7517, 2
      %v7520 = vrot.slane %v7419, 7
      %v7521 = vsel %vm6371, %v7519, %v7520
      %v7522 = vrot.slane %v7520, 2
      %v7523 = vrot.slane %v7420, 7
      %v7524 = vsel %vm6371, %v7522, %v7523
      %v7557 = vadd.f32 %v7193, %v7424
      %v7558 = vadd.f32 %v7194, %v7427
      %v7559 = vadd.f32 %v7195, %v7430
      %v7560 = vadd.f32 %v7196, %v7433
      %v7561 = vadd.f32 %v7197, %v7437
      %v7562 = vadd.f32 %v7198, %v7440
      %v7563 = vadd.f32 %v7199, %v7443
      %v7564 = vadd.f32 %v7200, %v7446
      %v7565 = vadd.f32 %v7201, %v7450
      %v7566 = vadd.f32 %v7202, %v7453
      %v7567 = vadd.f32 %v7203, %v7456
      %v7568 = vadd.f32 %v7204, %v7459
      %v7569 = vadd.f32 %v7205, %v7463
      %v7570 = vadd.f32 %v7206, %v7466
      %v7571 = vadd.f32 %v7207, %v7469
      %v7572 = vadd.f32 %v7208, %v7472
      %v7573 = vadd.f32 %v7209, %v7476
      %v7574 = vadd.f32 %v7210, %v7479
      %v7575 = vadd.f32 %v7211, %v7482
      %v7576 = vadd.f32 %v7212, %v7485
      %v7577 = vadd.f32 %v7213, %v7489
      %v7578 = vadd.f32 %v7214, %v7492
      %v7579 = vadd.f32 %v7215, %v7495
      %v7580 = vadd.f32 %v7216, %v7498
      %v7581 = vadd.f32 %v7217, %v7502
      %v7582 = vadd.f32 %v7218, %v7505
      %v7583 = vadd.f32 %v7219, %v7508
      %v7584 = vadd.f32 %v7220, %v7511
      %v7585 = vadd.f32 %v7221, %v7515
      %v7586 = vadd.f32 %v7222, %v7518
      %v7587 = vadd.f32 %v7223, %v7521
      %v7588 = vadd.f32 %v7224, %v7524
      %s7589 = scalar_lea.vmem %s342, 320
      %v7590 = vld [vmem:[%s7589] sm:$0xf]
      %v7591 = vld [vmem:[%s7589 + $0x4] sm:$0xf]
      %v7592 = vld [vmem:[%s7589 + $0x8] sm:$0xf]
      %v7593 = vld [vmem:[%s7589 + $0xc] sm:$0xf]
      %v7594 = vld [vmem:[%s7589 + $0x10] sm:$0xf]
      %v7595 = vld [vmem:[%s7589 + $0x14] sm:$0xf]
      %v7596 = vld [vmem:[%s7589 + $0x18] sm:$0xf]
      %v7597 = vld [vmem:[%s7589 + $0x1c] sm:$0xf]
      %v7598 = vld [vmem:[%s7589 + $0x20] sm:$0xf]
      %v7599 = vld [vmem:[%s7589 + $0x24] sm:$0xf]
      %v7600 = vld [vmem:[%s7589 + $0x28] sm:$0xf]
      %v7601 = vld [vmem:[%s7589 + $0x2c] sm:$0xf]
      %v7602 = vld [vmem:[%s7589 + $0x30] sm:$0xf]
      %v7603 = vld [vmem:[%s7589 + $0x34] sm:$0xf]
      %v7604 = vld [vmem:[%s7589 + $0x38] sm:$0xf]
      %v7605 = vld [vmem:[%s7589 + $0x3c] sm:$0xf]
      %7606 = vst [vmem:[#allocation1] ss:$9 sm:$0xff] %v6837
      %s7607 = scalar_lea.vmem [#allocation1], 1
      %7608 = vst [vmem:[%s7607] ss:$9 sm:$0xff] %v6840
      %s7609 = scalar_lea.vmem [#allocation1], 2
      %7610 = vst [vmem:[%s7609] ss:$9 sm:$0xff] %v6843
      %s7611 = scalar_lea.vmem [#allocation1], 3
      %7612 = vst [vmem:[%s7611] ss:$9 sm:$0xff] %v6846
      %s7613 = scalar_lea.vmem [#allocation1], 4
      %7614 = vst [vmem:[%s7613] ss:$9 sm:$0xff] %v6849
      %s7615 = scalar_lea.vmem [#allocation1], 5
      %7616 = vst [vmem:[%s7615] ss:$9 sm:$0xff] %v6852
      %s7617 = scalar_lea.vmem [#allocation1], 6
      %7618 = vst [vmem:[%s7617] ss:$9 sm:$0xff] %v6855
      %s7619 = scalar_lea.vmem [#allocation1], 7
      %7620 = vst [vmem:[%s7619] ss:$9 sm:$0xff] %v6858
      %v7621 = vld [vmem:[#allocation1] sm:$0xff]
      %7622 = vst [vmem:[#allocation1] ss:$9 sm:$0xff] %v6861
      %7623 = vst [vmem:[%s7607] ss:$9 sm:$0xff] %v6864
      %7624 = vst [vmem:[%s7609] ss:$9 sm:$0xff] %v6867
      %7625 = vst [vmem:[%s7611] ss:$9 sm:$0xff] %v6870
      %7626 = vst [vmem:[%s7613] ss:$9 sm:$0xff] %v6873
      %7627 = vst [vmem:[%s7615] ss:$9 sm:$0xff] %v6876
      %7628 = vst [vmem:[%s7617] ss:$9 sm:$0xff] %v6879
      %7629 = vst [vmem:[%s7619] ss:$9 sm:$0xff] %v6882
      %v7630 = vld [vmem:[#allocation1] sm:$0xff]
      %7631 = vst [vmem:[#allocation1] ss:$9 sm:$0xff] %v6885
      %7632 = vst [vmem:[%s7607] ss:$9 sm:$0xff] %v6888
      %7633 = vst [vmem:[%s7609] ss:$9 sm:$0xff] %v6891
      %7634 = vst [vmem:[%s7611] ss:$9 sm:$0xff] %v6894
      %7635 = vst [vmem:[%s7613] ss:$9 sm:$0xff] %v6897
      %7636 = vst [vmem:[%s7615] ss:$9 sm:$0xff] %v6900
      %7637 = vst [vmem:[%s7617] ss:$9 sm:$0xff] %v6903
      %7638 = vst [vmem:[%s7619] ss:$9 sm:$0xff] %v6906
      %v7639 = vld [vmem:[#allocation1] sm:$0xff]
      %7640 = vst [vmem:[#allocation1] ss:$9 sm:$0xff] %v6909
      %7641 = vst [vmem:[%s7607] ss:$9 sm:$0xff] %v6912
      %7642 = vst [vmem:[%s7609] ss:$9 sm:$0xff] %v6915
      %7643 = vst [vmem:[%s7611] ss:$9 sm:$0xff] %v6918
      %7644 = vst [vmem:[%s7613] ss:$9 sm:$0xff] %v6921
      %7645 = vst [vmem:[%s7615] ss:$9 sm:$0xff] %v6924
      %7646 = vst [vmem:[%s7617] ss:$9 sm:$0xff] %v6927
      %7647 = vst [vmem:[%s7619] ss:$9 sm:$0xff] %v6930
      %v7648 = vld [vmem:[#allocation1] sm:$0xff]
      %7649 = vst [vmem:[#allocation1] ss:$9 sm:$0xff] %v6933
      %7650 = vst [vmem:[%s7607] ss:$9 sm:$0xff] %v6936
      %7651 = vst [vmem:[%s7609] ss:$9 sm:$0xff] %v6939
      %7652 = vst [vmem:[%s7611] ss:$9 sm:$0xff] %v6942
      %7653 = vst [vmem:[%s7613] ss:$9 sm:$0xff] %v6945
      %7654 = vst [vmem:[%s7615] ss:$9 sm:$0xff] %v6948
      %7655 = vst [vmem:[%s7617] ss:$9 sm:$0xff] %v6951
      %7656 = vst [vmem:[%s7619] ss:$9 sm:$0xff] %v6954
      %v7657 = vld [vmem:[#allocation1] sm:$0xff]
      %v7679 = vunpack.c.l.b16 %v7590
      %v7680 = vunpack.c.l.b16 %v7591
      %v7681 = vunpack.c.l.b16 %v7592
      %v7682 = vunpack.c.l.b16 %v7593
      %v7683 = vunpack.c.l.b16 %v7594
      %v7684 = vunpack.c.l.b16 %v7595
      %v7685 = vunpack.c.l.b16 %v7596
      %v7686 = vunpack.c.l.b16 %v7597
      %v7687 = vunpack.c.l.b16 %v7598
      %v7688 = vunpack.c.l.b16 %v7599
      %v7689 = vunpack.c.l.b16 %v7600
      %v7690 = vunpack.c.l.b16 %v7601
      %v7691 = vunpack.c.l.b16 %v7602
      %v7692 = vunpack.c.l.b16 %v7603
      %v7693 = vunpack.c.l.b16 %v7604
      %v7694 = vunpack.c.l.b16 %v7605
      %v7695 = vpack.c.b16 %v7680, %v7679
      %v7696 = vpack.c.b16 %v7682, %v7681
      %v7697 = vpack.c.b16 %v7684, %v7683
      %v7698 = vpack.c.b16 %v7686, %v7685
      %v7699 = vpack.c.b16 %v7688, %v7687
      %v7700 = vpack.c.b16 %v7690, %v7689
      %v7701 = vpack.c.b16 %v7692, %v7691
      %v7702 = vpack.c.b16 %v7694, %v7693
      %7711 = vmatpush.bf16.msra.mxu0 %v7702
      %7712 = vmatpush.bf16.msra.mxu0 %v7701
      %7713 = vmatpush.bf16.msra.mxu0 %v7700
      %7714 = vmatpush.bf16.msra.mxu0 %v7699
      %7715 = vmatpush.bf16.msra.mxu0 %v7698
      %7716 = vmatpush.bf16.msra.mxu0 %v7697
      %7717 = vmatpush.bf16.msra.mxu0 %v7696
      %7718 = vmatpush.bf16.msra.mxu0 %v7695
      %7719 = vmatmul.bf16.gmra.mxu0 %v7621
      %v7720 = vpop.f32.mrf.mxu0
      %v7721 = vadd.f32 0.0, %v7720
      %v7722 = vpop.f32.mrf.mxu0
      %v7723 = vadd.f32 0.0, %v7722
      %7724 = vmatmul.bf16.gmra.mxu0 %v7630
      %v7725 = vpop.f32.mrf.mxu0
      %v7726 = vadd.f32 0.0, %v7725
      %v7727 = vpop.f32.mrf.mxu0
      %v7728 = vadd.f32 0.0, %v7727
      %7729 = vmatmul.bf16.gmra.mxu0 %v7639
      %v7730 = vpop.f32.mrf.mxu0
      %v7731 = vadd.f32 0.0, %v7730
      %v7732 = vpop.f32.mrf.mxu0
      %v7733 = vadd.f32 0.0, %v7732
      %7734 = vmatmul.bf16.gmra.mxu0 %v7648
      %v7735 = vpop.f32.mrf.mxu0
      %v7736 = vadd.f32 0.0, %v7735
      %v7737 = vpop.f32.mrf.mxu0
      %v7738 = vadd.f32 0.0, %v7737
      %7739 = vmatmul.bf16.gmra.mxu0 %v7657
      %v7740 = vpop.f32.mrf.mxu0
      %v7741 = vadd.f32 0.0, %v7740
      %v7742 = vpop.f32.mrf.mxu0
      %v7743 = vadd.f32 0.0, %v7742
      %7744 = vdwg.mxu0
      %v7755 = vrot.slane %v7721, 2
      %v7756 = vrot.slane %v7721, 4
      %v7757 = vrot.slane %v7721, 6
      %v7758 = vrot.slane %v7723, 4
      %v7759 = vrot.slane %v7723, 6
      %v7760 = vrot.slane %v7726, 2
      %v7761 = vrot.slane %v7726, 6
      %v7762 = vrot.slane %v7728, 2
      %v7763 = vrot.slane %v7728, 4
      %v7764 = vrot.slane %v7731, 2
      %v7765 = vrot.slane %v7731, 4
      %v7766 = vrot.slane %v7731, 6
      %v7767 = vrot.slane %v7733, 2
      %v7768 = vrot.slane %v7733, 4
      %v7769 = vrot.slane %v7733, 6
      %v7770 = vrot.slane %v7736, 4
      %v7771 = vrot.slane %v7736, 6
      %v7772 = vrot.slane %v7738, 2
      %v7773 = vrot.slane %v7738, 6
      %v7774 = vrot.slane %v7741, 2
      %v7775 = vrot.slane %v7741, 4
      %v7776 = vrot.slane %v7743, 2
      %v7777 = vrot.slane %v7743, 4
      %v7778 = vrot.slane %v7743, 6
      %v7803 = vadd.f32 %v7557, %v7755
      %v7804 = vadd.f32 %v7558, %v7756
      %v7805 = vadd.f32 %v7559, %v7757
      %v7806 = vadd.f32 %v7560, %v7723
      %v7807 = vadd.f32 %v7561, %v7758
      %v7808 = vadd.f32 %v7562, %v7759
      %v7809 = vadd.f32 %v7563, %v7726
      %v7810 = vadd.f32 %v7564, %v7760
      %v7811 = vadd.f32 %v7565, %v7761
      %v7812 = vadd.f32 %v7566, %v7728
      %v7813 = vadd.f32 %v7567, %v7762
      %v7814 = vadd.f32 %v7568, %v7763
      %v7815 = vadd.f32 %v7569, %v7731
      %v7816 = vadd.f32 %v7570, %v7764
      %v7817 = vadd.f32 %v7571, %v7765
      %v7818 = vadd.f32 %v7572, %v7766
      %v7819 = vadd.f32 %v7573, %v7767
      %v7820 = vadd.f32 %v7574, %v7768
      %v7821 = vadd.f32 %v7575, %v7769
      %v7822 = vadd.f32 %v7576, %v7736
      %v7823 = vadd.f32 %v7577, %v7770
      %v7824 = vadd.f32 %v7578, %v7771
      %v7825 = vadd.f32 %v7579, %v7738
      %v7826 = vadd.f32 %v7580, %v7772
      %v7827 = vadd.f32 %v7581, %v7773
      %v7828 = vadd.f32 %v7582, %v7741
      %v7829 = vadd.f32 %v7583, %v7774
      %v7830 = vadd.f32 %v7584, %v7775
      %v7831 = vadd.f32 %v7585, %v7743
      %v7832 = vadd.f32 %v7586, %v7776
      %v7833 = vadd.f32 %v7587, %v7777
      %v7834 = vadd.f32 %v7588, %v7778
      %s7835 = scalar_lea.vmem [#allocation2], 16
      %v7836 = vld [vmem:[%s7835] sm:$0xf]
      %v7837 = vld [vmem:[%s7835 + $0x4] sm:$0x1]
      %v7838 = vld [vmem:[%s7835 + $0x8] sm:$0xf]
      %v7839 = vld [vmem:[%s7835 + $0xc] sm:$0x1]
      %v7840 = vld [vmem:[%s7835 + $0x10] sm:$0xf]
      %v7841 = vld [vmem:[%s7835 + $0x14] sm:$0x1]
      %v7842 = vld [vmem:[%s7835 + $0x18] sm:$0xf]
      %v7843 = vld [vmem:[%s7835 + $0x1c] sm:$0x1]
      %v7844 = vld [vmem:[%s7835 + $0x20] sm:$0xf]
      %v7845 = vld [vmem:[%s7835 + $0x24] sm:$0x1]
      %v7846 = vld [vmem:[%s7835 + $0x28] sm:$0xf]
      %v7847 = vld [vmem:[%s7835 + $0x2c] sm:$0x1]
      %v7848 = vld [vmem:[%s7835 + $0x30] sm:$0xf]
      %v7849 = vld [vmem:[%s7835 + $0x34] sm:$0x1]
      %v7850 = vld [vmem:[%s7835 + $0x38] sm:$0xf]
      %v7851 = vld [vmem:[%s7835 + $0x3c] sm:$0x1]
      %v7868 = vrot.slane %v7836, 3
      %v7869 = vrot.slane %v7837, 3
      %v7870 = vrot.slane %v7838, 3
      %v7871 = vrot.slane %v7839, 3
      %v7872 = vrot.slane %v7840, 3
      %v7873 = vrot.slane %v7841, 3
      %v7874 = vrot.slane %v7842, 3
      %v7875 = vrot.slane %v7843, 3
      %v7876 = vrot.slane %v7844, 3
      %v7877 = vrot.slane %v7845, 3
      %v7878 = vrot.slane %v7846, 3
      %v7879 = vrot.slane %v7847, 3
      %v7880 = vrot.slane %v7848, 3
      %v7881 = vrot.slane %v7849, 3
      %v7882 = vrot.slane %v7850, 3
      %v7883 = vrot.slane %v7851, 3
      %v7886 = vsel %vm5810, %v7836, %v7868
      %v7887 = vsel %vm5814, %v7836, %v7868
      %v7889 = vrot.slane %v7887, 1
      %v7890 = vsel %vm5818, %v7836, %v7868
      %v7892 = vrot.slane %v7890, 2
      %v7893 = vsel %vm5822, %v7836, %v7868
      %v7895 = vrot.slane %v7893, 3
      %v7898 = vsel %vm5810, %v7837, %v7869
      %v7901 = vsel %vm5810, %v7838, %v7870
      %v7902 = vsel %vm5814, %v7838, %v7870
      %v7904 = vrot.slane %v7902, 1
      %v7905 = vsel %vm5818, %v7838, %v7870
      %v7907 = vrot.slane %v7905, 2
      %v7908 = vsel %vm5822, %v7838, %v7870
      %v7910 = vrot.slane %v7908, 3
      %v7913 = vsel %vm5810, %v7839, %v7871
      %v7916 = vsel %vm5810, %v7840, %v7872
      %v7917 = vsel %vm5814, %v7840, %v7872
      %v7919 = vrot.slane %v7917, 1
      %v7920 = vsel %vm5818, %v7840, %v7872
      %v7922 = vrot.slane %v7920, 2
      %v7923 = vsel %vm5822, %v7840, %v7872
      %v7925 = vrot.slane %v7923, 3
      %v7928 = vsel %vm5810, %v7841, %v7873
      %v7931 = vsel %vm5810, %v7842, %v7874
      %v7932 = vsel %vm5814, %v7842, %v7874
      %v7934 = vrot.slane %v7932, 1
      %v7935 = vsel %vm5818, %v7842, %v7874
      %v7937 = vrot.slane %v7935, 2
      %v7938 = vsel %vm5822, %v7842, %v7874
      %v7940 = vrot.slane %v7938, 3
      %v7943 = vsel %vm5810, %v7843, %v7875
      %v7946 = vsel %vm5810, %v7844, %v7876
      %v7947 = vsel %vm5814, %v7844, %v7876
      %v7949 = vrot.slane %v7947, 1
      %v7950 = vsel %vm5818, %v7844, %v7876
      %v7952 = vrot.slane %v7950, 2
      %v7953 = vsel %vm5822, %v7844, %v7876
      %v7955 = vrot.slane %v7953, 3
      %v7958 = vsel %vm5810, %v7845, %v7877
      %v7961 = vsel %vm5810, %v7846, %v7878
      %v7962 = vsel %vm5814, %v7846, %v7878
      %v7964 = vrot.slane %v7962, 1
      %v7965 = vsel %vm5818, %v7846, %v7878
      %v7967 = vrot.slane %v7965, 2
      %v7968 = vsel %vm5822, %v7846, %v7878
      %v7970 = vrot.slane %v7968, 3
      %v7973 = vsel %vm5810, %v7847, %v7879
      %v7976 = vsel %vm5810, %v7848, %v7880
      %v7977 = vsel %vm5814, %v7848, %v7880
      %v7979 = vrot.slane %v7977, 1
      %v7980 = vsel %vm5818, %v7848, %v7880
      %v7982 = vrot.slane %v7980, 2
      %v7983 = vsel %vm5822, %v7848, %v7880
      %v7985 = vrot.slane %v7983, 3
      %v7988 = vsel %vm5810, %v7849, %v7881
      %v7991 = vsel %vm5810, %v7850, %v7882
      %v7992 = vsel %vm5814, %v7850, %v7882
      %v7994 = vrot.slane %v7992, 1
      %v7995 = vsel %vm5818, %v7850, %v7882
      %v7997 = vrot.slane %v7995, 2
      %v7998 = vsel %vm5822, %v7850, %v7882
      %v8000 = vrot.slane %v7998, 3
      %v8003 = vsel %vm5810, %v7851, %v7883
      %s8004 = scalar_lea.vmem %s342, 384
      %v8005 = vld [vmem:[%s8004] sm:$0xf]
      %v8006 = vld [vmem:[%s8004 + $0x4] sm:$0xf]
      %v8007 = vld [vmem:[%s8004 + $0x8] sm:$0xf]
      %v8008 = vld [vmem:[%s8004 + $0xc] sm:$0xf]
      %v8009 = vld [vmem:[%s8004 + $0x10] sm:$0xf]
      %v8010 = vld [vmem:[%s8004 + $0x14] sm:$0xf]
      %v8011 = vld [vmem:[%s8004 + $0x18] sm:$0xf]
      %v8012 = vld [vmem:[%s8004 + $0x1c] sm:$0xf]
      %v8013 = vld [vmem:[%s8004 + $0x20] sm:$0xf]
      %v8014 = vld [vmem:[%s8004 + $0x24] sm:$0xf]
      %v8015 = vld [vmem:[%s8004 + $0x28] sm:$0xf]
      %v8016 = vld [vmem:[%s8004 + $0x2c] sm:$0xf]
      %v8017 = vld [vmem:[%s8004 + $0x30] sm:$0xf]
      %v8018 = vld [vmem:[%s8004 + $0x34] sm:$0xf]
      %v8019 = vld [vmem:[%s8004 + $0x38] sm:$0xf]
      %v8020 = vld [vmem:[%s8004 + $0x3c] sm:$0xf]
      %8021 = vst [vmem:[#allocation1] ss:$9 sm:$0xff] %v7886
      %s8023 = scalar_lea.vmem [#allocation1], 1
      %8024 = vst [vmem:[%s8023] ss:$9 sm:$0xff] %v7889
      %s8026 = scalar_lea.vmem [#allocation1], 2
      %8027 = vst [vmem:[%s8026] ss:$9 sm:$0xff] %v7892
      %s8029 = scalar_lea.vmem [#allocation1], 3
      %8030 = vst [vmem:[%s8029] ss:$9 sm:$0xff] %v7895
      %s8031 = scalar_lea.vmem [#allocation1], 4
      %8032 = vst [vmem:[%s8031] ss:$9 sm:$0xff] %v7898
      %s8033 = scalar_lea.vmem [#allocation1], 5
      %8034 = vst [vmem:[%s8033] ss:$9 sm:$0xff] %v7901
      %s8036 = scalar_lea.vmem [#allocation1], 6
      %8037 = vst [vmem:[%s8036] ss:$9 sm:$0xff] %v7904
      %s8039 = scalar_lea.vmem [#allocation1], 7
      %8040 = vst [vmem:[%s8039] ss:$9 sm:$0xff] %v7907
      %v8041 = vld [vmem:[#allocation1] sm:$0xff]
      %8043 = vst [vmem:[#allocation1] ss:$9 sm:$0xff] %v7910
      %8044 = vst [vmem:[%s8023] ss:$9 sm:$0xff] %v7913
      %8045 = vst [vmem:[%s8026] ss:$9 sm:$0xff] %v7916
      %8047 = vst [vmem:[%s8029] ss:$9 sm:$0xff] %v7919
      %8049 = vst [vmem:[%s8031] ss:$9 sm:$0xff] %v7922
      %8051 = vst [vmem:[%s8033] ss:$9 sm:$0xff] %v7925
      %8052 = vst [vmem:[%s8036] ss:$9 sm:$0xff] %v7928
      %8053 = vst [vmem:[%s8039] ss:$9 sm:$0xff] %v7931
      %v8054 = vld [vmem:[#allocation1] sm:$0xff]
      %8056 = vst [vmem:[#allocation1] ss:$9 sm:$0xff] %v7934
      %8058 = vst [vmem:[%s8023] ss:$9 sm:$0xff] %v7937
      %8060 = vst [vmem:[%s8026] ss:$9 sm:$0xff] %v7940
      %8061 = vst [vmem:[%s8029] ss:$9 sm:$0xff] %v7943
      %8062 = vst [vmem:[%s8031] ss:$9 sm:$0xff] %v7946
      %8064 = vst [vmem:[%s8033] ss:$9 sm:$0xff] %v7949
      %8066 = vst [vmem:[%s8036] ss:$9 sm:$0xff] %v7952
      %8068 = vst [vmem:[%s8039] ss:$9 sm:$0xff] %v7955
      %v8069 = vld [vmem:[#allocation1] sm:$0xff]
      %8070 = vst [vmem:[#allocation1] ss:$9 sm:$0xff] %v7958
      %8071 = vst [vmem:[%s8023] ss:$9 sm:$0xff] %v7961
      %8073 = vst [vmem:[%s8026] ss:$9 sm:$0xff] %v7964
      %8075 = vst [vmem:[%s8029] ss:$9 sm:$0xff] %v7967
      %8077 = vst [vmem:[%s8031] ss:$9 sm:$0xff] %v7970
      %8078 = vst [vmem:[%s8033] ss:$9 sm:$0xff] %v7973
      %8079 = vst [vmem:[%s8036] ss:$9 sm:$0xff] %v7976
      %8081 = vst [vmem:[%s8039] ss:$9 sm:$0xff] %v7979
      %v8082 = vld [vmem:[#allocation1] sm:$0xff]
      %8084 = vst [vmem:[#allocation1] ss:$9 sm:$0xff] %v7982
      %8086 = vst [vmem:[%s8023] ss:$9 sm:$0xff] %v7985
      %8087 = vst [vmem:[%s8026] ss:$9 sm:$0xff] %v7988
      %8088 = vst [vmem:[%s8029] ss:$9 sm:$0xff] %v7991
      %8090 = vst [vmem:[%s8031] ss:$9 sm:$0xff] %v7994
      %8092 = vst [vmem:[%s8033] ss:$9 sm:$0xff] %v7997
      %8094 = vst [vmem:[%s8036] ss:$9 sm:$0xff] %v8000
      %8095 = vst [vmem:[%s8039] ss:$9 sm:$0xff] %v8003
      %v8096 = vld [vmem:[#allocation1] sm:$0xff]
      %v8118 = vunpack.c.l.b16 %v8005
      %v8119 = vunpack.c.l.b16 %v8006
      %v8120 = vunpack.c.l.b16 %v8007
      %v8121 = vunpack.c.l.b16 %v8008
      %v8122 = vunpack.c.l.b16 %v8009
      %v8123 = vunpack.c.l.b16 %v8010
      %v8124 = vunpack.c.l.b16 %v8011
      %v8125 = vunpack.c.l.b16 %v8012
      %v8126 = vunpack.c.l.b16 %v8013
      %v8127 = vunpack.c.l.b16 %v8014
      %v8128 = vunpack.c.l.b16 %v8015
      %v8129 = vunpack.c.l.b16 %v8016
      %v8130 = vunpack.c.l.b16 %v8017
      %v8131 = vunpack.c.l.b16 %v8018
      %v8132 = vunpack.c.l.b16 %v8019
      %v8133 = vunpack.c.l.b16 %v8020
      %v8134 = vpack.c.b16 %v8119, %v8118
      %v8135 = vpack.c.b16 %v8121, %v8120
      %v8136 = vpack.c.b16 %v8123, %v8122
      %v8137 = vpack.c.b16 %v8125, %v8124
      %v8138 = vpack.c.b16 %v8127, %v8126
      %v8139 = vpack.c.b16 %v8129, %v8128
      %v8140 = vpack.c.b16 %v8131, %v8130
      %v8141 = vpack.c.b16 %v8133, %v8132
      %8150 = vmatpush.bf16.msra.mxu0 %v8141
      %8151 = vmatpush.bf16.msra.mxu0 %v8140
      %8152 = vmatpush.bf16.msra.mxu0 %v8139
      %8153 = vmatpush.bf16.msra.mxu0 %v8138
      %8154 = vmatpush.bf16.msra.mxu0 %v8137
      %8155 = vmatpush.bf16.msra.mxu0 %v8136
      %8156 = vmatpush.bf16.msra.mxu0 %v8135
      %8157 = vmatpush.bf16.msra.mxu0 %v8134
      %8158 = vmatmul.bf16.gmra.mxu0 %v8041
      %v8159 = vpop.f32.mrf.mxu0
      %v8160 = vadd.f32 0.0, %v8159
      %v8161 = vpop.f32.mrf.mxu0
      %v8162 = vadd.f32 0.0, %v8161
      %8163 = vmatmul.bf16.gmra.mxu0 %v8054
      %v8164 = vpop.f32.mrf.mxu0
      %v8165 = vadd.f32 0.0, %v8164
      %v8166 = vpop.f32.mrf.mxu0
      %v8167 = vadd.f32 0.0, %v8166
      %8168 = vmatmul.bf16.gmra.mxu0 %v8069
      %v8169 = vpop.f32.mrf.mxu0
      %v8170 = vadd.f32 0.0, %v8169
      %v8171 = vpop.f32.mrf.mxu0
      %v8172 = vadd.f32 0.0, %v8171
      %8173 = vmatmul.bf16.gmra.mxu0 %v8082
      %v8174 = vpop.f32.mrf.mxu0
      %v8175 = vadd.f32 0.0, %v8174
      %v8176 = vpop.f32.mrf.mxu0
      %v8177 = vadd.f32 0.0, %v8176
      %8178 = vmatmul.bf16.gmra.mxu0 %v8096
      %v8179 = vpop.f32.mrf.mxu0
      %v8180 = vadd.f32 0.0, %v8179
      %v8181 = vpop.f32.mrf.mxu0
      %v8182 = vadd.f32 0.0, %v8181
      %8183 = vdwg.mxu0
      %v8194 = vrot.slane %v8160, 2
      %v8195 = vrot.slane %v8160, 4
      %v8196 = vrot.slane %v8160, 6
      %v8197 = vrot.slane %v8162, 2
      %v8198 = vrot.slane %v8162, 4
      %v8199 = vrot.slane %v8162, 6
      %v8200 = vrot.slane %v8165, 4
      %v8201 = vrot.slane %v8165, 6
      %v8202 = vrot.slane %v8167, 2
      %v8203 = vrot.slane %v8167, 6
      %v8204 = vrot.slane %v8170, 2
      %v8205 = vrot.slane %v8170, 4
      %v8206 = vrot.slane %v8172, 2
      %v8207 = vrot.slane %v8172, 4
      %v8208 = vrot.slane %v8172, 6
      %v8209 = vrot.slane %v8175, 2
      %v8210 = vrot.slane %v8175, 4
      %v8211 = vrot.slane %v8175, 6
      %v8212 = vrot.slane %v8177, 4
      %v8213 = vrot.slane %v8177, 6
      %v8214 = vrot.slane %v8180, 2
      %v8215 = vrot.slane %v8180, 6
      %v8216 = vrot.slane %v8182, 2
      %v8217 = vrot.slane %v8182, 4
      %v8242 = vadd.f32 %v7803, %v8160
      %v8243 = vadd.f32 %v7804, %v8194
      %v8244 = vadd.f32 %v7805, %v8195
      %v8245 = vadd.f32 %v7806, %v8196
      %v8246 = vadd.f32 %v7807, %v8197
      %v8247 = vadd.f32 %v7808, %v8198
      %v8248 = vadd.f32 %v7809, %v8199
      %v8249 = vadd.f32 %v7810, %v8165
      %v8250 = vadd.f32 %v7811, %v8200
      %v8251 = vadd.f32 %v7812, %v8201
      %v8252 = vadd.f32 %v7813, %v8167
      %v8253 = vadd.f32 %v7814, %v8202
      %v8254 = vadd.f32 %v7815, %v8203
      %v8255 = vadd.f32 %v7816, %v8170
      %v8256 = vadd.f32 %v7817, %v8204
      %v8257 = vadd.f32 %v7818, %v8205
      %v8258 = vadd.f32 %v7819, %v8172
      %v8259 = vadd.f32 %v7820, %v8206
      %v8260 = vadd.f32 %v7821, %v8207
      %v8261 = vadd.f32 %v7822, %v8208
      %v8262 = vadd.f32 %v7823, %v8209
      %v8263 = vadd.f32 %v7824, %v8210
      %v8264 = vadd.f32 %v7825, %v8211
      %v8265 = vadd.f32 %v7826, %v8177
      %v8266 = vadd.f32 %v7827, %v8212
      %v8267 = vadd.f32 %v7828, %v8213
      %v8268 = vadd.f32 %v7829, %v8180
      %v8269 = vadd.f32 %v7830, %v8214
      %v8270 = vadd.f32 %v7831, %v8215
      %v8271 = vadd.f32 %v7832, %v8182
      %v8272 = vadd.f32 %v7833, %v8216
      %v8273 = vadd.f32 %v7834, %v8217
      %s8274 = scalar_lea.vmem %s342, 448
      %v8275 = vld [vmem:[%s8274] sm:$0xf]
      %v8276 = vld [vmem:[%s8274 + $0x4] sm:$0xf]
      %v8277 = vld [vmem:[%s8274 + $0x8] sm:$0xf]
      %v8278 = vld [vmem:[%s8274 + $0xc] sm:$0xf]
      %v8279 = vld [vmem:[%s8274 + $0x10] sm:$0xf]
      %v8280 = vld [vmem:[%s8274 + $0x14] sm:$0xf]
      %v8281 = vld [vmem:[%s8274 + $0x18] sm:$0xf]
      %v8282 = vld [vmem:[%s8274 + $0x1c] sm:$0xf]
      %v8283 = vld [vmem:[%s8274 + $0x20] sm:$0xf]
      %v8284 = vld [vmem:[%s8274 + $0x24] sm:$0xf]
      %v8285 = vld [vmem:[%s8274 + $0x28] sm:$0xf]
      %v8286 = vld [vmem:[%s8274 + $0x2c] sm:$0xf]
      %v8287 = vld [vmem:[%s8274 + $0x30] sm:$0xf]
      %v8288 = vld [vmem:[%s8274 + $0x34] sm:$0xf]
      %v8289 = vld [vmem:[%s8274 + $0x38] sm:$0xf]
      %v8290 = vld [vmem:[%s8274 + $0x3c] sm:$0xf]
      %8291 = vst [vmem:[#allocation1] ss:$9 sm:$0xff] %v7886
      %s8292 = scalar_lea.vmem [#allocation1], 1
      %8293 = vst [vmem:[%s8292] ss:$9 sm:$0xff] %v7889
      %s8294 = scalar_lea.vmem [#allocation1], 2
      %8295 = vst [vmem:[%s8294] ss:$9 sm:$0xff] %v7892
      %s8296 = scalar_lea.vmem [#allocation1], 3
      %8297 = vst [vmem:[%s8296] ss:$9 sm:$0xff] %v7895
      %s8298 = scalar_lea.vmem [#allocation1], 4
      %8299 = vst [vmem:[%s8298] ss:$9 sm:$0xff] %v7898
      %s8300 = scalar_lea.vmem [#allocation1], 5
      %8301 = vst [vmem:[%s8300] ss:$9 sm:$0xff] %v7901
      %s8302 = scalar_lea.vmem [#allocation1], 6
      %8303 = vst [vmem:[%s8302] ss:$9 sm:$0xff] %v7904
      %s8304 = scalar_lea.vmem [#allocation1], 7
      %8305 = vst [vmem:[%s8304] ss:$9 sm:$0xff] %v7907
      %v8306 = vld [vmem:[#allocation1] sm:$0xff]
      %8307 = vst [vmem:[#allocation1] ss:$9 sm:$0xff] %v7910
      %8308 = vst [vmem:[%s8292] ss:$9 sm:$0xff] %v7913
      %8309 = vst [vmem:[%s8294] ss:$9 sm:$0xff] %v7916
      %8310 = vst [vmem:[%s8296] ss:$9 sm:$0xff] %v7919
      %8311 = vst [vmem:[%s8298] ss:$9 sm:$0xff] %v7922
      %8312 = vst [vmem:[%s8300] ss:$9 sm:$0xff] %v7925
      %8313 = vst [vmem:[%s8302] ss:$9 sm:$0xff] %v7928
      %8314 = vst [vmem:[%s8304] ss:$9 sm:$0xff] %v7931
      %v8315 = vld [vmem:[#allocation1] sm:$0xff]
      %8316 = vst [vmem:[#allocation1] ss:$9 sm:$0xff] %v7934
      %8317 = vst [vmem:[%s8292] ss:$9 sm:$0xff] %v7937
      %8318 = vst [vmem:[%s8294] ss:$9 sm:$0xff] %v7940
      %8319 = vst [vmem:[%s8296] ss:$9 sm:$0xff] %v7943
      %8320 = vst [vmem:[%s8298] ss:$9 sm:$0xff] %v7946
      %8321 = vst [vmem:[%s8300] ss:$9 sm:$0xff] %v7949
      %8322 = vst [vmem:[%s8302] ss:$9 sm:$0xff] %v7952
      %8323 = vst [vmem:[%s8304] ss:$9 sm:$0xff] %v7955
      %v8324 = vld [vmem:[#allocation1] sm:$0xff]
      %8325 = vst [vmem:[#allocation1] ss:$9 sm:$0xff] %v7958
      %8326 = vst [vmem:[%s8292] ss:$9 sm:$0xff] %v7961
      %8327 = vst [vmem:[%s8294] ss:$9 sm:$0xff] %v7964
      %8328 = vst [vmem:[%s8296] ss:$9 sm:$0xff] %v7967
      %8329 = vst [vmem:[%s8298] ss:$9 sm:$0xff] %v7970
      %8330 = vst [vmem:[%s8300] ss:$9 sm:$0xff] %v7973
      %8331 = vst [vmem:[%s8302] ss:$9 sm:$0xff] %v7976
      %8332 = vst [vmem:[%s8304] ss:$9 sm:$0xff] %v7979
      %v8333 = vld [vmem:[#allocation1] sm:$0xff]
      %8334 = vst [vmem:[#allocation1] ss:$9 sm:$0xff] %v7982
      %8335 = vst [vmem:[%s8292] ss:$9 sm:$0xff] %v7985
      %8336 = vst [vmem:[%s8294] ss:$9 sm:$0xff] %v7988
      %8337 = vst [vmem:[%s8296] ss:$9 sm:$0xff] %v7991
      %8338 = vst [vmem:[%s8298] ss:$9 sm:$0xff] %v7994
      %8339 = vst [vmem:[%s8300] ss:$9 sm:$0xff] %v7997
      %8340 = vst [vmem:[%s8302] ss:$9 sm:$0xff] %v8000
      %8341 = vst [vmem:[%s8304] ss:$9 sm:$0xff] %v8003
      %v8342 = vld [vmem:[#allocation1] sm:$0xff]
      %v8364 = vunpack.c.l.b16 %v8275
      %v8365 = vunpack.c.l.b16 %v8276
      %v8366 = vunpack.c.l.b16 %v8277
      %v8367 = vunpack.c.l.b16 %v8278
      %v8368 = vunpack.c.l.b16 %v8279
      %v8369 = vunpack.c.l.b16 %v8280
      %v8370 = vunpack.c.l.b16 %v8281
      %v8371 = vunpack.c.l.b16 %v8282
      %v8372 = vunpack.c.l.b16 %v8283
      %v8373 = vunpack.c.l.b16 %v8284
      %v8374 = vunpack.c.l.b16 %v8285
      %v8375 = vunpack.c.l.b16 %v8286
      %v8376 = vunpack.c.l.b16 %v8287
      %v8377 = vunpack.c.l.b16 %v8288
      %v8378 = vunpack.c.l.b16 %v8289
      %v8379 = vunpack.c.l.b16 %v8290
      %v8380 = vpack.c.b16 %v8365, %v8364
      %v8381 = vpack.c.b16 %v8367, %v8366
      %v8382 = vpack.c.b16 %v8369, %v8368
      %v8383 = vpack.c.b16 %v8371, %v8370
      %v8384 = vpack.c.b16 %v8373, %v8372
      %v8385 = vpack.c.b16 %v8375, %v8374
      %v8386 = vpack.c.b16 %v8377, %v8376
      %v8387 = vpack.c.b16 %v8379, %v8378
      %8396 = vmatpush.bf16.msra.mxu0 %v8387
      %8397 = vmatpush.bf16.msra.mxu0 %v8386
      %8398 = vmatpush.bf16.msra.mxu0 %v8385
      %8399 = vmatpush.bf16.msra.mxu0 %v8384
      %8400 = vmatpush.bf16.msra.mxu0 %v8383
      %8401 = vmatpush.bf16.msra.mxu0 %v8382
      %8402 = vmatpush.bf16.msra.mxu0 %v8381
      %8403 = vmatpush.bf16.msra.mxu0 %v8380
      %8404 = vmatmul.bf16.gmra.mxu0 %v8306
      %v8405 = vpop.f32.mrf.mxu0
      %v8406 = vadd.f32 0.0, %v8405
      %v8407 = vpop.f32.mrf.mxu0
      %v8408 = vadd.f32 0.0, %v8407
      %8409 = vmatmul.bf16.gmra.mxu0 %v8315
      %v8410 = vpop.f32.mrf.mxu0
      %v8411 = vadd.f32 0.0, %v8410
      %v8412 = vpop.f32.mrf.mxu0
      %v8413 = vadd.f32 0.0, %v8412
      %8414 = vmatmul.bf16.gmra.mxu0 %v8324
      %v8415 = vpop.f32.mrf.mxu0
      %v8416 = vadd.f32 0.0, %v8415
      %v8417 = vpop.f32.mrf.mxu0
      %v8418 = vadd.f32 0.0, %v8417
      %8419 = vmatmul.bf16.gmra.mxu0 %v8333
      %v8420 = vpop.f32.mrf.mxu0
      %v8421 = vadd.f32 0.0, %v8420
      %v8422 = vpop.f32.mrf.mxu0
      %v8423 = vadd.f32 0.0, %v8422
      %8424 = vmatmul.bf16.gmra.mxu0 %v8342
      %v8425 = vpop.f32.mrf.mxu0
      %v8426 = vadd.f32 0.0, %v8425
      %v8427 = vpop.f32.mrf.mxu0
      %v8428 = vadd.f32 0.0, %v8427
      %8429 = vdwg.mxu0
      %v8440 = vrot.slane %v8406, 2
      %v8441 = vrot.slane %v8406, 4
      %v8442 = vrot.slane %v8406, 6
      %v8443 = vrot.slane %v8408, 2
      %v8444 = vrot.slane %v8408, 4
      %v8445 = vrot.slane %v8408, 6
      %v8446 = vrot.slane %v8411, 2
      %v8447 = vrot.slane %v8411, 4
      %v8448 = vrot.slane %v8411, 6
      %v8449 = vrot.slane %v8413, 2
      %v8450 = vrot.slane %v8413, 4
      %v8451 = vrot.slane %v8413, 6
      %v8452 = vrot.slane %v8416, 2
      %v8453 = vrot.slane %v8416, 4
      %v8454 = vrot.slane %v8416, 6
      %v8455 = vrot.slane %v8418, 2
      %v8456 = vrot.slane %v8418, 4
      %v8457 = vrot.slane %v8418, 6
      %v8458 = vrot.slane %v8421, 2
      %v8459 = vrot.slane %v8421, 4
      %v8460 = vrot.slane %v8421, 6
      %v8461 = vrot.slane %v8423, 2
      %v8462 = vrot.slane %v8423, 4
      %v8463 = vrot.slane %v8423, 6
      %v8464 = vrot.slane %v8426, 2
      %v8465 = vrot.slane %v8426, 4
      %v8466 = vrot.slane %v8426, 6
      %v8467 = vrot.slane %v8428, 2
      %v8468 = vrot.slane %v8428, 4
      %v8469 = vrot.slane %v8428, 6
      %v8470 = vrot.slane %v8406, 7
      %v8471 = vrot.slane %v8470, 2
      %v8472 = vrot.slane %v8440, 7
      %v8473 = vsel %vm6371, %v8471, %v8472
      %v8474 = vrot.slane %v8472, 2
      %v8475 = vrot.slane %v8441, 7
      %v8476 = vsel %vm6371, %v8474, %v8475
      %v8477 = vrot.slane %v8475, 2
      %v8478 = vrot.slane %v8442, 7
      %v8479 = vsel %vm6371, %v8477, %v8478
      %v8480 = vrot.slane %v8478, 2
      %v8481 = vrot.slane %v8408, 7
      %v8482 = vsel %vm6371, %v8480, %v8481
      %v8483 = vrot.slane %v8443, 7
      %v8484 = vrot.slane %v8483, 2
      %v8485 = vrot.slane %v8444, 7
      %v8486 = vsel %vm6371, %v8484, %v8485
      %v8487 = vrot.slane %v8485, 2
      %v8488 = vrot.slane %v8445, 7
      %v8489 = vsel %vm6371, %v8487, %v8488
      %v8490 = vrot.slane %v8488, 2
      %v8491 = vrot.slane %v8411, 7
      %v8492 = vsel %vm6371, %v8490, %v8491
      %v8493 = vrot.slane %v8491, 2
      %v8494 = vrot.slane %v8446, 7
      %v8495 = vsel %vm6371, %v8493, %v8494
      %v8496 = vrot.slane %v8447, 7
      %v8497 = vrot.slane %v8496, 2
      %v8498 = vrot.slane %v8448, 7
      %v8499 = vsel %vm6371, %v8497, %v8498
      %v8500 = vrot.slane %v8498, 2
      %v8501 = vrot.slane %v8413, 7
      %v8502 = vsel %vm6371, %v8500, %v8501
      %v8503 = vrot.slane %v8501, 2
      %v8504 = vrot.slane %v8449, 7
      %v8505 = vsel %vm6371, %v8503, %v8504
      %v8506 = vrot.slane %v8504, 2
      %v8507 = vrot.slane %v8450, 7
      %v8508 = vsel %vm6371, %v8506, %v8507
      %v8509 = vrot.slane %v8451, 7
      %v8510 = vrot.slane %v8509, 2
      %v8511 = vrot.slane %v8416, 7
      %v8512 = vsel %vm6371, %v8510, %v8511
      %v8513 = vrot.slane %v8511, 2
      %v8514 = vrot.slane %v8452, 7
      %v8515 = vsel %vm6371, %v8513, %v8514
      %v8516 = vrot.slane %v8514, 2
      %v8517 = vrot.slane %v8453, 7
      %v8518 = vsel %vm6371, %v8516, %v8517
      %v8519 = vrot.slane %v8517, 2
      %v8520 = vrot.slane %v8454, 7
      %v8521 = vsel %vm6371, %v8519, %v8520
      %v8522 = vrot.slane %v8418, 7
      %v8523 = vrot.slane %v8522, 2
      %v8524 = vrot.slane %v8455, 7
      %v8525 = vsel %vm6371, %v8523, %v8524
      %v8526 = vrot.slane %v8524, 2
      %v8527 = vrot.slane %v8456, 7
      %v8528 = vsel %vm6371, %v8526, %v8527
      %v8529 = vrot.slane %v8527, 2
      %v8530 = vrot.slane %v8457, 7
      %v8531 = vsel %vm6371, %v8529, %v8530
      %v8532 = vrot.slane %v8530, 2
      %v8533 = vrot.slane %v8421, 7
      %v8534 = vsel %vm6371, %v8532, %v8533
      %v8535 = vrot.slane %v8458, 7
      %v8536 = vrot.slane %v8535, 2
      %v8537 = vrot.slane %v8459, 7
      %v8538 = vsel %vm6371, %v8536, %v8537
      %v8539 = vrot.slane %v8537, 2
      %v8540 = vrot.slane %v8460, 7
      %v8541 = vsel %vm6371, %v8539, %v8540
      %v8542 = vrot.slane %v8540, 2
      %v8543 = vrot.slane %v8423, 7
      %v8544 = vsel %vm6371, %v8542, %v8543
      %v8545 = vrot.slane %v8543, 2
      %v8546 = vrot.slane %v8461, 7
      %v8547 = vsel %vm6371, %v8545, %v8546
      %v8548 = vrot.slane %v8462, 7
      %v8549 = vrot.slane %v8548, 2
      %v8550 = vrot.slane %v8463, 7
      %v8551 = vsel %vm6371, %v8549, %v8550
      %v8552 = vrot.slane %v8550, 2
      %v8553 = vrot.slane %v8426, 7
      %v8554 = vsel %vm6371, %v8552, %v8553
      %v8555 = vrot.slane %v8553, 2
      %v8556 = vrot.slane %v8464, 7
      %v8557 = vsel %vm6371, %v8555, %v8556
      %v8558 = vrot.slane %v8556, 2
      %v8559 = vrot.slane %v8465, 7
      %v8560 = vsel %vm6371, %v8558, %v8559
      %v8561 = vrot.slane %v8466, 7
      %v8562 = vrot.slane %v8561, 2
      %v8563 = vrot.slane %v8428, 7
      %v8564 = vsel %vm6371, %v8562, %v8563
      %v8565 = vrot.slane %v8563, 2
      %v8566 = vrot.slane %v8467, 7
      %v8567 = vsel %vm6371, %v8565, %v8566
      %v8568 = vrot.slane %v8566, 2
      %v8569 = vrot.slane %v8468, 7
      %v8570 = vsel %vm6371, %v8568, %v8569
      %v8571 = vrot.slane %v8569, 2
      %v8572 = vrot.slane %v8469, 7
      %v8573 = vsel %vm6371, %v8571, %v8572
      %v8606 = vadd.f32 %v8242, %v8473
      %v8607 = vadd.f32 %v8243, %v8476
      %v8608 = vadd.f32 %v8244, %v8479
      %v8609 = vadd.f32 %v8245, %v8482
      %v8610 = vadd.f32 %v8246, %v8486
      %v8611 = vadd.f32 %v8247, %v8489
      %v8612 = vadd.f32 %v8248, %v8492
      %v8613 = vadd.f32 %v8249, %v8495
      %v8614 = vadd.f32 %v8250, %v8499
      %v8615 = vadd.f32 %v8251, %v8502
      %v8616 = vadd.f32 %v8252, %v8505
      %v8617 = vadd.f32 %v8253, %v8508
      %v8618 = vadd.f32 %v8254, %v8512
      %v8619 = vadd.f32 %v8255, %v8515
      %v8620 = vadd.f32 %v8256, %v8518
      %v8621 = vadd.f32 %v8257, %v8521
      %v8622 = vadd.f32 %v8258, %v8525
      %v8623 = vadd.f32 %v8259, %v8528
      %v8624 = vadd.f32 %v8260, %v8531
      %v8625 = vadd.f32 %v8261, %v8534
      %v8626 = vadd.f32 %v8262, %v8538
      %v8627 = vadd.f32 %v8263, %v8541
      %v8628 = vadd.f32 %v8264, %v8544
      %v8629 = vadd.f32 %v8265, %v8547
      %v8630 = vadd.f32 %v8266, %v8551
      %v8631 = vadd.f32 %v8267, %v8554
      %v8632 = vadd.f32 %v8268, %v8557
      %v8633 = vadd.f32 %v8269, %v8560
      %v8634 = vadd.f32 %v8270, %v8564
      %v8635 = vadd.f32 %v8271, %v8567
      %v8636 = vadd.f32 %v8272, %v8570
      %v8637 = vadd.f32 %v8273, %v8573
      %s8638 = scalar_lea.vmem %s342, 512
      %v8639 = vld [vmem:[%s8638] sm:$0xf]
      %v8640 = vld [vmem:[%s8638 + $0x4] sm:$0xf]
      %v8641 = vld [vmem:[%s8638 + $0x8] sm:$0xf]
      %v8642 = vld [vmem:[%s8638 + $0xc] sm:$0xf]
      %v8643 = vld [vmem:[%s8638 + $0x10] sm:$0xf]
      %v8644 = vld [vmem:[%s8638 + $0x14] sm:$0xf]
      %v8645 = vld [vmem:[%s8638 + $0x18] sm:$0xf]
      %v8646 = vld [vmem:[%s8638 + $0x1c] sm:$0xf]
      %v8647 = vld [vmem:[%s8638 + $0x20] sm:$0xf]
      %v8648 = vld [vmem:[%s8638 + $0x24] sm:$0xf]
      %v8649 = vld [vmem:[%s8638 + $0x28] sm:$0xf]
      %v8650 = vld [vmem:[%s8638 + $0x2c] sm:$0xf]
      %v8651 = vld [vmem:[%s8638 + $0x30] sm:$0xf]
      %v8652 = vld [vmem:[%s8638 + $0x34] sm:$0xf]
      %v8653 = vld [vmem:[%s8638 + $0x38] sm:$0xf]
      %v8654 = vld [vmem:[%s8638 + $0x3c] sm:$0xf]
      %8655 = vst [vmem:[#allocation1] ss:$9 sm:$0xff] %v7886
      %s8656 = scalar_lea.vmem [#allocation1], 1
      %8657 = vst [vmem:[%s8656] ss:$9 sm:$0xff] %v7889
      %s8658 = scalar_lea.vmem [#allocation1], 2
      %8659 = vst [vmem:[%s8658] ss:$9 sm:$0xff] %v7892
      %s8660 = scalar_lea.vmem [#allocation1], 3
      %8661 = vst [vmem:[%s8660] ss:$9 sm:$0xff] %v7895
      %s8662 = scalar_lea.vmem [#allocation1], 4
      %8663 = vst [vmem:[%s8662] ss:$9 sm:$0xff] %v7898
      %s8664 = scalar_lea.vmem [#allocation1], 5
      %8665 = vst [vmem:[%s8664] ss:$9 sm:$0xff] %v7901
      %s8666 = scalar_lea.vmem [#allocation1], 6
      %8667 = vst [vmem:[%s8666] ss:$9 sm:$0xff] %v7904
      %s8668 = scalar_lea.vmem [#allocation1], 7
      %8669 = vst [vmem:[%s8668] ss:$9 sm:$0xff] %v7907
      %v8670 = vld [vmem:[#allocation1] sm:$0xff]
      %8671 = vst [vmem:[#allocation1] ss:$9 sm:$0xff] %v7910
      %8672 = vst [vmem:[%s8656] ss:$9 sm:$0xff] %v7913
      %8673 = vst [vmem:[%s8658] ss:$9 sm:$0xff] %v7916
      %8674 = vst [vmem:[%s8660] ss:$9 sm:$0xff] %v7919
      %8675 = vst [vmem:[%s8662] ss:$9 sm:$0xff] %v7922
      %8676 = vst [vmem:[%s8664] ss:$9 sm:$0xff] %v7925
      %8677 = vst [vmem:[%s8666] ss:$9 sm:$0xff] %v7928
      %8678 = vst [vmem:[%s8668] ss:$9 sm:$0xff] %v7931
      %v8679 = vld [vmem:[#allocation1] sm:$0xff]
      %8680 = vst [vmem:[#allocation1] ss:$9 sm:$0xff] %v7934
      %8681 = vst [vmem:[%s8656] ss:$9 sm:$0xff] %v7937
      %8682 = vst [vmem:[%s8658] ss:$9 sm:$0xff] %v7940
      %8683 = vst [vmem:[%s8660] ss:$9 sm:$0xff] %v7943
      %8684 = vst [vmem:[%s8662] ss:$9 sm:$0xff] %v7946
      %8685 = vst [vmem:[%s8664] ss:$9 sm:$0xff] %v7949
      %8686 = vst [vmem:[%s8666] ss:$9 sm:$0xff] %v7952
      %8687 = vst [vmem:[%s8668] ss:$9 sm:$0xff] %v7955
      %v8688 = vld [vmem:[#allocation1] sm:$0xff]
      %8689 = vst [vmem:[#allocation1] ss:$9 sm:$0xff] %v7958
      %8690 = vst [vmem:[%s8656] ss:$9 sm:$0xff] %v7961
      %8691 = vst [vmem:[%s8658] ss:$9 sm:$0xff] %v7964
      %8692 = vst [vmem:[%s8660] ss:$9 sm:$0xff] %v7967
      %8693 = vst [vmem:[%s8662] ss:$9 sm:$0xff] %v7970
      %8694 = vst [vmem:[%s8664] ss:$9 sm:$0xff] %v7973
      %8695 = vst [vmem:[%s8666] ss:$9 sm:$0xff] %v7976
      %8696 = vst [vmem:[%s8668] ss:$9 sm:$0xff] %v7979
      %v8697 = vld [vmem:[#allocation1] sm:$0xff]
      %8698 = vst [vmem:[#allocation1] ss:$9 sm:$0xff] %v7982
      %8699 = vst [vmem:[%s8656] ss:$9 sm:$0xff] %v7985
      %8700 = vst [vmem:[%s8658] ss:$9 sm:$0xff] %v7988
      %8701 = vst [vmem:[%s8660] ss:$9 sm:$0xff] %v7991
      %8702 = vst [vmem:[%s8662] ss:$9 sm:$0xff] %v7994
      %8703 = vst [vmem:[%s8664] ss:$9 sm:$0xff] %v7997
      %8704 = vst [vmem:[%s8666] ss:$9 sm:$0xff] %v8000
      %8705 = vst [vmem:[%s8668] ss:$9 sm:$0xff] %v8003
      %v8706 = vld [vmem:[#allocation1] sm:$0xff]
      %v8728 = vunpack.c.l.b16 %v8639
      %v8729 = vunpack.c.l.b16 %v8640
      %v8730 = vunpack.c.l.b16 %v8641
      %v8731 = vunpack.c.l.b16 %v8642
      %v8732 = vunpack.c.l.b16 %v8643
      %v8733 = vunpack.c.l.b16 %v8644
      %v8734 = vunpack.c.l.b16 %v8645
      %v8735 = vunpack.c.l.b16 %v8646
      %v8736 = vunpack.c.l.b16 %v8647
      %v8737 = vunpack.c.l.b16 %v8648
      %v8738 = vunpack.c.l.b16 %v8649
      %v8739 = vunpack.c.l.b16 %v8650
      %v8740 = vunpack.c.l.b16 %v8651
      %v8741 = vunpack.c.l.b16 %v8652
      %v8742 = vunpack.c.l.b16 %v8653
      %v8743 = vunpack.c.l.b16 %v8654
      %v8744 = vpack.c.b16 %v8729, %v8728
      %v8745 = vpack.c.b16 %v8731, %v8730
      %v8746 = vpack.c.b16 %v8733, %v8732
      %v8747 = vpack.c.b16 %v8735, %v8734
      %v8748 = vpack.c.b16 %v8737, %v8736
      %v8749 = vpack.c.b16 %v8739, %v8738
      %v8750 = vpack.c.b16 %v8741, %v8740
      %v8751 = vpack.c.b16 %v8743, %v8742
      %8760 = vmatpush.bf16.msra.mxu0 %v8751
      %8761 = vmatpush.bf16.msra.mxu0 %v8750
      %8762 = vmatpush.bf16.msra.mxu0 %v8749
      %8763 = vmatpush.bf16.msra.mxu0 %v8748
      %8764 = vmatpush.bf16.msra.mxu0 %v8747
      %8765 = vmatpush.bf16.msra.mxu0 %v8746
      %8766 = vmatpush.bf16.msra.mxu0 %v8745
      %8767 = vmatpush.bf16.msra.mxu0 %v8744
      %8768 = vmatmul.bf16.gmra.mxu0 %v8670
      %v8769 = vpop.f32.mrf.mxu0
      %v8770 = vadd.f32 0.0, %v8769
      %v8771 = vpop.f32.mrf.mxu0
      %v8772 = vadd.f32 0.0, %v8771
      %8773 = vmatmul.bf16.gmra.mxu0 %v8679
      %v8774 = vpop.f32.mrf.mxu0
      %v8775 = vadd.f32 0.0, %v8774
      %v8776 = vpop.f32.mrf.mxu0
      %v8777 = vadd.f32 0.0, %v8776
      %8778 = vmatmul.bf16.gmra.mxu0 %v8688
      %v8779 = vpop.f32.mrf.mxu0
      %v8780 = vadd.f32 0.0, %v8779
      %v8781 = vpop.f32.mrf.mxu0
      %v8782 = vadd.f32 0.0, %v8781
      %8783 = vmatmul.bf16.gmra.mxu0 %v8697
      %v8784 = vpop.f32.mrf.mxu0
      %v8785 = vadd.f32 0.0, %v8784
      %v8786 = vpop.f32.mrf.mxu0
      %v8787 = vadd.f32 0.0, %v8786
      %8788 = vmatmul.bf16.gmra.mxu0 %v8706
      %v8789 = vpop.f32.mrf.mxu0
      %v8790 = vadd.f32 0.0, %v8789
      %v8791 = vpop.f32.mrf.mxu0
      %v8792 = vadd.f32 0.0, %v8791
      %8793 = vdwg.mxu0
      %v8804 = vrot.slane %v8770, 2
      %v8805 = vrot.slane %v8770, 4
      %v8806 = vrot.slane %v8770, 6
      %v8807 = vrot.slane %v8772, 4
      %v8808 = vrot.slane %v8772, 6
      %v8809 = vrot.slane %v8775, 2
      %v8810 = vrot.slane %v8775, 6
      %v8811 = vrot.slane %v8777, 2
      %v8812 = vrot.slane %v8777, 4
      %v8813 = vrot.slane %v8780, 2
      %v8814 = vrot.slane %v8780, 4
      %v8815 = vrot.slane %v8780, 6
      %v8816 = vrot.slane %v8782, 2
      %v8817 = vrot.slane %v8782, 4
      %v8818 = vrot.slane %v8782, 6
      %v8819 = vrot.slane %v8785, 4
      %v8820 = vrot.slane %v8785, 6
      %v8821 = vrot.slane %v8787, 2
      %v8822 = vrot.slane %v8787, 6
      %v8823 = vrot.slane %v8790, 2
      %v8824 = vrot.slane %v8790, 4
      %v8825 = vrot.slane %v8792, 2
      %v8826 = vrot.slane %v8792, 4
      %v8827 = vrot.slane %v8792, 6
      %v8852 = vadd.f32 %v8606, %v8804
      %v8853 = vadd.f32 %v8607, %v8805
      %v8854 = vadd.f32 %v8608, %v8806
      %v8855 = vadd.f32 %v8609, %v8772
      %v8856 = vadd.f32 %v8610, %v8807
      %v8857 = vadd.f32 %v8611, %v8808
      %v8858 = vadd.f32 %v8612, %v8775
      %v8859 = vadd.f32 %v8613, %v8809
      %v8860 = vadd.f32 %v8614, %v8810
      %v8861 = vadd.f32 %v8615, %v8777
      %v8862 = vadd.f32 %v8616, %v8811
      %v8863 = vadd.f32 %v8617, %v8812
      %v8864 = vadd.f32 %v8618, %v8780
      %v8865 = vadd.f32 %v8619, %v8813
      %v8866 = vadd.f32 %v8620, %v8814
      %v8867 = vadd.f32 %v8621, %v8815
      %v8868 = vadd.f32 %v8622, %v8816
      %v8869 = vadd.f32 %v8623, %v8817
      %v8870 = vadd.f32 %v8624, %v8818
      %v8871 = vadd.f32 %v8625, %v8785
      %v8872 = vadd.f32 %v8626, %v8819
      %v8873 = vadd.f32 %v8627, %v8820
      %v8874 = vadd.f32 %v8628, %v8787
      %v8875 = vadd.f32 %v8629, %v8821
      %v8876 = vadd.f32 %v8630, %v8822
      %v8877 = vadd.f32 %v8631, %v8790
      %v8878 = vadd.f32 %v8632, %v8823
      %v8879 = vadd.f32 %v8633, %v8824
      %v8880 = vadd.f32 %v8634, %v8792
      %v8881 = vadd.f32 %v8635, %v8825
      %v8882 = vadd.f32 %v8636, %v8826
      %v8883 = vadd.f32 %v8637, %v8827
      %v8884 = vld [vmem:[%s345] sm:$0x1]
      %v8886 = vperm.slane %v8884, 0
      %v8888 = vrot.slane %v8886, 2
      %v8889 = vrot.slane %v8886, 4
      %v8890 = vrot.slane %v8886, 6
      %v8894 = vadd.f32 %v8852, %v8886
      %v8895 = vadd.f32 %v8853, %v8888
      %v8896 = vadd.f32 %v8854, %v8889
      %v8897 = vadd.f32 %v8855, %v8890
      %v8898 = vadd.f32 %v8856, %v8886
      %v8899 = vadd.f32 %v8857, %v8888
      %v8900 = vadd.f32 %v8858, %v8889
      %v8901 = vadd.f32 %v8859, %v8890
      %v8902 = vadd.f32 %v8860, %v8886
      %v8903 = vadd.f32 %v8861, %v8888
      %v8904 = vadd.f32 %v8862, %v8889
      %v8905 = vadd.f32 %v8863, %v8890
      %v8906 = vadd.f32 %v8864, %v8886
      %v8907 = vadd.f32 %v8865, %v8888
      %v8908 = vadd.f32 %v8866, %v8889
      %v8909 = vadd.f32 %v8867, %v8890
      %v8910 = vadd.f32 %v8868, %v8886
      %v8911 = vadd.f32 %v8869, %v8888
      %v8912 = vadd.f32 %v8870, %v8889
      %v8913 = vadd.f32 %v8871, %v8890
      %v8914 = vadd.f32 %v8872, %v8886
      %v8915 = vadd.f32 %v8873, %v8888
      %v8916 = vadd.f32 %v8874, %v8889
      %v8917 = vadd.f32 %v8875, %v8890
      %v8918 = vadd.f32 %v8876, %v8886
      %v8919 = vadd.f32 %v8877, %v8888
      %v8920 = vadd.f32 %v8878, %v8889
      %v8921 = vadd.f32 %v8879, %v8890
      %v8922 = vadd.f32 %v8880, %v8886
      %v8923 = vadd.f32 %v8881, %v8888
      %v8924 = vadd.f32 %v8882, %v8889
      %v8925 = vadd.f32 %v8883, %v8890
      %s8926 = scalar_lea.vmem %s338, 216
      %v8927 = vld [vmem:[%s8926] sm:$0xf]
      %v8928 = vld [vmem:[%s8926 + $0x8] sm:$0xf]
      %v8929 = vld [vmem:[%s8926 + $0x10] sm:$0xf]
      %v8930 = vld [vmem:[%s8926 + $0x18] sm:$0xf]
      %v8931 = vld [vmem:[%s8926 + $0x20] sm:$0xf]
      %v8932 = vld [vmem:[%s8926 + $0x28] sm:$0xf]
      %v8933 = vld [vmem:[%s8926 + $0x30] sm:$0xf]
      %v8934 = vld [vmem:[%s8926 + $0x38] sm:$0xf]
      %v8935 = vld [vmem:[%s349] sm:$0xf]
      %v8936 = vld [vmem:[%s349 + $0x4] sm:$0xf]
      %v8937 = vld [vmem:[%s349 + $0x8] sm:$0xf]
      %v8938 = vld [vmem:[%s349 + $0xc] sm:$0xf]
      %v8939 = vld [vmem:[%s349 + $0x10] sm:$0xf]
      %v8940 = vld [vmem:[%s349 + $0x14] sm:$0xf]
      %v8941 = vld [vmem:[%s349 + $0x18] sm:$0xf]
      %v8942 = vld [vmem:[%s349 + $0x1c] sm:$0xf]
      %v8943 = vld [vmem:[%s349 + $0x20] sm:$0xf]
      %v8944 = vld [vmem:[%s349 + $0x24] sm:$0xf]
      %v8945 = vld [vmem:[%s349 + $0x28] sm:$0xf]
      %v8946 = vld [vmem:[%s349 + $0x2c] sm:$0xf]
      %v8947 = vld [vmem:[%s349 + $0x30] sm:$0xf]
      %v8948 = vld [vmem:[%s349 + $0x34] sm:$0xf]
      %v8949 = vld [vmem:[%s349 + $0x38] sm:$0xf]
      %v8950 = vld [vmem:[%s349 + $0x3c] sm:$0xf]
      %v8959 = vunpack.c.l.b16 %v8927
      %v8960 = vunpack.c.l.b16 %v8928
      %v8961 = vunpack.c.l.b16 %v8929
      %v8962 = vunpack.c.l.b16 %v8930
      %v8963 = vunpack.c.l.b16 %v8931
      %v8964 = vunpack.c.l.b16 %v8932
      %v8965 = vunpack.c.l.b16 %v8933
      %v8966 = vunpack.c.l.b16 %v8934
      %v8967 = vpack.c.b16 %v8960, %v8959
      %v8968 = vpack.c.b16 %v8962, %v8961
      %v8969 = vpack.c.b16 %v8964, %v8963
      %v8970 = vpack.c.b16 %v8966, %v8965
      %v8991 = vunpack.c.l.b16 %v8935
      %v8992 = vunpack.c.l.b16 %v8936
      %v8993 = vunpack.c.l.b16 %v8937
      %v8994 = vunpack.c.l.b16 %v8938
      %v8995 = vunpack.c.l.b16 %v8939
      %v8996 = vunpack.c.l.b16 %v8940
      %v8997 = vunpack.c.l.b16 %v8941
      %v8998 = vunpack.c.l.b16 %v8942
      %v8999 = vunpack.c.l.b16 %v8943
      %v9000 = vunpack.c.l.b16 %v8944
      %v9001 = vunpack.c.l.b16 %v8945
      %v9002 = vunpack.c.l.b16 %v8946
      %v9003 = vunpack.c.l.b16 %v8947
      %v9004 = vunpack.c.l.b16 %v8948
      %v9005 = vunpack.c.l.b16 %v8949
      %v9006 = vunpack.c.l.b16 %v8950
      %v9007 = vpack.c.b16 %v8992, %v8991
      %v9008 = vpack.c.b16 %v8994, %v8993
      %v9009 = vpack.c.b16 %v8996, %v8995
      %v9010 = vpack.c.b16 %v8998, %v8997
      %v9011 = vpack.c.b16 %v9000, %v8999
      %v9012 = vpack.c.b16 %v9002, %v9001
      %v9013 = vpack.c.b16 %v9004, %v9003
      %v9014 = vpack.c.b16 %v9006, %v9005
      %9023 = vmatpush.bf16.msra.mxu0 %v9014
      %9024 = vmatpush.bf16.msra.mxu0 %v9013
      %9025 = vmatpush.bf16.msra.mxu0 %v9012
      %9026 = vmatpush.bf16.msra.mxu0 %v9011
      %9027 = vmatpush.bf16.msra.mxu0 %v9010
      %9028 = vmatpush.bf16.msra.mxu0 %v9009
      %9029 = vmatpush.bf16.msra.mxu0 %v9008
      %9030 = vmatpush.bf16.msra.mxu0 %v9007
      %9031 = vmatmul.bf16.gmra.mxu0 %v8967
      %v9032 = vpop.f32.mrf.mxu0
      %v9033 = vadd.f32 0.0, %v9032
      %v9034 = vpop.f32.mrf.mxu0
      %v9035 = vadd.f32 0.0, %v9034
      %9036 = vmatmul.bf16.gmra.mxu0 %v8968
      %v9037 = vpop.f32.mrf.mxu0
      %v9038 = vadd.f32 0.0, %v9037
      %v9039 = vpop.f32.mrf.mxu0
      %v9040 = vadd.f32 0.0, %v9039
      %9041 = vmatmul.bf16.gmra.mxu0 %v8969
      %v9042 = vpop.f32.mrf.mxu0
      %v9043 = vadd.f32 0.0, %v9042
      %v9044 = vpop.f32.mrf.mxu0
      %v9045 = vadd.f32 0.0, %v9044
      %9046 = vmatmul.bf16.gmra.mxu0 %v8970
      %v9047 = vpop.f32.mrf.mxu0
      %v9048 = vadd.f32 0.0, %v9047
      %v9049 = vpop.f32.mrf.mxu0
      %v9050 = vadd.f32 0.0, %v9049
      %9051 = vdwg.mxu0
      %v9052 = vld [vmem:[%s352] sm:$0x1]
      %v9054 = vperm.slane %v9052, 0
      %v9056 = vadd.f32 %v9033, %v9054
      %v9057 = vadd.f32 %v9035, %v9054
      %v9058 = vadd.f32 %v9038, %v9054
      %v9059 = vadd.f32 %v9040, %v9054
      %v9060 = vadd.f32 %v9043, %v9054
      %v9061 = vadd.f32 %v9045, %v9054
      %v9062 = vadd.f32 %v9048, %v9054
      %v9063 = vadd.f32 %v9050, %v9054
      %v9072 = vrot.slane %v9056, 2
      %v9073 = vrot.slane %v9056, 4
      %v9074 = vrot.slane %v9056, 6
      %v9075 = vrot.slane %v9057, 2
      %v9076 = vrot.slane %v9057, 4
      %v9077 = vrot.slane %v9057, 6
      %v9078 = vrot.slane %v9058, 2
      %v9079 = vrot.slane %v9058, 4
      %v9080 = vrot.slane %v9058, 6
      %v9081 = vrot.slane %v9059, 2
      %v9082 = vrot.slane %v9059, 4
      %v9083 = vrot.slane %v9059, 6
      %v9084 = vrot.slane %v9060, 2
      %v9085 = vrot.slane %v9060, 4
      %v9086 = vrot.slane %v9060, 6
      %v9087 = vrot.slane %v9061, 2
      %v9088 = vrot.slane %v9061, 4
      %v9089 = vrot.slane %v9061, 6
      %v9090 = vrot.slane %v9062, 2
      %v9091 = vrot.slane %v9062, 4
      %v9092 = vrot.slane %v9062, 6
      %v9093 = vrot.slane %v9063, 2
      %v9094 = vrot.slane %v9063, 4
      %v9095 = vrot.slane %v9063, 6
      %v9120 = vadd.f32 %v8894, %v9056
      %v9121 = vadd.f32 %v8895, %v9072
      %v9122 = vadd.f32 %v8896, %v9073
      %v9123 = vadd.f32 %v8897, %v9074
      %v9124 = vadd.f32 %v8898, %v9057
      %v9125 = vadd.f32 %v8899, %v9075
      %v9126 = vadd.f32 %v8900, %v9076
      %v9127 = vadd.f32 %v8901, %v9077
      %v9128 = vadd.f32 %v8902, %v9058
      %v9129 = vadd.f32 %v8903, %v9078
      %v9130 = vadd.f32 %v8904, %v9079
      %v9131 = vadd.f32 %v8905, %v9080
      %v9132 = vadd.f32 %v8906, %v9059
      %v9133 = vadd.f32 %v8907, %v9081
      %v9134 = vadd.f32 %v8908, %v9082
      %v9135 = vadd.f32 %v8909, %v9083
      %v9136 = vadd.f32 %v8910, %v9060
      %v9137 = vadd.f32 %v8911, %v9084
      %v9138 = vadd.f32 %v8912, %v9085
      %v9139 = vadd.f32 %v8913, %v9086
      %v9140 = vadd.f32 %v8914, %v9061
      %v9141 = vadd.f32 %v8915, %v9087
      %v9142 = vadd.f32 %v8916, %v9088
      %v9143 = vadd.f32 %v8917, %v9089
      %v9144 = vadd.f32 %v8918, %v9062
      %v9145 = vadd.f32 %v8919, %v9090
      %v9146 = vadd.f32 %v8920, %v9091
      %v9147 = vadd.f32 %v8921, %v9092
      %v9148 = vadd.f32 %v8922, %v9063
      %v9149 = vadd.f32 %v8923, %v9093
      %v9150 = vadd.f32 %v8924, %v9094
      %v9151 = vadd.f32 %v8925, %v9095
      %v9152 = vmax.f32 %v9120, 0.0
      %v9153 = vmax.f32 %v9121, 0.0
      %v9154 = vmax.f32 %v9122, 0.0
      %v9155 = vmax.f32 %v9123, 0.0
      %v9156 = vmax.f32 %v9124, 0.0
      %v9157 = vmax.f32 %v9125, 0.0
      %v9158 = vmax.f32 %v9126, 0.0
      %v9159 = vmax.f32 %v9127, 0.0
      %v9160 = vmax.f32 %v9128, 0.0
      %v9161 = vmax.f32 %v9129, 0.0
      %v9162 = vmax.f32 %v9130, 0.0
      %v9163 = vmax.f32 %v9131, 0.0
      %v9164 = vmax.f32 %v9132, 0.0
      %v9165 = vmax.f32 %v9133, 0.0
      %v9166 = vmax.f32 %v9134, 0.0
      %v9167 = vmax.f32 %v9135, 0.0
      %v9168 = vmax.f32 %v9136, 0.0
      %v9169 = vmax.f32 %v9137, 0.0
      %v9170 = vmax.f32 %v9138, 0.0
      %v9171 = vmax.f32 %v9139, 0.0
      %v9172 = vmax.f32 %v9140, 0.0
      %v9173 = vmax.f32 %v9141, 0.0
      %v9174 = vmax.f32 %v9142, 0.0
      %v9175 = vmax.f32 %v9143, 0.0
      %v9176 = vmax.f32 %v9144, 0.0
      %v9177 = vmax.f32 %v9145, 0.0
      %v9178 = vmax.f32 %v9146, 0.0
      %v9179 = vmax.f32 %v9147, 0.0
      %v9180 = vmax.f32 %v9148, 0.0
      %v9181 = vmax.f32 %v9149, 0.0
      %v9182 = vmax.f32 %v9150, 0.0
      %v9183 = vmax.f32 %v9151, 0.0
      %9216 = vst [vmem:[#allocation1] ss:$4 sm:$0xff] %v9152
      %s9217 = scalar_lea.vmem [#allocation1], 1
      %9218 = vst [vmem:[%s9217] ss:$4 sm:$0xff] %v9153
      %s9219 = scalar_lea.vmem [#allocation1], 2
      %9220 = vst [vmem:[%s9219] ss:$4 sm:$0xff] %v9154
      %s9221 = scalar_lea.vmem [#allocation1], 3
      %9222 = vst [vmem:[%s9221] ss:$4 sm:$0xff] %v9155
      %v9223 = vld.sshfl [vmem:[#allocation1] sm:$0xff pattern:$0x73625140]
      %s9224 = scalar_lea.vmem [#allocation1], 32
      %9225 = vst [vmem:[%s9224] ss:$4 sm:$0xff] %v9156
      %s9226 = scalar_lea.vmem [#allocation1], 33
      %9227 = vst [vmem:[%s9226] ss:$4 sm:$0xff] %v9157
      %s9228 = scalar_lea.vmem [#allocation1], 34
      %9229 = vst [vmem:[%s9228] ss:$4 sm:$0xff] %v9158
      %s9230 = scalar_lea.vmem [#allocation1], 35
      %9231 = vst [vmem:[%s9230] ss:$4 sm:$0xff] %v9159
      %v9232 = vld.sshfl [vmem:[#allocation1 + $0x20] sm:$0xff pattern:$0x73625140]
      %9233 = vst [vmem:[#allocation1] ss:$4 sm:$0xff] %v9160
      %9234 = vst [vmem:[%s9217] ss:$4 sm:$0xff] %v9161
      %9235 = vst [vmem:[%s9219] ss:$4 sm:$0xff] %v9162
      %9236 = vst [vmem:[%s9221] ss:$4 sm:$0xff] %v9163
      %v9237 = vld.sshfl [vmem:[#allocation1] sm:$0xff pattern:$0x73625140]
      %9238 = vst [vmem:[%s9224] ss:$4 sm:$0xff] %v9164
      %9239 = vst [vmem:[%s9226] ss:$4 sm:$0xff] %v9165
      %9240 = vst [vmem:[%s9228] ss:$4 sm:$0xff] %v9166
      %9241 = vst [vmem:[%s9230] ss:$4 sm:$0xff] %v9167
      %v9242 = vld.sshfl [vmem:[#allocation1 + $0x20] sm:$0xff pattern:$0x73625140]
      %9243 = vst [vmem:[#allocation1] ss:$4 sm:$0xff] %v9168
      %9244 = vst [vmem:[%s9217] ss:$4 sm:$0xff] %v9169
      %9245 = vst [vmem:[%s9219] ss:$4 sm:$0xff] %v9170
      %9246 = vst [vmem:[%s9221] ss:$4 sm:$0xff] %v9171
      %v9247 = vld.sshfl [vmem:[#allocation1] sm:$0xff pattern:$0x73625140]
      %9248 = vst [vmem:[%s9224] ss:$4 sm:$0xff] %v9172
      %9249 = vst [vmem:[%s9226] ss:$4 sm:$0xff] %v9173
      %9250 = vst [vmem:[%s9228] ss:$4 sm:$0xff] %v9174
      %9251 = vst [vmem:[%s9230] ss:$4 sm:$0xff] %v9175
      %v9252 = vld.sshfl [vmem:[#allocation1 + $0x20] sm:$0xff pattern:$0x73625140]
      %9253 = vst [vmem:[#allocation1] ss:$4 sm:$0xff] %v9176
      %9254 = vst [vmem:[%s9217] ss:$4 sm:$0xff] %v9177
      %9255 = vst [vmem:[%s9219] ss:$4 sm:$0xff] %v9178
      %9256 = vst [vmem:[%s9221] ss:$4 sm:$0xff] %v9179
      %v9257 = vld.sshfl [vmem:[#allocation1] sm:$0xff pattern:$0x73625140]
      %9258 = vst [vmem:[%s9224] ss:$4 sm:$0xff] %v9180
      %9259 = vst [vmem:[%s9226] ss:$4 sm:$0xff] %v9181
      %9260 = vst [vmem:[%s9228] ss:$4 sm:$0xff] %v9182
      %9261 = vst [vmem:[%s9230] ss:$4 sm:$0xff] %v9183
      %v9262 = vld.sshfl [vmem:[#allocation1 + $0x20] sm:$0xff pattern:$0x73625140]
      %v9271 = vpack.c.bf16 %v9223, %v9223
      %v9272 = vpack.c.bf16 %v9232, %v9232
      %v9273 = vpack.c.bf16 %v9237, %v9237
      %v9274 = vpack.c.bf16 %v9242, %v9242
      %v9275 = vpack.c.bf16 %v9247, %v9247
      %v9276 = vpack.c.bf16 %v9252, %v9252
      %v9277 = vpack.c.bf16 %v9257, %v9257
      %v9278 = vpack.c.bf16 %v9262, %v9262
      %9279 = vst [vmem:[%s360] sm:$0xf] %v9271
      %9280 = vst [vmem:[%s360 + $0x4] sm:$0xf] %v9272
      %9281 = vst [vmem:[%s360 + $0x8] sm:$0xf] %v9273
      %9282 = vst [vmem:[%s360 + $0xc] sm:$0xf] %v9274
      %9283 = vst [vmem:[%s360 + $0x10] sm:$0xf] %v9275
      %9284 = vst [vmem:[%s360 + $0x14] sm:$0xf] %v9276
      %9285 = vst [vmem:[%s360 + $0x18] sm:$0xf] %v9277
      %9286 = vst [vmem:[%s360 + $0x1c] sm:$0xf] %v9278
      %p9287 = scmp.lt.s32.totalorder %s22, 1
      %s9288 = scalar_select %p9287, %s22, 1
      %p9289 = scmp.lt.s32.totalorder %s23, 0
      %s9290 = scalar_select %p9289, %s23, 0
      %s9291 = smul.addr %s9288, 8
      %s9292 = sadd.s32 %s9290, %s9291
      %s9293 = smul.addr %s9292, 4
      %s9294 = scalar_lea.vmem %s7, %s9293
      // Predicated region
      $region53: #{basic_block_forward.1} parent=47 // pred_check
        %p9295 = pneg %p222
      $region54: #{basic_block_forward.1} parent=47 // pred_check_branch
        %9297 = sbr.rel (%p9295) target = $region56
      $region55: #{basic_block_forward.1} parent=47 // pred_region
        _
      $region56: #{basic_block_forward.1} parent=47 // pred_fallthru
        _
    $region48: #{basic_block_forward.1} parent=5 // pred_fallthru
      _
    %p9298 = scmp.le.s32.totalorder 2, %s13
    // Predicated region
    $region57: #{basic_block_forward.1} parent=5 // pred_check
      %p9299 = pneg %p9298
    $region58: #{basic_block_forward.1} parent=5 // pred_check_branch
      %9301 = sbr.rel (%p9299) target = $region60
    $region59: #{basic_block_forward.1} parent=5 // pred_region
      %s9302 = ssub.s32 %s13, 2
      // Predicated region
      $region61: #{basic_block_forward.1} parent=59 // pred_check
        %p9303 = pneg %p228
      $region62: #{basic_block_forward.1} parent=59 // pred_check_branch
        %9305 = sbr.rel (%p9303) target = $region64
      $region63: #{basic_block_forward.1} parent=59 // pred_region
        %p9306 = scmp.lt.s32.totalorder %s24, 1
        %s9307 = scalar_select %p9306, %s24, 1
        %p9308 = scmp.lt.s32.totalorder %s25, 0
        %s9309 = scalar_select %p9308, %s25, 0
        %s9310 = smul.addr %s9307, 8
        %s9311 = sadd.s32 %s9309, %s9310
        %s9312 = smul.addr %s9311, 4
        %s9313 = scalar_lea.vmem %s7, %s9312
      $region64: #{basic_block_forward.1} parent=59 // pred_fallthru
        _
    $region60: #{basic_block_forward.1} parent=5 // pred_fallthru
      _
  $region6: #{basic_block_forward.1} parent=0 // loop_footer
    %s17 = sadd.s32 1, %s13
  $region7: #{basic_block_forward.1} parent=0 // loop_footer_branch
    %12 = sbr.rel target = $region3
  $region8: #{basic_block_forward.1} parent=0 // loop_exit
    _

</llo_original>
